<compile_context>
chip_gen: v7x
topology: tpu7x:2x2x1
jax: 0.10.0
libtpu: 0.0.40
codegen_flags: <defaults>
</compile_context>

<pallas_src>
import functools

import jax
import jax.numpy as jnp
from jax import lax
from jax.experimental import pallas as pl
from jax.experimental.pallas import tpu as pltpu

# ----------------------------------------------------------------------------
# Pallas kernels
# ----------------------------------------------------------------------------


def _mlp_kernel(*refs, acts):
    # refs = (x_ref, w1, b1, w2, b2, ..., o_ref); whole chain runs in-register/VMEM.
    x_ref, o_ref = refs[0], refs[-1]
    h = x_ref[...]
    for i, act in enumerate(acts):
        w = refs[1 + 2 * i][...]
        b = refs[2 + 2 * i][...]
        h = jnp.dot(h, w, preferred_element_type=jnp.float32) + b
        if act == "relu":
            h = jnp.maximum(h, 0.0)
    o_ref[...] = h


def pallas_mlp(x, layers, acts=None):
    """Fused per-point MLP chain.  x: (..., K); layers: [(w, b_or_None), ...].

    Equivalent to a stack of 1x1 Conv1d / nn.Linear (+ optional ReLU) applied per point.
    The batch/point axes are collapsed to one tall LHS so a single kernel launch and a
    single weight DMA cover the whole tensor.
    """
    if acts is None:
        acts = ["none"] * len(layers)
    lead = x.shape[:-1]
    K = x.shape[-1]
    R = 1
    for d in lead:
        R *= d
    x2 = x.reshape(R, K).astype(jnp.float32)
    args = [x2]
    for (w, b) in layers:
        M = w.shape[1]
        if b is None:
            b = jnp.zeros((M,), jnp.float32)
        args.append(w.astype(jnp.float32))
        args.append(b.reshape(1, M).astype(jnp.float32))
    M_out = layers[-1][0].shape[1]
    out = pl.pallas_call(
        functools.partial(_mlp_kernel, acts=tuple(acts)),
        out_shape=jax.ShapeDtypeStruct((R, M_out), jnp.float32),
    )(*args)
    return out.reshape(lead + (M_out,))


def _qkv_kernel(qi_ref, ki_ref, vi_ref, wq, bq, wk, bk, wv, bv, qo, ko, vo):
    qo[...] = jnp.dot(qi_ref[...], wq[...], preferred_element_type=jnp.float32) + bq[...]
    ko[...] = jnp.dot(ki_ref[...], wk[...], preferred_element_type=jnp.float32) + bk[...]
    vo[...] = jnp.dot(vi_ref[...], wv[...], preferred_element_type=jnp.float32) + bv[...]


def pallas_qkv(q_in, k_in, v_in, p):
    """Fused Q/K/V projections (three dots, one kernel launch)."""
    B, Nq, D = q_in.shape
    Nk = k_in.shape[1]
    f32 = jnp.float32
    args = [q_in.reshape(B * Nq, D).astype(f32),
            k_in.reshape(B * Nk, D).astype(f32),
            v_in.reshape(B * Nk, D).astype(f32)]
    for name in ("q", "k", "v"):
        args.append(p[name]["w"].astype(f32))
        args.append(p[name]["b"].reshape(1, -1).astype(f32))
    q, k, v = pl.pallas_call(
        _qkv_kernel,
        out_shape=(jax.ShapeDtypeStruct((B * Nq, D), f32),
                   jax.ShapeDtypeStruct((B * Nk, D), f32),
                   jax.ShapeDtypeStruct((B * Nk, D), f32)),
    )(*args)
    return q.reshape(B, Nq, D), k.reshape(B, Nk, D), v.reshape(B, Nk, D)


def _attn_kernel(q_ref, k_ref, v_ref, bias_ref, o_ref, *, scale):
    # q: (H, Nq, Dh), k/v: (H, Nk, Dh), bias: (1, Nk) additive (-1e9 on padded keys).
    q = q_ref[...]
    k = k_ref[...]
    v = v_ref[...]
    bias = bias_ref[...]
    # q @ k^T without explicit transpose: contract last dims, batch over heads.
    s = lax.dot_general(q, k, (((2,), (2,)), ((0,), (0,))),
                        preferred_element_type=jnp.float32) * scale      # (H, Nq, Nk)
    s = s + bias[None]                                                   # broadcast over H, Nq
    s = s - jnp.max(s, axis=-1, keepdims=True)
    p = jnp.exp(s)
    p = p * pl.reciprocal(jnp.sum(p, axis=-1, keepdims=True), approx=True)
    o_ref[...] = lax.dot_general(p, v, (((2,), (1,)), ((0,), (0,))),
                                 preferred_element_type=jnp.float32)     # (H, Nq, Dh)


def pallas_attention_core(q, k, v, bias):
    """q: (B, H, Nq, Dh), k/v: (B, H, Nk, Dh), bias: (B, 1, Nk)."""
    B, H, Nq, Dh = q.shape
    Nk = k.shape[2]
    scale = 1.0 / float(Dh) ** 0.5
    return pl.pallas_call(
        functools.partial(_attn_kernel, scale=scale),
        out_shape=jax.ShapeDtypeStruct((B, H, Nq, Dh), jnp.float32),
        grid=(B,),
        in_specs=[
            pl.BlockSpec((None, H, Nq, Dh), lambda b: (b, 0, 0, 0)),
            pl.BlockSpec((None, H, Nk, Dh), lambda b: (b, 0, 0, 0)),
            pl.BlockSpec((None, H, Nk, Dh), lambda b: (b, 0, 0, 0)),
            pl.BlockSpec((None, 1, Nk), lambda b: (b, 0, 0)),
        ],
        out_specs=pl.BlockSpec((None, H, Nq, Dh), lambda b: (b, 0, 0, 0)),
        compiler_params=pltpu.CompilerParams(dimension_semantics=("parallel",)),
    )(q, k, v, bias)


def _masked_pool_kernel(m_ref, f_ref, o_ref):
    # m: (P, Q), f: (P, D) -> mask^T @ feats / (mask.sum(points) + 1e-8) : (Q, D)
    m = m_ref[...]
    f = f_ref[...]
    num = lax.dot_general(m, f, (((0,), (0,)), ((), ())),
                          preferred_element_type=jnp.float32)             # (Q, D)
    den = jnp.sum(m, axis=0)[:, None] + 1e-8                              # (Q, 1)
    o_ref[...] = num * pl.reciprocal(den, approx=True)


def pallas_masked_pool(mask, feats):
    """mask: (B, P, Q), feats: (B, P, D) -> (B, Q, D)."""
    B, P, Q = mask.shape
    D = feats.shape[2]
    return pl.pallas_call(
        _masked_pool_kernel,
        out_shape=jax.ShapeDtypeStruct((B, Q, D), jnp.float32),
        grid=(B,),
        in_specs=[
            pl.BlockSpec((None, P, Q), lambda i: (i, 0, 0)),
            pl.BlockSpec((None, P, D), lambda i: (i, 0, 0)),
        ],
        out_specs=pl.BlockSpec((None, Q, D), lambda i: (i, 0, 0)),
        compiler_params=pltpu.CompilerParams(dimension_semantics=("parallel",)),
    )(mask.astype(jnp.float32), feats.astype(jnp.float32))


def _score_kernel(f_ref, y_ref, o_ref):
    # 6 * normalize(f, -1) @ normalize(y, -1)^T  : (P, Q)
    f = f_ref[...]
    y = y_ref[...]
    fn = f * lax.rsqrt(jnp.maximum(jnp.sum(f * f, axis=-1, keepdims=True), 1e-24))
    yn = y * lax.rsqrt(jnp.maximum(jnp.sum(y * y, axis=-1, keepdims=True), 1e-24))
    o_ref[...] = 6.0 * lax.dot_general(fn, yn, (((1,), (1,)), ((), ())),
                                       preferred_element_type=jnp.float32)


def pallas_scores(feats, y):
    """feats: (B, P, D), y: (B, Q, D) -> (B, P, Q)."""
    B, P, D = feats.shape
    Q = y.shape[1]
    return pl.pallas_call(
        _score_kernel,
        out_shape=jax.ShapeDtypeStruct((B, P, Q), jnp.float32),
        grid=(B,),
        in_specs=[
            pl.BlockSpec((None, P, D), lambda i: (i, 0, 0)),
            pl.BlockSpec((None, Q, D), lambda i: (i, 0, 0)),
        ],
        out_specs=pl.BlockSpec((None, P, Q), lambda i: (i, 0, 0)),
        compiler_params=pltpu.CompilerParams(dimension_semantics=("parallel",)),
    )(feats.astype(jnp.float32), y.astype(jnp.float32))


# ----------------------------------------------------------------------------
# Model pieces (glue in JAX, compute via Pallas kernels above)
# ----------------------------------------------------------------------------

BN_EVAL_SCALE = 1.0 / (1.0 + 1e-5) ** 0.5  # BatchNorm1d at init, eval mode


def layer_norm(x, p, eps=1e-5):
    mu = jnp.mean(x, axis=-1, keepdims=True)
    var = jnp.mean((x - mu) ** 2, axis=-1, keepdims=True)
    return (x - mu) / jnp.sqrt(var + eps) * p["g"] + p["b"]


def mha(q_in, k_in, v_in, key_pad_mask, p, num_heads):
    """q_in: (B, Nq, D), k_in/v_in: (B, Nk, D), key_pad_mask: (B, Nk) bool (True = pad)."""
    B, Nq, D = q_in.shape
    Nk = k_in.shape[1]
    H = num_heads
    Dh = D // H
    q, k, v = pallas_qkv(q_in, k_in, v_in, p)                       # one fused kernel
    q = q.reshape(B, Nq, H, Dh).transpose(0, 2, 1, 3)
    k = k.reshape(B, Nk, H, Dh).transpose(0, 2, 1, 3)
    v = v.reshape(B, Nk, H, Dh).transpose(0, 2, 1, 3)
    bias = jnp.where(key_pad_mask[:, None, :], -1e9, 0.0).astype(jnp.float32)   # (B, 1, Nk)
    o = pallas_attention_core(q, k, v, bias)
    o = o.transpose(0, 2, 1, 3).reshape(B, Nq, D)
    return pallas_mlp(o, [(p["o"]["w"], p["o"]["b"])], ["none"])


def pc_autoencoder(pc, p, stride=2):
    """Synthetic PCAutoEncoder: fused per-point MLP encoder + strided downsampling."""
    # TODO(synk): K=3 contraction underuses the MXU; acceptable at these shapes.
    ups_feats = pallas_mlp(
        pc, [(p["enc1"]["w"], p["enc1"]["b"]), (p["enc2"]["w"], p["enc2"]["b"])],
        ["relu", "relu"])                                            # (B, P, D)
    lat_xyz = pc[:, ::stride, :]
    lat_feats = pallas_mlp(ups_feats[:, ::stride, :], [(p["lat"]["w"], p["lat"]["b"])], ["none"])
    return {
        "lat_feats": lat_feats,
        "lat_xyz": lat_xyz,
        "ups_feats": ups_feats,
        "sa0_xyz": pc,
    }


def pos_emb(xyz, p):
    return pallas_mlp(
        xyz, [(p["p1"]["w"], p["p1"]["b"]), (p["p2"]["w"], p["p2"]["b"])], ["relu", "none"])


def upsample(x, res_dict, p):
    """Synthetic UpSample: nearest (stride-based) upsample of latent feats fused with skip."""
    ups = res_dict["ups_feats"]                       # (B, P, D)
    B, P, D = ups.shape
    L = x.shape[1]
    x_up = jnp.repeat(x, P // L, axis=1)              # (B, P, D)
    fused = jnp.concatenate([x_up, ups], axis=-1)     # (B, P, 2D)
    feats = pallas_mlp(
        fused, [(p["u1"]["w"], p["u1"]["b"]), (p["u2"]["w"], p["u2"]["b"])], ["relu", "none"])
    return None, feats, None


def parallel_attention_layer(x, x_mask, y, y_mask, x_pos, y_pos, lp, num_heads):
    # self-attention on seq1 (x)
    qx = x + x_pos
    x = layer_norm(x + mha(qx, qx, x, x_mask, lp["sa1"], num_heads), lp["ln_sa1"])
    # self-attention on seq2 (y)  (self_attention2=True)
    qy = y + y_pos
    y = layer_norm(y + mha(qy, qy, y, y_mask, lp["sa2"], num_heads), lp["ln_sa2"])
    # parallel cross-attention (both directions from the same pre-cross features)
    x_prev, y_prev = x, y
    x2 = mha(x_prev + x_pos, y_prev + y_pos, y_prev, y_mask, lp["ca_x"], num_heads)
    y2 = mha(y_prev + y_pos, x_prev + x_pos, x_prev, x_mask, lp["ca_y"], num_heads)
    x = layer_norm(x_prev + x2, lp["ln_ca_x"])
    y = layer_norm(y_prev + y2, lp["ln_ca_y"])
    # FFNs (post-norm), each a single fused 2-layer kernel
    x2 = pallas_mlp(x, [(lp["ff1a"]["w"], lp["ff1a"]["b"]), (lp["ff1b"]["w"], lp["ff1b"]["b"])],
                    ["relu", "none"])
    x = layer_norm(x + x2, lp["ln_ff1"])
    y2 = pallas_mlp(y, [(lp["ff2a"]["w"], lp["ff2a"]["b"]), (lp["ff2b"]["w"], lp["ff2b"]["b"])],
                    ["relu", "none"])
    y = layer_norm(y + y2, lp["ln_ff2"])
    return x, y


def obj_head(y, p):
    """obj head: conv1x1(no bias)-BN-ReLU-[drop]-conv1x1(no bias)-BN-ReLU-[drop]-conv1x1(->1),
    fused into one kernel (BN folded as eval-mode scalar)."""
    out = pallas_mlp(
        y,
        [(p["o1"]["w"] * BN_EVAL_SCALE, None),
         (p["o2"]["w"] * BN_EVAL_SCALE, None),
         (p["o3"]["w"], p["o3"]["b"])],
        ["relu", "relu", "none"])                                    # (B, Q, 1)
    return out[..., 0]                                               # == .squeeze(1) in NCW


# ----------------------------------------------------------------------------
# Full forward pass
# ----------------------------------------------------------------------------


def analogical_networks_forward(pc_1_list, mask_1_list, pc_2, params, *, num_layers, num_heads):
    # --- _encode_anchors_ ---
    anchor_ys, anchor_ypos = [], []
    for pc, mask in zip(pc_1_list, mask_1_list):
        res = pc_autoencoder(pc, params["btlnck"])
        D = res["ups_feats"].shape[-1]
        # Fused pooling: cluster features and cluster centroids share the mask denominator.
        pooled = pallas_masked_pool(
            mask, jnp.concatenate([res["ups_feats"], res["sa0_xyz"]], axis=-1))
        anchor_ys.append(pooled[..., :D])                            # (B, Q, D)
        anchor_ypos.append(pos_emb(pooled[..., D:], params["pos"]))  # centroids -> pos emb
    # --- _encode_target ---
    res_t = pc_autoencoder(pc_2, params["btlnck"])
    x = res_t["lat_feats"]                                           # (B, L, D)
    x_pos = pos_emb(res_t["lat_xyz"], params["pos"])
    # --- _construct_queries (num_query == 0) ---
    y = jnp.concatenate(anchor_ys, axis=1)                           # (B, A*Q, D)
    y_pos = jnp.concatenate(anchor_ypos, axis=1)
    # --- _construct_pad_masks ---
    B = x.shape[0]
    x_mask = jnp.zeros((B, x.shape[1]), dtype=bool)
    y_mask = jnp.concatenate(
        [~jnp.any(m.astype(bool), axis=1) for m in mask_1_list], axis=1)
    # --- _decode ---
    scores, objectness, sem_logits = [], [], []
    for k in range(num_layers):
        lp = params["layers"][k]
        x, y = parallel_attention_layer(x, x_mask, y, y_mask, x_pos, y_pos, lp, num_heads)
        _, feats, _ = upsample(x, res_t, lp["up"])                   # (B, P, D)
        y_score = y                                                  # mem_decodes=True
        scores.append(pallas_scores(feats, y_score))                 # (B, P, A*Q)
        objectness.append(obj_head(y_score, lp["obj"]))              # (B, A*Q)
        # predict_classes=False -> no sem_cls head
    return scores, objectness, sem_logits


# ----------------------------------------------------------------------------
# Deterministic parameter init
# ----------------------------------------------------------------------------


def init_params(key, D=32, num_layers=2, enc_hidden=64):
    keys = iter(jax.random.split(key, 1024))

    def lin(kin, kout, bias=True):
        s = 1.0 / float(kin) ** 0.5
        w = jax.random.uniform(next(keys), (kin, kout), jnp.float32, -s, s)
        b = jax.random.uniform(next(keys), (kout,), jnp.float32, -s, s) if bias else None
        return {"w": w, "b": b}

    def ln():
        return {"g": jnp.ones((D,), jnp.float32), "b": jnp.zeros((D,), jnp.float32)}

    def mha_p():
        return {"q": lin(D, D), "k": lin(D, D), "v": lin(D, D), "o": lin(D, D)}

    params = {
        "btlnck": {"enc1": lin(3, enc_hidden), "enc2": lin(enc_hidden, D), "lat": lin(D, D)},
        "pos": {"p1": lin(3, D), "p2": lin(D, D)},
        "layers": [],
    }
    for _ in range(num_layers):
        params["layers"].append({
            "sa1": mha_p(), "sa2": mha_p(), "ca_x": mha_p(), "ca_y": mha_p(),
            "ln_sa1": ln(), "ln_sa2": ln(), "ln_ca_x": ln(), "ln_ca_y": ln(),
            "ff1a": lin(D, 4 * D), "ff1b": lin(4 * D, D),
            "ff2a": lin(D, 4 * D), "ff2b": lin(4 * D, D),
            "ln_ff1": ln(), "ln_ff2": ln(),
            "up": {"u1": lin(2 * D, D), "u2": lin(D, D)},
            "obj": {"o1": lin(D, D, bias=False), "o2": lin(D, D, bias=False), "o3": lin(D, 1)},
        })
    return params


# ----------------------------------------------------------------------------
# Main
# ----------------------------------------------------------------------------

if __name__ == "__main__":
    B, P, Q = 2, 16, 4          # batch, points per cloud, clusters per anchor
    D, H = 32, 4                # feature dim, attention heads
    NUM_LAYERS = 2
    NUM_ANCHORS = 1

    root = jax.random.PRNGKey(0)
    k_param, k_pc1, k_pc2, k_cls = jax.random.split(root, 4)

    params = init_params(k_param, D=D, num_layers=NUM_LAYERS)

    pc_1 = [jax.random.normal(k_pc1, (B, P, 3), jnp.float32)]
    pc_2 = jax.random.normal(k_pc2, (B, P, 3), jnp.float32)
    cluster_ids = jax.random.randint(k_cls, (B, P), 0, Q)
    mask_1 = [jax.nn.one_hot(cluster_ids, Q, dtype=jnp.float32)]   # (B, P, Q)

    fwd = jax.jit(functools.partial(
        analogical_networks_forward, num_layers=NUM_LAYERS, num_heads=H))

    scores, objectness, sem_logits = fwd(pc_1, mask_1, pc_2, params)
    jax.block_until_ready((scores, objectness))

    assert len(scores) == NUM_LAYERS and len(objectness) == NUM_LAYERS
    assert scores[0].shape == (B, P, NUM_ANCHORS * Q)
    assert objectness[0].shape == (B, NUM_ANCHORS * Q)
    assert all(bool(jnp.all(jnp.isfinite(s))) for s in scores)
    assert all(bool(jnp.all(jnp.isfinite(o))) for o in objectness)
    print("KERNEL_OK")
</pallas_src>

<mosaic_0001>
module attributes {stable_mosaic.version = 11 : i64} {
  func.func @_mlp_kernel(%arg0: memref<32x3xf32, #tpu.memory_space<vmem>>, %arg1: memref<3x64xf32, #tpu.memory_space<vmem>>, %arg2: memref<1x64xf32, #tpu.memory_space<vmem>>, %arg3: memref<64x32xf32, #tpu.memory_space<vmem>>, %arg4: memref<1x32xf32, #tpu.memory_space<vmem>>, %arg5: memref<32x32xf32, #tpu.memory_space<vmem>>) attributes {dimension_semantics = [], scalar_prefetch = 0 : i64, scratch_operands = 0 : i64, tpu.core_type = #tpu.core_type<tc>} {
    %c0 = arith.constant 0 : index
    %c0_0 = arith.constant 0 : index
    %0 = vector.load %arg0[%c0, %c0_0] : memref<32x3xf32, #tpu.memory_space<vmem>>, vector<32x3xf32>
    %c0_1 = arith.constant 0 : index
    %c0_2 = arith.constant 0 : index
    %1 = vector.load %arg1[%c0_1, %c0_2] : memref<3x64xf32, #tpu.memory_space<vmem>>, vector<3x64xf32>
    %c0_3 = arith.constant 0 : index
    %c0_4 = arith.constant 0 : index
    %2 = vector.load %arg2[%c0_3, %c0_4] : memref<1x64xf32, #tpu.memory_space<vmem>>, vector<1x64xf32>
    %cst = arith.constant dense<0.000000e+00> : vector<32x64xf32>
    %3 = tpu.matmul %0, %1, %cst {dimension_numbers = #tpu.dot_dimension_numbers<[1], [0], [0], [1], [0, 0, 1, 1], [], []>} : vector<32x3xf32>, vector<3x64xf32>, vector<32x64xf32> -> vector<32x64xf32>
    %4 = vector.broadcast %2 : vector<1x64xf32> to vector<32x64xf32>
    %5 = arith.addf %3, %4 : vector<32x64xf32>
    %cst_5 = arith.constant 0.000000e+00 : f32
    %6 = vector.broadcast %cst_5 : f32 to vector<32x64xf32>
    %7 = arith.maximumf %5, %6 : vector<32x64xf32>
    %c0_6 = arith.constant 0 : index
    %c0_7 = arith.constant 0 : index
    %8 = vector.load %arg3[%c0_6, %c0_7] : memref<64x32xf32, #tpu.memory_space<vmem>>, vector<64x32xf32>
    %c0_8 = arith.constant 0 : index
    %c0_9 = arith.constant 0 : index
    %9 = vector.load %arg4[%c0_8, %c0_9] : memref<1x32xf32, #tpu.memory_space<vmem>>, vector<1x32xf32>
    %cst_10 = arith.constant dense<0.000000e+00> : vector<32x32xf32>
    %10 = tpu.matmul %7, %8, %cst_10 {dimension_numbers = #tpu.dot_dimension_numbers<[1], [0], [0], [1], [0, 0, 1, 1], [], []>} : vector<32x64xf32>, vector<64x32xf32>, vector<32x32xf32> -> vector<32x32xf32>
    %11 = vector.broadcast %9 : vector<1x32xf32> to vector<32x32xf32>
    %12 = arith.addf %10, %11 : vector<32x32xf32>
    %cst_11 = arith.constant 0.000000e+00 : f32
    %13 = vector.broadcast %cst_11 : f32 to vector<32x32xf32>
    %14 = arith.maximumf %12, %13 : vector<32x32xf32>
    %c0_12 = arith.constant 0 : index
    %c0_13 = arith.constant 0 : index
    %15 = vector.load %arg5[%c0_12, %c0_13] : memref<32x32xf32, #tpu.memory_space<vmem>>, vector<32x32xf32>
    tpu.vector_store %arg5[%c0_12, %c0_13], %14 {strides = array<i32>} : memref<32x32xf32, #tpu.memory_space<vmem>>, vector<32x32xf32>,
    return
  }
}

module attributes {stable_mosaic.version = 11 : i64} {
  func.func @_mlp_kernel(%arg0: memref<8x3xf32, #tpu.memory_space<vmem>>, %arg1: memref<3x32xf32, #tpu.memory_space<vmem>>, %arg2: memref<1x32xf32, #tpu.memory_space<vmem>>, %arg3: memref<32x32xf32, #tpu.memory_space<vmem>>, %arg4: memref<1x32xf32, #tpu.memory_space<vmem>>, %arg5: memref<8x32xf32, #tpu.memory_space<vmem>>) attributes {dimension_semantics = [], scalar_prefetch = 0 : i64, scratch_operands = 0 : i64, tpu.core_type = #tpu.core_type<tc>} {
    %c0 = arith.constant 0 : index
    %c0_0 = arith.constant 0 : index
    %0 = vector.load %arg0[%c0, %c0_0] : memref<8x3xf32, #tpu.memory_space<vmem>>, vector<8x3xf32>
    %c0_1 = arith.constant 0 : index
    %c0_2 = arith.constant 0 : index
    %1 = vector.load %arg1[%c0_1, %c0_2] : memref<3x32xf32, #tpu.memory_space<vmem>>, vector<3x32xf32>
    %c0_3 = arith.constant 0 : index
    %c0_4 = arith.constant 0 : index
    %2 = vector.load %arg2[%c0_3, %c0_4] : memref<1x32xf32, #tpu.memory_space<vmem>>, vector<1x32xf32>
    %cst = arith.constant dense<0.000000e+00> : vector<8x32xf32>
    %3 = tpu.matmul %0, %1, %cst {dimension_numbers = #tpu.dot_dimension_numbers<[1], [0], [0], [1], [0, 0, 1, 1], [], []>} : vector<8x3xf32>, vector<3x32xf32>, vector<8x32xf32> -> vector<8x32xf32>
    %4 = vector.broadcast %2 : vector<1x32xf32> to vector<8x32xf32>
    %5 = arith.addf %3, %4 : vector<8x32xf32>
    %cst_5 = arith.constant 0.000000e+00 : f32
    %6 = vector.broadcast %cst_5 : f32 to vector<8x32xf32>
    %7 = arith.maximumf %5, %6 : vector<8x32xf32>
    %c0_6 = arith.constant 0 : index
    %c0_7 = arith.constant 0 : index
    %8 = vector.load %arg3[%c0_6, %c0_7] : memref<32x32xf32, #tpu.memory_space<vmem>>, vector<32x32xf32>
    %c0_8 = arith.constant 0 : index
    %c0_9 = arith.constant 0 : index
    %9 = vector.load %arg4[%c0_8, %c0_9] : memref<1x32xf32, #tpu.memory_space<vmem>>, vector<1x32xf32>
    %cst_10 = arith.constant dense<0.000000e+00> : vector<8x32xf32>
    %10 = tpu.matmul %7, %8, %cst_10 {dimension_numbers = #tpu.dot_dimension_numbers<[1], [0], [0], [1], [0, 0, 1, 1], [], []>} : vector<8x32xf32>, vector<32x32xf32>, vector<8x32xf32> -> vector<8x32xf32>
    %11 = vector.broadcast %9 : vector<1x32xf32> to vector<8x32xf32>
    %12 = arith.addf %10, %11 : vector<8x32xf32>
    %c0_11 = arith.constant 0 : index
    %c0_12 = arith.constant 0 : index
    %13 = vector.load %arg5[%c0_11, %c0_12] : memref<8x32xf32, #tpu.memory_space<vmem>>, vector<8x32xf32>
    tpu.vector_store %arg5[%c0_11, %c0_12], %12 {strides = array<i32>} : memref<8x32xf32, #tpu.memory_space<vmem>>, vector<8x32xf32>,
    return
  }
}

module attributes {stable_mosaic.version = 11 : i64} {
  func.func @_masked_pool_kernel(%arg0: i32, %arg1: memref<1x16x4xf32, #tpu.memory_space<vmem>>, %arg2: memref<1x16x35xf32, #tpu.memory_space<vmem>>, %arg3: memref<1x4x35xf32, #tpu.memory_space<vmem>>) attributes {dimension_semantics = [#tpu.dimension_semantics<parallel>], iteration_bounds = array<i64: 2>, scalar_prefetch = 0 : i64, scratch_operands = 0 : i64, tpu.core_type = #tpu.core_type<tc>, window_params = [{transform_indices = @transform_0, window_bounds = array<i64: 1, 16, 4>}, {transform_indices = @transform_1, window_bounds = array<i64: 1, 16, 35>}, {transform_indices = @transform_2, window_bounds = array<i64: 1, 4, 35>}]} {
    %c0 = arith.constant 0 : index
    %c0_0 = arith.constant 0 : index
    %c0_1 = arith.constant 0 : index
    %0 = vector.load %arg1[%c0, %c0_0, %c0_1] : memref<1x16x4xf32, #tpu.memory_space<vmem>>, vector<1x16x4xf32>
    %1 = vector.shape_cast %0 : vector<1x16x4xf32> to vector<16x4xf32>
    %c0_2 = arith.constant 0 : index
    %c0_3 = arith.constant 0 : index
    %c0_4 = arith.constant 0 : index
    %2 = vector.load %arg2[%c0_2, %c0_3, %c0_4] : memref<1x16x35xf32, #tpu.memory_space<vmem>>, vector<1x16x35xf32>
    %3 = vector.shape_cast %2 : vector<1x16x35xf32> to vector<16x35xf32>
    %cst = arith.constant dense<0.000000e+00> : vector<4x35xf32>
    %4 = tpu.matmul %1, %3, %cst {dimension_numbers = #tpu.dot_dimension_numbers<[0], [0], [1], [1], [0, 1, 1, 1], [], []>} : vector<16x4xf32>, vector<16x35xf32>, vector<4x35xf32> -> vector<4x35xf32>
    %cst_5 = arith.constant dense<0.000000e+00> : vector<4xf32>
    %5 = vector.multi_reduction <add>, %1, %cst_5 [0] : vector<16x4xf32> to vector<4xf32>
    %6 = vector.shape_cast %5 : vector<4xf32> to vector<4x1xf32>
    %cst_6 = arith.constant 9.99999993E-9 : f32
    %7 = vector.broadcast %cst_6 : f32 to vector<4x1xf32>
    %8 = arith.addf %6, %7 : vector<4x1xf32>
    %9 = tpu.reciprocal %8 {approx = true} : vector<4x1xf32> -> vector<4x1xf32>
    %10 = vector.broadcast %9 : vector<4x1xf32> to vector<4x35xf32>
    %11 = arith.mulf %4, %10 : vector<4x35xf32>
    %c0_7 = arith.constant 0 : index
    %c0_8 = arith.constant 0 : index
    %c0_9 = arith.constant 0 : index
    %12 = vector.load %arg3[%c0_7, %c0_8, %c0_9] : memref<1x4x35xf32, #tpu.memory_space<vmem>>, vector<1x4x35xf32>
    %13 = vector.shape_cast %12 : vector<1x4x35xf32> to vector<4x35xf32>
    %14 = vector.shape_cast %11 : vector<4x35xf32> to vector<1x4x35xf32>
    tpu.vector_store %arg3[%c0_7, %c0_8, %c0_9], %14 {strides = array<i32>} : memref<1x4x35xf32, #tpu.memory_space<vmem>>, vector<1x4x35xf32>,
    return
  }
  func.func @transform_0(%arg0: i32) -> (i32, i32, i32) {
    %c0_i32 = arith.constant 0 : i32
    %c0_i32_0 = arith.constant 0 : i32
    %c0_i32_1 = arith.constant 0 : i32
    return %arg0, %c0_i32, %c0_i32_0 : i32, i32, i32
  }
  func.func @transform_1(%arg0: i32) -> (i32, i32, i32) {
    %c0_i32 = arith.constant 0 : i32
    %c0_i32_0 = arith.constant 0 : i32
    %c0_i32_1 = arith.constant 0 : i32
    return %arg0, %c0_i32, %c0_i32_0 : i32, i32, i32
  }
  func.func @transform_2(%arg0: i32) -> (i32, i32, i32) {
    %c0_i32 = arith.constant 0 : i32
    %c0_i32_0 = arith.constant 0 : i32
    %c0_i32_1 = arith.constant 0 : i32
    return %arg0, %c0_i32, %c0_i32_0 : i32, i32, i32
  }
}

module attributes {stable_mosaic.version = 11 : i64} {
  func.func @_qkv_kernel(%arg0: memref<8x32xf32, #tpu.memory_space<vmem>>, %arg1: memref<8x32xf32, #tpu.memory_space<vmem>>, %arg2: memref<8x32xf32, #tpu.memory_space<vmem>>, %arg3: memref<32x32xf32, #tpu.memory_space<vmem>>, %arg4: memref<1x32xf32, #tpu.memory_space<vmem>>, %arg5: memref<32x32xf32, #tpu.memory_space<vmem>>, %arg6: memref<1x32xf32, #tpu.memory_space<vmem>>, %arg7: memref<32x32xf32, #tpu.memory_space<vmem>>, %arg8: memref<1x32xf32, #tpu.memory_space<vmem>>, %arg9: memref<8x32xf32, #tpu.memory_space<vmem>>, %arg10: memref<8x32xf32, #tpu.memory_space<vmem>>, %arg11: memref<8x32xf32, #tpu.memory_space<vmem>>) attributes {dimension_semantics = [], scalar_prefetch = 0 : i64, scratch_operands = 0 : i64, tpu.core_type = #tpu.core_type<tc>} {
    %c0 = arith.constant 0 : index
    %c0_0 = arith.constant 0 : index
    %0 = vector.load %arg0[%c0, %c0_0] : memref<8x32xf32, #tpu.memory_space<vmem>>, vector<8x32xf32>
    %c0_1 = arith.constant 0 : index
    %c0_2 = arith.constant 0 : index
    %1 = vector.load %arg3[%c0_1, %c0_2] : memref<32x32xf32, #tpu.memory_space<vmem>>, vector<32x32xf32>
    %cst = arith.constant dense<0.000000e+00> : vector<8x32xf32>
    %2 = tpu.matmul %0, %1, %cst {dimension_numbers = #tpu.dot_dimension_numbers<[1], [0], [0], [1], [0, 0, 1, 1], [], []>} : vector<8x32xf32>, vector<32x32xf32>, vector<8x32xf32> -> vector<8x32xf32>
    %c0_3 = arith.constant 0 : index
    %c0_4 = arith.constant 0 : index
    %3 = vector.load %arg4[%c0_3, %c0_4] : memref<1x32xf32, #tpu.memory_space<vmem>>, vector<1x32xf32>
    %4 = vector.broadcast %3 : vector<1x32xf32> to vector<8x32xf32>
    %5 = arith.addf %2, %4 : vector<8x32xf32>
    %c0_5 = arith.constant 0 : index
    %c0_6 = arith.constant 0 : index
    %6 = vector.load %arg9[%c0_5, %c0_6] : memref<8x32xf32, #tpu.memory_space<vmem>>, vector<8x32xf32>
    tpu.vector_store %arg9[%c0_5, %c0_6], %5 {strides = array<i32>} : memref<8x32xf32, #tpu.memory_space<vmem>>, vector<8x32xf32>,
    %c0_7 = arith.constant 0 : index
    %c0_8 = arith.constant 0 : index
    %7 = vector.load %arg1[%c0_7, %c0_8] : memref<8x32xf32, #tpu.memory_space<vmem>>, vector<8x32xf32>
    %c0_9 = arith.constant 0 : index
    %c0_10 = arith.constant 0 : index
    %8 = vector.load %arg5[%c0_9, %c0_10] : memref<32x32xf32, #tpu.memory_space<vmem>>, vector<32x32xf32>
    %cst_11 = arith.constant dense<0.000000e+00> : vector<8x32xf32>
    %9 = tpu.matmul %7, %8, %cst_11 {dimension_numbers = #tpu.dot_dimension_numbers<[1], [0], [0], [1], [0, 0, 1, 1], [], []>} : vector<8x32xf32>, vector<32x32xf32>, vector<8x32xf32> -> vector<8x32xf32>
    %c0_12 = arith.constant 0 : index
    %c0_13 = arith.constant 0 : index
    %10 = vector.load %arg6[%c0_12, %c0_13] : memref<1x32xf32, #tpu.memory_space<vmem>>, vector<1x32xf32>
    %11 = vector.broadcast %10 : vector<1x32xf32> to vector<8x32xf32>
    %12 = arith.addf %9, %11 : vector<8x32xf32>
    %c0_14 = arith.constant 0 : index
    %c0_15 = arith.constant 0 : index
    %13 = vector.load %arg10[%c0_14, %c0_15] : memref<8x32xf32, #tpu.memory_space<vmem>>, vector<8x32xf32>
    tpu.vector_store %arg10[%c0_14, %c0_15], %12 {strides = array<i32>} : memref<8x32xf32, #tpu.memory_space<vmem>>, vector<8x32xf32>,
    %c0_16 = arith.constant 0 : index
    %c0_17 = arith.constant 0 : index
    %14 = vector.load %arg2[%c0_16, %c0_17] : memref<8x32xf32, #tpu.memory_space<vmem>>, vector<8x32xf32>
    %c0_18 = arith.constant 0 : index
    %c0_19 = arith.constant 0 : index
    %15 = vector.load %arg7[%c0_18, %c0_19] : memref<32x32xf32, #tpu.memory_space<vmem>>, vector<32x32xf32>
    %cst_20 = arith.constant dense<0.000000e+00> : vector<8x32xf32>
    %16 = tpu.matmul %14, %15, %cst_20 {dimension_numbers = #tpu.dot_dimension_numbers<[1], [0], [0], [1], [0, 0, 1, 1], [], []>} : vector<8x32xf32>, vector<32x32xf32>, vector<8x32xf32> -> vector<8x32xf32>
    %c0_21 = arith.constant 0 : index
    %c0_22 = arith.constant 0 : index
    %17 = vector.load %arg8[%c0_21, %c0_22] : memref<1x32xf32, #tpu.memory_space<vmem>>, vector<1x32xf32>
    %18 = vector.broadcast %17 : vector<1x32xf32> to vector<8x32xf32>
    %19 = arith.addf %16, %18 : vector<8x32xf32>
    %c0_23 = arith.constant 0 : index
    %c0_24 = arith.constant 0 : index
    %20 = vector.load %arg11[%c0_23, %c0_24] : memref<8x32xf32, #tpu.memory_space<vmem>>, vector<8x32xf32>
    tpu.vector_store %arg11[%c0_23, %c0_24], %19 {strides = array<i32>} : memref<8x32xf32, #tpu.memory_space<vmem>>, vector<8x32xf32>,
    return
  }
}

module attributes {stable_mosaic.version = 11 : i64} {
  func.func @_attn_kernel(%arg0: i32, %arg1: memref<1x4x4x8xf32, #tpu.memory_space<vmem>>, %arg2: memref<1x4x4x8xf32, #tpu.memory_space<vmem>>, %arg3: memref<1x4x4x8xf32, #tpu.memory_space<vmem>>, %arg4: memref<1x1x4xf32, #tpu.memory_space<vmem>>, %arg5: memref<1x4x4x8xf32, #tpu.memory_space<vmem>>) attributes {dimension_semantics = [#tpu.dimension_semantics<parallel>], iteration_bounds = array<i64: 2>, scalar_prefetch = 0 : i64, scratch_operands = 0 : i64, tpu.core_type = #tpu.core_type<tc>, window_params = [{transform_indices = @transform_0, window_bounds = array<i64: 1, 4, 4, 8>}, {transform_indices = @transform_1, window_bounds = array<i64: 1, 4, 4, 8>}, {transform_indices = @transform_2, window_bounds = array<i64: 1, 4, 4, 8>}, {transform_indices = @transform_3, window_bounds = array<i64: 1, 1, 4>}, {transform_indices = @transform_4, window_bounds = array<i64: 1, 4, 4, 8>}]} {
    %c0 = arith.constant 0 : index
    %c0_0 = arith.constant 0 : index
    %c0_1 = arith.constant 0 : index
    %c0_2 = arith.constant 0 : index
    %0 = vector.load %arg1[%c0, %c0_0, %c0_1, %c0_2] : memref<1x4x4x8xf32, #tpu.memory_space<vmem>>, vector<1x4x4x8xf32>
    %1 = vector.shape_cast %0 : vector<1x4x4x8xf32> to vector<4x4x8xf32>
    %c0_3 = arith.constant 0 : index
    %c0_4 = arith.constant 0 : index
    %c0_5 = arith.constant 0 : index
    %c0_6 = arith.constant 0 : index
    %2 = vector.load %arg2[%c0_3, %c0_4, %c0_5, %c0_6] : memref<1x4x4x8xf32, #tpu.memory_space<vmem>>, vector<1x4x4x8xf32>
    %3 = vector.shape_cast %2 : vector<1x4x4x8xf32> to vector<4x4x8xf32>
    %c0_7 = arith.constant 0 : index
    %c0_8 = arith.constant 0 : index
    %c0_9 = arith.constant 0 : index
    %c0_10 = arith.constant 0 : index
    %4 = vector.load %arg3[%c0_7, %c0_8, %c0_9, %c0_10] : memref<1x4x4x8xf32, #tpu.memory_space<vmem>>, vector<1x4x4x8xf32>
    %5 = vector.shape_cast %4 : vector<1x4x4x8xf32> to vector<4x4x8xf32>
    %c0_11 = arith.constant 0 : index
    %c0_12 = arith.constant 0 : index
    %c0_13 = arith.constant 0 : index
    %6 = vector.load %arg4[%c0_11, %c0_12, %c0_13] : memref<1x1x4xf32, #tpu.memory_space<vmem>>, vector<1x1x4xf32>
    %7 = vector.shape_cast %6 : vector<1x1x4xf32> to vector<1x4xf32>
    %cst = arith.constant dense<0.000000e+00> : vector<4x4x4xf32>
    %8 = tpu.matmul %1, %3, %cst {dimension_numbers = #tpu.dot_dimension_numbers<[2], [2], [1], [1], [0, 0, 0, 1, 1, 1], [0], [0]>} : vector<4x4x8xf32>, vector<4x4x8xf32>, vector<4x4x4xf32> -> vector<4x4x4xf32>
    %cst_14 = arith.constant 0.353553385 : f32
    %9 = vector.broadcast %cst_14 : f32 to vector<4x4x4xf32>
    %10 = arith.mulf %8, %9 : vector<4x4x4xf32>
    %11 = vector.shape_cast %7 : vector<1x4xf32> to vector<1x1x4xf32>
    %12 = vector.broadcast %11 : vector<1x1x4xf32> to vector<4x4x4xf32>
    %13 = arith.addf %10, %12 : vector<4x4x4xf32>
    %cst_15 = arith.constant dense<0xFF800000> : vector<4x4xf32>
    %14 = vector.multi_reduction <maximumf>, %13, %cst_15 [2] : vector<4x4x4xf32> to vector<4x4xf32>
    %15 = vector.shape_cast %14 : vector<4x4xf32> to vector<4x4x1xf32>
    %16 = vector.broadcast %15 : vector<4x4x1xf32> to vector<4x4x4xf32>
    %17 = arith.subf %13, %16 : vector<4x4x4xf32>
    %18 = math.exp %17 : vector<4x4x4xf32>
    %cst_16 = arith.constant dense<0.000000e+00> : vector<4x4xf32>
    %19 = vector.multi_reduction <add>, %18, %cst_16 [2] : vector<4x4x4xf32> to vector<4x4xf32>
    %20 = vector.shape_cast %19 : vector<4x4xf32> to vector<4x4x1xf32>
    %21 = tpu.reciprocal %20 {approx = true} : vector<4x4x1xf32> -> vector<4x4x1xf32>
    %22 = vector.broadcast %21 : vector<4x4x1xf32> to vector<4x4x4xf32>
    %23 = arith.mulf %18, %22 : vector<4x4x4xf32>
    %cst_17 = arith.constant dense<0.000000e+00> : vector<4x4x8xf32>
    %24 = tpu.matmul %23, %5, %cst_17 {dimension_numbers = #tpu.dot_dimension_numbers<[2], [1], [1], [2], [0, 0, 0, 1, 1, 2], [0], [0]>} : vector<4x4x4xf32>, vector<4x4x8xf32>, vector<4x4x8xf32> -> vector<4x4x8xf32>
    %c0_18 = arith.constant 0 : index
    %c0_19 = arith.constant 0 : index
    %c0_20 = arith.constant 0 : index
    %c0_21 = arith.constant 0 : index
    %25 = vector.load %arg5[%c0_18, %c0_19, %c0_20, %c0_21] : memref<1x4x4x8xf32, #tpu.memory_space<vmem>>, vector<1x4x4x8xf32>
    %26 = vector.shape_cast %25 : vector<1x4x4x8xf32> to vector<4x4x8xf32>
    %27 = vector.shape_cast %24 : vector<4x4x8xf32> to vector<1x4x4x8xf32>
    tpu.vector_store %arg5[%c0_18, %c0_19, %c0_20, %c0_21], %27 {strides = array<i32>} : memref<1x4x4x8xf32, #tpu.memory_space<vmem>>, vector<1x4x4x8xf32>,
    return
  }
  func.func @transform_0(%arg0: i32) -> (i32, i32, i32, i32) {
    %c0_i32 = arith.constant 0 : i32
    %c0_i32_0 = arith.constant 0 : i32
    %c0_i32_1 = arith.constant 0 : i32
    %c0_i32_2 = arith.constant 0 : i32
    return %arg0, %c0_i32, %c0_i32_0, %c0_i32_1 : i32, i32, i32, i32
  }
  func.func @transform_1(%arg0: i32) -> (i32, i32, i32, i32) {
    %c0_i32 = arith.constant 0 : i32
    %c0_i32_0 = arith.constant 0 : i32
    %c0_i32_1 = arith.constant 0 : i32
    %c0_i32_2 = arith.constant 0 : i32
    return %arg0, %c0_i32, %c0_i32_0, %c0_i32_1 : i32, i32, i32, i32
  }
  func.func @transform_2(%arg0: i32) -> (i32, i32, i32, i32) {
    %c0_i32 = arith.constant 0 : i32
    %c0_i32_0 = arith.constant 0 : i32
    %c0_i32_1 = arith.constant 0 : i32
    %c0_i32_2 = arith.constant 0 : i32
    return %arg0, %c0_i32, %c0_i32_0, %c0_i32_1 : i32, i32, i32, i32
  }
  func.func @transform_3(%arg0: i32) -> (i32, i32, i32) {
    %c0_i32 = arith.constant 0 : i32
    %c0_i32_0 = arith.constant 0 : i32
    %c0_i32_1 = arith.constant 0 : i32
    return %arg0, %c0_i32, %c0_i32_0 : i32, i32, i32
  }
  func.func @transform_4(%arg0: i32) -> (i32, i32, i32, i32) {
    %c0_i32 = arith.constant 0 : i32
    %c0_i32_0 = arith.constant 0 : i32
    %c0_i32_1 = arith.constant 0 : i32
    %c0_i32_2 = arith.constant 0 : i32
    return %arg0, %c0_i32, %c0_i32_0, %c0_i32_1 : i32, i32, i32, i32
  }
}

module attributes {stable_mosaic.version = 11 : i64} {
  func.func @_mlp_kernel(%arg0: memref<8x32xf32, #tpu.memory_space<vmem>>, %arg1: memref<32x32xf32, #tpu.memory_space<vmem>>, %arg2: memref<1x32xf32, #tpu.memory_space<vmem>>, %arg3: memref<8x32xf32, #tpu.memory_space<vmem>>) attributes {dimension_semantics = [], scalar_prefetch = 0 : i64, scratch_operands = 0 : i64, tpu.core_type = #tpu.core_type<tc>} {
    %c0 = arith.constant 0 : index
    %c0_0 = arith.constant 0 : index
    %0 = vector.load %arg0[%c0, %c0_0] : memref<8x32xf32, #tpu.memory_space<vmem>>, vector<8x32xf32>
    %c0_1 = arith.constant 0 : index
    %c0_2 = arith.constant 0 : index
    %1 = vector.load %arg1[%c0_1, %c0_2] : memref<32x32xf32, #tpu.memory_space<vmem>>, vector<32x32xf32>
    %c0_3 = arith.constant 0 : index
    %c0_4 = arith.constant 0 : index
    %2 = vector.load %arg2[%c0_3, %c0_4] : memref<1x32xf32, #tpu.memory_space<vmem>>, vector<1x32xf32>
    %cst = arith.constant dense<0.000000e+00> : vector<8x32xf32>
    %3 = tpu.matmul %0, %1, %cst {dimension_numbers = #tpu.dot_dimension_numbers<[1], [0], [0], [1], [0, 0, 1, 1], [], []>} : vector<8x32xf32>, vector<32x32xf32>, vector<8x32xf32> -> vector<8x32xf32>
    %4 = vector.broadcast %2 : vector<1x32xf32> to vector<8x32xf32>
    %5 = arith.addf %3, %4 : vector<8x32xf32>
    %c0_5 = arith.constant 0 : index
    %c0_6 = arith.constant 0 : index
    %6 = vector.load %arg3[%c0_5, %c0_6] : memref<8x32xf32, #tpu.memory_space<vmem>>, vector<8x32xf32>
    tpu.vector_store %arg3[%c0_5, %c0_6], %5 {strides = array<i32>} : memref<8x32xf32, #tpu.memory_space<vmem>>, vector<8x32xf32>,
    return
  }
}

module attributes {stable_mosaic.version = 11 : i64} {
  func.func @_mlp_kernel(%arg0: memref<16x32xf32, #tpu.memory_space<vmem>>, %arg1: memref<32x32xf32, #tpu.memory_space<vmem>>, %arg2: memref<1x32xf32, #tpu.memory_space<vmem>>, %arg3: memref<16x32xf32, #tpu.memory_space<vmem>>) attributes {dimension_semantics = [], scalar_prefetch = 0 : i64, scratch_operands = 0 : i64, tpu.core_type = #tpu.core_type<tc>} {
    %c0 = arith.constant 0 : index
    %c0_0 = arith.constant 0 : index
    %0 = vector.load %arg0[%c0, %c0_0] : memref<16x32xf32, #tpu.memory_space<vmem>>, vector<16x32xf32>
    %c0_1 = arith.constant 0 : index
    %c0_2 = arith.constant 0 : index
    %1 = vector.load %arg1[%c0_1, %c0_2] : memref<32x32xf32, #tpu.memory_space<vmem>>, vector<32x32xf32>
    %c0_3 = arith.constant 0 : index
    %c0_4 = arith.constant 0 : index
    %2 = vector.load %arg2[%c0_3, %c0_4] : memref<1x32xf32, #tpu.memory_space<vmem>>, vector<1x32xf32>
    %cst = arith.constant dense<0.000000e+00> : vector<16x32xf32>
    %3 = tpu.matmul %0, %1, %cst {dimension_numbers = #tpu.dot_dimension_numbers<[1], [0], [0], [1], [0, 0, 1, 1], [], []>} : vector<16x32xf32>, vector<32x32xf32>, vector<16x32xf32> -> vector<16x32xf32>
    %4 = vector.broadcast %2 : vector<1x32xf32> to vector<16x32xf32>
    %5 = arith.addf %3, %4 : vector<16x32xf32>
    %c0_5 = arith.constant 0 : index
    %c0_6 = arith.constant 0 : index
    %6 = vector.load %arg3[%c0_5, %c0_6] : memref<16x32xf32, #tpu.memory_space<vmem>>, vector<16x32xf32>
    tpu.vector_store %arg3[%c0_5, %c0_6], %5 {strides = array<i32>} : memref<16x32xf32, #tpu.memory_space<vmem>>, vector<16x32xf32>,
    return
  }
}

module attributes {stable_mosaic.version = 11 : i64} {
  func.func @_qkv_kernel(%arg0: memref<16x32xf32, #tpu.memory_space<vmem>>, %arg1: memref<16x32xf32, #tpu.memory_space<vmem>>, %arg2: memref<16x32xf32, #tpu.memory_space<vmem>>, %arg3: memref<32x32xf32, #tpu.memory_space<vmem>>, %arg4: memref<1x32xf32, #tpu.memory_space<vmem>>, %arg5: memref<32x32xf32, #tpu.memory_space<vmem>>, %arg6: memref<1x32xf32, #tpu.memory_space<vmem>>, %arg7: memref<32x32xf32, #tpu.memory_space<vmem>>, %arg8: memref<1x32xf32, #tpu.memory_space<vmem>>, %arg9: memref<16x32xf32, #tpu.memory_space<vmem>>, %arg10: memref<16x32xf32, #tpu.memory_space<vmem>>, %arg11: memref<16x32xf32, #tpu.memory_space<vmem>>) attributes {dimension_semantics = [], scalar_prefetch = 0 : i64, scratch_operands = 0 : i64, tpu.core_type = #tpu.core_type<tc>} {
    %c0 = arith.constant 0 : index
    %c0_0 = arith.constant 0 : index
    %0 = vector.load %arg0[%c0, %c0_0] : memref<16x32xf32, #tpu.memory_space<vmem>>, vector<16x32xf32>
    %c0_1 = arith.constant 0 : index
    %c0_2 = arith.constant 0 : index
    %1 = vector.load %arg3[%c0_1, %c0_2] : memref<32x32xf32, #tpu.memory_space<vmem>>, vector<32x32xf32>
    %cst = arith.constant dense<0.000000e+00> : vector<16x32xf32>
    %2 = tpu.matmul %0, %1, %cst {dimension_numbers = #tpu.dot_dimension_numbers<[1], [0], [0], [1], [0, 0, 1, 1], [], []>} : vector<16x32xf32>, vector<32x32xf32>, vector<16x32xf32> -> vector<16x32xf32>
    %c0_3 = arith.constant 0 : index
    %c0_4 = arith.constant 0 : index
    %3 = vector.load %arg4[%c0_3, %c0_4] : memref<1x32xf32, #tpu.memory_space<vmem>>, vector<1x32xf32>
    %4 = vector.broadcast %3 : vector<1x32xf32> to vector<16x32xf32>
    %5 = arith.addf %2, %4 : vector<16x32xf32>
    %c0_5 = arith.constant 0 : index
    %c0_6 = arith.constant 0 : index
    %6 = vector.load %arg9[%c0_5, %c0_6] : memref<16x32xf32, #tpu.memory_space<vmem>>, vector<16x32xf32>
    tpu.vector_store %arg9[%c0_5, %c0_6], %5 {strides = array<i32>} : memref<16x32xf32, #tpu.memory_space<vmem>>, vector<16x32xf32>,
    %c0_7 = arith.constant 0 : index
    %c0_8 = arith.constant 0 : index
    %7 = vector.load %arg1[%c0_7, %c0_8] : memref<16x32xf32, #tpu.memory_space<vmem>>, vector<16x32xf32>
    %c0_9 = arith.constant 0 : index
    %c0_10 = arith.constant 0 : index
    %8 = vector.load %arg5[%c0_9, %c0_10] : memref<32x32xf32, #tpu.memory_space<vmem>>, vector<32x32xf32>
    %cst_11 = arith.constant dense<0.000000e+00> : vector<16x32xf32>
    %9 = tpu.matmul %7, %8, %cst_11 {dimension_numbers = #tpu.dot_dimension_numbers<[1], [0], [0], [1], [0, 0, 1, 1], [], []>} : vector<16x32xf32>, vector<32x32xf32>, vector<16x32xf32> -> vector<16x32xf32>
    %c0_12 = arith.constant 0 : index
    %c0_13 = arith.constant 0 : index
    %10 = vector.load %arg6[%c0_12, %c0_13] : memref<1x32xf32, #tpu.memory_space<vmem>>, vector<1x32xf32>
    %11 = vector.broadcast %10 : vector<1x32xf32> to vector<16x32xf32>
    %12 = arith.addf %9, %11 : vector<16x32xf32>
    %c0_14 = arith.constant 0 : index
    %c0_15 = arith.constant 0 : index
    %13 = vector.load %arg10[%c0_14, %c0_15] : memref<16x32xf32, #tpu.memory_space<vmem>>, vector<16x32xf32>
    tpu.vector_store %arg10[%c0_14, %c0_15], %12 {strides = array<i32>} : memref<16x32xf32, #tpu.memory_space<vmem>>, vector<16x32xf32>,
    %c0_16 = arith.constant 0 : index
    %c0_17 = arith.constant 0 : index
    %14 = vector.load %arg2[%c0_16, %c0_17] : memref<16x32xf32, #tpu.memory_space<vmem>>, vector<16x32xf32>
    %c0_18 = arith.constant 0 : index
    %c0_19 = arith.constant 0 : index
    %15 = vector.load %arg7[%c0_18, %c0_19] : memref<32x32xf32, #tpu.memory_space<vmem>>, vector<32x32xf32>
    %cst_20 = arith.constant dense<0.000000e+00> : vector<16x32xf32>
    %16 = tpu.matmul %14, %15, %cst_20 {dimension_numbers = #tpu.dot_dimension_numbers<[1], [0], [0], [1], [0, 0, 1, 1], [], []>} : vector<16x32xf32>, vector<32x32xf32>, vector<16x32xf32> -> vector<16x32xf32>
    %c0_21 = arith.constant 0 : index
    %c0_22 = arith.constant 0 : index
    %17 = vector.load %arg8[%c0_21, %c0_22] : memref<1x32xf32, #tpu.memory_space<vmem>>, vector<1x32xf32>
    %18 = vector.broadcast %17 : vector<1x32xf32> to vector<16x32xf32>
    %19 = arith.addf %16, %18 : vector<16x32xf32>
    %c0_23 = arith.constant 0 : index
    %c0_24 = arith.constant 0 : index
    %20 = vector.load %arg11[%c0_23, %c0_24] : memref<16x32xf32, #tpu.memory_space<vmem>>, vector<16x32xf32>
    tpu.vector_store %arg11[%c0_23, %c0_24], %19 {strides = array<i32>} : memref<16x32xf32, #tpu.memory_space<vmem>>, vector<16x32xf32>,
    return
  }
}

module attributes {stable_mosaic.version = 11 : i64} {
  func.func @_mlp_kernel(%arg0: memref<16x3xf32, #tpu.memory_space<vmem>>, %arg1: memref<3x32xf32, #tpu.memory_space<vmem>>, %arg2: memref<1x32xf32, #tpu.memory_space<vmem>>, %arg3: memref<32x32xf32, #tpu.memory_space<vmem>>, %arg4: memref<1x32xf32, #tpu.memory_space<vmem>>, %arg5: memref<16x32xf32, #tpu.memory_space<vmem>>) attributes {dimension_semantics = [], scalar_prefetch = 0 : i64, scratch_operands = 0 : i64, tpu.core_type = #tpu.core_type<tc>} {
    %c0 = arith.constant 0 : index
    %c0_0 = arith.constant 0 : index
    %0 = vector.load %arg0[%c0, %c0_0] : memref<16x3xf32, #tpu.memory_space<vmem>>, vector<16x3xf32>
    %c0_1 = arith.constant 0 : index
    %c0_2 = arith.constant 0 : index
    %1 = vector.load %arg1[%c0_1, %c0_2] : memref<3x32xf32, #tpu.memory_space<vmem>>, vector<3x32xf32>
    %c0_3 = arith.constant 0 : index
    %c0_4 = arith.constant 0 : index
    %2 = vector.load %arg2[%c0_3, %c0_4] : memref<1x32xf32, #tpu.memory_space<vmem>>, vector<1x32xf32>
    %cst = arith.constant dense<0.000000e+00> : vector<16x32xf32>
    %3 = tpu.matmul %0, %1, %cst {dimension_numbers = #tpu.dot_dimension_numbers<[1], [0], [0], [1], [0, 0, 1, 1], [], []>} : vector<16x3xf32>, vector<3x32xf32>, vector<16x32xf32> -> vector<16x32xf32>
    %4 = vector.broadcast %2 : vector<1x32xf32> to vector<16x32xf32>
    %5 = arith.addf %3, %4 : vector<16x32xf32>
    %cst_5 = arith.constant 0.000000e+00 : f32
    %6 = vector.broadcast %cst_5 : f32 to vector<16x32xf32>
    %7 = arith.maximumf %5, %6 : vector<16x32xf32>
    %c0_6 = arith.constant 0 : index
    %c0_7 = arith.constant 0 : index
    %8 = vector.load %arg3[%c0_6, %c0_7] : memref<32x32xf32, #tpu.memory_space<vmem>>, vector<32x32xf32>
    %c0_8 = arith.constant 0 : index
    %c0_9 = arith.constant 0 : index
    %9 = vector.load %arg4[%c0_8, %c0_9] : memref<1x32xf32, #tpu.memory_space<vmem>>, vector<1x32xf32>
    %cst_10 = arith.constant dense<0.000000e+00> : vector<16x32xf32>
    %10 = tpu.matmul %7, %8, %cst_10 {dimension_numbers = #tpu.dot_dimension_numbers<[1], [0], [0], [1], [0, 0, 1, 1], [], []>} : vector<16x32xf32>, vector<32x32xf32>, vector<16x32xf32> -> vector<16x32xf32>
    %11 = vector.broadcast %9 : vector<1x32xf32> to vector<16x32xf32>
    %12 = arith.addf %10, %11 : vector<16x32xf32>
    %c0_11 = arith.constant 0 : index
    %c0_12 = arith.constant 0 : index
    %13 = vector.load %arg5[%c0_11, %c0_12] : memref<16x32xf32, #tpu.memory_space<vmem>>, vector<16x32xf32>
    tpu.vector_store %arg5[%c0_11, %c0_12], %12 {strides = array<i32>} : memref<16x32xf32, #tpu.memory_space<vmem>>, vector<16x32xf32>,
    return
  }
}

module attributes {stable_mosaic.version = 11 : i64} {
  func.func @_attn_kernel(%arg0: i32, %arg1: memref<1x4x8x8xf32, #tpu.memory_space<vmem>>, %arg2: memref<1x4x8x8xf32, #tpu.memory_space<vmem>>, %arg3: memref<1x4x8x8xf32, #tpu.memory_space<vmem>>, %arg4: memref<1x1x8xf32, #tpu.memory_space<vmem>>, %arg5: memref<1x4x8x8xf32, #tpu.memory_space<vmem>>) attributes {dimension_semantics = [#tpu.dimension_semantics<parallel>], iteration_bounds = array<i64: 2>, scalar_prefetch = 0 : i64, scratch_operands = 0 : i64, tpu.core_type = #tpu.core_type<tc>, window_params = [{transform_indices = @transform_0, window_bounds = array<i64: 1, 4, 8, 8>}, {transform_indices = @transform_1, window_bounds = array<i64: 1, 4, 8, 8>}, {transform_indices = @transform_2, window_bounds = array<i64: 1, 4, 8, 8>}, {transform_indices = @transform_3, window_bounds = array<i64: 1, 1, 8>}, {transform_indices = @transform_4, window_bounds = array<i64: 1, 4, 8, 8>}]} {
    %c0 = arith.constant 0 : index
    %c0_0 = arith.constant 0 : index
    %c0_1 = arith.constant 0 : index
    %c0_2 = arith.constant 0 : index
    %0 = vector.load %arg1[%c0, %c0_0, %c0_1, %c0_2] : memref<1x4x8x8xf32, #tpu.memory_space<vmem>>, vector<1x4x8x8xf32>
    %1 = vector.shape_cast %0 : vector<1x4x8x8xf32> to vector<4x8x8xf32>
    %c0_3 = arith.constant 0 : index
    %c0_4 = arith.constant 0 : index
    %c0_5 = arith.constant 0 : index
    %c0_6 = arith.constant 0 : index
    %2 = vector.load %arg2[%c0_3, %c0_4, %c0_5, %c0_6] : memref<1x4x8x8xf32, #tpu.memory_space<vmem>>, vector<1x4x8x8xf32>
    %3 = vector.shape_cast %2 : vector<1x4x8x8xf32> to vector<4x8x8xf32>
    %c0_7 = arith.constant 0 : index
    %c0_8 = arith.constant 0 : index
    %c0_9 = arith.constant 0 : index
    %c0_10 = arith.constant 0 : index
    %4 = vector.load %arg3[%c0_7, %c0_8, %c0_9, %c0_10] : memref<1x4x8x8xf32, #tpu.memory_space<vmem>>, vector<1x4x8x8xf32>
    %5 = vector.shape_cast %4 : vector<1x4x8x8xf32> to vector<4x8x8xf32>
    %c0_11 = arith.constant 0 : index
    %c0_12 = arith.constant 0 : index
    %c0_13 = arith.constant 0 : index
    %6 = vector.load %arg4[%c0_11, %c0_12, %c0_13] : memref<1x1x8xf32, #tpu.memory_space<vmem>>, vector<1x1x8xf32>
    %7 = vector.shape_cast %6 : vector<1x1x8xf32> to vector<1x8xf32>
    %cst = arith.constant dense<0.000000e+00> : vector<4x8x8xf32>
    %8 = tpu.matmul %1, %3, %cst {dimension_numbers = #tpu.dot_dimension_numbers<[2], [2], [1], [1], [0, 0, 0, 1, 1, 1], [0], [0]>} : vector<4x8x8xf32>, vector<4x8x8xf32>, vector<4x8x8xf32> -> vector<4x8x8xf32>
    %cst_14 = arith.constant 0.353553385 : f32
    %9 = vector.broadcast %cst_14 : f32 to vector<4x8x8xf32>
    %10 = arith.mulf %8, %9 : vector<4x8x8xf32>
    %11 = vector.shape_cast %7 : vector<1x8xf32> to vector<1x1x8xf32>
    %12 = vector.broadcast %11 : vector<1x1x8xf32> to vector<4x8x8xf32>
    %13 = arith.addf %10, %12 : vector<4x8x8xf32>
    %cst_15 = arith.constant dense<0xFF800000> : vector<4x8xf32>
    %14 = vector.multi_reduction <maximumf>, %13, %cst_15 [2] : vector<4x8x8xf32> to vector<4x8xf32>
    %15 = vector.shape_cast %14 : vector<4x8xf32> to vector<4x8x1xf32>
    %16 = vector.broadcast %15 : vector<4x8x1xf32> to vector<4x8x8xf32>
    %17 = arith.subf %13, %16 : vector<4x8x8xf32>
    %18 = math.exp %17 : vector<4x8x8xf32>
    %cst_16 = arith.constant dense<0.000000e+00> : vector<4x8xf32>
    %19 = vector.multi_reduction <add>, %18, %cst_16 [2] : vector<4x8x8xf32> to vector<4x8xf32>
    %20 = vector.shape_cast %19 : vector<4x8xf32> to vector<4x8x1xf32>
    %21 = tpu.reciprocal %20 {approx = true} : vector<4x8x1xf32> -> vector<4x8x1xf32>
    %22 = vector.broadcast %21 : vector<4x8x1xf32> to vector<4x8x8xf32>
    %23 = arith.mulf %18, %22 : vector<4x8x8xf32>
    %cst_17 = arith.constant dense<0.000000e+00> : vector<4x8x8xf32>
    %24 = tpu.matmul %23, %5, %cst_17 {dimension_numbers = #tpu.dot_dimension_numbers<[2], [1], [1], [2], [0, 0, 0, 1, 1, 2], [0], [0]>} : vector<4x8x8xf32>, vector<4x8x8xf32>, vector<4x8x8xf32> -> vector<4x8x8xf32>
    %c0_18 = arith.constant 0 : index
    %c0_19 = arith.constant 0 : index
    %c0_20 = arith.constant 0 : index
    %c0_21 = arith.constant 0 : index
    %25 = vector.load %arg5[%c0_18, %c0_19, %c0_20, %c0_21] : memref<1x4x8x8xf32, #tpu.memory_space<vmem>>, vector<1x4x8x8xf32>
    %26 = vector.shape_cast %25 : vector<1x4x8x8xf32> to vector<4x8x8xf32>
    %27 = vector.shape_cast %24 : vector<4x8x8xf32> to vector<1x4x8x8xf32>
    tpu.vector_store %arg5[%c0_18, %c0_19, %c0_20, %c0_21], %27 {strides = array<i32>} : memref<1x4x8x8xf32, #tpu.memory_space<vmem>>, vector<1x4x8x8xf32>,
    return
  }
  func.func @transform_0(%arg0: i32) -> (i32, i32, i32, i32) {
    %c0_i32 = arith.constant 0 : i32
    %c0_i32_0 = arith.constant 0 : i32
    %c0_i32_1 = arith.constant 0 : i32
    %c0_i32_2 = arith.constant 0 : i32
    return %arg0, %c0_i32, %c0_i32_0, %c0_i32_1 : i32, i32, i32, i32
  }
  func.func @transform_1(%arg0: i32) -> (i32, i32, i32, i32) {
    %c0_i32 = arith.constant 0 : i32
    %c0_i32_0 = arith.constant 0 : i32
    %c0_i32_1 = arith.constant 0 : i32
    %c0_i32_2 = arith.constant 0 : i32
    return %arg0, %c0_i32, %c0_i32_0, %c0_i32_1 : i32, i32, i32, i32
  }
  func.func @transform_2(%arg0: i32) -> (i32, i32, i32, i32) {
    %c0_i32 = arith.constant 0 : i32
    %c0_i32_0 = arith.constant 0 : i32
    %c0_i32_1 = arith.constant 0 : i32
    %c0_i32_2 = arith.constant 0 : i32
    return %arg0, %c0_i32, %c0_i32_0, %c0_i32_1 : i32, i32, i32, i32
  }
  func.func @transform_3(%arg0: i32) -> (i32, i32, i32) {
    %c0_i32 = arith.constant 0 : i32
    %c0_i32_0 = arith.constant 0 : i32
    %c0_i32_1 = arith.constant 0 : i32
    return %arg0, %c0_i32, %c0_i32_0 : i32, i32, i32
  }
  func.func @transform_4(%arg0: i32) -> (i32, i32, i32, i32) {
    %c0_i32 = arith.constant 0 : i32
    %c0_i32_0 = arith.constant 0 : i32
    %c0_i32_1 = arith.constant 0 : i32
    %c0_i32_2 = arith.constant 0 : i32
    return %arg0, %c0_i32, %c0_i32_0, %c0_i32_1 : i32, i32, i32, i32
  }
}

module attributes {stable_mosaic.version = 11 : i64} {
  func.func @_qkv_kernel(%arg0: memref<8x32xf32, #tpu.memory_space<vmem>>, %arg1: memref<16x32xf32, #tpu.memory_space<vmem>>, %arg2: memref<16x32xf32, #tpu.memory_space<vmem>>, %arg3: memref<32x32xf32, #tpu.memory_space<vmem>>, %arg4: memref<1x32xf32, #tpu.memory_space<vmem>>, %arg5: memref<32x32xf32, #tpu.memory_space<vmem>>, %arg6: memref<1x32xf32, #tpu.memory_space<vmem>>, %arg7: memref<32x32xf32, #tpu.memory_space<vmem>>, %arg8: memref<1x32xf32, #tpu.memory_space<vmem>>, %arg9: memref<8x32xf32, #tpu.memory_space<vmem>>, %arg10: memref<16x32xf32, #tpu.memory_space<vmem>>, %arg11: memref<16x32xf32, #tpu.memory_space<vmem>>) attributes {dimension_semantics = [], scalar_prefetch = 0 : i64, scratch_operands = 0 : i64, tpu.core_type = #tpu.core_type<tc>} {
    %c0 = arith.constant 0 : index
    %c0_0 = arith.constant 0 : index
    %0 = vector.load %arg0[%c0, %c0_0] : memref<8x32xf32, #tpu.memory_space<vmem>>, vector<8x32xf32>
    %c0_1 = arith.constant 0 : index
    %c0_2 = arith.constant 0 : index
    %1 = vector.load %arg3[%c0_1, %c0_2] : memref<32x32xf32, #tpu.memory_space<vmem>>, vector<32x32xf32>
    %cst = arith.constant dense<0.000000e+00> : vector<8x32xf32>
    %2 = tpu.matmul %0, %1, %cst {dimension_numbers = #tpu.dot_dimension_numbers<[1], [0], [0], [1], [0, 0, 1, 1], [], []>} : vector<8x32xf32>, vector<32x32xf32>, vector<8x32xf32> -> vector<8x32xf32>
    %c0_3 = arith.constant 0 : index
    %c0_4 = arith.constant 0 : index
    %3 = vector.load %arg4[%c0_3, %c0_4] : memref<1x32xf32, #tpu.memory_space<vmem>>, vector<1x32xf32>
    %4 = vector.broadcast %3 : vector<1x32xf32> to vector<8x32xf32>
    %5 = arith.addf %2, %4 : vector<8x32xf32>
    %c0_5 = arith.constant 0 : index
    %c0_6 = arith.constant 0 : index
    %6 = vector.load %arg9[%c0_5, %c0_6] : memref<8x32xf32, #tpu.memory_space<vmem>>, vector<8x32xf32>
    tpu.vector_store %arg9[%c0_5, %c0_6], %5 {strides = array<i32>} : memref<8x32xf32, #tpu.memory_space<vmem>>, vector<8x32xf32>,
    %c0_7 = arith.constant 0 : index
    %c0_8 = arith.constant 0 : index
    %7 = vector.load %arg1[%c0_7, %c0_8] : memref<16x32xf32, #tpu.memory_space<vmem>>, vector<16x32xf32>
    %c0_9 = arith.constant 0 : index
    %c0_10 = arith.constant 0 : index
    %8 = vector.load %arg5[%c0_9, %c0_10] : memref<32x32xf32, #tpu.memory_space<vmem>>, vector<32x32xf32>
    %cst_11 = arith.constant dense<0.000000e+00> : vector<16x32xf32>
    %9 = tpu.matmul %7, %8, %cst_11 {dimension_numbers = #tpu.dot_dimension_numbers<[1], [0], [0], [1], [0, 0, 1, 1], [], []>} : vector<16x32xf32>, vector<32x32xf32>, vector<16x32xf32> -> vector<16x32xf32>
    %c0_12 = arith.constant 0 : index
    %c0_13 = arith.constant 0 : index
    %10 = vector.load %arg6[%c0_12, %c0_13] : memref<1x32xf32, #tpu.memory_space<vmem>>, vector<1x32xf32>
    %11 = vector.broadcast %10 : vector<1x32xf32> to vector<16x32xf32>
    %12 = arith.addf %9, %11 : vector<16x32xf32>
    %c0_14 = arith.constant 0 : index
    %c0_15 = arith.constant 0 : index
    %13 = vector.load %arg10[%c0_14, %c0_15] : memref<16x32xf32, #tpu.memory_space<vmem>>, vector<16x32xf32>
    tpu.vector_store %arg10[%c0_14, %c0_15], %12 {strides = array<i32>} : memref<16x32xf32, #tpu.memory_space<vmem>>, vector<16x32xf32>,
    %c0_16 = arith.constant 0 : index
    %c0_17 = arith.constant 0 : index
    %14 = vector.load %arg2[%c0_16, %c0_17] : memref<16x32xf32, #tpu.memory_space<vmem>>, vector<16x32xf32>
    %c0_18 = arith.constant 0 : index
    %c0_19 = arith.constant 0 : index
    %15 = vector.load %arg7[%c0_18, %c0_19] : memref<32x32xf32, #tpu.memory_space<vmem>>, vector<32x32xf32>
    %cst_20 = arith.constant dense<0.000000e+00> : vector<16x32xf32>
    %16 = tpu.matmul %14, %15, %cst_20 {dimension_numbers = #tpu.dot_dimension_numbers<[1], [0], [0], [1], [0, 0, 1, 1], [], []>} : vector<16x32xf32>, vector<32x32xf32>, vector<16x32xf32> -> vector<16x32xf32>
    %c0_21 = arith.constant 0 : index
    %c0_22 = arith.constant 0 : index
    %17 = vector.load %arg8[%c0_21, %c0_22] : memref<1x32xf32, #tpu.memory_space<vmem>>, vector<1x32xf32>
    %18 = vector.broadcast %17 : vector<1x32xf32> to vector<16x32xf32>
    %19 = arith.addf %16, %18 : vector<16x32xf32>
    %c0_23 = arith.constant 0 : index
    %c0_24 = arith.constant 0 : index
    %20 = vector.load %arg11[%c0_23, %c0_24] : memref<16x32xf32, #tpu.memory_space<vmem>>, vector<16x32xf32>
    tpu.vector_store %arg11[%c0_23, %c0_24], %19 {strides = array<i32>} : memref<16x32xf32, #tpu.memory_space<vmem>>, vector<16x32xf32>,
    return
  }
}

module attributes {stable_mosaic.version = 11 : i64} {
  func.func @_attn_kernel(%arg0: i32, %arg1: memref<1x4x4x8xf32, #tpu.memory_space<vmem>>, %arg2: memref<1x4x8x8xf32, #tpu.memory_space<vmem>>, %arg3: memref<1x4x8x8xf32, #tpu.memory_space<vmem>>, %arg4: memref<1x1x8xf32, #tpu.memory_space<vmem>>, %arg5: memref<1x4x4x8xf32, #tpu.memory_space<vmem>>) attributes {dimension_semantics = [#tpu.dimension_semantics<parallel>], iteration_bounds = array<i64: 2>, scalar_prefetch = 0 : i64, scratch_operands = 0 : i64, tpu.core_type = #tpu.core_type<tc>, window_params = [{transform_indices = @transform_0, window_bounds = array<i64: 1, 4, 4, 8>}, {transform_indices = @transform_1, window_bounds = array<i64: 1, 4, 8, 8>}, {transform_indices = @transform_2, window_bounds = array<i64: 1, 4, 8, 8>}, {transform_indices = @transform_3, window_bounds = array<i64: 1, 1, 8>}, {transform_indices = @transform_4, window_bounds = array<i64: 1, 4, 4, 8>}]} {
    %c0 = arith.constant 0 : index
    %c0_0 = arith.constant 0 : index
    %c0_1 = arith.constant 0 : index
    %c0_2 = arith.constant 0 : index
    %0 = vector.load %arg1[%c0, %c0_0, %c0_1, %c0_2] : memref<1x4x4x8xf32, #tpu.memory_space<vmem>>, vector<1x4x4x8xf32>
    %1 = vector.shape_cast %0 : vector<1x4x4x8xf32> to vector<4x4x8xf32>
    %c0_3 = arith.constant 0 : index
    %c0_4 = arith.constant 0 : index
    %c0_5 = arith.constant 0 : index
    %c0_6 = arith.constant 0 : index
    %2 = vector.load %arg2[%c0_3, %c0_4, %c0_5, %c0_6] : memref<1x4x8x8xf32, #tpu.memory_space<vmem>>, vector<1x4x8x8xf32>
    %3 = vector.shape_cast %2 : vector<1x4x8x8xf32> to vector<4x8x8xf32>
    %c0_7 = arith.constant 0 : index
    %c0_8 = arith.constant 0 : index
    %c0_9 = arith.constant 0 : index
    %c0_10 = arith.constant 0 : index
    %4 = vector.load %arg3[%c0_7, %c0_8, %c0_9, %c0_10] : memref<1x4x8x8xf32, #tpu.memory_space<vmem>>, vector<1x4x8x8xf32>
    %5 = vector.shape_cast %4 : vector<1x4x8x8xf32> to vector<4x8x8xf32>
    %c0_11 = arith.constant 0 : index
    %c0_12 = arith.constant 0 : index
    %c0_13 = arith.constant 0 : index
    %6 = vector.load %arg4[%c0_11, %c0_12, %c0_13] : memref<1x1x8xf32, #tpu.memory_space<vmem>>, vector<1x1x8xf32>
    %7 = vector.shape_cast %6 : vector<1x1x8xf32> to vector<1x8xf32>
    %cst = arith.constant dense<0.000000e+00> : vector<4x4x8xf32>
    %8 = tpu.matmul %1, %3, %cst {dimension_numbers = #tpu.dot_dimension_numbers<[2], [2], [1], [1], [0, 0, 0, 1, 1, 1], [0], [0]>} : vector<4x4x8xf32>, vector<4x8x8xf32>, vector<4x4x8xf32> -> vector<4x4x8xf32>
    %cst_14 = arith.constant 0.353553385 : f32
    %9 = vector.broadcast %cst_14 : f32 to vector<4x4x8xf32>
    %10 = arith.mulf %8, %9 : vector<4x4x8xf32>
    %11 = vector.shape_cast %7 : vector<1x8xf32> to vector<1x1x8xf32>
    %12 = vector.broadcast %11 : vector<1x1x8xf32> to vector<4x4x8xf32>
    %13 = arith.addf %10, %12 : vector<4x4x8xf32>
    %cst_15 = arith.constant dense<0xFF800000> : vector<4x4xf32>
    %14 = vector.multi_reduction <maximumf>, %13, %cst_15 [2] : vector<4x4x8xf32> to vector<4x4xf32>
    %15 = vector.shape_cast %14 : vector<4x4xf32> to vector<4x4x1xf32>
    %16 = vector.broadcast %15 : vector<4x4x1xf32> to vector<4x4x8xf32>
    %17 = arith.subf %13, %16 : vector<4x4x8xf32>
    %18 = math.exp %17 : vector<4x4x8xf32>
    %cst_16 = arith.constant dense<0.000000e+00> : vector<4x4xf32>
    %19 = vector.multi_reduction <add>, %18, %cst_16 [2] : vector<4x4x8xf32> to vector<4x4xf32>
    %20 = vector.shape_cast %19 : vector<4x4xf32> to vector<4x4x1xf32>
    %21 = tpu.reciprocal %20 {approx = true} : vector<4x4x1xf32> -> vector<4x4x1xf32>
    %22 = vector.broadcast %21 : vector<4x4x1xf32> to vector<4x4x8xf32>
    %23 = arith.mulf %18, %22 : vector<4x4x8xf32>
    %cst_17 = arith.constant dense<0.000000e+00> : vector<4x4x8xf32>
    %24 = tpu.matmul %23, %5, %cst_17 {dimension_numbers = #tpu.dot_dimension_numbers<[2], [1], [1], [2], [0, 0, 0, 1, 1, 2], [0], [0]>} : vector<4x4x8xf32>, vector<4x8x8xf32>, vector<4x4x8xf32> -> vector<4x4x8xf32>
    %c0_18 = arith.constant 0 : index
    %c0_19 = arith.constant 0 : index
    %c0_20 = arith.constant 0 : index
    %c0_21 = arith.constant 0 : index
    %25 = vector.load %arg5[%c0_18, %c0_19, %c0_20, %c0_21] : memref<1x4x4x8xf32, #tpu.memory_space<vmem>>, vector<1x4x4x8xf32>
    %26 = vector.shape_cast %25 : vector<1x4x4x8xf32> to vector<4x4x8xf32>
    %27 = vector.shape_cast %24 : vector<4x4x8xf32> to vector<1x4x4x8xf32>
    tpu.vector_store %arg5[%c0_18, %c0_19, %c0_20, %c0_21], %27 {strides = array<i32>} : memref<1x4x4x8xf32, #tpu.memory_space<vmem>>, vector<1x4x4x8xf32>,
    return
  }
  func.func @transform_0(%arg0: i32) -> (i32, i32, i32, i32) {
    %c0_i32 = arith.constant 0 : i32
    %c0_i32_0 = arith.constant 0 : i32
    %c0_i32_1 = arith.constant 0 : i32
    %c0_i32_2 = arith.constant 0 : i32
    return %arg0, %c0_i32, %c0_i32_0, %c0_i32_1 : i32, i32, i32, i32
  }
  func.func @transform_1(%arg0: i32) -> (i32, i32, i32, i32) {
    %c0_i32 = arith.constant 0 : i32
    %c0_i32_0 = arith.constant 0 : i32
    %c0_i32_1 = arith.constant 0 : i32
    %c0_i32_2 = arith.constant 0 : i32
    return %arg0, %c0_i32, %c0_i32_0, %c0_i32_1 : i32, i32, i32, i32
  }
  func.func @transform_2(%arg0: i32) -> (i32, i32, i32, i32) {
    %c0_i32 = arith.constant 0 : i32
    %c0_i32_0 = arith.constant 0 : i32
    %c0_i32_1 = arith.constant 0 : i32
    %c0_i32_2 = arith.constant 0 : i32
    return %arg0, %c0_i32, %c0_i32_0, %c0_i32_1 : i32, i32, i32, i32
  }
  func.func @transform_3(%arg0: i32) -> (i32, i32, i32) {
    %c0_i32 = arith.constant 0 : i32
    %c0_i32_0 = arith.constant 0 : i32
    %c0_i32_1 = arith.constant 0 : i32
    return %arg0, %c0_i32, %c0_i32_0 : i32, i32, i32
  }
  func.func @transform_4(%arg0: i32) -> (i32, i32, i32, i32) {
    %c0_i32 = arith.constant 0 : i32
    %c0_i32_0 = arith.constant 0 : i32
    %c0_i32_1 = arith.constant 0 : i32
    %c0_i32_2 = arith.constant 0 : i32
    return %arg0, %c0_i32, %c0_i32_0, %c0_i32_1 : i32, i32, i32, i32
  }
}

module attributes {stable_mosaic.version = 11 : i64} {
  func.func @_mlp_kernel(%arg0: memref<8x32xf32, #tpu.memory_space<vmem>>, %arg1: memref<32x128xf32, #tpu.memory_space<vmem>>, %arg2: memref<1x128xf32, #tpu.memory_space<vmem>>, %arg3: memref<128x32xf32, #tpu.memory_space<vmem>>, %arg4: memref<1x32xf32, #tpu.memory_space<vmem>>, %arg5: memref<8x32xf32, #tpu.memory_space<vmem>>) attributes {dimension_semantics = [], scalar_prefetch = 0 : i64, scratch_operands = 0 : i64, tpu.core_type = #tpu.core_type<tc>} {
    %c0 = arith.constant 0 : index
    %c0_0 = arith.constant 0 : index
    %0 = vector.load %arg0[%c0, %c0_0] : memref<8x32xf32, #tpu.memory_space<vmem>>, vector<8x32xf32>
    %c0_1 = arith.constant 0 : index
    %c0_2 = arith.constant 0 : index
    %1 = vector.load %arg1[%c0_1, %c0_2] : memref<32x128xf32, #tpu.memory_space<vmem>>, vector<32x128xf32>
    %c0_3 = arith.constant 0 : index
    %c0_4 = arith.constant 0 : index
    %2 = vector.load %arg2[%c0_3, %c0_4] : memref<1x128xf32, #tpu.memory_space<vmem>>, vector<1x128xf32>
    %cst = arith.constant dense<0.000000e+00> : vector<8x128xf32>
    %3 = tpu.matmul %0, %1, %cst {dimension_numbers = #tpu.dot_dimension_numbers<[1], [0], [0], [1], [0, 0, 1, 1], [], []>} : vector<8x32xf32>, vector<32x128xf32>, vector<8x128xf32> -> vector<8x128xf32>
    %4 = vector.broadcast %2 : vector<1x128xf32> to vector<8x128xf32>
    %5 = arith.addf %3, %4 : vector<8x128xf32>
    %cst_5 = arith.constant 0.000000e+00 : f32
    %6 = vector.broadcast %cst_5 : f32 to vector<8x128xf32>
    %7 = arith.maximumf %5, %6 : vector<8x128xf32>
    %c0_6 = arith.constant 0 : index
    %c0_7 = arith.constant 0 : index
    %8 = vector.load %arg3[%c0_6, %c0_7] : memref<128x32xf32, #tpu.memory_space<vmem>>, vector<128x32xf32>
    %c0_8 = arith.constant 0 : index
    %c0_9 = arith.constant 0 : index
    %9 = vector.load %arg4[%c0_8, %c0_9] : memref<1x32xf32, #tpu.memory_space<vmem>>, vector<1x32xf32>
    %cst_10 = arith.constant dense<0.000000e+00> : vector<8x32xf32>
    %10 = tpu.matmul %7, %8, %cst_10 {dimension_numbers = #tpu.dot_dimension_numbers<[1], [0], [0], [1], [0, 0, 1, 1], [], []>} : vector<8x128xf32>, vector<128x32xf32>, vector<8x32xf32> -> vector<8x32xf32>
    %11 = vector.broadcast %9 : vector<1x32xf32> to vector<8x32xf32>
    %12 = arith.addf %10, %11 : vector<8x32xf32>
    %c0_11 = arith.constant 0 : index
    %c0_12 = arith.constant 0 : index
    %13 = vector.load %arg5[%c0_11, %c0_12] : memref<8x32xf32, #tpu.memory_space<vmem>>, vector<8x32xf32>
    tpu.vector_store %arg5[%c0_11, %c0_12], %12 {strides = array<i32>} : memref<8x32xf32, #tpu.memory_space<vmem>>, vector<8x32xf32>,
    return
  }
}

module attributes {stable_mosaic.version = 11 : i64} {
  func.func @_qkv_kernel(%arg0: memref<16x32xf32, #tpu.memory_space<vmem>>, %arg1: memref<8x32xf32, #tpu.memory_space<vmem>>, %arg2: memref<8x32xf32, #tpu.memory_space<vmem>>, %arg3: memref<32x32xf32, #tpu.memory_space<vmem>>, %arg4: memref<1x32xf32, #tpu.memory_space<vmem>>, %arg5: memref<32x32xf32, #tpu.memory_space<vmem>>, %arg6: memref<1x32xf32, #tpu.memory_space<vmem>>, %arg7: memref<32x32xf32, #tpu.memory_space<vmem>>, %arg8: memref<1x32xf32, #tpu.memory_space<vmem>>, %arg9: memref<16x32xf32, #tpu.memory_space<vmem>>, %arg10: memref<8x32xf32, #tpu.memory_space<vmem>>, %arg11: memref<8x32xf32, #tpu.memory_space<vmem>>) attributes {dimension_semantics = [], scalar_prefetch = 0 : i64, scratch_operands = 0 : i64, tpu.core_type = #tpu.core_type<tc>} {
    %c0 = arith.constant 0 : index
    %c0_0 = arith.constant 0 : index
    %0 = vector.load %arg0[%c0, %c0_0] : memref<16x32xf32, #tpu.memory_space<vmem>>, vector<16x32xf32>
    %c0_1 = arith.constant 0 : index
    %c0_2 = arith.constant 0 : index
    %1 = vector.load %arg3[%c0_1, %c0_2] : memref<32x32xf32, #tpu.memory_space<vmem>>, vector<32x32xf32>
    %cst = arith.constant dense<0.000000e+00> : vector<16x32xf32>
    %2 = tpu.matmul %0, %1, %cst {dimension_numbers = #tpu.dot_dimension_numbers<[1], [0], [0], [1], [0, 0, 1, 1], [], []>} : vector<16x32xf32>, vector<32x32xf32>, vector<16x32xf32> -> vector<16x32xf32>
    %c0_3 = arith.constant 0 : index
    %c0_4 = arith.constant 0 : index
    %3 = vector.load %arg4[%c0_3, %c0_4] : memref<1x32xf32, #tpu.memory_space<vmem>>, vector<1x32xf32>
    %4 = vector.broadcast %3 : vector<1x32xf32> to vector<16x32xf32>
    %5 = arith.addf %2, %4 : vector<16x32xf32>
    %c0_5 = arith.constant 0 : index
    %c0_6 = arith.constant 0 : index
    %6 = vector.load %arg9[%c0_5, %c0_6] : memref<16x32xf32, #tpu.memory_space<vmem>>, vector<16x32xf32>
    tpu.vector_store %arg9[%c0_5, %c0_6], %5 {strides = array<i32>} : memref<16x32xf32, #tpu.memory_space<vmem>>, vector<16x32xf32>,
    %c0_7 = arith.constant 0 : index
    %c0_8 = arith.constant 0 : index
    %7 = vector.load %arg1[%c0_7, %c0_8] : memref<8x32xf32, #tpu.memory_space<vmem>>, vector<8x32xf32>
    %c0_9 = arith.constant 0 : index
    %c0_10 = arith.constant 0 : index
    %8 = vector.load %arg5[%c0_9, %c0_10] : memref<32x32xf32, #tpu.memory_space<vmem>>, vector<32x32xf32>
    %cst_11 = arith.constant dense<0.000000e+00> : vector<8x32xf32>
    %9 = tpu.matmul %7, %8, %cst_11 {dimension_numbers = #tpu.dot_dimension_numbers<[1], [0], [0], [1], [0, 0, 1, 1], [], []>} : vector<8x32xf32>, vector<32x32xf32>, vector<8x32xf32> -> vector<8x32xf32>
    %c0_12 = arith.constant 0 : index
    %c0_13 = arith.constant 0 : index
    %10 = vector.load %arg6[%c0_12, %c0_13] : memref<1x32xf32, #tpu.memory_space<vmem>>, vector<1x32xf32>
    %11 = vector.broadcast %10 : vector<1x32xf32> to vector<8x32xf32>
    %12 = arith.addf %9, %11 : vector<8x32xf32>
    %c0_14 = arith.constant 0 : index
    %c0_15 = arith.constant 0 : index
    %13 = vector.load %arg10[%c0_14, %c0_15] : memref<8x32xf32, #tpu.memory_space<vmem>>, vector<8x32xf32>
    tpu.vector_store %arg10[%c0_14, %c0_15], %12 {strides = array<i32>} : memref<8x32xf32, #tpu.memory_space<vmem>>, vector<8x32xf32>,
    %c0_16 = arith.constant 0 : index
    %c0_17 = arith.constant 0 : index
    %14 = vector.load %arg2[%c0_16, %c0_17] : memref<8x32xf32, #tpu.memory_space<vmem>>, vector<8x32xf32>
    %c0_18 = arith.constant 0 : index
    %c0_19 = arith.constant 0 : index
    %15 = vector.load %arg7[%c0_18, %c0_19] : memref<32x32xf32, #tpu.memory_space<vmem>>, vector<32x32xf32>
    %cst_20 = arith.constant dense<0.000000e+00> : vector<8x32xf32>
    %16 = tpu.matmul %14, %15, %cst_20 {dimension_numbers = #tpu.dot_dimension_numbers<[1], [0], [0], [1], [0, 0, 1, 1], [], []>} : vector<8x32xf32>, vector<32x32xf32>, vector<8x32xf32> -> vector<8x32xf32>
    %c0_21 = arith.constant 0 : index
    %c0_22 = arith.constant 0 : index
    %17 = vector.load %arg8[%c0_21, %c0_22] : memref<1x32xf32, #tpu.memory_space<vmem>>, vector<1x32xf32>
    %18 = vector.broadcast %17 : vector<1x32xf32> to vector<8x32xf32>
    %19 = arith.addf %16, %18 : vector<8x32xf32>
    %c0_23 = arith.constant 0 : index
    %c0_24 = arith.constant 0 : index
    %20 = vector.load %arg11[%c0_23, %c0_24] : memref<8x32xf32, #tpu.memory_space<vmem>>, vector<8x32xf32>
    tpu.vector_store %arg11[%c0_23, %c0_24], %19 {strides = array<i32>} : memref<8x32xf32, #tpu.memory_space<vmem>>, vector<8x32xf32>,
    return
  }
}

module attributes {stable_mosaic.version = 11 : i64} {
  func.func @_attn_kernel(%arg0: i32, %arg1: memref<1x4x8x8xf32, #tpu.memory_space<vmem>>, %arg2: memref<1x4x4x8xf32, #tpu.memory_space<vmem>>, %arg3: memref<1x4x4x8xf32, #tpu.memory_space<vmem>>, %arg4: memref<1x1x4xf32, #tpu.memory_space<vmem>>, %arg5: memref<1x4x8x8xf32, #tpu.memory_space<vmem>>) attributes {dimension_semantics = [#tpu.dimension_semantics<parallel>], iteration_bounds = array<i64: 2>, scalar_prefetch = 0 : i64, scratch_operands = 0 : i64, tpu.core_type = #tpu.core_type<tc>, window_params = [{transform_indices = @transform_0, window_bounds = array<i64: 1, 4, 8, 8>}, {transform_indices = @transform_1, window_bounds = array<i64: 1, 4, 4, 8>}, {transform_indices = @transform_2, window_bounds = array<i64: 1, 4, 4, 8>}, {transform_indices = @transform_3, window_bounds = array<i64: 1, 1, 4>}, {transform_indices = @transform_4, window_bounds = array<i64: 1, 4, 8, 8>}]} {
    %c0 = arith.constant 0 : index
    %c0_0 = arith.constant 0 : index
    %c0_1 = arith.constant 0 : index
    %c0_2 = arith.constant 0 : index
    %0 = vector.load %arg1[%c0, %c0_0, %c0_1, %c0_2] : memref<1x4x8x8xf32, #tpu.memory_space<vmem>>, vector<1x4x8x8xf32>
    %1 = vector.shape_cast %0 : vector<1x4x8x8xf32> to vector<4x8x8xf32>
    %c0_3 = arith.constant 0 : index
    %c0_4 = arith.constant 0 : index
    %c0_5 = arith.constant 0 : index
    %c0_6 = arith.constant 0 : index
    %2 = vector.load %arg2[%c0_3, %c0_4, %c0_5, %c0_6] : memref<1x4x4x8xf32, #tpu.memory_space<vmem>>, vector<1x4x4x8xf32>
    %3 = vector.shape_cast %2 : vector<1x4x4x8xf32> to vector<4x4x8xf32>
    %c0_7 = arith.constant 0 : index
    %c0_8 = arith.constant 0 : index
    %c0_9 = arith.constant 0 : index
    %c0_10 = arith.constant 0 : index
    %4 = vector.load %arg3[%c0_7, %c0_8, %c0_9, %c0_10] : memref<1x4x4x8xf32, #tpu.memory_space<vmem>>, vector<1x4x4x8xf32>
    %5 = vector.shape_cast %4 : vector<1x4x4x8xf32> to vector<4x4x8xf32>
    %c0_11 = arith.constant 0 : index
    %c0_12 = arith.constant 0 : index
    %c0_13 = arith.constant 0 : index
    %6 = vector.load %arg4[%c0_11, %c0_12, %c0_13] : memref<1x1x4xf32, #tpu.memory_space<vmem>>, vector<1x1x4xf32>
    %7 = vector.shape_cast %6 : vector<1x1x4xf32> to vector<1x4xf32>
    %cst = arith.constant dense<0.000000e+00> : vector<4x8x4xf32>
    %8 = tpu.matmul %1, %3, %cst {dimension_numbers = #tpu.dot_dimension_numbers<[2], [2], [1], [1], [0, 0, 0, 1, 1, 1], [0], [0]>} : vector<4x8x8xf32>, vector<4x4x8xf32>, vector<4x8x4xf32> -> vector<4x8x4xf32>
    %cst_14 = arith.constant 0.353553385 : f32
    %9 = vector.broadcast %cst_14 : f32 to vector<4x8x4xf32>
    %10 = arith.mulf %8, %9 : vector<4x8x4xf32>
    %11 = vector.shape_cast %7 : vector<1x4xf32> to vector<1x1x4xf32>
    %12 = vector.broadcast %11 : vector<1x1x4xf32> to vector<4x8x4xf32>
    %13 = arith.addf %10, %12 : vector<4x8x4xf32>
    %cst_15 = arith.constant dense<0xFF800000> : vector<4x8xf32>
    %14 = vector.multi_reduction <maximumf>, %13, %cst_15 [2] : vector<4x8x4xf32> to vector<4x8xf32>
    %15 = vector.shape_cast %14 : vector<4x8xf32> to vector<4x8x1xf32>
    %16 = vector.broadcast %15 : vector<4x8x1xf32> to vector<4x8x4xf32>
    %17 = arith.subf %13, %16 : vector<4x8x4xf32>
    %18 = math.exp %17 : vector<4x8x4xf32>
    %cst_16 = arith.constant dense<0.000000e+00> : vector<4x8xf32>
    %19 = vector.multi_reduction <add>, %18, %cst_16 [2] : vector<4x8x4xf32> to vector<4x8xf32>
    %20 = vector.shape_cast %19 : vector<4x8xf32> to vector<4x8x1xf32>
    %21 = tpu.reciprocal %20 {approx = true} : vector<4x8x1xf32> -> vector<4x8x1xf32>
    %22 = vector.broadcast %21 : vector<4x8x1xf32> to vector<4x8x4xf32>
    %23 = arith.mulf %18, %22 : vector<4x8x4xf32>
    %cst_17 = arith.constant dense<0.000000e+00> : vector<4x8x8xf32>
    %24 = tpu.matmul %23, %5, %cst_17 {dimension_numbers = #tpu.dot_dimension_numbers<[2], [1], [1], [2], [0, 0, 0, 1, 1, 2], [0], [0]>} : vector<4x8x4xf32>, vector<4x4x8xf32>, vector<4x8x8xf32> -> vector<4x8x8xf32>
    %c0_18 = arith.constant 0 : index
    %c0_19 = arith.constant 0 : index
    %c0_20 = arith.constant 0 : index
    %c0_21 = arith.constant 0 : index
    %25 = vector.load %arg5[%c0_18, %c0_19, %c0_20, %c0_21] : memref<1x4x8x8xf32, #tpu.memory_space<vmem>>, vector<1x4x8x8xf32>
    %26 = vector.shape_cast %25 : vector<1x4x8x8xf32> to vector<4x8x8xf32>
    %27 = vector.shape_cast %24 : vector<4x8x8xf32> to vector<1x4x8x8xf32>
    tpu.vector_store %arg5[%c0_18, %c0_19, %c0_20, %c0_21], %27 {strides = array<i32>} : memref<1x4x8x8xf32, #tpu.memory_space<vmem>>, vector<1x4x8x8xf32>,
    return
  }
  func.func @transform_0(%arg0: i32) -> (i32, i32, i32, i32) {
    %c0_i32 = arith.constant 0 : i32
    %c0_i32_0 = arith.constant 0 : i32
    %c0_i32_1 = arith.constant 0 : i32
    %c0_i32_2 = arith.constant 0 : i32
    return %arg0, %c0_i32, %c0_i32_0, %c0_i32_1 : i32, i32, i32, i32
  }
  func.func @transform_1(%arg0: i32) -> (i32, i32, i32, i32) {
    %c0_i32 = arith.constant 0 : i32
    %c0_i32_0 = arith.constant 0 : i32
    %c0_i32_1 = arith.constant 0 : i32
    %c0_i32_2 = arith.constant 0 : i32
    return %arg0, %c0_i32, %c0_i32_0, %c0_i32_1 : i32, i32, i32, i32
  }
  func.func @transform_2(%arg0: i32) -> (i32, i32, i32, i32) {
    %c0_i32 = arith.constant 0 : i32
    %c0_i32_0 = arith.constant 0 : i32
    %c0_i32_1 = arith.constant 0 : i32
    %c0_i32_2 = arith.constant 0 : i32
    return %arg0, %c0_i32, %c0_i32_0, %c0_i32_1 : i32, i32, i32, i32
  }
  func.func @transform_3(%arg0: i32) -> (i32, i32, i32) {
    %c0_i32 = arith.constant 0 : i32
    %c0_i32_0 = arith.constant 0 : i32
    %c0_i32_1 = arith.constant 0 : i32
    return %arg0, %c0_i32, %c0_i32_0 : i32, i32, i32
  }
  func.func @transform_4(%arg0: i32) -> (i32, i32, i32, i32) {
    %c0_i32 = arith.constant 0 : i32
    %c0_i32_0 = arith.constant 0 : i32
    %c0_i32_1 = arith.constant 0 : i32
    %c0_i32_2 = arith.constant 0 : i32
    return %arg0, %c0_i32, %c0_i32_0, %c0_i32_1 : i32, i32, i32, i32
  }
}

module attributes {stable_mosaic.version = 11 : i64} {
  func.func @_mlp_kernel(%arg0: memref<16x32xf32, #tpu.memory_space<vmem>>, %arg1: memref<32x128xf32, #tpu.memory_space<vmem>>, %arg2: memref<1x128xf32, #tpu.memory_space<vmem>>, %arg3: memref<128x32xf32, #tpu.memory_space<vmem>>, %arg4: memref<1x32xf32, #tpu.memory_space<vmem>>, %arg5: memref<16x32xf32, #tpu.memory_space<vmem>>) attributes {dimension_semantics = [], scalar_prefetch = 0 : i64, scratch_operands = 0 : i64, tpu.core_type = #tpu.core_type<tc>} {
    %c0 = arith.constant 0 : index
    %c0_0 = arith.constant 0 : index
    %0 = vector.load %arg0[%c0, %c0_0] : memref<16x32xf32, #tpu.memory_space<vmem>>, vector<16x32xf32>
    %c0_1 = arith.constant 0 : index
    %c0_2 = arith.constant 0 : index
    %1 = vector.load %arg1[%c0_1, %c0_2] : memref<32x128xf32, #tpu.memory_space<vmem>>, vector<32x128xf32>
    %c0_3 = arith.constant 0 : index
    %c0_4 = arith.constant 0 : index
    %2 = vector.load %arg2[%c0_3, %c0_4] : memref<1x128xf32, #tpu.memory_space<vmem>>, vector<1x128xf32>
    %cst = arith.constant dense<0.000000e+00> : vector<16x128xf32>
    %3 = tpu.matmul %0, %1, %cst {dimension_numbers = #tpu.dot_dimension_numbers<[1], [0], [0], [1], [0, 0, 1, 1], [], []>} : vector<16x32xf32>, vector<32x128xf32>, vector<16x128xf32> -> vector<16x128xf32>
    %4 = vector.broadcast %2 : vector<1x128xf32> to vector<16x128xf32>
    %5 = arith.addf %3, %4 : vector<16x128xf32>
    %cst_5 = arith.constant 0.000000e+00 : f32
    %6 = vector.broadcast %cst_5 : f32 to vector<16x128xf32>
    %7 = arith.maximumf %5, %6 : vector<16x128xf32>
    %c0_6 = arith.constant 0 : index
    %c0_7 = arith.constant 0 : index
    %8 = vector.load %arg3[%c0_6, %c0_7] : memref<128x32xf32, #tpu.memory_space<vmem>>, vector<128x32xf32>
    %c0_8 = arith.constant 0 : index
    %c0_9 = arith.constant 0 : index
    %9 = vector.load %arg4[%c0_8, %c0_9] : memref<1x32xf32, #tpu.memory_space<vmem>>, vector<1x32xf32>
    %cst_10 = arith.constant dense<0.000000e+00> : vector<16x32xf32>
    %10 = tpu.matmul %7, %8, %cst_10 {dimension_numbers = #tpu.dot_dimension_numbers<[1], [0], [0], [1], [0, 0, 1, 1], [], []>} : vector<16x128xf32>, vector<128x32xf32>, vector<16x32xf32> -> vector<16x32xf32>
    %11 = vector.broadcast %9 : vector<1x32xf32> to vector<16x32xf32>
    %12 = arith.addf %10, %11 : vector<16x32xf32>
    %c0_11 = arith.constant 0 : index
    %c0_12 = arith.constant 0 : index
    %13 = vector.load %arg5[%c0_11, %c0_12] : memref<16x32xf32, #tpu.memory_space<vmem>>, vector<16x32xf32>
    tpu.vector_store %arg5[%c0_11, %c0_12], %12 {strides = array<i32>} : memref<16x32xf32, #tpu.memory_space<vmem>>, vector<16x32xf32>,
    return
  }
}

module attributes {stable_mosaic.version = 11 : i64} {
  func.func @_mlp_kernel(%arg0: memref<8x32xf32, #tpu.memory_space<vmem>>, %arg1: memref<32x32xf32, #tpu.memory_space<vmem>>, %arg2: memref<1x32xf32, #tpu.memory_space<vmem>>, %arg3: memref<32x32xf32, #tpu.memory_space<vmem>>, %arg4: memref<1x32xf32, #tpu.memory_space<vmem>>, %arg5: memref<32x1xf32, #tpu.memory_space<vmem>>, %arg6: memref<1x1xf32, #tpu.memory_space<vmem>>, %arg7: memref<8x1xf32, #tpu.memory_space<vmem>>) attributes {dimension_semantics = [], scalar_prefetch = 0 : i64, scratch_operands = 0 : i64, tpu.core_type = #tpu.core_type<tc>} {
    %c0 = arith.constant 0 : index
    %c0_0 = arith.constant 0 : index
    %0 = vector.load %arg0[%c0, %c0_0] : memref<8x32xf32, #tpu.memory_space<vmem>>, vector<8x32xf32>
    %c0_1 = arith.constant 0 : index
    %c0_2 = arith.constant 0 : index
    %1 = vector.load %arg1[%c0_1, %c0_2] : memref<32x32xf32, #tpu.memory_space<vmem>>, vector<32x32xf32>
    %c0_3 = arith.constant 0 : index
    %c0_4 = arith.constant 0 : index
    %2 = vector.load %arg2[%c0_3, %c0_4] : memref<1x32xf32, #tpu.memory_space<vmem>>, vector<1x32xf32>
    %cst = arith.constant dense<0.000000e+00> : vector<8x32xf32>
    %3 = tpu.matmul %0, %1, %cst {dimension_numbers = #tpu.dot_dimension_numbers<[1], [0], [0], [1], [0, 0, 1, 1], [], []>} : vector<8x32xf32>, vector<32x32xf32>, vector<8x32xf32> -> vector<8x32xf32>
    %4 = vector.broadcast %2 : vector<1x32xf32> to vector<8x32xf32>
    %5 = arith.addf %3, %4 : vector<8x32xf32>
    %cst_5 = arith.constant 0.000000e+00 : f32
    %6 = vector.broadcast %cst_5 : f32 to vector<8x32xf32>
    %7 = arith.maximumf %5, %6 : vector<8x32xf32>
    %c0_6 = arith.constant 0 : index
    %c0_7 = arith.constant 0 : index
    %8 = vector.load %arg3[%c0_6, %c0_7] : memref<32x32xf32, #tpu.memory_space<vmem>>, vector<32x32xf32>
    %c0_8 = arith.constant 0 : index
    %c0_9 = arith.constant 0 : index
    %9 = vector.load %arg4[%c0_8, %c0_9] : memref<1x32xf32, #tpu.memory_space<vmem>>, vector<1x32xf32>
    %cst_10 = arith.constant dense<0.000000e+00> : vector<8x32xf32>
    %10 = tpu.matmul %7, %8, %cst_10 {dimension_numbers = #tpu.dot_dimension_numbers<[1], [0], [0], [1], [0, 0, 1, 1], [], []>} : vector<8x32xf32>, vector<32x32xf32>, vector<8x32xf32> -> vector<8x32xf32>
    %11 = vector.broadcast %9 : vector<1x32xf32> to vector<8x32xf32>
    %12 = arith.addf %10, %11 : vector<8x32xf32>
    %cst_11 = arith.constant 0.000000e+00 : f32
    %13 = vector.broadcast %cst_11 : f32 to vector<8x32xf32>
    %14 = arith.maximumf %12, %13 : vector<8x32xf32>
    %c0_12 = arith.constant 0 : index
    %c0_13 = arith.constant 0 : index
    %15 = vector.load %arg5[%c0_12, %c0_13] : memref<32x1xf32, #tpu.memory_space<vmem>>, vector<32x1xf32>
    %c0_14 = arith.constant 0 : index
    %c0_15 = arith.constant 0 : index
    %16 = vector.load %arg6[%c0_14, %c0_15] : memref<1x1xf32, #tpu.memory_space<vmem>>, vector<1x1xf32>
    %cst_16 = arith.constant dense<0.000000e+00> : vector<8x1xf32>
    %17 = tpu.matmul %14, %15, %cst_16 {dimension_numbers = #tpu.dot_dimension_numbers<[1], [0], [0], [1], [0, 0, 1, 1], [], []>} : vector<8x32xf32>, vector<32x1xf32>, vector<8x1xf32> -> vector<8x1xf32>
    %18 = vector.broadcast %16 : vector<1x1xf32> to vector<8x1xf32>
    %19 = arith.addf %17, %18 : vector<8x1xf32>
    %c0_17 = arith.constant 0 : index
    %c0_18 = arith.constant 0 : index
    %20 = vector.load %arg7[%c0_17, %c0_18] : memref<8x1xf32, #tpu.memory_space<vmem>>, vector<8x1xf32>
    tpu.vector_store %arg7[%c0_17, %c0_18], %19 {strides = array<i32>} : memref<8x1xf32, #tpu.memory_space<vmem>>, vector<8x1xf32>,
    return
  }
}

module attributes {stable_mosaic.version = 11 : i64} {
  func.func @_score_kernel(%arg0: i32, %arg1: memref<1x16x32xf32, #tpu.memory_space<vmem>>, %arg2: memref<1x4x32xf32, #tpu.memory_space<vmem>>, %arg3: memref<1x16x4xf32, #tpu.memory_space<vmem>>) attributes {dimension_semantics = [#tpu.dimension_semantics<parallel>], iteration_bounds = array<i64: 2>, scalar_prefetch = 0 : i64, scratch_operands = 0 : i64, tpu.core_type = #tpu.core_type<tc>, window_params = [{transform_indices = @transform_0, window_bounds = array<i64: 1, 16, 32>}, {transform_indices = @transform_1, window_bounds = array<i64: 1, 4, 32>}, {transform_indices = @transform_2, window_bounds = array<i64: 1, 16, 4>}]} {
    %c0 = arith.constant 0 : index
    %c0_0 = arith.constant 0 : index
    %c0_1 = arith.constant 0 : index
    %0 = vector.load %arg1[%c0, %c0_0, %c0_1] : memref<1x16x32xf32, #tpu.memory_space<vmem>>, vector<1x16x32xf32>
    %1 = vector.shape_cast %0 : vector<1x16x32xf32> to vector<16x32xf32>
    %c0_2 = arith.constant 0 : index
    %c0_3 = arith.constant 0 : index
    %c0_4 = arith.constant 0 : index
    %2 = vector.load %arg2[%c0_2, %c0_3, %c0_4] : memref<1x4x32xf32, #tpu.memory_space<vmem>>, vector<1x4x32xf32>
    %3 = vector.shape_cast %2 : vector<1x4x32xf32> to vector<4x32xf32>
    %4 = arith.mulf %1, %1 : vector<16x32xf32>
    %cst = arith.constant dense<0.000000e+00> : vector<16xf32>
    %5 = vector.multi_reduction <add>, %4, %cst [1] : vector<16x32xf32> to vector<16xf32>
    %6 = vector.shape_cast %5 : vector<16xf32> to vector<16x1xf32>
    %cst_5 = arith.constant 1.000000e-24 : f32
    %7 = vector.broadcast %cst_5 : f32 to vector<16x1xf32>
    %8 = arith.maximumf %6, %7 : vector<16x1xf32>
    %9 = math.rsqrt %8 : vector<16x1xf32>
    %10 = vector.broadcast %9 : vector<16x1xf32> to vector<16x32xf32>
    %11 = arith.mulf %1, %10 : vector<16x32xf32>
    %12 = arith.mulf %3, %3 : vector<4x32xf32>
    %cst_6 = arith.constant dense<0.000000e+00> : vector<4xf32>
    %13 = vector.multi_reduction <add>, %12, %cst_6 [1] : vector<4x32xf32> to vector<4xf32>
    %14 = vector.shape_cast %13 : vector<4xf32> to vector<4x1xf32>
    %cst_7 = arith.constant 1.000000e-24 : f32
    %15 = vector.broadcast %cst_7 : f32 to vector<4x1xf32>
    %16 = arith.maximumf %14, %15 : vector<4x1xf32>
    %17 = math.rsqrt %16 : vector<4x1xf32>
    %18 = vector.broadcast %17 : vector<4x1xf32> to vector<4x32xf32>
    %19 = arith.mulf %3, %18 : vector<4x32xf32>
    %cst_8 = arith.constant dense<0.000000e+00> : vector<16x4xf32>
    %20 = tpu.matmul %11, %19, %cst_8 {dimension_numbers = #tpu.dot_dimension_numbers<[1], [1], [0], [0], [0, 0, 1, 0], [], []>} : vector<16x32xf32>, vector<4x32xf32>, vector<16x4xf32> -> vector<16x4xf32>
    %cst_9 = arith.constant 6.000000e+00 : f32
    %21 = vector.broadcast %cst_9 : f32 to vector<16x4xf32>
    %22 = arith.mulf %21, %20 : vector<16x4xf32>
    %c0_10 = arith.constant 0 : index
    %c0_11 = arith.constant 0 : index
    %c0_12 = arith.constant 0 : index
    %23 = vector.load %arg3[%c0_10, %c0_11, %c0_12] : memref<1x16x4xf32, #tpu.memory_space<vmem>>, vector<1x16x4xf32>
    %24 = vector.shape_cast %23 : vector<1x16x4xf32> to vector<16x4xf32>
    %25 = vector.shape_cast %22 : vector<16x4xf32> to vector<1x16x4xf32>
    tpu.vector_store %arg3[%c0_10, %c0_11, %c0_12], %25 {strides = array<i32>} : memref<1x16x4xf32, #tpu.memory_space<vmem>>, vector<1x16x4xf32>,
    return
  }
  func.func @transform_0(%arg0: i32) -> (i32, i32, i32) {
    %c0_i32 = arith.constant 0 : i32
    %c0_i32_0 = arith.constant 0 : i32
    %c0_i32_1 = arith.constant 0 : i32
    return %arg0, %c0_i32, %c0_i32_0 : i32, i32, i32
  }
  func.func @transform_1(%arg0: i32) -> (i32, i32, i32) {
    %c0_i32 = arith.constant 0 : i32
    %c0_i32_0 = arith.constant 0 : i32
    %c0_i32_1 = arith.constant 0 : i32
    return %arg0, %c0_i32, %c0_i32_0 : i32, i32, i32
  }
  func.func @transform_2(%arg0: i32) -> (i32, i32, i32) {
    %c0_i32 = arith.constant 0 : i32
    %c0_i32_0 = arith.constant 0 : i32
    %c0_i32_1 = arith.constant 0 : i32
    return %arg0, %c0_i32, %c0_i32_0 : i32, i32, i32
  }
}

module attributes {stable_mosaic.version = 11 : i64} {
  func.func @_mlp_kernel(%arg0: memref<32x64xf32, #tpu.memory_space<vmem>>, %arg1: memref<64x32xf32, #tpu.memory_space<vmem>>, %arg2: memref<1x32xf32, #tpu.memory_space<vmem>>, %arg3: memref<32x32xf32, #tpu.memory_space<vmem>>, %arg4: memref<1x32xf32, #tpu.memory_space<vmem>>, %arg5: memref<32x32xf32, #tpu.memory_space<vmem>>) attributes {dimension_semantics = [], scalar_prefetch = 0 : i64, scratch_operands = 0 : i64, tpu.core_type = #tpu.core_type<tc>} {
    %c0 = arith.constant 0 : index
    %c0_0 = arith.constant 0 : index
    %0 = vector.load %arg0[%c0, %c0_0] : memref<32x64xf32, #tpu.memory_space<vmem>>, vector<32x64xf32>
    %c0_1 = arith.constant 0 : index
    %c0_2 = arith.constant 0 : index
    %1 = vector.load %arg1[%c0_1, %c0_2] : memref<64x32xf32, #tpu.memory_space<vmem>>, vector<64x32xf32>
    %c0_3 = arith.constant 0 : index
    %c0_4 = arith.constant 0 : index
    %2 = vector.load %arg2[%c0_3, %c0_4] : memref<1x32xf32, #tpu.memory_space<vmem>>, vector<1x32xf32>
    %cst = arith.constant dense<0.000000e+00> : vector<32x32xf32>
    %3 = tpu.matmul %0, %1, %cst {dimension_numbers = #tpu.dot_dimension_numbers<[1], [0], [0], [1], [0, 0, 1, 1], [], []>} : vector<32x64xf32>, vector<64x32xf32>, vector<32x32xf32> -> vector<32x32xf32>
    %4 = vector.broadcast %2 : vector<1x32xf32> to vector<32x32xf32>
    %5 = arith.addf %3, %4 : vector<32x32xf32>
    %cst_5 = arith.constant 0.000000e+00 : f32
    %6 = vector.broadcast %cst_5 : f32 to vector<32x32xf32>
    %7 = arith.maximumf %5, %6 : vector<32x32xf32>
    %c0_6 = arith.constant 0 : index
    %c0_7 = arith.constant 0 : index
    %8 = vector.load %arg3[%c0_6, %c0_7] : memref<32x32xf32, #tpu.memory_space<vmem>>, vector<32x32xf32>
    %c0_8 = arith.constant 0 : index
    %c0_9 = arith.constant 0 : index
    %9 = vector.load %arg4[%c0_8, %c0_9] : memref<1x32xf32, #tpu.memory_space<vmem>>, vector<1x32xf32>
    %cst_10 = arith.constant dense<0.000000e+00> : vector<32x32xf32>
    %10 = tpu.matmul %7, %8, %cst_10 {dimension_numbers = #tpu.dot_dimension_numbers<[1], [0], [0], [1], [0, 0, 1, 1], [], []>} : vector<32x32xf32>, vector<32x32xf32>, vector<32x32xf32> -> vector<32x32xf32>
    %11 = vector.broadcast %9 : vector<1x32xf32> to vector<32x32xf32>
    %12 = arith.addf %10, %11 : vector<32x32xf32>
    %c0_11 = arith.constant 0 : index
    %c0_12 = arith.constant 0 : index
    %13 = vector.load %arg5[%c0_11, %c0_12] : memref<32x32xf32, #tpu.memory_space<vmem>>, vector<32x32xf32>
    tpu.vector_store %arg5[%c0_11, %c0_12], %12 {strides = array<i32>} : memref<32x32xf32, #tpu.memory_space<vmem>>, vector<32x32xf32>,
    return
  }
}

</mosaic_0001>

<llo_original>
// kernel: analogical_networks_forward.42
$region0: #{analogical_networks_forward.42}
  #allocation0 [shape = 'u32[]', space=smem, size = 0x4, offset = 0x4, fixed_abs, tag = 'smem constant byte address 0x4 - core index']
  #allocation1 [shape = 'u32[144,128]{1,0:T(1,128)}', space=vmem, size = 0x12000, scoped, tag = 'internal scratch']
  %s0 = inlined_call_operand.vmem [shape: f32[8,3], index: 0, kind: input, shape index: {}]
  %s1 = inlined_call_operand.vmem [shape: f32[3,32], index: 1, kind: input, shape index: {}]
  %s2 = inlined_call_operand.vmem [shape: f32[1,32], index: 2, kind: input, shape index: {}]
  %s3 = inlined_call_operand.vmem [shape: f32[32,32], index: 3, kind: input, shape index: {}]
  %s4 = inlined_call_operand.vmem [shape: f32[1,32], index: 4, kind: input, shape index: {}]
  %s5 = inlined_call_operand.vmem [shape: f32[8,32], index: 5, kind: output, shape index: {}]
  %s6 = sld [smem:[#allocation0]]
  $region30: #{analogical_networks_forward.42} parent=0
    _
  %s8 = ssub.s32 1, %s6
  %s9 = scalar_select 0, %s8, %s6
  // Predicated region
  $region2: #{analogical_networks_forward.42} parent=0 // pred_check
    _
  $region3: #{analogical_networks_forward.42} parent=0 // pred_check_branch
    %11 = sbr.rel (0) target = $region5
  $region4: #{analogical_networks_forward.42} parent=0 // pred_region
    _
  $region5: #{analogical_networks_forward.42} parent=0 // pred_fallthru
    _
  // Predicated region
  $region6: #{analogical_networks_forward.42} parent=0 // pred_check
    _
  $region7: #{analogical_networks_forward.42} parent=0 // pred_check_branch
    %13 = sbr.rel (0) target = $region9
  $region8: #{analogical_networks_forward.42} parent=0 // pred_region
    _
  $region9: #{analogical_networks_forward.42} parent=0 // pred_fallthru
    _
  // Predicated region
  $region10: #{analogical_networks_forward.42} parent=0 // pred_check
    _
  $region11: #{analogical_networks_forward.42} parent=0 // pred_check_branch
    %15 = sbr.rel (0) target = $region13
  $region12: #{analogical_networks_forward.42} parent=0 // pred_region
    _
  $region13: #{analogical_networks_forward.42} parent=0 // pred_fallthru
    _
  // Predicated region
  $region14: #{analogical_networks_forward.42} parent=0 // pred_check
    _
  $region15: #{analogical_networks_forward.42} parent=0 // pred_check_branch
    %17 = sbr.rel (0) target = $region17
  $region16: #{analogical_networks_forward.42} parent=0 // pred_region
    _
  $region17: #{analogical_networks_forward.42} parent=0 // pred_fallthru
    _
  // Predicated region
  $region18: #{analogical_networks_forward.42} parent=0 // pred_check
    _
  $region19: #{analogical_networks_forward.42} parent=0 // pred_check_branch
    %19 = sbr.rel (0) target = $region21
  $region20: #{analogical_networks_forward.42} parent=0 // pred_region
    _
  $region21: #{analogical_networks_forward.42} parent=0 // pred_fallthru
    _
  %v20 = vld [vmem:[%s0] sm:$0xff]
  %v21 = vld [vmem:[%s1] sm:$0x7]
  %v22 = vld [vmem:[%s2] sm:$0x1]
  %v24 = vlaneseq
  %v25 = vshrl.u32 %v24, 7
  %v26 = vsub.s32 0, %v25
  %v27 = vrot.slane %v22, %v26
  %vm29 = vcmask 23552
  %v31 = vsel %vm29, %v20, 0
  %vm33 = vcmask 1042432
  %v35 = vsel %vm33, %v21, 0
  %37 = vmatprep.subr.mxu0 0.0
  %38 = vmatpush1.msra.mxu0 %v35
  %39 = vmatprep.subr.mxu0 0.0
  %40 = vmatpush1.msra.mxu0 0.0
  %41 = vmatprep.subr.mxu0 0.0
  %42 = vmatpush1.msra.mxu0 0.0
  %43 = vmatprep.subr.mxu0 0.0
  %44 = vmatpush1.msra.mxu0 0.0
  %45 = vmatprep.subr.mxu0 0.0
  %46 = vmatpush1.msra.mxu0 0.0
  %47 = vmatprep.subr.mxu0 0.0
  %48 = vmatpush1.msra.mxu0 0.0
  %49 = vmatprep.subr.mxu0 0.0
  %50 = vmatpush1.msra.mxu0 0.0
  %51 = vmatprep.subr.mxu0 0.0
  %52 = vmatpush1.msra.mxu0 0.0
  %53 = vmatprep.subr.mxu0 0.0
  %54 = vmatpush1.msra.mxu0 0.0
  %55 = vmatprep.subr.mxu0 0.0
  %56 = vmatpush1.msra.mxu0 0.0
  %57 = vmatprep.subr.mxu0 0.0
  %58 = vmatpush1.msra.mxu0 0.0
  %59 = vmatprep.subr.mxu0 0.0
  %60 = vmatpush1.msra.mxu0 0.0
  %61 = vmatprep.subr.mxu0 0.0
  %62 = vmatpush1.msra.mxu0 0.0
  %63 = vmatprep.subr.mxu0 0.0
  %64 = vmatpush1.msra.mxu0 0.0
  %65 = vmatprep.subr.mxu0 0.0
  %66 = vmatpush1.msra.mxu0 0.0
  %67 = vmatprep.subr.mxu0 0.0
  %68 = vmatpush1.msra.mxu0 0.0
  %69 = vmatprep.subr.mxu0 0.0
  %70 = vmatpush1.msra.mxu0 0.0
  %71 = vmatprep.subr.mxu0 0.0
  %72 = vmatpush1.msra.mxu0 0.0
  %73 = vmatprep.subr.mxu0 0.0
  %74 = vmatpush1.msra.mxu0 0.0
  %75 = vmatprep.subr.mxu0 0.0
  %76 = vmatpush1.msra.mxu0 0.0
  %77 = vmatprep.subr.mxu0 0.0
  %78 = vmatpush1.msra.mxu0 0.0
  %79 = vmatprep.subr.mxu0 0.0
  %80 = vmatpush1.msra.mxu0 0.0
  %81 = vmatprep.subr.mxu0 0.0
  %82 = vmatpush1.msra.mxu0 0.0
  %83 = vmatprep.subr.mxu0 0.0
  %84 = vmatpush1.msra.mxu0 0.0
  %85 = vmatprep.subr.mxu0 0.0
  %86 = vmatpush1.msra.mxu0 0.0
  %87 = vmatprep.subr.mxu0 0.0
  %88 = vmatpush1.msra.mxu0 0.0
  %89 = vmatprep.subr.mxu0 0.0
  %90 = vmatpush1.msra.mxu0 0.0
  %91 = vmatprep.subr.mxu0 0.0
  %92 = vmatpush1.msra.mxu0 0.0
  %93 = vmatprep.subr.mxu0 0.0
  %94 = vmatpush1.msra.mxu0 0.0
  %95 = vmatprep.subr.mxu0 0.0
  %96 = vmatpush1.msra.mxu0 0.0
  %97 = vmatprep.subr.mxu0 0.0
  %98 = vmatpush1.msra.mxu0 0.0
  %99 = vmatprep.subr.mxu0 0.0
  %100 = vmatpush1.msra.mxu0 0.0
  %101 = vmatprep.mubr.f32.mxu0 0.0
  %102 = vmatmul.mubr.f32.gmra.mrb[0].mxu0 %v31
  %v103 = vpop.f32.mrb[0].mxu0
  %v104 = vadd.f32 %v27, %v103
  %v105 = vpop.f32.mrb[0].mxu0
  %106 = vdwg.mxu0
  %v107 = vmax.f32 %v104, 0.0
  %v108 = vld [vmem:[%s3] sm:$0xff]
  %v109 = vld [vmem:[%s3 + $0x8] sm:$0xff]
  %v110 = vld [vmem:[%s3 + $0x10] sm:$0xff]
  %v111 = vld [vmem:[%s3 + $0x18] sm:$0xff]
  %v112 = vld [vmem:[%s4] sm:$0x1]
  %v114 = vlaneseq
  %v115 = vshrl.u32 %v114, 7
  %v116 = vsub.s32 0, %v115
  %v117 = vrot.slane %v112, %v116
  %vm119 = vcmask 261120
  %v121 = vsel %vm119, %v107, 0
  %123 = vmatprep.subr.mxu0 0.0
  %124 = vmatpush1.msra.mxu0 %v108
  %125 = vmatprep.subr.mxu0 0.0
  %126 = vmatpush1.msra.mxu0 %v109
  %127 = vmatprep.subr.mxu0 0.0
  %128 = vmatpush1.msra.mxu0 %v110
  %129 = vmatprep.subr.mxu0 0.0
  %130 = vmatpush1.msra.mxu0 %v111
  %131 = vmatprep.subr.mxu0 0.0
  %132 = vmatpush1.msra.mxu0 0.0
  %133 = vmatprep.subr.mxu0 0.0
  %134 = vmatpush1.msra.mxu0 0.0
  %135 = vmatprep.subr.mxu0 0.0
  %136 = vmatpush1.msra.mxu0 0.0
  %137 = vmatprep.subr.mxu0 0.0
  %138 = vmatpush1.msra.mxu0 0.0
  %139 = vmatprep.subr.mxu0 0.0
  %140 = vmatpush1.msra.mxu0 0.0
  %141 = vmatprep.subr.mxu0 0.0
  %142 = vmatpush1.msra.mxu0 0.0
  %143 = vmatprep.subr.mxu0 0.0
  %144 = vmatpush1.msra.mxu0 0.0
  %145 = vmatprep.subr.mxu0 0.0
  %146 = vmatpush1.msra.mxu0 0.0
  %147 = vmatprep.subr.mxu0 0.0
  %148 = vmatpush1.msra.mxu0 0.0
  %149 = vmatprep.subr.mxu0 0.0
  %150 = vmatpush1.msra.mxu0 0.0
  %151 = vmatprep.subr.mxu0 0.0
  %152 = vmatpush1.msra.mxu0 0.0
  %153 = vmatprep.subr.mxu0 0.0
  %154 = vmatpush1.msra.mxu0 0.0
  %155 = vmatprep.subr.mxu0 0.0
  %156 = vmatpush1.msra.mxu0 0.0
  %157 = vmatprep.subr.mxu0 0.0
  %158 = vmatpush1.msra.mxu0 0.0
  %159 = vmatprep.subr.mxu0 0.0
  %160 = vmatpush1.msra.mxu0 0.0
  %161 = vmatprep.subr.mxu0 0.0
  %162 = vmatpush1.msra.mxu0 0.0
  %163 = vmatprep.subr.mxu0 0.0
  %164 = vmatpush1.msra.mxu0 0.0
  %165 = vmatprep.subr.mxu0 0.0
  %166 = vmatpush1.msra.mxu0 0.0
  %167 = vmatprep.subr.mxu0 0.0
  %168 = vmatpush1.msra.mxu0 0.0
  %169 = vmatprep.subr.mxu0 0.0
  %170 = vmatpush1.msra.mxu0 0.0
  %171 = vmatprep.subr.mxu0 0.0
  %172 = vmatpush1.msra.mxu0 0.0
  %173 = vmatprep.subr.mxu0 0.0
  %174 = vmatpush1.msra.mxu0 0.0
  %175 = vmatprep.subr.mxu0 0.0
  %176 = vmatpush1.msra.mxu0 0.0
  %177 = vmatprep.subr.mxu0 0.0
  %178 = vmatpush1.msra.mxu0 0.0
  %179 = vmatprep.subr.mxu0 0.0
  %180 = vmatpush1.msra.mxu0 0.0
  %181 = vmatprep.subr.mxu0 0.0
  %182 = vmatpush1.msra.mxu0 0.0
  %183 = vmatprep.subr.mxu0 0.0
  %184 = vmatpush1.msra.mxu0 0.0
  %185 = vmatprep.subr.mxu0 0.0
  %186 = vmatpush1.msra.mxu0 0.0
  %187 = vmatprep.mubr.f32.mxu0 0.0
  %188 = vmatmul.mubr.f32.gmra.mrb[0].mxu0 %v121
  %v189 = vpop.f32.mrb[0].mxu0
  %v190 = vadd.f32 %v117, %v189
  %v191 = vpop.f32.mrb[0].mxu0
  %192 = vdwg.mxu0
  %193 = vst.msk [vmem:[%s5] sm:$0xff] %vm119, %v190
  // Predicated region
  $region22: #{analogical_networks_forward.42} parent=0 // pred_check
    _
  $region23: #{analogical_networks_forward.42} parent=0 // pred_check_branch
    %195 = sbr.rel (0) target = $region25
  $region24: #{analogical_networks_forward.42} parent=0 // pred_region
    _
  $region25: #{analogical_networks_forward.42} parent=0 // pred_fallthru
    _
  // Predicated region
  $region26: #{analogical_networks_forward.42} parent=0 // pred_check
    _
  $region27: #{analogical_networks_forward.42} parent=0 // pred_check_branch
    %197 = sbr.rel (0) target = $region29
  $region28: #{analogical_networks_forward.42} parent=0 // pred_region
    _
  $region29: #{analogical_networks_forward.42} parent=0 // pred_fallthru
    _

// kernel: analogical_networks_forward.41
$region0: #{analogical_networks_forward.41}
  #allocation0 [shape = 'u32[]', space=smem, size = 0x4, offset = 0x4, fixed_abs, tag = 'smem constant byte address 0x4 - core index']
  #allocation1 [shape = 'u32[144,128]{1,0:T(1,128)}', space=vmem, size = 0x12000, scoped, tag = 'internal scratch']
  %s0 = inlined_call_operand.vmem [shape: f32[2,16,4], index: 0, kind: input, shape index: {}]
  %s1 = inlined_call_operand.vmem [shape: f32[2,16,35], index: 1, kind: input, shape index: {}]
  %s2 = inlined_call_operand.vmem [shape: f32[2,4,35], index: 2, kind: output, shape index: {}]
  %s3 = sld [smem:[#allocation0]]
  $region41: #{analogical_networks_forward.41} parent=0
    _
  %s5 = ssub.s32 1, %s3
  %s6 = scalar_select 0, %s5, %s3
  loop: start=0, step=1, limit=4
  $region2: #{analogical_networks_forward.41} parent=0 // loop_pre_header
    _
  $region3: #{analogical_networks_forward.41} parent=0 // loop_header
    %s8 = sphi 0, %s12
    %p9 = scmp.ge.s32.totalorder %s8, 4
    %s18 = sphi 0, %s20
    %s21 = sphi 0, %s18
    %s22 = sphi 0, %s21
    %s38 = sphi 0, %s22
    %s44 = sphi 0, %s46
    %s47 = sphi 0, %s44
    %s48 = sphi 0, %s47
    %s64 = sphi 0, %s48
    %s70 = sphi 0, %s72
    %s73 = sphi 0, %s70
    %s74 = sphi 0, %s73
    %s90 = sphi 0, %s74
  $region4: #{analogical_networks_forward.41} parent=0 // loop_header_branch
    %11 = sbr.rel (%p9) target = $region8
  $region5: #{analogical_networks_forward.41} parent=0 // loop_body
    %s13 = ssub.s32 %s8, 1
    %s14 = ssub.s32 %s8, 2
    %s15 = sadd.s32 %s8, 1
    %s16 = ssub.s32 %s8, %s15
    %p17 = scmp.eq.s32.totalorder %s16, 0
    %s19 = sadd.s32 %s18, 1
    %s20 = scalar_select %p17, %s18, %s19
    %p23 = pneg %p17
    %p24 = scmp.eq.s32.totalorder %s8, 1
    %p25 = por %p23, %p24
    %p26 = scmp.ne.s32.totalorder %s18, %s21
    %p27 = scmp.eq.s32.totalorder %s8, 0
    %p28 = por %p26, %p27
    %p29 = scmp.ne.s32.totalorder %s18, %s21
    %p30 = scmp.eq.s32.totalorder %s13, 1
    %p31 = por %p29, %p30
    %p32 = scmp.ne.s32.totalorder %s21, %s22
    %p33 = scmp.eq.s32.totalorder %s13, 0
    %p34 = por %p32, %p33
    %p35 = scmp.ne.s32.totalorder %s21, %s22
    %p36 = scmp.eq.s32.totalorder %s14, 1
    %p37 = por %p35, %p36
    %p39 = scmp.ne.s32.totalorder %s22, %s38
    %p40 = scmp.eq.s32.totalorder %s14, 0
    %p41 = por %p39, %p40
    %s42 = ssub.s32 %s8, %s15
    %p43 = scmp.eq.s32.totalorder %s42, 0
    %s45 = sadd.s32 %s44, 1
    %s46 = scalar_select %p43, %s44, %s45
    %p49 = pneg %p43
    %p50 = scmp.eq.s32.totalorder %s8, 1
    %p51 = por %p49, %p50
    %p52 = scmp.ne.s32.totalorder %s44, %s47
    %p53 = scmp.eq.s32.totalorder %s8, 0
    %p54 = por %p52, %p53
    %p55 = scmp.ne.s32.totalorder %s44, %s47
    %p56 = scmp.eq.s32.totalorder %s13, 1
    %p57 = por %p55, %p56
    %p58 = scmp.ne.s32.totalorder %s47, %s48
    %p59 = scmp.eq.s32.totalorder %s13, 0
    %p60 = por %p58, %p59
    %p61 = scmp.ne.s32.totalorder %s47, %s48
    %p62 = scmp.eq.s32.totalorder %s14, 1
    %p63 = por %p61, %p62
    %p65 = scmp.ne.s32.totalorder %s48, %s64
    %p66 = scmp.eq.s32.totalorder %s14, 0
    %p67 = por %p65, %p66
    %s68 = ssub.s32 %s8, %s15
    %p69 = scmp.eq.s32.totalorder %s68, 0
    %s71 = sadd.s32 %s70, 1
    %s72 = scalar_select %p69, %s70, %s71
    %p75 = pneg %p69
    %p76 = scmp.eq.s32.totalorder %s8, 1
    %p77 = por %p75, %p76
    %p78 = scmp.ne.s32.totalorder %s70, %s73
    %p79 = scmp.eq.s32.totalorder %s8, 0
    %p80 = por %p78, %p79
    %p81 = scmp.ne.s32.totalorder %s70, %s73
    %p82 = scmp.eq.s32.totalorder %s13, 1
    %p83 = por %p81, %p82
    %p84 = scmp.ne.s32.totalorder %s73, %s74
    %p85 = scmp.eq.s32.totalorder %s13, 0
    %p86 = por %p84, %p85
    %p87 = scmp.ne.s32.totalorder %s73, %s74
    %p88 = scmp.eq.s32.totalorder %s14, 1
    %p89 = por %p87, %p88
    %p91 = scmp.ne.s32.totalorder %s74, %s90
    %p92 = scmp.eq.s32.totalorder %s14, 0
    %p93 = por %p91, %p92
    %p94 = scmp.le.s32.totalorder 1, %s8
    %p95 = scmp.lt.s32.totalorder %s8, 3
    %p96 = pnand %p94, %p95
    %p97 = pneg %p96
    // Predicated region
    $region9: #{analogical_networks_forward.41} parent=5 // pred_check
      _
    $region10: #{analogical_networks_forward.41} parent=5 // pred_check_branch
      %99 = sbr.rel (%p96) target = $region12
    $region11: #{analogical_networks_forward.41} parent=5 // pred_region
      %s100 = ssub.s32 %s8, 1
    $region12: #{analogical_networks_forward.41} parent=5 // pred_fallthru
      _
    %p101 = scmp.lt.s32.totalorder %s8, 2
    // Predicated region
    $region13: #{analogical_networks_forward.41} parent=5 // pred_check
      %p102 = pneg %p101
    $region14: #{analogical_networks_forward.41} parent=5 // pred_check_branch
      %104 = sbr.rel (%p102) target = $region16
    $region15: #{analogical_networks_forward.41} parent=5 // pred_region
      // Predicated region
      $region17: #{analogical_networks_forward.41} parent=15 // pred_check
        %p105 = pneg %p28
      $region18: #{analogical_networks_forward.41} parent=15 // pred_check_branch
        %107 = sbr.rel (%p105) target = $region20
      $region19: #{analogical_networks_forward.41} parent=15 // pred_region
        %p108 = scmp.lt.s32.totalorder %s8, 1
        %s109 = scalar_select %p108, %s8, 1
        %s110 = smul.addr %s109, 2
        %s111 = smul.addr %s110, 8
        %s112 = scalar_lea.vmem %s0, %s111
      $region20: #{analogical_networks_forward.41} parent=15 // pred_fallthru
        _
      // Predicated region
      $region21: #{analogical_networks_forward.41} parent=15 // pred_check
        %p113 = pneg %p54
      $region22: #{analogical_networks_forward.41} parent=15 // pred_check_branch
        %115 = sbr.rel (%p113) target = $region24
      $region23: #{analogical_networks_forward.41} parent=15 // pred_region
        %p116 = scmp.lt.s32.totalorder %s8, 1
        %s117 = scalar_select %p116, %s8, 1
        %s118 = smul.addr %s117, 2
        %s119 = smul.addr %s118, 8
        %s120 = scalar_lea.vmem %s1, %s119
      $region24: #{analogical_networks_forward.41} parent=15 // pred_fallthru
        _
    $region16: #{analogical_networks_forward.41} parent=5 // pred_fallthru
      _
    %p121 = scmp.le.s32.totalorder 1, %s8
    %p122 = scmp.lt.s32.totalorder %s8, 3
    %p123 = pnand %p121, %p122
    %p124 = pneg %p123
    // Predicated region
    $region25: #{analogical_networks_forward.41} parent=5 // pred_check
      _
    $region26: #{analogical_networks_forward.41} parent=5 // pred_check_branch
      %126 = sbr.rel (%p123) target = $region28
    $region27: #{analogical_networks_forward.41} parent=5 // pred_region
      %s127 = ssub.s32 %s8, 1
      %p128 = scmp.lt.s32.totalorder %s13, 1
      %s129 = scalar_select %p128, %s13, 1
      %s130 = smul.addr %s129, 2
      %s131 = smul.addr %s130, 8
      %s132 = scalar_lea.vmem %s0, %s131
      %p133 = pneg %p34
      %p134 = pneg %p31
      %p135 = scmp.lt.s32.totalorder %s13, 1
      %s136 = scalar_select %p135, %s13, 1
      %s137 = smul.addr %s136, 2
      %s138 = smul.addr %s137, 8
      %s139 = scalar_lea.vmem %s1, %s138
      %p140 = pneg %p60
      %p141 = pneg %p57
      %p142 = pneg %p86
      %p143 = pneg %p83
      %p144 = scmp.lt.s32.totalorder %s13, 1
      %s145 = scalar_select %p144, %s13, 1
      %s146 = smul.addr %s145, 4
      %s147 = scalar_lea.vmem %s2, %s146
      %p148 = scmp.lt.s32.totalorder %s13, 1
      %s149 = scalar_select %p148, %s13, 1
      %s150 = smul.addr %s149, 2
      %s151 = smul.addr %s150, 8
      %s152 = scalar_lea.vmem %s0, %s151
      %p153 = scmp.lt.s32.totalorder %s13, 1
      %s154 = scalar_select %p153, %s13, 1
      %s155 = smul.addr %s154, 2
      %s156 = smul.addr %s155, 8
      %s157 = scalar_lea.vmem %s1, %s156
      %p158 = scmp.lt.s32.totalorder %s13, 1
      %s159 = scalar_select %p158, %s13, 1
      %s160 = smul.addr %s159, 4
      %s161 = scalar_lea.vmem %s2, %s160
      %v162 = vld [vmem:[%s152] sm:$0xff]
      %v163 = vld [vmem:[%s152 + $0x8] sm:$0xff]
      %v164 = vld [vmem:[%s157] sm:$0xff]
      %v165 = vld [vmem:[%s157 + $0x8] sm:$0xff]
      %166 = vxpose.xlu0.b32.start [1/16] %v162, 128
      %167 = vxpose.xlu0.b32.cont [2/16] %v163, 128
      %168 = vxpose.xlu0.b32.cont [3/16] 0.0, 128
      %169 = vxpose.xlu0.b32.cont [4/16] 0.0, 128
      %170 = vxpose.xlu0.b32.cont [5/16] 0.0, 128
      %171 = vxpose.xlu0.b32.cont [6/16] 0.0, 128
      %172 = vxpose.xlu0.b32.cont [7/16] 0.0, 128
      %173 = vxpose.xlu0.b32.cont [8/16] 0.0, 128
      %174 = vxpose.xlu0.b32.cont [9/16] 0.0, 128
      %175 = vxpose.xlu0.b32.cont [10/16] 0.0, 128
      %176 = vxpose.xlu0.b32.cont [11/16] 0.0, 128
      %177 = vxpose.xlu0.b32.cont [12/16] 0.0, 128
      %178 = vxpose.xlu0.b32.cont [13/16] 0.0, 128
      %179 = vxpose.xlu0.b32.cont [14/16] 0.0, 128
      %180 = vxpose.xlu0.b32.cont [15/16] 0.0, 128
      %181 = vxpose.xlu0.b32.end [16/16] 0.0, 128
      %v182 = vpop.trf.xlu0
      %v183 = vpop.trf.xlu0
      %v184 = vpop.trf.xlu0
      %v185 = vpop.trf.xlu0
      %v186 = vpop.trf.xlu0
      %v187 = vpop.trf.xlu0
      %v188 = vpop.trf.xlu0
      %v189 = vpop.trf.xlu0
      %v190 = vpop.trf.xlu0
      %v191 = vpop.trf.xlu0
      %v192 = vpop.trf.xlu0
      %v193 = vpop.trf.xlu0
      %v194 = vpop.trf.xlu0
      %v195 = vpop.trf.xlu0
      %v196 = vpop.trf.xlu0
      %v197 = vpop.trf.xlu0
      %vm198 = vcmask 130048
      %v200 = vsel %vm198, %v182, 0
      %202 = vmatprep.subr.mxu0 0.0
      %203 = vmatpush1.msra.mxu0 %v164
      %204 = vmatprep.subr.mxu0 0.0
      %205 = vmatpush1.msra.mxu0 %v165
      %206 = vmatprep.subr.mxu0 0.0
      %207 = vmatpush1.msra.mxu0 0.0
      %208 = vmatprep.subr.mxu0 0.0
      %209 = vmatpush1.msra.mxu0 0.0
      %210 = vmatprep.subr.mxu0 0.0
      %211 = vmatpush1.msra.mxu0 0.0
      %212 = vmatprep.subr.mxu0 0.0
      %213 = vmatpush1.msra.mxu0 0.0
      %214 = vmatprep.subr.mxu0 0.0
      %215 = vmatpush1.msra.mxu0 0.0
      %216 = vmatprep.subr.mxu0 0.0
      %217 = vmatpush1.msra.mxu0 0.0
      %218 = vmatprep.subr.mxu0 0.0
      %219 = vmatpush1.msra.mxu0 0.0
      %220 = vmatprep.subr.mxu0 0.0
      %221 = vmatpush1.msra.mxu0 0.0
      %222 = vmatprep.subr.mxu0 0.0
      %223 = vmatpush1.msra.mxu0 0.0
      %224 = vmatprep.subr.mxu0 0.0
      %225 = vmatpush1.msra.mxu0 0.0
      %226 = vmatprep.subr.mxu0 0.0
      %227 = vmatpush1.msra.mxu0 0.0
      %228 = vmatprep.subr.mxu0 0.0
      %229 = vmatpush1.msra.mxu0 0.0
      %230 = vmatprep.subr.mxu0 0.0
      %231 = vmatpush1.msra.mxu0 0.0
      %232 = vmatprep.subr.mxu0 0.0
      %233 = vmatpush1.msra.mxu0 0.0
      %234 = vmatprep.subr.mxu0 0.0
      %235 = vmatpush1.msra.mxu0 0.0
      %236 = vmatprep.subr.mxu0 0.0
      %237 = vmatpush1.msra.mxu0 0.0
      %238 = vmatprep.subr.mxu0 0.0
      %239 = vmatpush1.msra.mxu0 0.0
      %240 = vmatprep.subr.mxu0 0.0
      %241 = vmatpush1.msra.mxu0 0.0
      %242 = vmatprep.subr.mxu0 0.0
      %243 = vmatpush1.msra.mxu0 0.0
      %244 = vmatprep.subr.mxu0 0.0
      %245 = vmatpush1.msra.mxu0 0.0
      %246 = vmatprep.subr.mxu0 0.0
      %247 = vmatpush1.msra.mxu0 0.0
      %248 = vmatprep.subr.mxu0 0.0
      %249 = vmatpush1.msra.mxu0 0.0
      %250 = vmatprep.subr.mxu0 0.0
      %251 = vmatpush1.msra.mxu0 0.0
      %252 = vmatprep.subr.mxu0 0.0
      %253 = vmatpush1.msra.mxu0 0.0
      %254 = vmatprep.subr.mxu0 0.0
      %255 = vmatpush1.msra.mxu0 0.0
      %256 = vmatprep.subr.mxu0 0.0
      %257 = vmatpush1.msra.mxu0 0.0
      %258 = vmatprep.subr.mxu0 0.0
      %259 = vmatpush1.msra.mxu0 0.0
      %260 = vmatprep.subr.mxu0 0.0
      %261 = vmatpush1.msra.mxu0 0.0
      %262 = vmatprep.subr.mxu0 0.0
      %263 = vmatpush1.msra.mxu0 0.0
      %264 = vmatprep.subr.mxu0 0.0
      %265 = vmatpush1.msra.mxu0 0.0
      %266 = vmatprep.mubr.f32.mxu0 0.0
      %267 = vmatmul.mubr.f32.gmra.mrb[0].mxu0 %v200
      %v268 = vpop.f32.mrb[0].mxu0
      %v269 = vadd.f32 0.0, %v268
      %v270 = vpop.f32.mrb[0].mxu0
      %271 = vdwg.mxu0
      %vm272 = vcmask 31744
      %v273 = vsel %vm272, %v162, 0.0
      %v274 = vsel %vm272, %v163, 0.0
      %v275 = vadd.f32 %v273, %v274
      %v276 = vrot.slane %v275, 4
      %v277 = vadd.f32 %v275, %v276
      %v278 = vrot.slane %v277, 2
      %v279 = vadd.f32 %v277, %v278
      %v280 = vrot.slane %v279, 1
      %v281 = vadd.f32 %v279, %v280
      %283 = vbcast.lane.b32.xlu0 %v281, 256
      %v284 = vpop.permute.xlu0 %283
      %v285 = vadd.f32 %v284, 1e-08
      %v286 = vrcp.pop %v285
      %v287 = vmul.f32 %v269, %v286
      %vm288 = vcmask 281600
      %289 = vst.msk [vmem:[%s161] sm:$0xf] %vm288, %v287
      %p290 = scmp.lt.s32.totalorder %s13, 1
      %s291 = scalar_select %p290, %s13, 1
      %s292 = smul.addr %s291, 4
      %s293 = scalar_lea.vmem %s2, %s292
      // Predicated region
      $region29: #{analogical_networks_forward.41} parent=27 // pred_check
        %p294 = pneg %p83
      $region30: #{analogical_networks_forward.41} parent=27 // pred_check_branch
        %296 = sbr.rel (%p294) target = $region32
      $region31: #{analogical_networks_forward.41} parent=27 // pred_region
        _
      $region32: #{analogical_networks_forward.41} parent=27 // pred_fallthru
        _
    $region28: #{analogical_networks_forward.41} parent=5 // pred_fallthru
      _
    %p297 = scmp.le.s32.totalorder 2, %s8
    // Predicated region
    $region33: #{analogical_networks_forward.41} parent=5 // pred_check
      %p298 = pneg %p297
    $region34: #{analogical_networks_forward.41} parent=5 // pred_check_branch
      %300 = sbr.rel (%p298) target = $region36
    $region35: #{analogical_networks_forward.41} parent=5 // pred_region
      %s301 = ssub.s32 %s8, 2
      // Predicated region
      $region37: #{analogical_networks_forward.41} parent=35 // pred_check
        %p302 = pneg %p89
      $region38: #{analogical_networks_forward.41} parent=35 // pred_check_branch
        %304 = sbr.rel (%p302) target = $region40
      $region39: #{analogical_networks_forward.41} parent=35 // pred_region
        %p305 = scmp.lt.s32.totalorder %s14, 1
        %s306 = scalar_select %p305, %s14, 1
        %s307 = smul.addr %s306, 4
        %s308 = scalar_lea.vmem %s2, %s307
      $region40: #{analogical_networks_forward.41} parent=35 // pred_fallthru
        _
    $region36: #{analogical_networks_forward.41} parent=5 // pred_fallthru
      _
  $region6: #{analogical_networks_forward.41} parent=0 // loop_footer
    %s12 = sadd.s32 1, %s8
  $region7: #{analogical_networks_forward.41} parent=0 // loop_footer_branch
    %7 = sbr.rel target = $region3
  $region8: #{analogical_networks_forward.41} parent=0 // loop_exit
    _

// kernel: analogical_networks_forward.40
$region0: #{analogical_networks_forward.40}
  #allocation0 [shape = 'u32[]', space=smem, size = 0x4, offset = 0x4, fixed_abs, tag = 'smem constant byte address 0x4 - core index']
  #allocation1 [shape = 'u32[144,128]{1,0:T(1,128)}', space=vmem, size = 0x12000, scoped, tag = 'internal scratch']
  %s0 = inlined_call_operand.vmem [shape: f32[32,3], index: 0, kind: input, shape index: {}]
  %s1 = inlined_call_operand.vmem [shape: f32[3,64], index: 1, kind: input, shape index: {}]
  %s2 = inlined_call_operand.vmem [shape: f32[1,64], index: 2, kind: input, shape index: {}]
  %s3 = inlined_call_operand.vmem [shape: f32[64,32], index: 3, kind: input, shape index: {}]
  %s4 = inlined_call_operand.vmem [shape: f32[1,32], index: 4, kind: input, shape index: {}]
  %s5 = inlined_call_operand.vmem [shape: f32[32,32], index: 5, kind: output, shape index: {}]
  %s6 = sld [smem:[#allocation0]]
  $region30: #{analogical_networks_forward.40} parent=0
    _
  %s8 = ssub.s32 1, %s6
  %s9 = scalar_select 0, %s8, %s6
  // Predicated region
  $region2: #{analogical_networks_forward.40} parent=0 // pred_check
    _
  $region3: #{analogical_networks_forward.40} parent=0 // pred_check_branch
    %11 = sbr.rel (0) target = $region5
  $region4: #{analogical_networks_forward.40} parent=0 // pred_region
    _
  $region5: #{analogical_networks_forward.40} parent=0 // pred_fallthru
    _
  // Predicated region
  $region6: #{analogical_networks_forward.40} parent=0 // pred_check
    _
  $region7: #{analogical_networks_forward.40} parent=0 // pred_check_branch
    %13 = sbr.rel (0) target = $region9
  $region8: #{analogical_networks_forward.40} parent=0 // pred_region
    _
  $region9: #{analogical_networks_forward.40} parent=0 // pred_fallthru
    _
  // Predicated region
  $region10: #{analogical_networks_forward.40} parent=0 // pred_check
    _
  $region11: #{analogical_networks_forward.40} parent=0 // pred_check_branch
    %15 = sbr.rel (0) target = $region13
  $region12: #{analogical_networks_forward.40} parent=0 // pred_region
    _
  $region13: #{analogical_networks_forward.40} parent=0 // pred_fallthru
    _
  // Predicated region
  $region14: #{analogical_networks_forward.40} parent=0 // pred_check
    _
  $region15: #{analogical_networks_forward.40} parent=0 // pred_check_branch
    %17 = sbr.rel (0) target = $region17
  $region16: #{analogical_networks_forward.40} parent=0 // pred_region
    _
  $region17: #{analogical_networks_forward.40} parent=0 // pred_fallthru
    _
  // Predicated region
  $region18: #{analogical_networks_forward.40} parent=0 // pred_check
    _
  $region19: #{analogical_networks_forward.40} parent=0 // pred_check_branch
    %19 = sbr.rel (0) target = $region21
  $region20: #{analogical_networks_forward.40} parent=0 // pred_region
    _
  $region21: #{analogical_networks_forward.40} parent=0 // pred_fallthru
    _
  %v20 = vld [vmem:[%s0] sm:$0xff]
  %v21 = vld [vmem:[%s0 + $0x8] sm:$0xff]
  %v22 = vld [vmem:[%s0 + $0x10] sm:$0xff]
  %v23 = vld [vmem:[%s0 + $0x18] sm:$0xff]
  %v24 = vld [vmem:[%s1] sm:$0x7]
  %v25 = vld [vmem:[%s2] sm:$0x1]
  %v27 = vlaneseq
  %v28 = vshrl.u32 %v27, 7
  %v29 = vsub.s32 0, %v28
  %v30 = vrot.slane %v25, %v29
  %vm32 = vcmask 23552
  %v34 = vsel %vm32, %v20, 0
  %v37 = vsel %vm32, %v21, 0
  %v40 = vsel %vm32, %v22, 0
  %v43 = vsel %vm32, %v23, 0
  %vm45 = vcmask 1042432
  %v47 = vsel %vm45, %v24, 0
  %49 = vmatprep.subr.mxu0 0.0
  %50 = vmatpush1.msra.mxu0 %v47
  %51 = vmatprep.subr.mxu0 0.0
  %52 = vmatpush1.msra.mxu0 0.0
  %53 = vmatprep.subr.mxu0 0.0
  %54 = vmatpush1.msra.mxu0 0.0
  %55 = vmatprep.subr.mxu0 0.0
  %56 = vmatpush1.msra.mxu0 0.0
  %57 = vmatprep.subr.mxu0 0.0
  %58 = vmatpush1.msra.mxu0 0.0
  %59 = vmatprep.subr.mxu0 0.0
  %60 = vmatpush1.msra.mxu0 0.0
  %61 = vmatprep.subr.mxu0 0.0
  %62 = vmatpush1.msra.mxu0 0.0
  %63 = vmatprep.subr.mxu0 0.0
  %64 = vmatpush1.msra.mxu0 0.0
  %65 = vmatprep.subr.mxu0 0.0
  %66 = vmatpush1.msra.mxu0 0.0
  %67 = vmatprep.subr.mxu0 0.0
  %68 = vmatpush1.msra.mxu0 0.0
  %69 = vmatprep.subr.mxu0 0.0
  %70 = vmatpush1.msra.mxu0 0.0
  %71 = vmatprep.subr.mxu0 0.0
  %72 = vmatpush1.msra.mxu0 0.0
  %73 = vmatprep.subr.mxu0 0.0
  %74 = vmatpush1.msra.mxu0 0.0
  %75 = vmatprep.subr.mxu0 0.0
  %76 = vmatpush1.msra.mxu0 0.0
  %77 = vmatprep.subr.mxu0 0.0
  %78 = vmatpush1.msra.mxu0 0.0
  %79 = vmatprep.subr.mxu0 0.0
  %80 = vmatpush1.msra.mxu0 0.0
  %81 = vmatprep.subr.mxu0 0.0
  %82 = vmatpush1.msra.mxu0 0.0
  %83 = vmatprep.subr.mxu0 0.0
  %84 = vmatpush1.msra.mxu0 0.0
  %85 = vmatprep.subr.mxu0 0.0
  %86 = vmatpush1.msra.mxu0 0.0
  %87 = vmatprep.subr.mxu0 0.0
  %88 = vmatpush1.msra.mxu0 0.0
  %89 = vmatprep.subr.mxu0 0.0
  %90 = vmatpush1.msra.mxu0 0.0
  %91 = vmatprep.subr.mxu0 0.0
  %92 = vmatpush1.msra.mxu0 0.0
  %93 = vmatprep.subr.mxu0 0.0
  %94 = vmatpush1.msra.mxu0 0.0
  %95 = vmatprep.subr.mxu0 0.0
  %96 = vmatpush1.msra.mxu0 0.0
  %97 = vmatprep.subr.mxu0 0.0
  %98 = vmatpush1.msra.mxu0 0.0
  %99 = vmatprep.subr.mxu0 0.0
  %100 = vmatpush1.msra.mxu0 0.0
  %101 = vmatprep.subr.mxu0 0.0
  %102 = vmatpush1.msra.mxu0 0.0
  %103 = vmatprep.subr.mxu0 0.0
  %104 = vmatpush1.msra.mxu0 0.0
  %105 = vmatprep.subr.mxu0 0.0
  %106 = vmatpush1.msra.mxu0 0.0
  %107 = vmatprep.subr.mxu0 0.0
  %108 = vmatpush1.msra.mxu0 0.0
  %109 = vmatprep.subr.mxu0 0.0
  %110 = vmatpush1.msra.mxu0 0.0
  %111 = vmatprep.subr.mxu0 0.0
  %112 = vmatpush1.msra.mxu0 0.0
  %113 = vmatprep.mubr.f32.mxu0 0.0
  %114 = vmatmul.mubr.f32.gmra.mrb[0].mxu0 %v34
  %v115 = vpop.f32.mrb[0].mxu0
  %v116 = vadd.f32 %v30, %v115
  %v117 = vpop.f32.mrb[0].mxu0
  %118 = vmatprep.mubr.f32.mxu0 0.0
  %119 = vmatmul.mubr.f32.gmra.mrb[0].mxu0 %v37
  %v120 = vpop.f32.mrb[0].mxu0
  %v121 = vadd.f32 %v30, %v120
  %v122 = vpop.f32.mrb[0].mxu0
  %123 = vmatprep.mubr.f32.mxu0 0.0
  %124 = vmatmul.mubr.f32.gmra.mrb[0].mxu0 %v40
  %v125 = vpop.f32.mrb[0].mxu0
  %v126 = vadd.f32 %v30, %v125
  %v127 = vpop.f32.mrb[0].mxu0
  %128 = vmatprep.mubr.f32.mxu0 0.0
  %129 = vmatmul.mubr.f32.gmra.mrb[0].mxu0 %v43
  %v130 = vpop.f32.mrb[0].mxu0
  %v131 = vadd.f32 %v30, %v130
  %v132 = vpop.f32.mrb[0].mxu0
  %133 = vdwg.mxu0
  %v134 = vmax.f32 %v116, 0.0
  %v135 = vmax.f32 %v121, 0.0
  %v136 = vmax.f32 %v126, 0.0
  %v137 = vmax.f32 %v131, 0.0
  %v138 = vld [vmem:[%s3] sm:$0xff]
  %v139 = vld [vmem:[%s3 + $0x8] sm:$0xff]
  %v140 = vld [vmem:[%s3 + $0x10] sm:$0xff]
  %v141 = vld [vmem:[%s3 + $0x18] sm:$0xff]
  %v142 = vld [vmem:[%s3 + $0x20] sm:$0xff]
  %v143 = vld [vmem:[%s3 + $0x28] sm:$0xff]
  %v144 = vld [vmem:[%s3 + $0x30] sm:$0xff]
  %v145 = vld [vmem:[%s3 + $0x38] sm:$0xff]
  %v146 = vld [vmem:[%s4] sm:$0x1]
  %v148 = vlaneseq
  %v149 = vshrl.u32 %v148, 7
  %v150 = vsub.s32 0, %v149
  %v151 = vrot.slane %v146, %v150
  %vm153 = vcmask 523264
  %v155 = vsel %vm153, %v134, 0
  %v158 = vsel %vm153, %v135, 0
  %v161 = vsel %vm153, %v136, 0
  %v164 = vsel %vm153, %v137, 0
  %166 = vmatprep.subr.mxu0 0.0
  %167 = vmatpush1.msra.mxu0 %v138
  %168 = vmatprep.subr.mxu0 0.0
  %169 = vmatpush1.msra.mxu0 %v139
  %170 = vmatprep.subr.mxu0 0.0
  %171 = vmatpush1.msra.mxu0 %v140
  %172 = vmatprep.subr.mxu0 0.0
  %173 = vmatpush1.msra.mxu0 %v141
  %174 = vmatprep.subr.mxu0 0.0
  %175 = vmatpush1.msra.mxu0 %v142
  %176 = vmatprep.subr.mxu0 0.0
  %177 = vmatpush1.msra.mxu0 %v143
  %178 = vmatprep.subr.mxu0 0.0
  %179 = vmatpush1.msra.mxu0 %v144
  %180 = vmatprep.subr.mxu0 0.0
  %181 = vmatpush1.msra.mxu0 %v145
  %182 = vmatprep.subr.mxu0 0.0
  %183 = vmatpush1.msra.mxu0 0.0
  %184 = vmatprep.subr.mxu0 0.0
  %185 = vmatpush1.msra.mxu0 0.0
  %186 = vmatprep.subr.mxu0 0.0
  %187 = vmatpush1.msra.mxu0 0.0
  %188 = vmatprep.subr.mxu0 0.0
  %189 = vmatpush1.msra.mxu0 0.0
  %190 = vmatprep.subr.mxu0 0.0
  %191 = vmatpush1.msra.mxu0 0.0
  %192 = vmatprep.subr.mxu0 0.0
  %193 = vmatpush1.msra.mxu0 0.0
  %194 = vmatprep.subr.mxu0 0.0
  %195 = vmatpush1.msra.mxu0 0.0
  %196 = vmatprep.subr.mxu0 0.0
  %197 = vmatpush1.msra.mxu0 0.0
  %198 = vmatprep.subr.mxu0 0.0
  %199 = vmatpush1.msra.mxu0 0.0
  %200 = vmatprep.subr.mxu0 0.0
  %201 = vmatpush1.msra.mxu0 0.0
  %202 = vmatprep.subr.mxu0 0.0
  %203 = vmatpush1.msra.mxu0 0.0
  %204 = vmatprep.subr.mxu0 0.0
  %205 = vmatpush1.msra.mxu0 0.0
  %206 = vmatprep.subr.mxu0 0.0
  %207 = vmatpush1.msra.mxu0 0.0
  %208 = vmatprep.subr.mxu0 0.0
  %209 = vmatpush1.msra.mxu0 0.0
  %210 = vmatprep.subr.mxu0 0.0
  %211 = vmatpush1.msra.mxu0 0.0
  %212 = vmatprep.subr.mxu0 0.0
  %213 = vmatpush1.msra.mxu0 0.0
  %214 = vmatprep.subr.mxu0 0.0
  %215 = vmatpush1.msra.mxu0 0.0
  %216 = vmatprep.subr.mxu0 0.0
  %217 = vmatpush1.msra.mxu0 0.0
  %218 = vmatprep.subr.mxu0 0.0
  %219 = vmatpush1.msra.mxu0 0.0
  %220 = vmatprep.subr.mxu0 0.0
  %221 = vmatpush1.msra.mxu0 0.0
  %222 = vmatprep.subr.mxu0 0.0
  %223 = vmatpush1.msra.mxu0 0.0
  %224 = vmatprep.subr.mxu0 0.0
  %225 = vmatpush1.msra.mxu0 0.0
  %226 = vmatprep.subr.mxu0 0.0
  %227 = vmatpush1.msra.mxu0 0.0
  %228 = vmatprep.subr.mxu0 0.0
  %229 = vmatpush1.msra.mxu0 0.0
  %230 = vmatprep.mubr.f32.mxu0 0.0
  %231 = vmatmul.mubr.f32.gmra.mrb[0].mxu0 %v155
  %v232 = vpop.f32.mrb[0].mxu0
  %v233 = vadd.f32 %v151, %v232
  %v234 = vpop.f32.mrb[0].mxu0
  %235 = vmatprep.mubr.f32.mxu0 0.0
  %236 = vmatmul.mubr.f32.gmra.mrb[0].mxu0 %v158
  %v237 = vpop.f32.mrb[0].mxu0
  %v238 = vadd.f32 %v151, %v237
  %v239 = vpop.f32.mrb[0].mxu0
  %240 = vmatprep.mubr.f32.mxu0 0.0
  %241 = vmatmul.mubr.f32.gmra.mrb[0].mxu0 %v161
  %v242 = vpop.f32.mrb[0].mxu0
  %v243 = vadd.f32 %v151, %v242
  %v244 = vpop.f32.mrb[0].mxu0
  %245 = vmatprep.mubr.f32.mxu0 0.0
  %246 = vmatmul.mubr.f32.gmra.mrb[0].mxu0 %v164
  %v247 = vpop.f32.mrb[0].mxu0
  %v248 = vadd.f32 %v151, %v247
  %v249 = vpop.f32.mrb[0].mxu0
  %250 = vdwg.mxu0
  %v251 = vmax.f32 %v233, 0.0
  %v252 = vmax.f32 %v238, 0.0
  %v253 = vmax.f32 %v243, 0.0
  %v254 = vmax.f32 %v248, 0.0
  %vm255 = vcmask 261120
  %256 = vst.msk [vmem:[%s5] sm:$0xff] %vm255, %v251
  %257 = vst.msk [vmem:[%s5 + $0x8] sm:$0xff] %vm255, %v252
  %258 = vst.msk [vmem:[%s5 + $0x10] sm:$0xff] %vm255, %v253
  %259 = vst.msk [vmem:[%s5 + $0x18] sm:$0xff] %vm255, %v254
  // Predicated region
  $region22: #{analogical_networks_forward.40} parent=0 // pred_check
    _
  $region23: #{analogical_networks_forward.40} parent=0 // pred_check_branch
    %261 = sbr.rel (0) target = $region25
  $region24: #{analogical_networks_forward.40} parent=0 // pred_region
    _
  $region25: #{analogical_networks_forward.40} parent=0 // pred_fallthru
    _
  // Predicated region
  $region26: #{analogical_networks_forward.40} parent=0 // pred_check
    _
  $region27: #{analogical_networks_forward.40} parent=0 // pred_check_branch
    %263 = sbr.rel (0) target = $region29
  $region28: #{analogical_networks_forward.40} parent=0 // pred_region
    _
  $region29: #{analogical_networks_forward.40} parent=0 // pred_fallthru
    _

// kernel: analogical_networks_forward.49
$region0: #{analogical_networks_forward.49}
  #allocation0 [shape = 'u32[]', space=smem, size = 0x4, offset = 0x4, fixed_abs, tag = 'smem constant byte address 0x4 - core index']
  #allocation1 [shape = 'u32[144,128]{1,0:T(1,128)}', space=vmem, size = 0x12000, scoped, tag = 'internal scratch']
  %s0 = inlined_call_operand.vmem [shape: f32[8,32], index: 0, kind: input, shape index: {}, may-alias: {0,1}]
  %s1 = inlined_call_operand.vmem [shape: f32[8,32], index: 1, kind: input, shape index: {}, may-alias: {0,1}]
  %s2 = inlined_call_operand.vmem [shape: f32[8,32], index: 2, kind: input, shape index: {}]
  %s3 = inlined_call_operand.vmem [shape: f32[32,32], index: 3, kind: input, shape index: {}]
  %s4 = inlined_call_operand.vmem [shape: f32[1,32], index: 4, kind: input, shape index: {}]
  %s5 = inlined_call_operand.vmem [shape: f32[32,32], index: 5, kind: input, shape index: {}]
  %s6 = inlined_call_operand.vmem [shape: f32[1,32], index: 6, kind: input, shape index: {}]
  %s7 = inlined_call_operand.vmem [shape: f32[32,32], index: 7, kind: input, shape index: {}]
  %s8 = inlined_call_operand.vmem [shape: f32[1,32], index: 8, kind: input, shape index: {}]
  %s9 = inlined_call_operand.vmem [shape: f32[8,32], index: 9, kind: output, shape index: {0}]
  %s10 = inlined_call_operand.vmem [shape: f32[8,32], index: 10, kind: output, shape index: {1}]
  %s11 = inlined_call_operand.vmem [shape: f32[8,32], index: 11, kind: output, shape index: {2}]
  %12 = xla_tuple %s9, %s10, %s11
  %s13 = sld [smem:[#allocation0]]
  $region62: #{analogical_networks_forward.49} parent=0
    _
  %s15 = ssub.s32 1, %s13
  %s16 = scalar_select 0, %s15, %s13
  // Predicated region
  $region2: #{analogical_networks_forward.49} parent=0 // pred_check
    _
  $region3: #{analogical_networks_forward.49} parent=0 // pred_check_branch
    %18 = sbr.rel (0) target = $region5
  $region4: #{analogical_networks_forward.49} parent=0 // pred_region
    _
  $region5: #{analogical_networks_forward.49} parent=0 // pred_fallthru
    _
  // Predicated region
  $region6: #{analogical_networks_forward.49} parent=0 // pred_check
    _
  $region7: #{analogical_networks_forward.49} parent=0 // pred_check_branch
    %20 = sbr.rel (0) target = $region9
  $region8: #{analogical_networks_forward.49} parent=0 // pred_region
    _
  $region9: #{analogical_networks_forward.49} parent=0 // pred_fallthru
    _
  // Predicated region
  $region10: #{analogical_networks_forward.49} parent=0 // pred_check
    _
  $region11: #{analogical_networks_forward.49} parent=0 // pred_check_branch
    %22 = sbr.rel (0) target = $region13
  $region12: #{analogical_networks_forward.49} parent=0 // pred_region
    _
  $region13: #{analogical_networks_forward.49} parent=0 // pred_fallthru
    _
  // Predicated region
  $region14: #{analogical_networks_forward.49} parent=0 // pred_check
    _
  $region15: #{analogical_networks_forward.49} parent=0 // pred_check_branch
    %24 = sbr.rel (0) target = $region17
  $region16: #{analogical_networks_forward.49} parent=0 // pred_region
    _
  $region17: #{analogical_networks_forward.49} parent=0 // pred_fallthru
    _
  // Predicated region
  $region18: #{analogical_networks_forward.49} parent=0 // pred_check
    _
  $region19: #{analogical_networks_forward.49} parent=0 // pred_check_branch
    %26 = sbr.rel (0) target = $region21
  $region20: #{analogical_networks_forward.49} parent=0 // pred_region
    _
  $region21: #{analogical_networks_forward.49} parent=0 // pred_fallthru
    _
  // Predicated region
  $region22: #{analogical_networks_forward.49} parent=0 // pred_check
    _
  $region23: #{analogical_networks_forward.49} parent=0 // pred_check_branch
    %28 = sbr.rel (0) target = $region25
  $region24: #{analogical_networks_forward.49} parent=0 // pred_region
    _
  $region25: #{analogical_networks_forward.49} parent=0 // pred_fallthru
    _
  // Predicated region
  $region26: #{analogical_networks_forward.49} parent=0 // pred_check
    _
  $region27: #{analogical_networks_forward.49} parent=0 // pred_check_branch
    %30 = sbr.rel (0) target = $region29
  $region28: #{analogical_networks_forward.49} parent=0 // pred_region
    _
  $region29: #{analogical_networks_forward.49} parent=0 // pred_fallthru
    _
  // Predicated region
  $region30: #{analogical_networks_forward.49} parent=0 // pred_check
    _
  $region31: #{analogical_networks_forward.49} parent=0 // pred_check_branch
    %32 = sbr.rel (0) target = $region33
  $region32: #{analogical_networks_forward.49} parent=0 // pred_region
    _
  $region33: #{analogical_networks_forward.49} parent=0 // pred_fallthru
    _
  // Predicated region
  $region34: #{analogical_networks_forward.49} parent=0 // pred_check
    _
  $region35: #{analogical_networks_forward.49} parent=0 // pred_check_branch
    %34 = sbr.rel (0) target = $region37
  $region36: #{analogical_networks_forward.49} parent=0 // pred_region
    _
  $region37: #{analogical_networks_forward.49} parent=0 // pred_fallthru
    _
  %v35 = vld [vmem:[%s0] sm:$0xff]
  %v36 = vld [vmem:[%s3] sm:$0xff]
  %v37 = vld [vmem:[%s3 + $0x8] sm:$0xff]
  %v38 = vld [vmem:[%s3 + $0x10] sm:$0xff]
  %v39 = vld [vmem:[%s3 + $0x18] sm:$0xff]
  %v40 = vld [vmem:[%s4] sm:$0x1]
  %v42 = vlaneseq
  %v43 = vshrl.u32 %v42, 7
  %v44 = vsub.s32 0, %v43
  %v45 = vrot.slane %v40, %v44
  %vm47 = vcmask 261120
  %v49 = vsel %vm47, %v35, 0
  %51 = vmatprep.subr.mxu0 0.0
  %52 = vmatpush1.msra.mxu0 %v36
  %53 = vmatprep.subr.mxu0 0.0
  %54 = vmatpush1.msra.mxu0 %v37
  %55 = vmatprep.subr.mxu0 0.0
  %56 = vmatpush1.msra.mxu0 %v38
  %57 = vmatprep.subr.mxu0 0.0
  %58 = vmatpush1.msra.mxu0 %v39
  %59 = vmatprep.subr.mxu0 0.0
  %60 = vmatpush1.msra.mxu0 0.0
  %61 = vmatprep.subr.mxu0 0.0
  %62 = vmatpush1.msra.mxu0 0.0
  %63 = vmatprep.subr.mxu0 0.0
  %64 = vmatpush1.msra.mxu0 0.0
  %65 = vmatprep.subr.mxu0 0.0
  %66 = vmatpush1.msra.mxu0 0.0
  %67 = vmatprep.subr.mxu0 0.0
  %68 = vmatpush1.msra.mxu0 0.0
  %69 = vmatprep.subr.mxu0 0.0
  %70 = vmatpush1.msra.mxu0 0.0
  %71 = vmatprep.subr.mxu0 0.0
  %72 = vmatpush1.msra.mxu0 0.0
  %73 = vmatprep.subr.mxu0 0.0
  %74 = vmatpush1.msra.mxu0 0.0
  %75 = vmatprep.subr.mxu0 0.0
  %76 = vmatpush1.msra.mxu0 0.0
  %77 = vmatprep.subr.mxu0 0.0
  %78 = vmatpush1.msra.mxu0 0.0
  %79 = vmatprep.subr.mxu0 0.0
  %80 = vmatpush1.msra.mxu0 0.0
  %81 = vmatprep.subr.mxu0 0.0
  %82 = vmatpush1.msra.mxu0 0.0
  %83 = vmatprep.subr.mxu0 0.0
  %84 = vmatpush1.msra.mxu0 0.0
  %85 = vmatprep.subr.mxu0 0.0
  %86 = vmatpush1.msra.mxu0 0.0
  %87 = vmatprep.subr.mxu0 0.0
  %88 = vmatpush1.msra.mxu0 0.0
  %89 = vmatprep.subr.mxu0 0.0
  %90 = vmatpush1.msra.mxu0 0.0
  %91 = vmatprep.subr.mxu0 0.0
  %92 = vmatpush1.msra.mxu0 0.0
  %93 = vmatprep.subr.mxu0 0.0
  %94 = vmatpush1.msra.mxu0 0.0
  %95 = vmatprep.subr.mxu0 0.0
  %96 = vmatpush1.msra.mxu0 0.0
  %97 = vmatprep.subr.mxu0 0.0
  %98 = vmatpush1.msra.mxu0 0.0
  %99 = vmatprep.subr.mxu0 0.0
  %100 = vmatpush1.msra.mxu0 0.0
  %101 = vmatprep.subr.mxu0 0.0
  %102 = vmatpush1.msra.mxu0 0.0
  %103 = vmatprep.subr.mxu0 0.0
  %104 = vmatpush1.msra.mxu0 0.0
  %105 = vmatprep.subr.mxu0 0.0
  %106 = vmatpush1.msra.mxu0 0.0
  %107 = vmatprep.subr.mxu0 0.0
  %108 = vmatpush1.msra.mxu0 0.0
  %109 = vmatprep.subr.mxu0 0.0
  %110 = vmatpush1.msra.mxu0 0.0
  %111 = vmatprep.subr.mxu0 0.0
  %112 = vmatpush1.msra.mxu0 0.0
  %113 = vmatprep.subr.mxu0 0.0
  %114 = vmatpush1.msra.mxu0 0.0
  %115 = vmatprep.mubr.f32.mxu0 0.0
  %116 = vmatmul.mubr.f32.gmra.mrb[0].mxu0 %v49
  %v117 = vpop.f32.mrb[0].mxu0
  %v118 = vadd.f32 %v45, %v117
  %v119 = vpop.f32.mrb[0].mxu0
  %120 = vdwg.mxu0
  %121 = vst.msk [vmem:[%s9] sm:$0xff] %vm47, %v118
  %v122 = vld [vmem:[%s1] sm:$0xff]
  %v123 = vld [vmem:[%s5] sm:$0xff]
  %v124 = vld [vmem:[%s5 + $0x8] sm:$0xff]
  %v125 = vld [vmem:[%s5 + $0x10] sm:$0xff]
  %v126 = vld [vmem:[%s5 + $0x18] sm:$0xff]
  %v127 = vld [vmem:[%s6] sm:$0x1]
  %v129 = vlaneseq
  %v130 = vshrl.u32 %v129, 7
  %v131 = vsub.s32 0, %v130
  %v132 = vrot.slane %v127, %v131
  %v135 = vsel %vm47, %v122, 0
  %137 = vmatprep.subr.mxu0 0.0
  %138 = vmatpush1.msra.mxu0 %v123
  %139 = vmatprep.subr.mxu0 0.0
  %140 = vmatpush1.msra.mxu0 %v124
  %141 = vmatprep.subr.mxu0 0.0
  %142 = vmatpush1.msra.mxu0 %v125
  %143 = vmatprep.subr.mxu0 0.0
  %144 = vmatpush1.msra.mxu0 %v126
  %145 = vmatprep.subr.mxu0 0.0
  %146 = vmatpush1.msra.mxu0 0.0
  %147 = vmatprep.subr.mxu0 0.0
  %148 = vmatpush1.msra.mxu0 0.0
  %149 = vmatprep.subr.mxu0 0.0
  %150 = vmatpush1.msra.mxu0 0.0
  %151 = vmatprep.subr.mxu0 0.0
  %152 = vmatpush1.msra.mxu0 0.0
  %153 = vmatprep.subr.mxu0 0.0
  %154 = vmatpush1.msra.mxu0 0.0
  %155 = vmatprep.subr.mxu0 0.0
  %156 = vmatpush1.msra.mxu0 0.0
  %157 = vmatprep.subr.mxu0 0.0
  %158 = vmatpush1.msra.mxu0 0.0
  %159 = vmatprep.subr.mxu0 0.0
  %160 = vmatpush1.msra.mxu0 0.0
  %161 = vmatprep.subr.mxu0 0.0
  %162 = vmatpush1.msra.mxu0 0.0
  %163 = vmatprep.subr.mxu0 0.0
  %164 = vmatpush1.msra.mxu0 0.0
  %165 = vmatprep.subr.mxu0 0.0
  %166 = vmatpush1.msra.mxu0 0.0
  %167 = vmatprep.subr.mxu0 0.0
  %168 = vmatpush1.msra.mxu0 0.0
  %169 = vmatprep.subr.mxu0 0.0
  %170 = vmatpush1.msra.mxu0 0.0
  %171 = vmatprep.subr.mxu0 0.0
  %172 = vmatpush1.msra.mxu0 0.0
  %173 = vmatprep.subr.mxu0 0.0
  %174 = vmatpush1.msra.mxu0 0.0
  %175 = vmatprep.subr.mxu0 0.0
  %176 = vmatpush1.msra.mxu0 0.0
  %177 = vmatprep.subr.mxu0 0.0
  %178 = vmatpush1.msra.mxu0 0.0
  %179 = vmatprep.subr.mxu0 0.0
  %180 = vmatpush1.msra.mxu0 0.0
  %181 = vmatprep.subr.mxu0 0.0
  %182 = vmatpush1.msra.mxu0 0.0
  %183 = vmatprep.subr.mxu0 0.0
  %184 = vmatpush1.msra.mxu0 0.0
  %185 = vmatprep.subr.mxu0 0.0
  %186 = vmatpush1.msra.mxu0 0.0
  %187 = vmatprep.subr.mxu0 0.0
  %188 = vmatpush1.msra.mxu0 0.0
  %189 = vmatprep.subr.mxu0 0.0
  %190 = vmatpush1.msra.mxu0 0.0
  %191 = vmatprep.subr.mxu0 0.0
  %192 = vmatpush1.msra.mxu0 0.0
  %193 = vmatprep.subr.mxu0 0.0
  %194 = vmatpush1.msra.mxu0 0.0
  %195 = vmatprep.subr.mxu0 0.0
  %196 = vmatpush1.msra.mxu0 0.0
  %197 = vmatprep.subr.mxu0 0.0
  %198 = vmatpush1.msra.mxu0 0.0
  %199 = vmatprep.subr.mxu0 0.0
  %200 = vmatpush1.msra.mxu0 0.0
  %201 = vmatprep.mubr.f32.mxu0 0.0
  %202 = vmatmul.mubr.f32.gmra.mrb[0].mxu0 %v135
  %v203 = vpop.f32.mrb[0].mxu0
  %v204 = vadd.f32 %v132, %v203
  %v205 = vpop.f32.mrb[0].mxu0
  %206 = vdwg.mxu0
  %207 = vst.msk [vmem:[%s10] sm:$0xff] %vm47, %v204
  %v208 = vld [vmem:[%s2] sm:$0xff]
  %v209 = vld [vmem:[%s7] sm:$0xff]
  %v210 = vld [vmem:[%s7 + $0x8] sm:$0xff]
  %v211 = vld [vmem:[%s7 + $0x10] sm:$0xff]
  %v212 = vld [vmem:[%s7 + $0x18] sm:$0xff]
  %v213 = vld [vmem:[%s8] sm:$0x1]
  %v215 = vlaneseq
  %v216 = vshrl.u32 %v215, 7
  %v217 = vsub.s32 0, %v216
  %v218 = vrot.slane %v213, %v217
  %v221 = vsel %vm47, %v208, 0
  %223 = vmatprep.subr.mxu0 0.0
  %224 = vmatpush1.msra.mxu0 %v209
  %225 = vmatprep.subr.mxu0 0.0
  %226 = vmatpush1.msra.mxu0 %v210
  %227 = vmatprep.subr.mxu0 0.0
  %228 = vmatpush1.msra.mxu0 %v211
  %229 = vmatprep.subr.mxu0 0.0
  %230 = vmatpush1.msra.mxu0 %v212
  %231 = vmatprep.subr.mxu0 0.0
  %232 = vmatpush1.msra.mxu0 0.0
  %233 = vmatprep.subr.mxu0 0.0
  %234 = vmatpush1.msra.mxu0 0.0
  %235 = vmatprep.subr.mxu0 0.0
  %236 = vmatpush1.msra.mxu0 0.0
  %237 = vmatprep.subr.mxu0 0.0
  %238 = vmatpush1.msra.mxu0 0.0
  %239 = vmatprep.subr.mxu0 0.0
  %240 = vmatpush1.msra.mxu0 0.0
  %241 = vmatprep.subr.mxu0 0.0
  %242 = vmatpush1.msra.mxu0 0.0
  %243 = vmatprep.subr.mxu0 0.0
  %244 = vmatpush1.msra.mxu0 0.0
  %245 = vmatprep.subr.mxu0 0.0
  %246 = vmatpush1.msra.mxu0 0.0
  %247 = vmatprep.subr.mxu0 0.0
  %248 = vmatpush1.msra.mxu0 0.0
  %249 = vmatprep.subr.mxu0 0.0
  %250 = vmatpush1.msra.mxu0 0.0
  %251 = vmatprep.subr.mxu0 0.0
  %252 = vmatpush1.msra.mxu0 0.0
  %253 = vmatprep.subr.mxu0 0.0
  %254 = vmatpush1.msra.mxu0 0.0
  %255 = vmatprep.subr.mxu0 0.0
  %256 = vmatpush1.msra.mxu0 0.0
  %257 = vmatprep.subr.mxu0 0.0
  %258 = vmatpush1.msra.mxu0 0.0
  %259 = vmatprep.subr.mxu0 0.0
  %260 = vmatpush1.msra.mxu0 0.0
  %261 = vmatprep.subr.mxu0 0.0
  %262 = vmatpush1.msra.mxu0 0.0
  %263 = vmatprep.subr.mxu0 0.0
  %264 = vmatpush1.msra.mxu0 0.0
  %265 = vmatprep.subr.mxu0 0.0
  %266 = vmatpush1.msra.mxu0 0.0
  %267 = vmatprep.subr.mxu0 0.0
  %268 = vmatpush1.msra.mxu0 0.0
  %269 = vmatprep.subr.mxu0 0.0
  %270 = vmatpush1.msra.mxu0 0.0
  %271 = vmatprep.subr.mxu0 0.0
  %272 = vmatpush1.msra.mxu0 0.0
  %273 = vmatprep.subr.mxu0 0.0
  %274 = vmatpush1.msra.mxu0 0.0
  %275 = vmatprep.subr.mxu0 0.0
  %276 = vmatpush1.msra.mxu0 0.0
  %277 = vmatprep.subr.mxu0 0.0
  %278 = vmatpush1.msra.mxu0 0.0
  %279 = vmatprep.subr.mxu0 0.0
  %280 = vmatpush1.msra.mxu0 0.0
  %281 = vmatprep.subr.mxu0 0.0
  %282 = vmatpush1.msra.mxu0 0.0
  %283 = vmatprep.subr.mxu0 0.0
  %284 = vmatpush1.msra.mxu0 0.0
  %285 = vmatprep.subr.mxu0 0.0
  %286 = vmatpush1.msra.mxu0 0.0
  %287 = vmatprep.mubr.f32.mxu0 0.0
  %288 = vmatmul.mubr.f32.gmra.mrb[0].mxu0 %v221
  %v289 = vpop.f32.mrb[0].mxu0
  %v290 = vadd.f32 %v218, %v289
  %v291 = vpop.f32.mrb[0].mxu0
  %292 = vdwg.mxu0
  %293 = vst.msk [vmem:[%s11] sm:$0xff] %vm47, %v290
  // Predicated region
  $region38: #{analogical_networks_forward.49} parent=0 // pred_check
    _
  $region39: #{analogical_networks_forward.49} parent=0 // pred_check_branch
    %295 = sbr.rel (0) target = $region41
  $region40: #{analogical_networks_forward.49} parent=0 // pred_region
    _
  $region41: #{analogical_networks_forward.49} parent=0 // pred_fallthru
    _
  // Predicated region
  $region42: #{analogical_networks_forward.49} parent=0 // pred_check
    _
  $region43: #{analogical_networks_forward.49} parent=0 // pred_check_branch
    %297 = sbr.rel (0) target = $region45
  $region44: #{analogical_networks_forward.49} parent=0 // pred_region
    _
  $region45: #{analogical_networks_forward.49} parent=0 // pred_fallthru
    _
  // Predicated region
  $region46: #{analogical_networks_forward.49} parent=0 // pred_check
    _
  $region47: #{analogical_networks_forward.49} parent=0 // pred_check_branch
    %299 = sbr.rel (0) target = $region49
  $region48: #{analogical_networks_forward.49} parent=0 // pred_region
    _
  $region49: #{analogical_networks_forward.49} parent=0 // pred_fallthru
    _
  // Predicated region
  $region50: #{analogical_networks_forward.49} parent=0 // pred_check
    _
  $region51: #{analogical_networks_forward.49} parent=0 // pred_check_branch
    %301 = sbr.rel (0) target = $region53
  $region52: #{analogical_networks_forward.49} parent=0 // pred_region
    _
  $region53: #{analogical_networks_forward.49} parent=0 // pred_fallthru
    _
  // Predicated region
  $region54: #{analogical_networks_forward.49} parent=0 // pred_check
    _
  $region55: #{analogical_networks_forward.49} parent=0 // pred_check_branch
    %303 = sbr.rel (0) target = $region57
  $region56: #{analogical_networks_forward.49} parent=0 // pred_region
    _
  $region57: #{analogical_networks_forward.49} parent=0 // pred_fallthru
    _
  // Predicated region
  $region58: #{analogical_networks_forward.49} parent=0 // pred_check
    _
  $region59: #{analogical_networks_forward.49} parent=0 // pred_check_branch
    %305 = sbr.rel (0) target = $region61
  $region60: #{analogical_networks_forward.49} parent=0 // pred_region
    _
  $region61: #{analogical_networks_forward.49} parent=0 // pred_fallthru
    _

// kernel: analogical_networks_forward.51
$region0: #{analogical_networks_forward.51}
  #allocation0 [shape = 'u32[]', space=smem, size = 0x4, offset = 0x4, fixed_abs, tag = 'smem constant byte address 0x4 - core index']
  #allocation1 [shape = 'u32[144,128]{1,0:T(1,128)}', space=vmem, size = 0x12000, scoped, tag = 'internal scratch']
  %s0 = inlined_call_operand.vmem [shape: f32[8,32], index: 0, kind: input, shape index: {}]
  %s1 = inlined_call_operand.vmem [shape: f32[32,32], index: 1, kind: input, shape index: {}]
  %s2 = inlined_call_operand.vmem [shape: f32[1,32], index: 2, kind: input, shape index: {}]
  %s3 = inlined_call_operand.vmem [shape: f32[8,32], index: 3, kind: output, shape index: {}]
  %s4 = sld [smem:[#allocation0]]
  $region22: #{analogical_networks_forward.51} parent=0
    _
  %s6 = ssub.s32 1, %s4
  %s7 = scalar_select 0, %s6, %s4
  // Predicated region
  $region2: #{analogical_networks_forward.51} parent=0 // pred_check
    _
  $region3: #{analogical_networks_forward.51} parent=0 // pred_check_branch
    %9 = sbr.rel (0) target = $region5
  $region4: #{analogical_networks_forward.51} parent=0 // pred_region
    _
  $region5: #{analogical_networks_forward.51} parent=0 // pred_fallthru
    _
  // Predicated region
  $region6: #{analogical_networks_forward.51} parent=0 // pred_check
    _
  $region7: #{analogical_networks_forward.51} parent=0 // pred_check_branch
    %11 = sbr.rel (0) target = $region9
  $region8: #{analogical_networks_forward.51} parent=0 // pred_region
    _
  $region9: #{analogical_networks_forward.51} parent=0 // pred_fallthru
    _
  // Predicated region
  $region10: #{analogical_networks_forward.51} parent=0 // pred_check
    _
  $region11: #{analogical_networks_forward.51} parent=0 // pred_check_branch
    %13 = sbr.rel (0) target = $region13
  $region12: #{analogical_networks_forward.51} parent=0 // pred_region
    _
  $region13: #{analogical_networks_forward.51} parent=0 // pred_fallthru
    _
  %v14 = vld [vmem:[%s0] sm:$0xff]
  %v15 = vld [vmem:[%s1] sm:$0xff]
  %v16 = vld [vmem:[%s1 + $0x8] sm:$0xff]
  %v17 = vld [vmem:[%s1 + $0x10] sm:$0xff]
  %v18 = vld [vmem:[%s1 + $0x18] sm:$0xff]
  %v19 = vld [vmem:[%s2] sm:$0x1]
  %v21 = vlaneseq
  %v22 = vshrl.u32 %v21, 7
  %v23 = vsub.s32 0, %v22
  %v24 = vrot.slane %v19, %v23
  %vm26 = vcmask 261120
  %v28 = vsel %vm26, %v14, 0
  %30 = vmatprep.subr.mxu0 0.0
  %31 = vmatpush1.msra.mxu0 %v15
  %32 = vmatprep.subr.mxu0 0.0
  %33 = vmatpush1.msra.mxu0 %v16
  %34 = vmatprep.subr.mxu0 0.0
  %35 = vmatpush1.msra.mxu0 %v17
  %36 = vmatprep.subr.mxu0 0.0
  %37 = vmatpush1.msra.mxu0 %v18
  %38 = vmatprep.subr.mxu0 0.0
  %39 = vmatpush1.msra.mxu0 0.0
  %40 = vmatprep.subr.mxu0 0.0
  %41 = vmatpush1.msra.mxu0 0.0
  %42 = vmatprep.subr.mxu0 0.0
  %43 = vmatpush1.msra.mxu0 0.0
  %44 = vmatprep.subr.mxu0 0.0
  %45 = vmatpush1.msra.mxu0 0.0
  %46 = vmatprep.subr.mxu0 0.0
  %47 = vmatpush1.msra.mxu0 0.0
  %48 = vmatprep.subr.mxu0 0.0
  %49 = vmatpush1.msra.mxu0 0.0
  %50 = vmatprep.subr.mxu0 0.0
  %51 = vmatpush1.msra.mxu0 0.0
  %52 = vmatprep.subr.mxu0 0.0
  %53 = vmatpush1.msra.mxu0 0.0
  %54 = vmatprep.subr.mxu0 0.0
  %55 = vmatpush1.msra.mxu0 0.0
  %56 = vmatprep.subr.mxu0 0.0
  %57 = vmatpush1.msra.mxu0 0.0
  %58 = vmatprep.subr.mxu0 0.0
  %59 = vmatpush1.msra.mxu0 0.0
  %60 = vmatprep.subr.mxu0 0.0
  %61 = vmatpush1.msra.mxu0 0.0
  %62 = vmatprep.subr.mxu0 0.0
  %63 = vmatpush1.msra.mxu0 0.0
  %64 = vmatprep.subr.mxu0 0.0
  %65 = vmatpush1.msra.mxu0 0.0
  %66 = vmatprep.subr.mxu0 0.0
  %67 = vmatpush1.msra.mxu0 0.0
  %68 = vmatprep.subr.mxu0 0.0
  %69 = vmatpush1.msra.mxu0 0.0
  %70 = vmatprep.subr.mxu0 0.0
  %71 = vmatpush1.msra.mxu0 0.0
  %72 = vmatprep.subr.mxu0 0.0
  %73 = vmatpush1.msra.mxu0 0.0
  %74 = vmatprep.subr.mxu0 0.0
  %75 = vmatpush1.msra.mxu0 0.0
  %76 = vmatprep.subr.mxu0 0.0
  %77 = vmatpush1.msra.mxu0 0.0
  %78 = vmatprep.subr.mxu0 0.0
  %79 = vmatpush1.msra.mxu0 0.0
  %80 = vmatprep.subr.mxu0 0.0
  %81 = vmatpush1.msra.mxu0 0.0
  %82 = vmatprep.subr.mxu0 0.0
  %83 = vmatpush1.msra.mxu0 0.0
  %84 = vmatprep.subr.mxu0 0.0
  %85 = vmatpush1.msra.mxu0 0.0
  %86 = vmatprep.subr.mxu0 0.0
  %87 = vmatpush1.msra.mxu0 0.0
  %88 = vmatprep.subr.mxu0 0.0
  %89 = vmatpush1.msra.mxu0 0.0
  %90 = vmatprep.subr.mxu0 0.0
  %91 = vmatpush1.msra.mxu0 0.0
  %92 = vmatprep.subr.mxu0 0.0
  %93 = vmatpush1.msra.mxu0 0.0
  %94 = vmatprep.mubr.f32.mxu0 0.0
  %95 = vmatmul.mubr.f32.gmra.mrb[0].mxu0 %v28
  %v96 = vpop.f32.mrb[0].mxu0
  %v97 = vadd.f32 %v24, %v96
  %v98 = vpop.f32.mrb[0].mxu0
  %99 = vdwg.mxu0
  %100 = vst.msk [vmem:[%s3] sm:$0xff] %vm26, %v97
  // Predicated region
  $region14: #{analogical_networks_forward.51} parent=0 // pred_check
    _
  $region15: #{analogical_networks_forward.51} parent=0 // pred_check_branch
    %102 = sbr.rel (0) target = $region17
  $region16: #{analogical_networks_forward.51} parent=0 // pred_region
    _
  $region17: #{analogical_networks_forward.51} parent=0 // pred_fallthru
    _
  // Predicated region
  $region18: #{analogical_networks_forward.51} parent=0 // pred_check
    _
  $region19: #{analogical_networks_forward.51} parent=0 // pred_check_branch
    %104 = sbr.rel (0) target = $region21
  $region20: #{analogical_networks_forward.51} parent=0 // pred_region
    _
  $region21: #{analogical_networks_forward.51} parent=0 // pred_fallthru
    _

// kernel: analogical_networks_forward.44
$region0: #{analogical_networks_forward.44}
  #allocation0 [shape = 'u32[]', space=smem, size = 0x4, offset = 0x4, fixed_abs, tag = 'smem constant byte address 0x4 - core index']
  #allocation1 [shape = 'u32[144,128]{1,0:T(1,128)}', space=vmem, size = 0x12000, scoped, tag = 'internal scratch']
  %s0 = inlined_call_operand.vmem [shape: f32[16,32], index: 0, kind: input, shape index: {}]
  %s1 = inlined_call_operand.vmem [shape: f32[32,32], index: 1, kind: input, shape index: {}]
  %s2 = inlined_call_operand.vmem [shape: f32[1,32], index: 2, kind: input, shape index: {}]
  %s3 = inlined_call_operand.vmem [shape: f32[16,32], index: 3, kind: output, shape index: {}]
  %s4 = sld [smem:[#allocation0]]
  $region22: #{analogical_networks_forward.44} parent=0
    _
  %s6 = ssub.s32 1, %s4
  %s7 = scalar_select 0, %s6, %s4
  // Predicated region
  $region2: #{analogical_networks_forward.44} parent=0 // pred_check
    _
  $region3: #{analogical_networks_forward.44} parent=0 // pred_check_branch
    %9 = sbr.rel (0) target = $region5
  $region4: #{analogical_networks_forward.44} parent=0 // pred_region
    _
  $region5: #{analogical_networks_forward.44} parent=0 // pred_fallthru
    _
  // Predicated region
  $region6: #{analogical_networks_forward.44} parent=0 // pred_check
    _
  $region7: #{analogical_networks_forward.44} parent=0 // pred_check_branch
    %11 = sbr.rel (0) target = $region9
  $region8: #{analogical_networks_forward.44} parent=0 // pred_region
    _
  $region9: #{analogical_networks_forward.44} parent=0 // pred_fallthru
    _
  // Predicated region
  $region10: #{analogical_networks_forward.44} parent=0 // pred_check
    _
  $region11: #{analogical_networks_forward.44} parent=0 // pred_check_branch
    %13 = sbr.rel (0) target = $region13
  $region12: #{analogical_networks_forward.44} parent=0 // pred_region
    _
  $region13: #{analogical_networks_forward.44} parent=0 // pred_fallthru
    _
  %v14 = vld [vmem:[%s0] sm:$0xff]
  %v15 = vld [vmem:[%s0 + $0x8] sm:$0xff]
  %v16 = vld [vmem:[%s1] sm:$0xff]
  %v17 = vld [vmem:[%s1 + $0x8] sm:$0xff]
  %v18 = vld [vmem:[%s1 + $0x10] sm:$0xff]
  %v19 = vld [vmem:[%s1 + $0x18] sm:$0xff]
  %v20 = vld [vmem:[%s2] sm:$0x1]
  %v22 = vlaneseq
  %v23 = vshrl.u32 %v22, 7
  %v24 = vsub.s32 0, %v23
  %v25 = vrot.slane %v20, %v24
  %vm27 = vcmask 261120
  %v29 = vsel %vm27, %v14, 0
  %v32 = vsel %vm27, %v15, 0
  %34 = vmatprep.subr.mxu0 0.0
  %35 = vmatpush1.msra.mxu0 %v16
  %36 = vmatprep.subr.mxu0 0.0
  %37 = vmatpush1.msra.mxu0 %v17
  %38 = vmatprep.subr.mxu0 0.0
  %39 = vmatpush1.msra.mxu0 %v18
  %40 = vmatprep.subr.mxu0 0.0
  %41 = vmatpush1.msra.mxu0 %v19
  %42 = vmatprep.subr.mxu0 0.0
  %43 = vmatpush1.msra.mxu0 0.0
  %44 = vmatprep.subr.mxu0 0.0
  %45 = vmatpush1.msra.mxu0 0.0
  %46 = vmatprep.subr.mxu0 0.0
  %47 = vmatpush1.msra.mxu0 0.0
  %48 = vmatprep.subr.mxu0 0.0
  %49 = vmatpush1.msra.mxu0 0.0
  %50 = vmatprep.subr.mxu0 0.0
  %51 = vmatpush1.msra.mxu0 0.0
  %52 = vmatprep.subr.mxu0 0.0
  %53 = vmatpush1.msra.mxu0 0.0
  %54 = vmatprep.subr.mxu0 0.0
  %55 = vmatpush1.msra.mxu0 0.0
  %56 = vmatprep.subr.mxu0 0.0
  %57 = vmatpush1.msra.mxu0 0.0
  %58 = vmatprep.subr.mxu0 0.0
  %59 = vmatpush1.msra.mxu0 0.0
  %60 = vmatprep.subr.mxu0 0.0
  %61 = vmatpush1.msra.mxu0 0.0
  %62 = vmatprep.subr.mxu0 0.0
  %63 = vmatpush1.msra.mxu0 0.0
  %64 = vmatprep.subr.mxu0 0.0
  %65 = vmatpush1.msra.mxu0 0.0
  %66 = vmatprep.subr.mxu0 0.0
  %67 = vmatpush1.msra.mxu0 0.0
  %68 = vmatprep.subr.mxu0 0.0
  %69 = vmatpush1.msra.mxu0 0.0
  %70 = vmatprep.subr.mxu0 0.0
  %71 = vmatpush1.msra.mxu0 0.0
  %72 = vmatprep.subr.mxu0 0.0
  %73 = vmatpush1.msra.mxu0 0.0
  %74 = vmatprep.subr.mxu0 0.0
  %75 = vmatpush1.msra.mxu0 0.0
  %76 = vmatprep.subr.mxu0 0.0
  %77 = vmatpush1.msra.mxu0 0.0
  %78 = vmatprep.subr.mxu0 0.0
  %79 = vmatpush1.msra.mxu0 0.0
  %80 = vmatprep.subr.mxu0 0.0
  %81 = vmatpush1.msra.mxu0 0.0
  %82 = vmatprep.subr.mxu0 0.0
  %83 = vmatpush1.msra.mxu0 0.0
  %84 = vmatprep.subr.mxu0 0.0
  %85 = vmatpush1.msra.mxu0 0.0
  %86 = vmatprep.subr.mxu0 0.0
  %87 = vmatpush1.msra.mxu0 0.0
  %88 = vmatprep.subr.mxu0 0.0
  %89 = vmatpush1.msra.mxu0 0.0
  %90 = vmatprep.subr.mxu0 0.0
  %91 = vmatpush1.msra.mxu0 0.0
  %92 = vmatprep.subr.mxu0 0.0
  %93 = vmatpush1.msra.mxu0 0.0
  %94 = vmatprep.subr.mxu0 0.0
  %95 = vmatpush1.msra.mxu0 0.0
  %96 = vmatprep.subr.mxu0 0.0
  %97 = vmatpush1.msra.mxu0 0.0
  %98 = vmatprep.mubr.f32.mxu0 0.0
  %99 = vmatmul.mubr.f32.gmra.mrb[0].mxu0 %v29
  %v100 = vpop.f32.mrb[0].mxu0
  %v101 = vadd.f32 %v25, %v100
  %v102 = vpop.f32.mrb[0].mxu0
  %103 = vmatprep.mubr.f32.mxu0 0.0
  %104 = vmatmul.mubr.f32.gmra.mrb[0].mxu0 %v32
  %v105 = vpop.f32.mrb[0].mxu0
  %v106 = vadd.f32 %v25, %v105
  %v107 = vpop.f32.mrb[0].mxu0
  %108 = vdwg.mxu0
  %109 = vst.msk [vmem:[%s3] sm:$0xff] %vm27, %v101
  %110 = vst.msk [vmem:[%s3 + $0x8] sm:$0xff] %vm27, %v106
  // Predicated region
  $region14: #{analogical_networks_forward.44} parent=0 // pred_check
    _
  $region15: #{analogical_networks_forward.44} parent=0 // pred_check_branch
    %112 = sbr.rel (0) target = $region17
  $region16: #{analogical_networks_forward.44} parent=0 // pred_region
    _
  $region17: #{analogical_networks_forward.44} parent=0 // pred_fallthru
    _
  // Predicated region
  $region18: #{analogical_networks_forward.44} parent=0 // pred_check
    _
  $region19: #{analogical_networks_forward.44} parent=0 // pred_check_branch
    %114 = sbr.rel (0) target = $region21
  $region20: #{analogical_networks_forward.44} parent=0 // pred_region
    _
  $region21: #{analogical_networks_forward.44} parent=0 // pred_fallthru
    _

// kernel: analogical_networks_forward.50
$region0: #{analogical_networks_forward.50}
  #allocation0 [shape = 'u32[]', space=smem, size = 0x4, offset = 0x4, fixed_abs, tag = 'smem constant byte address 0x4 - core index']
  #allocation1 [shape = 'u32[144,128]{1,0:T(1,128)}', space=vmem, size = 0x12000, scoped, tag = 'internal scratch']
  %s0 = inlined_call_operand.vmem [shape: f32[2,4,4,8], index: 0, kind: input, shape index: {}]
  %s1 = inlined_call_operand.vmem [shape: f32[2,4,4,8], index: 1, kind: input, shape index: {}]
  %s2 = inlined_call_operand.vmem [shape: f32[2,4,4,8], index: 2, kind: input, shape index: {}]
  %s3 = inlined_call_operand.vmem [shape: f32[2,1,4], index: 3, kind: input, shape index: {}]
  %s4 = inlined_call_operand.vmem [shape: f32[2,4,4,8], index: 4, kind: output, shape index: {}]
  %s5 = sld [smem:[#allocation0]]
  $region49: #{analogical_networks_forward.50} parent=0
    _
  %s7 = ssub.s32 1, %s5
  %s8 = scalar_select 0, %s7, %s5
  loop: start=0, step=1, limit=4
  $region2: #{analogical_networks_forward.50} parent=0 // loop_pre_header
    _
  $region3: #{analogical_networks_forward.50} parent=0 // loop_header
    %s10 = sphi 0, %s14
    %p11 = scmp.ge.s32.totalorder %s10, 4
    %s20 = sphi 0, %s22
    %s23 = sphi 0, %s20
    %s24 = sphi 0, %s23
    %s40 = sphi 0, %s24
    %s46 = sphi 0, %s48
    %s49 = sphi 0, %s46
    %s50 = sphi 0, %s49
    %s66 = sphi 0, %s50
    %s72 = sphi 0, %s74
    %s75 = sphi 0, %s72
    %s76 = sphi 0, %s75
    %s92 = sphi 0, %s76
    %s98 = sphi 0, %s100
    %s101 = sphi 0, %s98
    %s102 = sphi 0, %s101
    %s118 = sphi 0, %s102
    %s124 = sphi 0, %s126
    %s127 = sphi 0, %s124
    %s128 = sphi 0, %s127
    %s144 = sphi 0, %s128
  $region4: #{analogical_networks_forward.50} parent=0 // loop_header_branch
    %13 = sbr.rel (%p11) target = $region8
  $region5: #{analogical_networks_forward.50} parent=0 // loop_body
    %s15 = ssub.s32 %s10, 1
    %s16 = ssub.s32 %s10, 2
    %s17 = sadd.s32 %s10, 1
    %s18 = ssub.s32 %s10, %s17
    %p19 = scmp.eq.s32.totalorder %s18, 0
    %s21 = sadd.s32 %s20, 1
    %s22 = scalar_select %p19, %s20, %s21
    %p25 = pneg %p19
    %p26 = scmp.eq.s32.totalorder %s10, 1
    %p27 = por %p25, %p26
    %p28 = scmp.ne.s32.totalorder %s20, %s23
    %p29 = scmp.eq.s32.totalorder %s10, 0
    %p30 = por %p28, %p29
    %p31 = scmp.ne.s32.totalorder %s20, %s23
    %p32 = scmp.eq.s32.totalorder %s15, 1
    %p33 = por %p31, %p32
    %p34 = scmp.ne.s32.totalorder %s23, %s24
    %p35 = scmp.eq.s32.totalorder %s15, 0
    %p36 = por %p34, %p35
    %p37 = scmp.ne.s32.totalorder %s23, %s24
    %p38 = scmp.eq.s32.totalorder %s16, 1
    %p39 = por %p37, %p38
    %p41 = scmp.ne.s32.totalorder %s24, %s40
    %p42 = scmp.eq.s32.totalorder %s16, 0
    %p43 = por %p41, %p42
    %s44 = ssub.s32 %s10, %s17
    %p45 = scmp.eq.s32.totalorder %s44, 0
    %s47 = sadd.s32 %s46, 1
    %s48 = scalar_select %p45, %s46, %s47
    %p51 = pneg %p45
    %p52 = scmp.eq.s32.totalorder %s10, 1
    %p53 = por %p51, %p52
    %p54 = scmp.ne.s32.totalorder %s46, %s49
    %p55 = scmp.eq.s32.totalorder %s10, 0
    %p56 = por %p54, %p55
    %p57 = scmp.ne.s32.totalorder %s46, %s49
    %p58 = scmp.eq.s32.totalorder %s15, 1
    %p59 = por %p57, %p58
    %p60 = scmp.ne.s32.totalorder %s49, %s50
    %p61 = scmp.eq.s32.totalorder %s15, 0
    %p62 = por %p60, %p61
    %p63 = scmp.ne.s32.totalorder %s49, %s50
    %p64 = scmp.eq.s32.totalorder %s16, 1
    %p65 = por %p63, %p64
    %p67 = scmp.ne.s32.totalorder %s50, %s66
    %p68 = scmp.eq.s32.totalorder %s16, 0
    %p69 = por %p67, %p68
    %s70 = ssub.s32 %s10, %s17
    %p71 = scmp.eq.s32.totalorder %s70, 0
    %s73 = sadd.s32 %s72, 1
    %s74 = scalar_select %p71, %s72, %s73
    %p77 = pneg %p71
    %p78 = scmp.eq.s32.totalorder %s10, 1
    %p79 = por %p77, %p78
    %p80 = scmp.ne.s32.totalorder %s72, %s75
    %p81 = scmp.eq.s32.totalorder %s10, 0
    %p82 = por %p80, %p81
    %p83 = scmp.ne.s32.totalorder %s72, %s75
    %p84 = scmp.eq.s32.totalorder %s15, 1
    %p85 = por %p83, %p84
    %p86 = scmp.ne.s32.totalorder %s75, %s76
    %p87 = scmp.eq.s32.totalorder %s15, 0
    %p88 = por %p86, %p87
    %p89 = scmp.ne.s32.totalorder %s75, %s76
    %p90 = scmp.eq.s32.totalorder %s16, 1
    %p91 = por %p89, %p90
    %p93 = scmp.ne.s32.totalorder %s76, %s92
    %p94 = scmp.eq.s32.totalorder %s16, 0
    %p95 = por %p93, %p94
    %s96 = ssub.s32 %s10, %s17
    %p97 = scmp.eq.s32.totalorder %s96, 0
    %s99 = sadd.s32 %s98, 1
    %s100 = scalar_select %p97, %s98, %s99
    %p103 = pneg %p97
    %p104 = scmp.eq.s32.totalorder %s10, 1
    %p105 = por %p103, %p104
    %p106 = scmp.ne.s32.totalorder %s98, %s101
    %p107 = scmp.eq.s32.totalorder %s10, 0
    %p108 = por %p106, %p107
    %p109 = scmp.ne.s32.totalorder %s98, %s101
    %p110 = scmp.eq.s32.totalorder %s15, 1
    %p111 = por %p109, %p110
    %p112 = scmp.ne.s32.totalorder %s101, %s102
    %p113 = scmp.eq.s32.totalorder %s15, 0
    %p114 = por %p112, %p113
    %p115 = scmp.ne.s32.totalorder %s101, %s102
    %p116 = scmp.eq.s32.totalorder %s16, 1
    %p117 = por %p115, %p116
    %p119 = scmp.ne.s32.totalorder %s102, %s118
    %p120 = scmp.eq.s32.totalorder %s16, 0
    %p121 = por %p119, %p120
    %s122 = ssub.s32 %s10, %s17
    %p123 = scmp.eq.s32.totalorder %s122, 0
    %s125 = sadd.s32 %s124, 1
    %s126 = scalar_select %p123, %s124, %s125
    %p129 = pneg %p123
    %p130 = scmp.eq.s32.totalorder %s10, 1
    %p131 = por %p129, %p130
    %p132 = scmp.ne.s32.totalorder %s124, %s127
    %p133 = scmp.eq.s32.totalorder %s10, 0
    %p134 = por %p132, %p133
    %p135 = scmp.ne.s32.totalorder %s124, %s127
    %p136 = scmp.eq.s32.totalorder %s15, 1
    %p137 = por %p135, %p136
    %p138 = scmp.ne.s32.totalorder %s127, %s128
    %p139 = scmp.eq.s32.totalorder %s15, 0
    %p140 = por %p138, %p139
    %p141 = scmp.ne.s32.totalorder %s127, %s128
    %p142 = scmp.eq.s32.totalorder %s16, 1
    %p143 = por %p141, %p142
    %p145 = scmp.ne.s32.totalorder %s128, %s144
    %p146 = scmp.eq.s32.totalorder %s16, 0
    %p147 = por %p145, %p146
    %p148 = scmp.le.s32.totalorder 1, %s10
    %p149 = scmp.lt.s32.totalorder %s10, 3
    %p150 = pnand %p148, %p149
    %p151 = pneg %p150
    // Predicated region
    $region9: #{analogical_networks_forward.50} parent=5 // pred_check
      _
    $region10: #{analogical_networks_forward.50} parent=5 // pred_check_branch
      %153 = sbr.rel (%p150) target = $region12
    $region11: #{analogical_networks_forward.50} parent=5 // pred_region
      %s154 = ssub.s32 %s10, 1
    $region12: #{analogical_networks_forward.50} parent=5 // pred_fallthru
      _
    %p155 = scmp.lt.s32.totalorder %s10, 2
    // Predicated region
    $region13: #{analogical_networks_forward.50} parent=5 // pred_check
      %p156 = pneg %p155
    $region14: #{analogical_networks_forward.50} parent=5 // pred_check_branch
      %158 = sbr.rel (%p156) target = $region16
    $region15: #{analogical_networks_forward.50} parent=5 // pred_region
      // Predicated region
      $region17: #{analogical_networks_forward.50} parent=15 // pred_check
        %p159 = pneg %p30
      $region18: #{analogical_networks_forward.50} parent=15 // pred_check_branch
        %161 = sbr.rel (%p159) target = $region20
      $region19: #{analogical_networks_forward.50} parent=15 // pred_region
        %p162 = scmp.lt.s32.totalorder %s10, 1
        %s163 = scalar_select %p162, %s10, 1
        %s164 = smul.addr %s163, 4
        %s165 = smul.addr %s164, 4
        %s166 = scalar_lea.vmem %s0, %s165
      $region20: #{analogical_networks_forward.50} parent=15 // pred_fallthru
        _
      // Predicated region
      $region21: #{analogical_networks_forward.50} parent=15 // pred_check
        %p167 = pneg %p56
      $region22: #{analogical_networks_forward.50} parent=15 // pred_check_branch
        %169 = sbr.rel (%p167) target = $region24
      $region23: #{analogical_networks_forward.50} parent=15 // pred_region
        %p170 = scmp.lt.s32.totalorder %s10, 1
        %s171 = scalar_select %p170, %s10, 1
        %s172 = smul.addr %s171, 4
        %s173 = smul.addr %s172, 4
        %s174 = scalar_lea.vmem %s1, %s173
      $region24: #{analogical_networks_forward.50} parent=15 // pred_fallthru
        _
      // Predicated region
      $region25: #{analogical_networks_forward.50} parent=15 // pred_check
        %p175 = pneg %p82
      $region26: #{analogical_networks_forward.50} parent=15 // pred_check_branch
        %177 = sbr.rel (%p175) target = $region28
      $region27: #{analogical_networks_forward.50} parent=15 // pred_region
        %p178 = scmp.lt.s32.totalorder %s10, 1
        %s179 = scalar_select %p178, %s10, 1
        %s180 = smul.addr %s179, 4
        %s181 = smul.addr %s180, 4
        %s182 = scalar_lea.vmem %s2, %s181
      $region28: #{analogical_networks_forward.50} parent=15 // pred_fallthru
        _
      // Predicated region
      $region29: #{analogical_networks_forward.50} parent=15 // pred_check
        %p183 = pneg %p108
      $region30: #{analogical_networks_forward.50} parent=15 // pred_check_branch
        %185 = sbr.rel (%p183) target = $region32
      $region31: #{analogical_networks_forward.50} parent=15 // pred_region
        %p186 = scmp.lt.s32.totalorder %s10, 1
        %s187 = scalar_select %p186, %s10, 1
        %s188 = scalar_lea.vmem %s3, %s187
      $region32: #{analogical_networks_forward.50} parent=15 // pred_fallthru
        _
    $region16: #{analogical_networks_forward.50} parent=5 // pred_fallthru
      _
    %p189 = scmp.le.s32.totalorder 1, %s10
    %p190 = scmp.lt.s32.totalorder %s10, 3
    %p191 = pnand %p189, %p190
    %p192 = pneg %p191
    // Predicated region
    $region33: #{analogical_networks_forward.50} parent=5 // pred_check
      _
    $region34: #{analogical_networks_forward.50} parent=5 // pred_check_branch
      %194 = sbr.rel (%p191) target = $region36
    $region35: #{analogical_networks_forward.50} parent=5 // pred_region
      %s195 = ssub.s32 %s10, 1
      %p196 = scmp.lt.s32.totalorder %s15, 1
      %s197 = scalar_select %p196, %s15, 1
      %s198 = smul.addr %s197, 4
      %s199 = smul.addr %s198, 4
      %s200 = scalar_lea.vmem %s0, %s199
      %p201 = pneg %p36
      %p202 = pneg %p33
      %p203 = scmp.lt.s32.totalorder %s15, 1
      %s204 = scalar_select %p203, %s15, 1
      %s205 = smul.addr %s204, 4
      %s206 = smul.addr %s205, 4
      %s207 = scalar_lea.vmem %s1, %s206
      %p208 = pneg %p62
      %p209 = pneg %p59
      %p210 = scmp.lt.s32.totalorder %s15, 1
      %s211 = scalar_select %p210, %s15, 1
      %s212 = smul.addr %s211, 4
      %s213 = smul.addr %s212, 4
      %s214 = scalar_lea.vmem %s2, %s213
      %p215 = pneg %p88
      %p216 = pneg %p85
      %p217 = scmp.lt.s32.totalorder %s15, 1
      %s218 = scalar_select %p217, %s15, 1
      %s219 = scalar_lea.vmem %s3, %s218
      %p220 = pneg %p114
      %p221 = pneg %p111
      %p222 = pneg %p140
      %p223 = pneg %p137
      %p224 = scmp.lt.s32.totalorder %s15, 1
      %s225 = scalar_select %p224, %s15, 1
      %s226 = smul.addr %s225, 4
      %s227 = smul.addr %s226, 4
      %s228 = scalar_lea.vmem %s4, %s227
      %p229 = scmp.lt.s32.totalorder %s15, 1
      %s230 = scalar_select %p229, %s15, 1
      %s231 = smul.addr %s230, 4
      %s232 = smul.addr %s231, 4
      %s233 = scalar_lea.vmem %s0, %s232
      %p234 = scmp.lt.s32.totalorder %s15, 1
      %s235 = scalar_select %p234, %s15, 1
      %s236 = smul.addr %s235, 4
      %s237 = smul.addr %s236, 4
      %s238 = scalar_lea.vmem %s1, %s237
      %p239 = scmp.lt.s32.totalorder %s15, 1
      %s240 = scalar_select %p239, %s15, 1
      %s241 = smul.addr %s240, 4
      %s242 = smul.addr %s241, 4
      %s243 = scalar_lea.vmem %s2, %s242
      %p244 = scmp.lt.s32.totalorder %s15, 1
      %s245 = scalar_select %p244, %s15, 1
      %s246 = scalar_lea.vmem %s3, %s245
      %p247 = scmp.lt.s32.totalorder %s15, 1
      %s248 = scalar_select %p247, %s15, 1
      %s249 = smul.addr %s248, 4
      %s250 = smul.addr %s249, 4
      %s251 = scalar_lea.vmem %s4, %s250
      %v252 = vld [vmem:[%s233] sm:$0xf]
      %v253 = vld [vmem:[%s233 + $0x4] sm:$0xf]
      %v254 = vld [vmem:[%s233 + $0x8] sm:$0xf]
      %v255 = vld [vmem:[%s233 + $0xc] sm:$0xf]
      %v256 = vld [vmem:[%s238] sm:$0xf]
      %v257 = vld [vmem:[%s238 + $0x4] sm:$0xf]
      %v258 = vld [vmem:[%s238 + $0x8] sm:$0xf]
      %v259 = vld [vmem:[%s238 + $0xc] sm:$0xf]
      %v260 = vld [vmem:[%s243] sm:$0xf]
      %v261 = vld [vmem:[%s243 + $0x4] sm:$0xf]
      %v262 = vld [vmem:[%s243 + $0x8] sm:$0xf]
      %v263 = vld [vmem:[%s243 + $0xc] sm:$0xf]
      %v264 = vld [vmem:[%s246] sm:$0x1]
      %vm265 = vcmask 64512
      %v267 = vsel %vm265, %v252, 0
      %v270 = vsel %vm265, %v256, 0
      %272 = vmatprep.subr.mxu0 0.0
      %273 = vmatpush1.xpose.msra.mxu0 %v270
      %274 = vmatprep.subr.mxu0 0.0
      %275 = vmatpush1.xpose.msra.mxu0 0.0
      %276 = vmatprep.subr.mxu0 0.0
      %277 = vmatpush1.xpose.msra.mxu0 0.0
      %278 = vmatprep.subr.mxu0 0.0
      %279 = vmatpush1.xpose.msra.mxu0 0.0
      %280 = vmatprep.subr.mxu0 0.0
      %281 = vmatpush1.xpose.msra.mxu0 0.0
      %282 = vmatprep.subr.mxu0 0.0
      %283 = vmatpush1.xpose.msra.mxu0 0.0
      %284 = vmatprep.subr.mxu0 0.0
      %285 = vmatpush1.xpose.msra.mxu0 0.0
      %286 = vmatprep.subr.mxu0 0.0
      %287 = vmatpush1.xpose.msra.mxu0 0.0
      %288 = vmatprep.subr.mxu0 0.0
      %289 = vmatpush1.xpose.msra.mxu0 0.0
      %290 = vmatprep.subr.mxu0 0.0
      %291 = vmatpush1.xpose.msra.mxu0 0.0
      %292 = vmatprep.subr.mxu0 0.0
      %293 = vmatpush1.xpose.msra.mxu0 0.0
      %294 = vmatprep.subr.mxu0 0.0
      %295 = vmatpush1.xpose.msra.mxu0 0.0
      %296 = vmatprep.subr.mxu0 0.0
      %297 = vmatpush1.xpose.msra.mxu0 0.0
      %298 = vmatprep.subr.mxu0 0.0
      %299 = vmatpush1.xpose.msra.mxu0 0.0
      %300 = vmatprep.subr.mxu0 0.0
      %301 = vmatpush1.xpose.msra.mxu0 0.0
      %302 = vmatprep.subr.mxu0 0.0
      %303 = vmatpush1.xpose.msra.mxu0 0.0
      %304 = vmatprep.subr.mxu0 0.0
      %305 = vmatpush1.xpose.msra.mxu0 0.0
      %306 = vmatprep.subr.mxu0 0.0
      %307 = vmatpush1.xpose.msra.mxu0 0.0
      %308 = vmatprep.subr.mxu0 0.0
      %309 = vmatpush1.xpose.msra.mxu0 0.0
      %310 = vmatprep.subr.mxu0 0.0
      %311 = vmatpush1.xpose.msra.mxu0 0.0
      %312 = vmatprep.subr.mxu0 0.0
      %313 = vmatpush1.xpose.msra.mxu0 0.0
      %314 = vmatprep.subr.mxu0 0.0
      %315 = vmatpush1.xpose.msra.mxu0 0.0
      %316 = vmatprep.subr.mxu0 0.0
      %317 = vmatpush1.xpose.msra.mxu0 0.0
      %318 = vmatprep.subr.mxu0 0.0
      %319 = vmatpush1.xpose.msra.mxu0 0.0
      %320 = vmatprep.subr.mxu0 0.0
      %321 = vmatpush1.xpose.msra.mxu0 0.0
      %322 = vmatprep.subr.mxu0 0.0
      %323 = vmatpush1.xpose.msra.mxu0 0.0
      %324 = vmatprep.subr.mxu0 0.0
      %325 = vmatpush1.xpose.msra.mxu0 0.0
      %326 = vmatprep.subr.mxu0 0.0
      %327 = vmatpush1.xpose.msra.mxu0 0.0
      %328 = vmatprep.subr.mxu0 0.0
      %329 = vmatpush1.xpose.msra.mxu0 0.0
      %330 = vmatprep.subr.mxu0 0.0
      %331 = vmatpush1.xpose.msra.mxu0 0.0
      %332 = vmatprep.subr.mxu0 0.0
      %333 = vmatpush1.xpose.msra.mxu0 0.0
      %334 = vmatprep.subr.mxu0 0.0
      %335 = vmatpush1.xpose.msra.mxu0 0.0
      %336 = vmatprep.mubr.f32.mxu0 0.0
      %337 = vmatmul.mubr.f32.gmra.mrb[0].mxu0 %v267
      %v338 = vpop.f32.mrb[0].mxu0
      %v339 = vadd.f32 0.0, %v338
      %v340 = vpop.f32.mrb[0].mxu0
      %341 = vdwg.mxu0
      %v343 = vsel %vm265, %v253, 0
      %v346 = vsel %vm265, %v257, 0
      %348 = vmatprep.subr.mxu0 0.0
      %349 = vmatpush1.xpose.msra.mxu0 %v346
      %350 = vmatprep.subr.mxu0 0.0
      %351 = vmatpush1.xpose.msra.mxu0 0.0
      %352 = vmatprep.subr.mxu0 0.0
      %353 = vmatpush1.xpose.msra.mxu0 0.0
      %354 = vmatprep.subr.mxu0 0.0
      %355 = vmatpush1.xpose.msra.mxu0 0.0
      %356 = vmatprep.subr.mxu0 0.0
      %357 = vmatpush1.xpose.msra.mxu0 0.0
      %358 = vmatprep.subr.mxu0 0.0
      %359 = vmatpush1.xpose.msra.mxu0 0.0
      %360 = vmatprep.subr.mxu0 0.0
      %361 = vmatpush1.xpose.msra.mxu0 0.0
      %362 = vmatprep.subr.mxu0 0.0
      %363 = vmatpush1.xpose.msra.mxu0 0.0
      %364 = vmatprep.subr.mxu0 0.0
      %365 = vmatpush1.xpose.msra.mxu0 0.0
      %366 = vmatprep.subr.mxu0 0.0
      %367 = vmatpush1.xpose.msra.mxu0 0.0
      %368 = vmatprep.subr.mxu0 0.0
      %369 = vmatpush1.xpose.msra.mxu0 0.0
      %370 = vmatprep.subr.mxu0 0.0
      %371 = vmatpush1.xpose.msra.mxu0 0.0
      %372 = vmatprep.subr.mxu0 0.0
      %373 = vmatpush1.xpose.msra.mxu0 0.0
      %374 = vmatprep.subr.mxu0 0.0
      %375 = vmatpush1.xpose.msra.mxu0 0.0
      %376 = vmatprep.subr.mxu0 0.0
      %377 = vmatpush1.xpose.msra.mxu0 0.0
      %378 = vmatprep.subr.mxu0 0.0
      %379 = vmatpush1.xpose.msra.mxu0 0.0
      %380 = vmatprep.subr.mxu0 0.0
      %381 = vmatpush1.xpose.msra.mxu0 0.0
      %382 = vmatprep.subr.mxu0 0.0
      %383 = vmatpush1.xpose.msra.mxu0 0.0
      %384 = vmatprep.subr.mxu0 0.0
      %385 = vmatpush1.xpose.msra.mxu0 0.0
      %386 = vmatprep.subr.mxu0 0.0
      %387 = vmatpush1.xpose.msra.mxu0 0.0
      %388 = vmatprep.subr.mxu0 0.0
      %389 = vmatpush1.xpose.msra.mxu0 0.0
      %390 = vmatprep.subr.mxu0 0.0
      %391 = vmatpush1.xpose.msra.mxu0 0.0
      %392 = vmatprep.subr.mxu0 0.0
      %393 = vmatpush1.xpose.msra.mxu0 0.0
      %394 = vmatprep.subr.mxu0 0.0
      %395 = vmatpush1.xpose.msra.mxu0 0.0
      %396 = vmatprep.subr.mxu0 0.0
      %397 = vmatpush1.xpose.msra.mxu0 0.0
      %398 = vmatprep.subr.mxu0 0.0
      %399 = vmatpush1.xpose.msra.mxu0 0.0
      %400 = vmatprep.subr.mxu0 0.0
      %401 = vmatpush1.xpose.msra.mxu0 0.0
      %402 = vmatprep.subr.mxu0 0.0
      %403 = vmatpush1.xpose.msra.mxu0 0.0
      %404 = vmatprep.subr.mxu0 0.0
      %405 = vmatpush1.xpose.msra.mxu0 0.0
      %406 = vmatprep.subr.mxu0 0.0
      %407 = vmatpush1.xpose.msra.mxu0 0.0
      %408 = vmatprep.subr.mxu0 0.0
      %409 = vmatpush1.xpose.msra.mxu0 0.0
      %410 = vmatprep.subr.mxu0 0.0
      %411 = vmatpush1.xpose.msra.mxu0 0.0
      %412 = vmatprep.mubr.f32.mxu0 0.0
      %413 = vmatmul.mubr.f32.gmra.mrb[0].mxu0 %v343
      %v414 = vpop.f32.mrb[0].mxu0
      %v415 = vadd.f32 0.0, %v414
      %v416 = vpop.f32.mrb[0].mxu0
      %417 = vdwg.mxu0
      %v419 = vsel %vm265, %v254, 0
      %v422 = vsel %vm265, %v258, 0
      %424 = vmatprep.subr.mxu0 0.0
      %425 = vmatpush1.xpose.msra.mxu0 %v422
      %426 = vmatprep.subr.mxu0 0.0
      %427 = vmatpush1.xpose.msra.mxu0 0.0
      %428 = vmatprep.subr.mxu0 0.0
      %429 = vmatpush1.xpose.msra.mxu0 0.0
      %430 = vmatprep.subr.mxu0 0.0
      %431 = vmatpush1.xpose.msra.mxu0 0.0
      %432 = vmatprep.subr.mxu0 0.0
      %433 = vmatpush1.xpose.msra.mxu0 0.0
      %434 = vmatprep.subr.mxu0 0.0
      %435 = vmatpush1.xpose.msra.mxu0 0.0
      %436 = vmatprep.subr.mxu0 0.0
      %437 = vmatpush1.xpose.msra.mxu0 0.0
      %438 = vmatprep.subr.mxu0 0.0
      %439 = vmatpush1.xpose.msra.mxu0 0.0
      %440 = vmatprep.subr.mxu0 0.0
      %441 = vmatpush1.xpose.msra.mxu0 0.0
      %442 = vmatprep.subr.mxu0 0.0
      %443 = vmatpush1.xpose.msra.mxu0 0.0
      %444 = vmatprep.subr.mxu0 0.0
      %445 = vmatpush1.xpose.msra.mxu0 0.0
      %446 = vmatprep.subr.mxu0 0.0
      %447 = vmatpush1.xpose.msra.mxu0 0.0
      %448 = vmatprep.subr.mxu0 0.0
      %449 = vmatpush1.xpose.msra.mxu0 0.0
      %450 = vmatprep.subr.mxu0 0.0
      %451 = vmatpush1.xpose.msra.mxu0 0.0
      %452 = vmatprep.subr.mxu0 0.0
      %453 = vmatpush1.xpose.msra.mxu0 0.0
      %454 = vmatprep.subr.mxu0 0.0
      %455 = vmatpush1.xpose.msra.mxu0 0.0
      %456 = vmatprep.subr.mxu0 0.0
      %457 = vmatpush1.xpose.msra.mxu0 0.0
      %458 = vmatprep.subr.mxu0 0.0
      %459 = vmatpush1.xpose.msra.mxu0 0.0
      %460 = vmatprep.subr.mxu0 0.0
      %461 = vmatpush1.xpose.msra.mxu0 0.0
      %462 = vmatprep.subr.mxu0 0.0
      %463 = vmatpush1.xpose.msra.mxu0 0.0
      %464 = vmatprep.subr.mxu0 0.0
      %465 = vmatpush1.xpose.msra.mxu0 0.0
      %466 = vmatprep.subr.mxu0 0.0
      %467 = vmatpush1.xpose.msra.mxu0 0.0
      %468 = vmatprep.subr.mxu0 0.0
      %469 = vmatpush1.xpose.msra.mxu0 0.0
      %470 = vmatprep.subr.mxu0 0.0
      %471 = vmatpush1.xpose.msra.mxu0 0.0
      %472 = vmatprep.subr.mxu0 0.0
      %473 = vmatpush1.xpose.msra.mxu0 0.0
      %474 = vmatprep.subr.mxu0 0.0
      %475 = vmatpush1.xpose.msra.mxu0 0.0
      %476 = vmatprep.subr.mxu0 0.0
      %477 = vmatpush1.xpose.msra.mxu0 0.0
      %478 = vmatprep.subr.mxu0 0.0
      %479 = vmatpush1.xpose.msra.mxu0 0.0
      %480 = vmatprep.subr.mxu0 0.0
      %481 = vmatpush1.xpose.msra.mxu0 0.0
      %482 = vmatprep.subr.mxu0 0.0
      %483 = vmatpush1.xpose.msra.mxu0 0.0
      %484 = vmatprep.subr.mxu0 0.0
      %485 = vmatpush1.xpose.msra.mxu0 0.0
      %486 = vmatprep.subr.mxu0 0.0
      %487 = vmatpush1.xpose.msra.mxu0 0.0
      %488 = vmatprep.mubr.f32.mxu0 0.0
      %489 = vmatmul.mubr.f32.gmra.mrb[0].mxu0 %v419
      %v490 = vpop.f32.mrb[0].mxu0
      %v491 = vadd.f32 0.0, %v490
      %v492 = vpop.f32.mrb[0].mxu0
      %493 = vdwg.mxu0
      %v495 = vsel %vm265, %v255, 0
      %v498 = vsel %vm265, %v259, 0
      %500 = vmatprep.subr.mxu0 0.0
      %501 = vmatpush1.xpose.msra.mxu0 %v498
      %502 = vmatprep.subr.mxu0 0.0
      %503 = vmatpush1.xpose.msra.mxu0 0.0
      %504 = vmatprep.subr.mxu0 0.0
      %505 = vmatpush1.xpose.msra.mxu0 0.0
      %506 = vmatprep.subr.mxu0 0.0
      %507 = vmatpush1.xpose.msra.mxu0 0.0
      %508 = vmatprep.subr.mxu0 0.0
      %509 = vmatpush1.xpose.msra.mxu0 0.0
      %510 = vmatprep.subr.mxu0 0.0
      %511 = vmatpush1.xpose.msra.mxu0 0.0
      %512 = vmatprep.subr.mxu0 0.0
      %513 = vmatpush1.xpose.msra.mxu0 0.0
      %514 = vmatprep.subr.mxu0 0.0
      %515 = vmatpush1.xpose.msra.mxu0 0.0
      %516 = vmatprep.subr.mxu0 0.0
      %517 = vmatpush1.xpose.msra.mxu0 0.0
      %518 = vmatprep.subr.mxu0 0.0
      %519 = vmatpush1.xpose.msra.mxu0 0.0
      %520 = vmatprep.subr.mxu0 0.0
      %521 = vmatpush1.xpose.msra.mxu0 0.0
      %522 = vmatprep.subr.mxu0 0.0
      %523 = vmatpush1.xpose.msra.mxu0 0.0
      %524 = vmatprep.subr.mxu0 0.0
      %525 = vmatpush1.xpose.msra.mxu0 0.0
      %526 = vmatprep.subr.mxu0 0.0
      %527 = vmatpush1.xpose.msra.mxu0 0.0
      %528 = vmatprep.subr.mxu0 0.0
      %529 = vmatpush1.xpose.msra.mxu0 0.0
      %530 = vmatprep.subr.mxu0 0.0
      %531 = vmatpush1.xpose.msra.mxu0 0.0
      %532 = vmatprep.subr.mxu0 0.0
      %533 = vmatpush1.xpose.msra.mxu0 0.0
      %534 = vmatprep.subr.mxu0 0.0
      %535 = vmatpush1.xpose.msra.mxu0 0.0
      %536 = vmatprep.subr.mxu0 0.0
      %537 = vmatpush1.xpose.msra.mxu0 0.0
      %538 = vmatprep.subr.mxu0 0.0
      %539 = vmatpush1.xpose.msra.mxu0 0.0
      %540 = vmatprep.subr.mxu0 0.0
      %541 = vmatpush1.xpose.msra.mxu0 0.0
      %542 = vmatprep.subr.mxu0 0.0
      %543 = vmatpush1.xpose.msra.mxu0 0.0
      %544 = vmatprep.subr.mxu0 0.0
      %545 = vmatpush1.xpose.msra.mxu0 0.0
      %546 = vmatprep.subr.mxu0 0.0
      %547 = vmatpush1.xpose.msra.mxu0 0.0
      %548 = vmatprep.subr.mxu0 0.0
      %549 = vmatpush1.xpose.msra.mxu0 0.0
      %550 = vmatprep.subr.mxu0 0.0
      %551 = vmatpush1.xpose.msra.mxu0 0.0
      %552 = vmatprep.subr.mxu0 0.0
      %553 = vmatpush1.xpose.msra.mxu0 0.0
      %554 = vmatprep.subr.mxu0 0.0
      %555 = vmatpush1.xpose.msra.mxu0 0.0
      %556 = vmatprep.subr.mxu0 0.0
      %557 = vmatpush1.xpose.msra.mxu0 0.0
      %558 = vmatprep.subr.mxu0 0.0
      %559 = vmatpush1.xpose.msra.mxu0 0.0
      %560 = vmatprep.subr.mxu0 0.0
      %561 = vmatpush1.xpose.msra.mxu0 0.0
      %562 = vmatprep.subr.mxu0 0.0
      %563 = vmatpush1.xpose.msra.mxu0 0.0
      %564 = vmatprep.mubr.f32.mxu0 0.0
      %565 = vmatmul.mubr.f32.gmra.mrb[0].mxu0 %v495
      %v566 = vpop.f32.mrb[0].mxu0
      %v567 = vadd.f32 0.0, %v566
      %v568 = vpop.f32.mrb[0].mxu0
      %569 = vdwg.mxu0
      %v570 = vmul.f32 %v339, 0.35355338
      %v571 = vmul.f32 %v415, 0.35355338
      %v572 = vmul.f32 %v491, 0.35355338
      %v573 = vmul.f32 %v567, 0.35355338
      %v575 = vlaneseq
      %v576 = vshrl.u32 %v575, 7
      %v577 = vsub.s32 0, %v576
      %v578 = vrot.slane %v264, %v577
      %v580 = vadd.f32 %v570, %v578
      %v581 = vadd.f32 %v571, %v578
      %v582 = vadd.f32 %v572, %v578
      %v583 = vadd.f32 %v573, %v578
      %vm584 = vcmask 27648
      %v585 = vsel %vm584, %v580, -inf
      %586 = vmax.xlane.f32.xlu0 %v585
      %v587 = vpop.xlane.xlu0 %586
      %v588 = vsel %vm584, %v581, -inf
      %589 = vmax.xlane.f32.xlu0 %v588
      %v590 = vpop.xlane.xlu0 %589
      %v591 = vsel %vm584, %v582, -inf
      %592 = vmax.xlane.f32.xlu0 %v591
      %v593 = vpop.xlane.xlu0 %592
      %v594 = vsel %vm584, %v583, -inf
      %595 = vmax.xlane.f32.xlu0 %v594
      %v596 = vpop.xlane.xlu0 %595
      %v597 = vsub.f32 %v580, %v587
      %v598 = vsub.f32 %v581, %v590
      %v599 = vsub.f32 %v582, %v593
      %v600 = vsub.f32 %v583, %v596
      %v601 = vmul.f32 %v597, 1.442695
      %v602 = vpow.pop %v601
      %v603 = vmul.f32 %v598, 1.442695
      %v604 = vpow.pop %v603
      %v605 = vmul.f32 %v599, 1.442695
      %v606 = vpow.pop %v605
      %v607 = vmul.f32 %v600, 1.442695
      %v608 = vpow.pop %v607
      %v609 = vsel %vm584, %v602, 0.0
      %610 = vadd.xlane.f32.xlu0 %v609
      %v611 = vpop.xlane.xlu0 %610
      %v612 = vsel %vm584, %v604, 0.0
      %613 = vadd.xlane.f32.xlu0 %v612
      %v614 = vpop.xlane.xlu0 %613
      %v615 = vsel %vm584, %v606, 0.0
      %616 = vadd.xlane.f32.xlu0 %v615
      %v617 = vpop.xlane.xlu0 %616
      %v618 = vsel %vm584, %v608, 0.0
      %619 = vadd.xlane.f32.xlu0 %v618
      %v620 = vpop.xlane.xlu0 %619
      %v621 = vrcp.pop %v611
      %v622 = vrcp.pop %v614
      %v623 = vrcp.pop %v617
      %v624 = vrcp.pop %v620
      %v625 = vmul.f32 %v602, %v621
      %v626 = vmul.f32 %v604, %v622
      %v627 = vmul.f32 %v606, %v623
      %v628 = vmul.f32 %v608, %v624
      %vm629 = vcmask 31744
      %v631 = vsel %vm629, %v625, 0
      %vm633 = vcmask 1043456
      %v635 = vsel %vm633, %v260, 0
      %637 = vmatprep.subr.mxu0 0.0
      %638 = vmatpush1.msra.mxu0 %v635
      %639 = vmatprep.subr.mxu0 0.0
      %640 = vmatpush1.msra.mxu0 0.0
      %641 = vmatprep.subr.mxu0 0.0
      %642 = vmatpush1.msra.mxu0 0.0
      %643 = vmatprep.subr.mxu0 0.0
      %644 = vmatpush1.msra.mxu0 0.0
      %645 = vmatprep.subr.mxu0 0.0
      %646 = vmatpush1.msra.mxu0 0.0
      %647 = vmatprep.subr.mxu0 0.0
      %648 = vmatpush1.msra.mxu0 0.0
      %649 = vmatprep.subr.mxu0 0.0
      %650 = vmatpush1.msra.mxu0 0.0
      %651 = vmatprep.subr.mxu0 0.0
      %652 = vmatpush1.msra.mxu0 0.0
      %653 = vmatprep.subr.mxu0 0.0
      %654 = vmatpush1.msra.mxu0 0.0
      %655 = vmatprep.subr.mxu0 0.0
      %656 = vmatpush1.msra.mxu0 0.0
      %657 = vmatprep.subr.mxu0 0.0
      %658 = vmatpush1.msra.mxu0 0.0
      %659 = vmatprep.subr.mxu0 0.0
      %660 = vmatpush1.msra.mxu0 0.0
      %661 = vmatprep.subr.mxu0 0.0
      %662 = vmatpush1.msra.mxu0 0.0
      %663 = vmatprep.subr.mxu0 0.0
      %664 = vmatpush1.msra.mxu0 0.0
      %665 = vmatprep.subr.mxu0 0.0
      %666 = vmatpush1.msra.mxu0 0.0
      %667 = vmatprep.subr.mxu0 0.0
      %668 = vmatpush1.msra.mxu0 0.0
      %669 = vmatprep.subr.mxu0 0.0
      %670 = vmatpush1.msra.mxu0 0.0
      %671 = vmatprep.subr.mxu0 0.0
      %672 = vmatpush1.msra.mxu0 0.0
      %673 = vmatprep.subr.mxu0 0.0
      %674 = vmatpush1.msra.mxu0 0.0
      %675 = vmatprep.subr.mxu0 0.0
      %676 = vmatpush1.msra.mxu0 0.0
      %677 = vmatprep.subr.mxu0 0.0
      %678 = vmatpush1.msra.mxu0 0.0
      %679 = vmatprep.subr.mxu0 0.0
      %680 = vmatpush1.msra.mxu0 0.0
      %681 = vmatprep.subr.mxu0 0.0
      %682 = vmatpush1.msra.mxu0 0.0
      %683 = vmatprep.subr.mxu0 0.0
      %684 = vmatpush1.msra.mxu0 0.0
      %685 = vmatprep.subr.mxu0 0.0
      %686 = vmatpush1.msra.mxu0 0.0
      %687 = vmatprep.subr.mxu0 0.0
      %688 = vmatpush1.msra.mxu0 0.0
      %689 = vmatprep.subr.mxu0 0.0
      %690 = vmatpush1.msra.mxu0 0.0
      %691 = vmatprep.subr.mxu0 0.0
      %692 = vmatpush1.msra.mxu0 0.0
      %693 = vmatprep.subr.mxu0 0.0
      %694 = vmatpush1.msra.mxu0 0.0
      %695 = vmatprep.subr.mxu0 0.0
      %696 = vmatpush1.msra.mxu0 0.0
      %697 = vmatprep.subr.mxu0 0.0
      %698 = vmatpush1.msra.mxu0 0.0
      %699 = vmatprep.subr.mxu0 0.0
      %700 = vmatpush1.msra.mxu0 0.0
      %701 = vmatprep.mubr.f32.mxu0 0.0
      %702 = vmatmul.mubr.f32.gmra.mrb[0].mxu0 %v631
      %v703 = vpop.f32.mrb[0].mxu0
      %v704 = vadd.f32 0.0, %v703
      %v705 = vpop.f32.mrb[0].mxu0
      %706 = vdwg.mxu0
      %v708 = vsel %vm629, %v626, 0
      %v711 = vsel %vm633, %v261, 0
      %713 = vmatprep.subr.mxu0 0.0
      %714 = vmatpush1.msra.mxu0 %v711
      %715 = vmatprep.subr.mxu0 0.0
      %716 = vmatpush1.msra.mxu0 0.0
      %717 = vmatprep.subr.mxu0 0.0
      %718 = vmatpush1.msra.mxu0 0.0
      %719 = vmatprep.subr.mxu0 0.0
      %720 = vmatpush1.msra.mxu0 0.0
      %721 = vmatprep.subr.mxu0 0.0
      %722 = vmatpush1.msra.mxu0 0.0
      %723 = vmatprep.subr.mxu0 0.0
      %724 = vmatpush1.msra.mxu0 0.0
      %725 = vmatprep.subr.mxu0 0.0
      %726 = vmatpush1.msra.mxu0 0.0
      %727 = vmatprep.subr.mxu0 0.0
      %728 = vmatpush1.msra.mxu0 0.0
      %729 = vmatprep.subr.mxu0 0.0
      %730 = vmatpush1.msra.mxu0 0.0
      %731 = vmatprep.subr.mxu0 0.0
      %732 = vmatpush1.msra.mxu0 0.0
      %733 = vmatprep.subr.mxu0 0.0
      %734 = vmatpush1.msra.mxu0 0.0
      %735 = vmatprep.subr.mxu0 0.0
      %736 = vmatpush1.msra.mxu0 0.0
      %737 = vmatprep.subr.mxu0 0.0
      %738 = vmatpush1.msra.mxu0 0.0
      %739 = vmatprep.subr.mxu0 0.0
      %740 = vmatpush1.msra.mxu0 0.0
      %741 = vmatprep.subr.mxu0 0.0
      %742 = vmatpush1.msra.mxu0 0.0
      %743 = vmatprep.subr.mxu0 0.0
      %744 = vmatpush1.msra.mxu0 0.0
      %745 = vmatprep.subr.mxu0 0.0
      %746 = vmatpush1.msra.mxu0 0.0
      %747 = vmatprep.subr.mxu0 0.0
      %748 = vmatpush1.msra.mxu0 0.0
      %749 = vmatprep.subr.mxu0 0.0
      %750 = vmatpush1.msra.mxu0 0.0
      %751 = vmatprep.subr.mxu0 0.0
      %752 = vmatpush1.msra.mxu0 0.0
      %753 = vmatprep.subr.mxu0 0.0
      %754 = vmatpush1.msra.mxu0 0.0
      %755 = vmatprep.subr.mxu0 0.0
      %756 = vmatpush1.msra.mxu0 0.0
      %757 = vmatprep.subr.mxu0 0.0
      %758 = vmatpush1.msra.mxu0 0.0
      %759 = vmatprep.subr.mxu0 0.0
      %760 = vmatpush1.msra.mxu0 0.0
      %761 = vmatprep.subr.mxu0 0.0
      %762 = vmatpush1.msra.mxu0 0.0
      %763 = vmatprep.subr.mxu0 0.0
      %764 = vmatpush1.msra.mxu0 0.0
      %765 = vmatprep.subr.mxu0 0.0
      %766 = vmatpush1.msra.mxu0 0.0
      %767 = vmatprep.subr.mxu0 0.0
      %768 = vmatpush1.msra.mxu0 0.0
      %769 = vmatprep.subr.mxu0 0.0
      %770 = vmatpush1.msra.mxu0 0.0
      %771 = vmatprep.subr.mxu0 0.0
      %772 = vmatpush1.msra.mxu0 0.0
      %773 = vmatprep.subr.mxu0 0.0
      %774 = vmatpush1.msra.mxu0 0.0
      %775 = vmatprep.subr.mxu0 0.0
      %776 = vmatpush1.msra.mxu0 0.0
      %777 = vmatprep.mubr.f32.mxu0 0.0
      %778 = vmatmul.mubr.f32.gmra.mrb[0].mxu0 %v708
      %v779 = vpop.f32.mrb[0].mxu0
      %v780 = vadd.f32 0.0, %v779
      %v781 = vpop.f32.mrb[0].mxu0
      %782 = vdwg.mxu0
      %v784 = vsel %vm629, %v627, 0
      %v787 = vsel %vm633, %v262, 0
      %789 = vmatprep.subr.mxu0 0.0
      %790 = vmatpush1.msra.mxu0 %v787
      %791 = vmatprep.subr.mxu0 0.0
      %792 = vmatpush1.msra.mxu0 0.0
      %793 = vmatprep.subr.mxu0 0.0
      %794 = vmatpush1.msra.mxu0 0.0
      %795 = vmatprep.subr.mxu0 0.0
      %796 = vmatpush1.msra.mxu0 0.0
      %797 = vmatprep.subr.mxu0 0.0
      %798 = vmatpush1.msra.mxu0 0.0
      %799 = vmatprep.subr.mxu0 0.0
      %800 = vmatpush1.msra.mxu0 0.0
      %801 = vmatprep.subr.mxu0 0.0
      %802 = vmatpush1.msra.mxu0 0.0
      %803 = vmatprep.subr.mxu0 0.0
      %804 = vmatpush1.msra.mxu0 0.0
      %805 = vmatprep.subr.mxu0 0.0
      %806 = vmatpush1.msra.mxu0 0.0
      %807 = vmatprep.subr.mxu0 0.0
      %808 = vmatpush1.msra.mxu0 0.0
      %809 = vmatprep.subr.mxu0 0.0
      %810 = vmatpush1.msra.mxu0 0.0
      %811 = vmatprep.subr.mxu0 0.0
      %812 = vmatpush1.msra.mxu0 0.0
      %813 = vmatprep.subr.mxu0 0.0
      %814 = vmatpush1.msra.mxu0 0.0
      %815 = vmatprep.subr.mxu0 0.0
      %816 = vmatpush1.msra.mxu0 0.0
      %817 = vmatprep.subr.mxu0 0.0
      %818 = vmatpush1.msra.mxu0 0.0
      %819 = vmatprep.subr.mxu0 0.0
      %820 = vmatpush1.msra.mxu0 0.0
      %821 = vmatprep.subr.mxu0 0.0
      %822 = vmatpush1.msra.mxu0 0.0
      %823 = vmatprep.subr.mxu0 0.0
      %824 = vmatpush1.msra.mxu0 0.0
      %825 = vmatprep.subr.mxu0 0.0
      %826 = vmatpush1.msra.mxu0 0.0
      %827 = vmatprep.subr.mxu0 0.0
      %828 = vmatpush1.msra.mxu0 0.0
      %829 = vmatprep.subr.mxu0 0.0
      %830 = vmatpush1.msra.mxu0 0.0
      %831 = vmatprep.subr.mxu0 0.0
      %832 = vmatpush1.msra.mxu0 0.0
      %833 = vmatprep.subr.mxu0 0.0
      %834 = vmatpush1.msra.mxu0 0.0
      %835 = vmatprep.subr.mxu0 0.0
      %836 = vmatpush1.msra.mxu0 0.0
      %837 = vmatprep.subr.mxu0 0.0
      %838 = vmatpush1.msra.mxu0 0.0
      %839 = vmatprep.subr.mxu0 0.0
      %840 = vmatpush1.msra.mxu0 0.0
      %841 = vmatprep.subr.mxu0 0.0
      %842 = vmatpush1.msra.mxu0 0.0
      %843 = vmatprep.subr.mxu0 0.0
      %844 = vmatpush1.msra.mxu0 0.0
      %845 = vmatprep.subr.mxu0 0.0
      %846 = vmatpush1.msra.mxu0 0.0
      %847 = vmatprep.subr.mxu0 0.0
      %848 = vmatpush1.msra.mxu0 0.0
      %849 = vmatprep.subr.mxu0 0.0
      %850 = vmatpush1.msra.mxu0 0.0
      %851 = vmatprep.subr.mxu0 0.0
      %852 = vmatpush1.msra.mxu0 0.0
      %853 = vmatprep.mubr.f32.mxu0 0.0
      %854 = vmatmul.mubr.f32.gmra.mrb[0].mxu0 %v784
      %v855 = vpop.f32.mrb[0].mxu0
      %v856 = vadd.f32 0.0, %v855
      %v857 = vpop.f32.mrb[0].mxu0
      %858 = vdwg.mxu0
      %v860 = vsel %vm629, %v628, 0
      %v863 = vsel %vm633, %v263, 0
      %865 = vmatprep.subr.mxu0 0.0
      %866 = vmatpush1.msra.mxu0 %v863
      %867 = vmatprep.subr.mxu0 0.0
      %868 = vmatpush1.msra.mxu0 0.0
      %869 = vmatprep.subr.mxu0 0.0
      %870 = vmatpush1.msra.mxu0 0.0
      %871 = vmatprep.subr.mxu0 0.0
      %872 = vmatpush1.msra.mxu0 0.0
      %873 = vmatprep.subr.mxu0 0.0
      %874 = vmatpush1.msra.mxu0 0.0
      %875 = vmatprep.subr.mxu0 0.0
      %876 = vmatpush1.msra.mxu0 0.0
      %877 = vmatprep.subr.mxu0 0.0
      %878 = vmatpush1.msra.mxu0 0.0
      %879 = vmatprep.subr.mxu0 0.0
      %880 = vmatpush1.msra.mxu0 0.0
      %881 = vmatprep.subr.mxu0 0.0
      %882 = vmatpush1.msra.mxu0 0.0
      %883 = vmatprep.subr.mxu0 0.0
      %884 = vmatpush1.msra.mxu0 0.0
      %885 = vmatprep.subr.mxu0 0.0
      %886 = vmatpush1.msra.mxu0 0.0
      %887 = vmatprep.subr.mxu0 0.0
      %888 = vmatpush1.msra.mxu0 0.0
      %889 = vmatprep.subr.mxu0 0.0
      %890 = vmatpush1.msra.mxu0 0.0
      %891 = vmatprep.subr.mxu0 0.0
      %892 = vmatpush1.msra.mxu0 0.0
      %893 = vmatprep.subr.mxu0 0.0
      %894 = vmatpush1.msra.mxu0 0.0
      %895 = vmatprep.subr.mxu0 0.0
      %896 = vmatpush1.msra.mxu0 0.0
      %897 = vmatprep.subr.mxu0 0.0
      %898 = vmatpush1.msra.mxu0 0.0
      %899 = vmatprep.subr.mxu0 0.0
      %900 = vmatpush1.msra.mxu0 0.0
      %901 = vmatprep.subr.mxu0 0.0
      %902 = vmatpush1.msra.mxu0 0.0
      %903 = vmatprep.subr.mxu0 0.0
      %904 = vmatpush1.msra.mxu0 0.0
      %905 = vmatprep.subr.mxu0 0.0
      %906 = vmatpush1.msra.mxu0 0.0
      %907 = vmatprep.subr.mxu0 0.0
      %908 = vmatpush1.msra.mxu0 0.0
      %909 = vmatprep.subr.mxu0 0.0
      %910 = vmatpush1.msra.mxu0 0.0
      %911 = vmatprep.subr.mxu0 0.0
      %912 = vmatpush1.msra.mxu0 0.0
      %913 = vmatprep.subr.mxu0 0.0
      %914 = vmatpush1.msra.mxu0 0.0
      %915 = vmatprep.subr.mxu0 0.0
      %916 = vmatpush1.msra.mxu0 0.0
      %917 = vmatprep.subr.mxu0 0.0
      %918 = vmatpush1.msra.mxu0 0.0
      %919 = vmatprep.subr.mxu0 0.0
      %920 = vmatpush1.msra.mxu0 0.0
      %921 = vmatprep.subr.mxu0 0.0
      %922 = vmatpush1.msra.mxu0 0.0
      %923 = vmatprep.subr.mxu0 0.0
      %924 = vmatpush1.msra.mxu0 0.0
      %925 = vmatprep.subr.mxu0 0.0
      %926 = vmatpush1.msra.mxu0 0.0
      %927 = vmatprep.subr.mxu0 0.0
      %928 = vmatpush1.msra.mxu0 0.0
      %929 = vmatprep.mubr.f32.mxu0 0.0
      %930 = vmatmul.mubr.f32.gmra.mrb[0].mxu0 %v860
      %v931 = vpop.f32.mrb[0].mxu0
      %v932 = vadd.f32 0.0, %v931
      %v933 = vpop.f32.mrb[0].mxu0
      %934 = vdwg.mxu0
      %vm935 = vcmask 60416
      %936 = vst.msk [vmem:[%s251] sm:$0xf] %vm935, %v704
      %937 = vst.msk [vmem:[%s251 + $0x4] sm:$0xf] %vm935, %v780
      %938 = vst.msk [vmem:[%s251 + $0x8] sm:$0xf] %vm935, %v856
      %939 = vst.msk [vmem:[%s251 + $0xc] sm:$0xf] %vm935, %v932
      %p940 = scmp.lt.s32.totalorder %s15, 1
      %s941 = scalar_select %p940, %s15, 1
      %s942 = smul.addr %s941, 4
      %s943 = smul.addr %s942, 4
      %s944 = scalar_lea.vmem %s4, %s943
      // Predicated region
      $region37: #{analogical_networks_forward.50} parent=35 // pred_check
        %p945 = pneg %p137
      $region38: #{analogical_networks_forward.50} parent=35 // pred_check_branch
        %947 = sbr.rel (%p945) target = $region40
      $region39: #{analogical_networks_forward.50} parent=35 // pred_region
        _
      $region40: #{analogical_networks_forward.50} parent=35 // pred_fallthru
        _
    $region36: #{analogical_networks_forward.50} parent=5 // pred_fallthru
      _
    %p948 = scmp.le.s32.totalorder 2, %s10
    // Predicated region
    $region41: #{analogical_networks_forward.50} parent=5 // pred_check
      %p949 = pneg %p948
    $region42: #{analogical_networks_forward.50} parent=5 // pred_check_branch
      %951 = sbr.rel (%p949) target = $region44
    $region43: #{analogical_networks_forward.50} parent=5 // pred_region
      %s952 = ssub.s32 %s10, 2
      // Predicated region
      $region45: #{analogical_networks_forward.50} parent=43 // pred_check
        %p953 = pneg %p143
      $region46: #{analogical_networks_forward.50} parent=43 // pred_check_branch
        %955 = sbr.rel (%p953) target = $region48
      $region47: #{analogical_networks_forward.50} parent=43 // pred_region
        %p956 = scmp.lt.s32.totalorder %s16, 1
        %s957 = scalar_select %p956, %s16, 1
        %s958 = smul.addr %s957, 4
        %s959 = smul.addr %s958, 4
        %s960 = scalar_lea.vmem %s4, %s959
      $region48: #{analogical_networks_forward.50} parent=43 // pred_fallthru
        _
    $region44: #{analogical_networks_forward.50} parent=5 // pred_fallthru
      _
  $region6: #{analogical_networks_forward.50} parent=0 // loop_footer
    %s14 = sadd.s32 1, %s10
  $region7: #{analogical_networks_forward.50} parent=0 // loop_footer_branch
    %9 = sbr.rel target = $region3
  $region8: #{analogical_networks_forward.50} parent=0 // loop_exit
    _

// kernel: analogical_networks_forward.46
$region0: #{analogical_networks_forward.46}
  #allocation0 [shape = 'u32[]', space=smem, size = 0x4, offset = 0x4, fixed_abs, tag = 'smem constant byte address 0x4 - core index']
  #allocation1 [shape = 'u32[144,128]{1,0:T(1,128)}', space=vmem, size = 0x12000, scoped, tag = 'internal scratch']
  %s0 = inlined_call_operand.vmem [shape: f32[16,32], index: 0, kind: input, shape index: {}, may-alias: {0,1}]
  %s1 = inlined_call_operand.vmem [shape: f32[16,32], index: 1, kind: input, shape index: {}, may-alias: {0,1}]
  %s2 = inlined_call_operand.vmem [shape: f32[16,32], index: 2, kind: input, shape index: {}]
  %s3 = inlined_call_operand.vmem [shape: f32[32,32], index: 3, kind: input, shape index: {}]
  %s4 = inlined_call_operand.vmem [shape: f32[1,32], index: 4, kind: input, shape index: {}]
  %s5 = inlined_call_operand.vmem [shape: f32[32,32], index: 5, kind: input, shape index: {}]
  %s6 = inlined_call_operand.vmem [shape: f32[1,32], index: 6, kind: input, shape index: {}]
  %s7 = inlined_call_operand.vmem [shape: f32[32,32], index: 7, kind: input, shape index: {}]
  %s8 = inlined_call_operand.vmem [shape: f32[1,32], index: 8, kind: input, shape index: {}]
  %s9 = inlined_call_operand.vmem [shape: f32[16,32], index: 9, kind: output, shape index: {0}]
  %s10 = inlined_call_operand.vmem [shape: f32[16,32], index: 10, kind: output, shape index: {1}]
  %s11 = inlined_call_operand.vmem [shape: f32[16,32], index: 11, kind: output, shape index: {2}]
  %12 = xla_tuple %s9, %s10, %s11
  %s13 = sld [smem:[#allocation0]]
  $region62: #{analogical_networks_forward.46} parent=0
    _
  %s15 = ssub.s32 1, %s13
  %s16 = scalar_select 0, %s15, %s13
  // Predicated region
  $region2: #{analogical_networks_forward.46} parent=0 // pred_check
    _
  $region3: #{analogical_networks_forward.46} parent=0 // pred_check_branch
    %18 = sbr.rel (0) target = $region5
  $region4: #{analogical_networks_forward.46} parent=0 // pred_region
    _
  $region5: #{analogical_networks_forward.46} parent=0 // pred_fallthru
    _
  // Predicated region
  $region6: #{analogical_networks_forward.46} parent=0 // pred_check
    _
  $region7: #{analogical_networks_forward.46} parent=0 // pred_check_branch
    %20 = sbr.rel (0) target = $region9
  $region8: #{analogical_networks_forward.46} parent=0 // pred_region
    _
  $region9: #{analogical_networks_forward.46} parent=0 // pred_fallthru
    _
  // Predicated region
  $region10: #{analogical_networks_forward.46} parent=0 // pred_check
    _
  $region11: #{analogical_networks_forward.46} parent=0 // pred_check_branch
    %22 = sbr.rel (0) target = $region13
  $region12: #{analogical_networks_forward.46} parent=0 // pred_region
    _
  $region13: #{analogical_networks_forward.46} parent=0 // pred_fallthru
    _
  // Predicated region
  $region14: #{analogical_networks_forward.46} parent=0 // pred_check
    _
  $region15: #{analogical_networks_forward.46} parent=0 // pred_check_branch
    %24 = sbr.rel (0) target = $region17
  $region16: #{analogical_networks_forward.46} parent=0 // pred_region
    _
  $region17: #{analogical_networks_forward.46} parent=0 // pred_fallthru
    _
  // Predicated region
  $region18: #{analogical_networks_forward.46} parent=0 // pred_check
    _
  $region19: #{analogical_networks_forward.46} parent=0 // pred_check_branch
    %26 = sbr.rel (0) target = $region21
  $region20: #{analogical_networks_forward.46} parent=0 // pred_region
    _
  $region21: #{analogical_networks_forward.46} parent=0 // pred_fallthru
    _
  // Predicated region
  $region22: #{analogical_networks_forward.46} parent=0 // pred_check
    _
  $region23: #{analogical_networks_forward.46} parent=0 // pred_check_branch
    %28 = sbr.rel (0) target = $region25
  $region24: #{analogical_networks_forward.46} parent=0 // pred_region
    _
  $region25: #{analogical_networks_forward.46} parent=0 // pred_fallthru
    _
  // Predicated region
  $region26: #{analogical_networks_forward.46} parent=0 // pred_check
    _
  $region27: #{analogical_networks_forward.46} parent=0 // pred_check_branch
    %30 = sbr.rel (0) target = $region29
  $region28: #{analogical_networks_forward.46} parent=0 // pred_region
    _
  $region29: #{analogical_networks_forward.46} parent=0 // pred_fallthru
    _
  // Predicated region
  $region30: #{analogical_networks_forward.46} parent=0 // pred_check
    _
  $region31: #{analogical_networks_forward.46} parent=0 // pred_check_branch
    %32 = sbr.rel (0) target = $region33
  $region32: #{analogical_networks_forward.46} parent=0 // pred_region
    _
  $region33: #{analogical_networks_forward.46} parent=0 // pred_fallthru
    _
  // Predicated region
  $region34: #{analogical_networks_forward.46} parent=0 // pred_check
    _
  $region35: #{analogical_networks_forward.46} parent=0 // pred_check_branch
    %34 = sbr.rel (0) target = $region37
  $region36: #{analogical_networks_forward.46} parent=0 // pred_region
    _
  $region37: #{analogical_networks_forward.46} parent=0 // pred_fallthru
    _
  %v35 = vld [vmem:[%s0] sm:$0xff]
  %v36 = vld [vmem:[%s0 + $0x8] sm:$0xff]
  %v37 = vld [vmem:[%s3] sm:$0xff]
  %v38 = vld [vmem:[%s3 + $0x8] sm:$0xff]
  %v39 = vld [vmem:[%s3 + $0x10] sm:$0xff]
  %v40 = vld [vmem:[%s3 + $0x18] sm:$0xff]
  %v41 = vld [vmem:[%s4] sm:$0x1]
  %v43 = vlaneseq
  %v44 = vshrl.u32 %v43, 7
  %v45 = vsub.s32 0, %v44
  %v46 = vrot.slane %v41, %v45
  %vm48 = vcmask 261120
  %v50 = vsel %vm48, %v35, 0
  %v53 = vsel %vm48, %v36, 0
  %55 = vmatprep.subr.mxu0 0.0
  %56 = vmatpush1.msra.mxu0 %v37
  %57 = vmatprep.subr.mxu0 0.0
  %58 = vmatpush1.msra.mxu0 %v38
  %59 = vmatprep.subr.mxu0 0.0
  %60 = vmatpush1.msra.mxu0 %v39
  %61 = vmatprep.subr.mxu0 0.0
  %62 = vmatpush1.msra.mxu0 %v40
  %63 = vmatprep.subr.mxu0 0.0
  %64 = vmatpush1.msra.mxu0 0.0
  %65 = vmatprep.subr.mxu0 0.0
  %66 = vmatpush1.msra.mxu0 0.0
  %67 = vmatprep.subr.mxu0 0.0
  %68 = vmatpush1.msra.mxu0 0.0
  %69 = vmatprep.subr.mxu0 0.0
  %70 = vmatpush1.msra.mxu0 0.0
  %71 = vmatprep.subr.mxu0 0.0
  %72 = vmatpush1.msra.mxu0 0.0
  %73 = vmatprep.subr.mxu0 0.0
  %74 = vmatpush1.msra.mxu0 0.0
  %75 = vmatprep.subr.mxu0 0.0
  %76 = vmatpush1.msra.mxu0 0.0
  %77 = vmatprep.subr.mxu0 0.0
  %78 = vmatpush1.msra.mxu0 0.0
  %79 = vmatprep.subr.mxu0 0.0
  %80 = vmatpush1.msra.mxu0 0.0
  %81 = vmatprep.subr.mxu0 0.0
  %82 = vmatpush1.msra.mxu0 0.0
  %83 = vmatprep.subr.mxu0 0.0
  %84 = vmatpush1.msra.mxu0 0.0
  %85 = vmatprep.subr.mxu0 0.0
  %86 = vmatpush1.msra.mxu0 0.0
  %87 = vmatprep.subr.mxu0 0.0
  %88 = vmatpush1.msra.mxu0 0.0
  %89 = vmatprep.subr.mxu0 0.0
  %90 = vmatpush1.msra.mxu0 0.0
  %91 = vmatprep.subr.mxu0 0.0
  %92 = vmatpush1.msra.mxu0 0.0
  %93 = vmatprep.subr.mxu0 0.0
  %94 = vmatpush1.msra.mxu0 0.0
  %95 = vmatprep.subr.mxu0 0.0
  %96 = vmatpush1.msra.mxu0 0.0
  %97 = vmatprep.subr.mxu0 0.0
  %98 = vmatpush1.msra.mxu0 0.0
  %99 = vmatprep.subr.mxu0 0.0
  %100 = vmatpush1.msra.mxu0 0.0
  %101 = vmatprep.subr.mxu0 0.0
  %102 = vmatpush1.msra.mxu0 0.0
  %103 = vmatprep.subr.mxu0 0.0
  %104 = vmatpush1.msra.mxu0 0.0
  %105 = vmatprep.subr.mxu0 0.0
  %106 = vmatpush1.msra.mxu0 0.0
  %107 = vmatprep.subr.mxu0 0.0
  %108 = vmatpush1.msra.mxu0 0.0
  %109 = vmatprep.subr.mxu0 0.0
  %110 = vmatpush1.msra.mxu0 0.0
  %111 = vmatprep.subr.mxu0 0.0
  %112 = vmatpush1.msra.mxu0 0.0
  %113 = vmatprep.subr.mxu0 0.0
  %114 = vmatpush1.msra.mxu0 0.0
  %115 = vmatprep.subr.mxu0 0.0
  %116 = vmatpush1.msra.mxu0 0.0
  %117 = vmatprep.subr.mxu0 0.0
  %118 = vmatpush1.msra.mxu0 0.0
  %119 = vmatprep.mubr.f32.mxu0 0.0
  %120 = vmatmul.mubr.f32.gmra.mrb[0].mxu0 %v50
  %v121 = vpop.f32.mrb[0].mxu0
  %v122 = vadd.f32 %v46, %v121
  %v123 = vpop.f32.mrb[0].mxu0
  %124 = vmatprep.mubr.f32.mxu0 0.0
  %125 = vmatmul.mubr.f32.gmra.mrb[0].mxu0 %v53
  %v126 = vpop.f32.mrb[0].mxu0
  %v127 = vadd.f32 %v46, %v126
  %v128 = vpop.f32.mrb[0].mxu0
  %129 = vdwg.mxu0
  %130 = vst.msk [vmem:[%s9] sm:$0xff] %vm48, %v122
  %131 = vst.msk [vmem:[%s9 + $0x8] sm:$0xff] %vm48, %v127
  %v132 = vld [vmem:[%s1] sm:$0xff]
  %v133 = vld [vmem:[%s1 + $0x8] sm:$0xff]
  %v134 = vld [vmem:[%s5] sm:$0xff]
  %v135 = vld [vmem:[%s5 + $0x8] sm:$0xff]
  %v136 = vld [vmem:[%s5 + $0x10] sm:$0xff]
  %v137 = vld [vmem:[%s5 + $0x18] sm:$0xff]
  %v138 = vld [vmem:[%s6] sm:$0x1]
  %v140 = vlaneseq
  %v141 = vshrl.u32 %v140, 7
  %v142 = vsub.s32 0, %v141
  %v143 = vrot.slane %v138, %v142
  %v146 = vsel %vm48, %v132, 0
  %v149 = vsel %vm48, %v133, 0
  %151 = vmatprep.subr.mxu0 0.0
  %152 = vmatpush1.msra.mxu0 %v134
  %153 = vmatprep.subr.mxu0 0.0
  %154 = vmatpush1.msra.mxu0 %v135
  %155 = vmatprep.subr.mxu0 0.0
  %156 = vmatpush1.msra.mxu0 %v136
  %157 = vmatprep.subr.mxu0 0.0
  %158 = vmatpush1.msra.mxu0 %v137
  %159 = vmatprep.subr.mxu0 0.0
  %160 = vmatpush1.msra.mxu0 0.0
  %161 = vmatprep.subr.mxu0 0.0
  %162 = vmatpush1.msra.mxu0 0.0
  %163 = vmatprep.subr.mxu0 0.0
  %164 = vmatpush1.msra.mxu0 0.0
  %165 = vmatprep.subr.mxu0 0.0
  %166 = vmatpush1.msra.mxu0 0.0
  %167 = vmatprep.subr.mxu0 0.0
  %168 = vmatpush1.msra.mxu0 0.0
  %169 = vmatprep.subr.mxu0 0.0
  %170 = vmatpush1.msra.mxu0 0.0
  %171 = vmatprep.subr.mxu0 0.0
  %172 = vmatpush1.msra.mxu0 0.0
  %173 = vmatprep.subr.mxu0 0.0
  %174 = vmatpush1.msra.mxu0 0.0
  %175 = vmatprep.subr.mxu0 0.0
  %176 = vmatpush1.msra.mxu0 0.0
  %177 = vmatprep.subr.mxu0 0.0
  %178 = vmatpush1.msra.mxu0 0.0
  %179 = vmatprep.subr.mxu0 0.0
  %180 = vmatpush1.msra.mxu0 0.0
  %181 = vmatprep.subr.mxu0 0.0
  %182 = vmatpush1.msra.mxu0 0.0
  %183 = vmatprep.subr.mxu0 0.0
  %184 = vmatpush1.msra.mxu0 0.0
  %185 = vmatprep.subr.mxu0 0.0
  %186 = vmatpush1.msra.mxu0 0.0
  %187 = vmatprep.subr.mxu0 0.0
  %188 = vmatpush1.msra.mxu0 0.0
  %189 = vmatprep.subr.mxu0 0.0
  %190 = vmatpush1.msra.mxu0 0.0
  %191 = vmatprep.subr.mxu0 0.0
  %192 = vmatpush1.msra.mxu0 0.0
  %193 = vmatprep.subr.mxu0 0.0
  %194 = vmatpush1.msra.mxu0 0.0
  %195 = vmatprep.subr.mxu0 0.0
  %196 = vmatpush1.msra.mxu0 0.0
  %197 = vmatprep.subr.mxu0 0.0
  %198 = vmatpush1.msra.mxu0 0.0
  %199 = vmatprep.subr.mxu0 0.0
  %200 = vmatpush1.msra.mxu0 0.0
  %201 = vmatprep.subr.mxu0 0.0
  %202 = vmatpush1.msra.mxu0 0.0
  %203 = vmatprep.subr.mxu0 0.0
  %204 = vmatpush1.msra.mxu0 0.0
  %205 = vmatprep.subr.mxu0 0.0
  %206 = vmatpush1.msra.mxu0 0.0
  %207 = vmatprep.subr.mxu0 0.0
  %208 = vmatpush1.msra.mxu0 0.0
  %209 = vmatprep.subr.mxu0 0.0
  %210 = vmatpush1.msra.mxu0 0.0
  %211 = vmatprep.subr.mxu0 0.0
  %212 = vmatpush1.msra.mxu0 0.0
  %213 = vmatprep.subr.mxu0 0.0
  %214 = vmatpush1.msra.mxu0 0.0
  %215 = vmatprep.mubr.f32.mxu0 0.0
  %216 = vmatmul.mubr.f32.gmra.mrb[0].mxu0 %v146
  %v217 = vpop.f32.mrb[0].mxu0
  %v218 = vadd.f32 %v143, %v217
  %v219 = vpop.f32.mrb[0].mxu0
  %220 = vmatprep.mubr.f32.mxu0 0.0
  %221 = vmatmul.mubr.f32.gmra.mrb[0].mxu0 %v149
  %v222 = vpop.f32.mrb[0].mxu0
  %v223 = vadd.f32 %v143, %v222
  %v224 = vpop.f32.mrb[0].mxu0
  %225 = vdwg.mxu0
  %226 = vst.msk [vmem:[%s10] sm:$0xff] %vm48, %v218
  %227 = vst.msk [vmem:[%s10 + $0x8] sm:$0xff] %vm48, %v223
  %v228 = vld [vmem:[%s2] sm:$0xff]
  %v229 = vld [vmem:[%s2 + $0x8] sm:$0xff]
  %v230 = vld [vmem:[%s7] sm:$0xff]
  %v231 = vld [vmem:[%s7 + $0x8] sm:$0xff]
  %v232 = vld [vmem:[%s7 + $0x10] sm:$0xff]
  %v233 = vld [vmem:[%s7 + $0x18] sm:$0xff]
  %v234 = vld [vmem:[%s8] sm:$0x1]
  %v236 = vlaneseq
  %v237 = vshrl.u32 %v236, 7
  %v238 = vsub.s32 0, %v237
  %v239 = vrot.slane %v234, %v238
  %v242 = vsel %vm48, %v228, 0
  %v245 = vsel %vm48, %v229, 0
  %247 = vmatprep.subr.mxu0 0.0
  %248 = vmatpush1.msra.mxu0 %v230
  %249 = vmatprep.subr.mxu0 0.0
  %250 = vmatpush1.msra.mxu0 %v231
  %251 = vmatprep.subr.mxu0 0.0
  %252 = vmatpush1.msra.mxu0 %v232
  %253 = vmatprep.subr.mxu0 0.0
  %254 = vmatpush1.msra.mxu0 %v233
  %255 = vmatprep.subr.mxu0 0.0
  %256 = vmatpush1.msra.mxu0 0.0
  %257 = vmatprep.subr.mxu0 0.0
  %258 = vmatpush1.msra.mxu0 0.0
  %259 = vmatprep.subr.mxu0 0.0
  %260 = vmatpush1.msra.mxu0 0.0
  %261 = vmatprep.subr.mxu0 0.0
  %262 = vmatpush1.msra.mxu0 0.0
  %263 = vmatprep.subr.mxu0 0.0
  %264 = vmatpush1.msra.mxu0 0.0
  %265 = vmatprep.subr.mxu0 0.0
  %266 = vmatpush1.msra.mxu0 0.0
  %267 = vmatprep.subr.mxu0 0.0
  %268 = vmatpush1.msra.mxu0 0.0
  %269 = vmatprep.subr.mxu0 0.0
  %270 = vmatpush1.msra.mxu0 0.0
  %271 = vmatprep.subr.mxu0 0.0
  %272 = vmatpush1.msra.mxu0 0.0
  %273 = vmatprep.subr.mxu0 0.0
  %274 = vmatpush1.msra.mxu0 0.0
  %275 = vmatprep.subr.mxu0 0.0
  %276 = vmatpush1.msra.mxu0 0.0
  %277 = vmatprep.subr.mxu0 0.0
  %278 = vmatpush1.msra.mxu0 0.0
  %279 = vmatprep.subr.mxu0 0.0
  %280 = vmatpush1.msra.mxu0 0.0
  %281 = vmatprep.subr.mxu0 0.0
  %282 = vmatpush1.msra.mxu0 0.0
  %283 = vmatprep.subr.mxu0 0.0
  %284 = vmatpush1.msra.mxu0 0.0
  %285 = vmatprep.subr.mxu0 0.0
  %286 = vmatpush1.msra.mxu0 0.0
  %287 = vmatprep.subr.mxu0 0.0
  %288 = vmatpush1.msra.mxu0 0.0
  %289 = vmatprep.subr.mxu0 0.0
  %290 = vmatpush1.msra.mxu0 0.0
  %291 = vmatprep.subr.mxu0 0.0
  %292 = vmatpush1.msra.mxu0 0.0
  %293 = vmatprep.subr.mxu0 0.0
  %294 = vmatpush1.msra.mxu0 0.0
  %295 = vmatprep.subr.mxu0 0.0
  %296 = vmatpush1.msra.mxu0 0.0
  %297 = vmatprep.subr.mxu0 0.0
  %298 = vmatpush1.msra.mxu0 0.0
  %299 = vmatprep.subr.mxu0 0.0
  %300 = vmatpush1.msra.mxu0 0.0
  %301 = vmatprep.subr.mxu0 0.0
  %302 = vmatpush1.msra.mxu0 0.0
  %303 = vmatprep.subr.mxu0 0.0
  %304 = vmatpush1.msra.mxu0 0.0
  %305 = vmatprep.subr.mxu0 0.0
  %306 = vmatpush1.msra.mxu0 0.0
  %307 = vmatprep.subr.mxu0 0.0
  %308 = vmatpush1.msra.mxu0 0.0
  %309 = vmatprep.subr.mxu0 0.0
  %310 = vmatpush1.msra.mxu0 0.0
  %311 = vmatprep.mubr.f32.mxu0 0.0
  %312 = vmatmul.mubr.f32.gmra.mrb[0].mxu0 %v242
  %v313 = vpop.f32.mrb[0].mxu0
  %v314 = vadd.f32 %v239, %v313
  %v315 = vpop.f32.mrb[0].mxu0
  %316 = vmatprep.mubr.f32.mxu0 0.0
  %317 = vmatmul.mubr.f32.gmra.mrb[0].mxu0 %v245
  %v318 = vpop.f32.mrb[0].mxu0
  %v319 = vadd.f32 %v239, %v318
  %v320 = vpop.f32.mrb[0].mxu0
  %321 = vdwg.mxu0
  %322 = vst.msk [vmem:[%s11] sm:$0xff] %vm48, %v314
  %323 = vst.msk [vmem:[%s11 + $0x8] sm:$0xff] %vm48, %v319
  // Predicated region
  $region38: #{analogical_networks_forward.46} parent=0 // pred_check
    _
  $region39: #{analogical_networks_forward.46} parent=0 // pred_check_branch
    %325 = sbr.rel (0) target = $region41
  $region40: #{analogical_networks_forward.46} parent=0 // pred_region
    _
  $region41: #{analogical_networks_forward.46} parent=0 // pred_fallthru
    _
  // Predicated region
  $region42: #{analogical_networks_forward.46} parent=0 // pred_check
    _
  $region43: #{analogical_networks_forward.46} parent=0 // pred_check_branch
    %327 = sbr.rel (0) target = $region45
  $region44: #{analogical_networks_forward.46} parent=0 // pred_region
    _
  $region45: #{analogical_networks_forward.46} parent=0 // pred_fallthru
    _
  // Predicated region
  $region46: #{analogical_networks_forward.46} parent=0 // pred_check
    _
  $region47: #{analogical_networks_forward.46} parent=0 // pred_check_branch
    %329 = sbr.rel (0) target = $region49
  $region48: #{analogical_networks_forward.46} parent=0 // pred_region
    _
  $region49: #{analogical_networks_forward.46} parent=0 // pred_fallthru
    _
  // Predicated region
  $region50: #{analogical_networks_forward.46} parent=0 // pred_check
    _
  $region51: #{analogical_networks_forward.46} parent=0 // pred_check_branch
    %331 = sbr.rel (0) target = $region53
  $region52: #{analogical_networks_forward.46} parent=0 // pred_region
    _
  $region53: #{analogical_networks_forward.46} parent=0 // pred_fallthru
    _
  // Predicated region
  $region54: #{analogical_networks_forward.46} parent=0 // pred_check
    _
  $region55: #{analogical_networks_forward.46} parent=0 // pred_check_branch
    %333 = sbr.rel (0) target = $region57
  $region56: #{analogical_networks_forward.46} parent=0 // pred_region
    _
  $region57: #{analogical_networks_forward.46} parent=0 // pred_fallthru
    _
  // Predicated region
  $region58: #{analogical_networks_forward.46} parent=0 // pred_check
    _
  $region59: #{analogical_networks_forward.46} parent=0 // pred_check_branch
    %335 = sbr.rel (0) target = $region61
  $region60: #{analogical_networks_forward.46} parent=0 // pred_region
    _
  $region61: #{analogical_networks_forward.46} parent=0 // pred_fallthru
    _

// kernel: analogical_networks_forward.45
$region0: #{analogical_networks_forward.45}
  #allocation0 [shape = 'u32[]', space=smem, size = 0x4, offset = 0x4, fixed_abs, tag = 'smem constant byte address 0x4 - core index']
  #allocation1 [shape = 'u32[144,128]{1,0:T(1,128)}', space=vmem, size = 0x12000, scoped, tag = 'internal scratch']
  %s0 = inlined_call_operand.vmem [shape: f32[16,3], index: 0, kind: input, shape index: {}]
  %s1 = inlined_call_operand.vmem [shape: f32[3,32], index: 1, kind: input, shape index: {}]
  %s2 = inlined_call_operand.vmem [shape: f32[1,32], index: 2, kind: input, shape index: {}]
  %s3 = inlined_call_operand.vmem [shape: f32[32,32], index: 3, kind: input, shape index: {}]
  %s4 = inlined_call_operand.vmem [shape: f32[1,32], index: 4, kind: input, shape index: {}]
  %s5 = inlined_call_operand.vmem [shape: f32[16,32], index: 5, kind: output, shape index: {}]
  %s6 = sld [smem:[#allocation0]]
  $region30: #{analogical_networks_forward.45} parent=0
    _
  %s8 = ssub.s32 1, %s6
  %s9 = scalar_select 0, %s8, %s6
  // Predicated region
  $region2: #{analogical_networks_forward.45} parent=0 // pred_check
    _
  $region3: #{analogical_networks_forward.45} parent=0 // pred_check_branch
    %11 = sbr.rel (0) target = $region5
  $region4: #{analogical_networks_forward.45} parent=0 // pred_region
    _
  $region5: #{analogical_networks_forward.45} parent=0 // pred_fallthru
    _
  // Predicated region
  $region6: #{analogical_networks_forward.45} parent=0 // pred_check
    _
  $region7: #{analogical_networks_forward.45} parent=0 // pred_check_branch
    %13 = sbr.rel (0) target = $region9
  $region8: #{analogical_networks_forward.45} parent=0 // pred_region
    _
  $region9: #{analogical_networks_forward.45} parent=0 // pred_fallthru
    _
  // Predicated region
  $region10: #{analogical_networks_forward.45} parent=0 // pred_check
    _
  $region11: #{analogical_networks_forward.45} parent=0 // pred_check_branch
    %15 = sbr.rel (0) target = $region13
  $region12: #{analogical_networks_forward.45} parent=0 // pred_region
    _
  $region13: #{analogical_networks_forward.45} parent=0 // pred_fallthru
    _
  // Predicated region
  $region14: #{analogical_networks_forward.45} parent=0 // pred_check
    _
  $region15: #{analogical_networks_forward.45} parent=0 // pred_check_branch
    %17 = sbr.rel (0) target = $region17
  $region16: #{analogical_networks_forward.45} parent=0 // pred_region
    _
  $region17: #{analogical_networks_forward.45} parent=0 // pred_fallthru
    _
  // Predicated region
  $region18: #{analogical_networks_forward.45} parent=0 // pred_check
    _
  $region19: #{analogical_networks_forward.45} parent=0 // pred_check_branch
    %19 = sbr.rel (0) target = $region21
  $region20: #{analogical_networks_forward.45} parent=0 // pred_region
    _
  $region21: #{analogical_networks_forward.45} parent=0 // pred_fallthru
    _
  %v20 = vld [vmem:[%s0] sm:$0xff]
  %v21 = vld [vmem:[%s0 + $0x8] sm:$0xff]
  %v22 = vld [vmem:[%s1] sm:$0x7]
  %v23 = vld [vmem:[%s2] sm:$0x1]
  %v25 = vlaneseq
  %v26 = vshrl.u32 %v25, 7
  %v27 = vsub.s32 0, %v26
  %v28 = vrot.slane %v23, %v27
  %vm30 = vcmask 23552
  %v32 = vsel %vm30, %v20, 0
  %v35 = vsel %vm30, %v21, 0
  %vm37 = vcmask 1042432
  %v39 = vsel %vm37, %v22, 0
  %41 = vmatprep.subr.mxu0 0.0
  %42 = vmatpush1.msra.mxu0 %v39
  %43 = vmatprep.subr.mxu0 0.0
  %44 = vmatpush1.msra.mxu0 0.0
  %45 = vmatprep.subr.mxu0 0.0
  %46 = vmatpush1.msra.mxu0 0.0
  %47 = vmatprep.subr.mxu0 0.0
  %48 = vmatpush1.msra.mxu0 0.0
  %49 = vmatprep.subr.mxu0 0.0
  %50 = vmatpush1.msra.mxu0 0.0
  %51 = vmatprep.subr.mxu0 0.0
  %52 = vmatpush1.msra.mxu0 0.0
  %53 = vmatprep.subr.mxu0 0.0
  %54 = vmatpush1.msra.mxu0 0.0
  %55 = vmatprep.subr.mxu0 0.0
  %56 = vmatpush1.msra.mxu0 0.0
  %57 = vmatprep.subr.mxu0 0.0
  %58 = vmatpush1.msra.mxu0 0.0
  %59 = vmatprep.subr.mxu0 0.0
  %60 = vmatpush1.msra.mxu0 0.0
  %61 = vmatprep.subr.mxu0 0.0
  %62 = vmatpush1.msra.mxu0 0.0
  %63 = vmatprep.subr.mxu0 0.0
  %64 = vmatpush1.msra.mxu0 0.0
  %65 = vmatprep.subr.mxu0 0.0
  %66 = vmatpush1.msra.mxu0 0.0
  %67 = vmatprep.subr.mxu0 0.0
  %68 = vmatpush1.msra.mxu0 0.0
  %69 = vmatprep.subr.mxu0 0.0
  %70 = vmatpush1.msra.mxu0 0.0
  %71 = vmatprep.subr.mxu0 0.0
  %72 = vmatpush1.msra.mxu0 0.0
  %73 = vmatprep.subr.mxu0 0.0
  %74 = vmatpush1.msra.mxu0 0.0
  %75 = vmatprep.subr.mxu0 0.0
  %76 = vmatpush1.msra.mxu0 0.0
  %77 = vmatprep.subr.mxu0 0.0
  %78 = vmatpush1.msra.mxu0 0.0
  %79 = vmatprep.subr.mxu0 0.0
  %80 = vmatpush1.msra.mxu0 0.0
  %81 = vmatprep.subr.mxu0 0.0
  %82 = vmatpush1.msra.mxu0 0.0
  %83 = vmatprep.subr.mxu0 0.0
  %84 = vmatpush1.msra.mxu0 0.0
  %85 = vmatprep.subr.mxu0 0.0
  %86 = vmatpush1.msra.mxu0 0.0
  %87 = vmatprep.subr.mxu0 0.0
  %88 = vmatpush1.msra.mxu0 0.0
  %89 = vmatprep.subr.mxu0 0.0
  %90 = vmatpush1.msra.mxu0 0.0
  %91 = vmatprep.subr.mxu0 0.0
  %92 = vmatpush1.msra.mxu0 0.0
  %93 = vmatprep.subr.mxu0 0.0
  %94 = vmatpush1.msra.mxu0 0.0
  %95 = vmatprep.subr.mxu0 0.0
  %96 = vmatpush1.msra.mxu0 0.0
  %97 = vmatprep.subr.mxu0 0.0
  %98 = vmatpush1.msra.mxu0 0.0
  %99 = vmatprep.subr.mxu0 0.0
  %100 = vmatpush1.msra.mxu0 0.0
  %101 = vmatprep.subr.mxu0 0.0
  %102 = vmatpush1.msra.mxu0 0.0
  %103 = vmatprep.subr.mxu0 0.0
  %104 = vmatpush1.msra.mxu0 0.0
  %105 = vmatprep.mubr.f32.mxu0 0.0
  %106 = vmatmul.mubr.f32.gmra.mrb[0].mxu0 %v32
  %v107 = vpop.f32.mrb[0].mxu0
  %v108 = vadd.f32 %v28, %v107
  %v109 = vpop.f32.mrb[0].mxu0
  %110 = vmatprep.mubr.f32.mxu0 0.0
  %111 = vmatmul.mubr.f32.gmra.mrb[0].mxu0 %v35
  %v112 = vpop.f32.mrb[0].mxu0
  %v113 = vadd.f32 %v28, %v112
  %v114 = vpop.f32.mrb[0].mxu0
  %115 = vdwg.mxu0
  %v116 = vmax.f32 %v108, 0.0
  %v117 = vmax.f32 %v113, 0.0
  %v118 = vld [vmem:[%s3] sm:$0xff]
  %v119 = vld [vmem:[%s3 + $0x8] sm:$0xff]
  %v120 = vld [vmem:[%s3 + $0x10] sm:$0xff]
  %v121 = vld [vmem:[%s3 + $0x18] sm:$0xff]
  %v122 = vld [vmem:[%s4] sm:$0x1]
  %v124 = vlaneseq
  %v125 = vshrl.u32 %v124, 7
  %v126 = vsub.s32 0, %v125
  %v127 = vrot.slane %v122, %v126
  %vm129 = vcmask 261120
  %v131 = vsel %vm129, %v116, 0
  %v134 = vsel %vm129, %v117, 0
  %136 = vmatprep.subr.mxu0 0.0
  %137 = vmatpush1.msra.mxu0 %v118
  %138 = vmatprep.subr.mxu0 0.0
  %139 = vmatpush1.msra.mxu0 %v119
  %140 = vmatprep.subr.mxu0 0.0
  %141 = vmatpush1.msra.mxu0 %v120
  %142 = vmatprep.subr.mxu0 0.0
  %143 = vmatpush1.msra.mxu0 %v121
  %144 = vmatprep.subr.mxu0 0.0
  %145 = vmatpush1.msra.mxu0 0.0
  %146 = vmatprep.subr.mxu0 0.0
  %147 = vmatpush1.msra.mxu0 0.0
  %148 = vmatprep.subr.mxu0 0.0
  %149 = vmatpush1.msra.mxu0 0.0
  %150 = vmatprep.subr.mxu0 0.0
  %151 = vmatpush1.msra.mxu0 0.0
  %152 = vmatprep.subr.mxu0 0.0
  %153 = vmatpush1.msra.mxu0 0.0
  %154 = vmatprep.subr.mxu0 0.0
  %155 = vmatpush1.msra.mxu0 0.0
  %156 = vmatprep.subr.mxu0 0.0
  %157 = vmatpush1.msra.mxu0 0.0
  %158 = vmatprep.subr.mxu0 0.0
  %159 = vmatpush1.msra.mxu0 0.0
  %160 = vmatprep.subr.mxu0 0.0
  %161 = vmatpush1.msra.mxu0 0.0
  %162 = vmatprep.subr.mxu0 0.0
  %163 = vmatpush1.msra.mxu0 0.0
  %164 = vmatprep.subr.mxu0 0.0
  %165 = vmatpush1.msra.mxu0 0.0
  %166 = vmatprep.subr.mxu0 0.0
  %167 = vmatpush1.msra.mxu0 0.0
  %168 = vmatprep.subr.mxu0 0.0
  %169 = vmatpush1.msra.mxu0 0.0
  %170 = vmatprep.subr.mxu0 0.0
  %171 = vmatpush1.msra.mxu0 0.0
  %172 = vmatprep.subr.mxu0 0.0
  %173 = vmatpush1.msra.mxu0 0.0
  %174 = vmatprep.subr.mxu0 0.0
  %175 = vmatpush1.msra.mxu0 0.0
  %176 = vmatprep.subr.mxu0 0.0
  %177 = vmatpush1.msra.mxu0 0.0
  %178 = vmatprep.subr.mxu0 0.0
  %179 = vmatpush1.msra.mxu0 0.0
  %180 = vmatprep.subr.mxu0 0.0
  %181 = vmatpush1.msra.mxu0 0.0
  %182 = vmatprep.subr.mxu0 0.0
  %183 = vmatpush1.msra.mxu0 0.0
  %184 = vmatprep.subr.mxu0 0.0
  %185 = vmatpush1.msra.mxu0 0.0
  %186 = vmatprep.subr.mxu0 0.0
  %187 = vmatpush1.msra.mxu0 0.0
  %188 = vmatprep.subr.mxu0 0.0
  %189 = vmatpush1.msra.mxu0 0.0
  %190 = vmatprep.subr.mxu0 0.0
  %191 = vmatpush1.msra.mxu0 0.0
  %192 = vmatprep.subr.mxu0 0.0
  %193 = vmatpush1.msra.mxu0 0.0
  %194 = vmatprep.subr.mxu0 0.0
  %195 = vmatpush1.msra.mxu0 0.0
  %196 = vmatprep.subr.mxu0 0.0
  %197 = vmatpush1.msra.mxu0 0.0
  %198 = vmatprep.subr.mxu0 0.0
  %199 = vmatpush1.msra.mxu0 0.0
  %200 = vmatprep.mubr.f32.mxu0 0.0
  %201 = vmatmul.mubr.f32.gmra.mrb[0].mxu0 %v131
  %v202 = vpop.f32.mrb[0].mxu0
  %v203 = vadd.f32 %v127, %v202
  %v204 = vpop.f32.mrb[0].mxu0
  %205 = vmatprep.mubr.f32.mxu0 0.0
  %206 = vmatmul.mubr.f32.gmra.mrb[0].mxu0 %v134
  %v207 = vpop.f32.mrb[0].mxu0
  %v208 = vadd.f32 %v127, %v207
  %v209 = vpop.f32.mrb[0].mxu0
  %210 = vdwg.mxu0
  %211 = vst.msk [vmem:[%s5] sm:$0xff] %vm129, %v203
  %212 = vst.msk [vmem:[%s5 + $0x8] sm:$0xff] %vm129, %v208
  // Predicated region
  $region22: #{analogical_networks_forward.45} parent=0 // pred_check
    _
  $region23: #{analogical_networks_forward.45} parent=0 // pred_check_branch
    %214 = sbr.rel (0) target = $region25
  $region24: #{analogical_networks_forward.45} parent=0 // pred_region
    _
  $region25: #{analogical_networks_forward.45} parent=0 // pred_fallthru
    _
  // Predicated region
  $region26: #{analogical_networks_forward.45} parent=0 // pred_check
    _
  $region27: #{analogical_networks_forward.45} parent=0 // pred_check_branch
    %216 = sbr.rel (0) target = $region29
  $region28: #{analogical_networks_forward.45} parent=0 // pred_region
    _
  $region29: #{analogical_networks_forward.45} parent=0 // pred_fallthru
    _

// kernel: analogical_networks_forward.47
$region0: #{analogical_networks_forward.47}
  #allocation0 [shape = 'u32[]', space=smem, size = 0x4, offset = 0x4, fixed_abs, tag = 'smem constant byte address 0x4 - core index']
  #allocation1 [shape = 'u32[144,128]{1,0:T(1,128)}', space=vmem, size = 0x12000, scoped, tag = 'internal scratch']
  %s0 = inlined_call_operand.vmem [shape: f32[2,4,8,8], index: 0, kind: input, shape index: {}]
  %s1 = inlined_call_operand.vmem [shape: f32[2,4,8,8], index: 1, kind: input, shape index: {}]
  %s2 = inlined_call_operand.vmem [shape: f32[2,4,8,8], index: 2, kind: input, shape index: {}]
  %s3 = inlined_call_operand.vmem [shape: f32[2,1,8], index: 3, kind: input, shape index: {}]
  %s4 = inlined_call_operand.vmem [shape: f32[2,4,8,8], index: 4, kind: output, shape index: {}]
  %s5 = sld [smem:[#allocation0]]
  $region49: #{analogical_networks_forward.47} parent=0
    _
  %s7 = ssub.s32 1, %s5
  %s8 = scalar_select 0, %s7, %s5
  loop: start=0, step=1, limit=4
  $region2: #{analogical_networks_forward.47} parent=0 // loop_pre_header
    _
  $region3: #{analogical_networks_forward.47} parent=0 // loop_header
    %s10 = sphi 0, %s14
    %p11 = scmp.ge.s32.totalorder %s10, 4
    %s20 = sphi 0, %s22
    %s23 = sphi 0, %s20
    %s24 = sphi 0, %s23
    %s40 = sphi 0, %s24
    %s46 = sphi 0, %s48
    %s49 = sphi 0, %s46
    %s50 = sphi 0, %s49
    %s66 = sphi 0, %s50
    %s72 = sphi 0, %s74
    %s75 = sphi 0, %s72
    %s76 = sphi 0, %s75
    %s92 = sphi 0, %s76
    %s98 = sphi 0, %s100
    %s101 = sphi 0, %s98
    %s102 = sphi 0, %s101
    %s118 = sphi 0, %s102
    %s124 = sphi 0, %s126
    %s127 = sphi 0, %s124
    %s128 = sphi 0, %s127
    %s144 = sphi 0, %s128
  $region4: #{analogical_networks_forward.47} parent=0 // loop_header_branch
    %13 = sbr.rel (%p11) target = $region8
  $region5: #{analogical_networks_forward.47} parent=0 // loop_body
    %s15 = ssub.s32 %s10, 1
    %s16 = ssub.s32 %s10, 2
    %s17 = sadd.s32 %s10, 1
    %s18 = ssub.s32 %s10, %s17
    %p19 = scmp.eq.s32.totalorder %s18, 0
    %s21 = sadd.s32 %s20, 1
    %s22 = scalar_select %p19, %s20, %s21
    %p25 = pneg %p19
    %p26 = scmp.eq.s32.totalorder %s10, 1
    %p27 = por %p25, %p26
    %p28 = scmp.ne.s32.totalorder %s20, %s23
    %p29 = scmp.eq.s32.totalorder %s10, 0
    %p30 = por %p28, %p29
    %p31 = scmp.ne.s32.totalorder %s20, %s23
    %p32 = scmp.eq.s32.totalorder %s15, 1
    %p33 = por %p31, %p32
    %p34 = scmp.ne.s32.totalorder %s23, %s24
    %p35 = scmp.eq.s32.totalorder %s15, 0
    %p36 = por %p34, %p35
    %p37 = scmp.ne.s32.totalorder %s23, %s24
    %p38 = scmp.eq.s32.totalorder %s16, 1
    %p39 = por %p37, %p38
    %p41 = scmp.ne.s32.totalorder %s24, %s40
    %p42 = scmp.eq.s32.totalorder %s16, 0
    %p43 = por %p41, %p42
    %s44 = ssub.s32 %s10, %s17
    %p45 = scmp.eq.s32.totalorder %s44, 0
    %s47 = sadd.s32 %s46, 1
    %s48 = scalar_select %p45, %s46, %s47
    %p51 = pneg %p45
    %p52 = scmp.eq.s32.totalorder %s10, 1
    %p53 = por %p51, %p52
    %p54 = scmp.ne.s32.totalorder %s46, %s49
    %p55 = scmp.eq.s32.totalorder %s10, 0
    %p56 = por %p54, %p55
    %p57 = scmp.ne.s32.totalorder %s46, %s49
    %p58 = scmp.eq.s32.totalorder %s15, 1
    %p59 = por %p57, %p58
    %p60 = scmp.ne.s32.totalorder %s49, %s50
    %p61 = scmp.eq.s32.totalorder %s15, 0
    %p62 = por %p60, %p61
    %p63 = scmp.ne.s32.totalorder %s49, %s50
    %p64 = scmp.eq.s32.totalorder %s16, 1
    %p65 = por %p63, %p64
    %p67 = scmp.ne.s32.totalorder %s50, %s66
    %p68 = scmp.eq.s32.totalorder %s16, 0
    %p69 = por %p67, %p68
    %s70 = ssub.s32 %s10, %s17
    %p71 = scmp.eq.s32.totalorder %s70, 0
    %s73 = sadd.s32 %s72, 1
    %s74 = scalar_select %p71, %s72, %s73
    %p77 = pneg %p71
    %p78 = scmp.eq.s32.totalorder %s10, 1
    %p79 = por %p77, %p78
    %p80 = scmp.ne.s32.totalorder %s72, %s75
    %p81 = scmp.eq.s32.totalorder %s10, 0
    %p82 = por %p80, %p81
    %p83 = scmp.ne.s32.totalorder %s72, %s75
    %p84 = scmp.eq.s32.totalorder %s15, 1
    %p85 = por %p83, %p84
    %p86 = scmp.ne.s32.totalorder %s75, %s76
    %p87 = scmp.eq.s32.totalorder %s15, 0
    %p88 = por %p86, %p87
    %p89 = scmp.ne.s32.totalorder %s75, %s76
    %p90 = scmp.eq.s32.totalorder %s16, 1
    %p91 = por %p89, %p90
    %p93 = scmp.ne.s32.totalorder %s76, %s92
    %p94 = scmp.eq.s32.totalorder %s16, 0
    %p95 = por %p93, %p94
    %s96 = ssub.s32 %s10, %s17
    %p97 = scmp.eq.s32.totalorder %s96, 0
    %s99 = sadd.s32 %s98, 1
    %s100 = scalar_select %p97, %s98, %s99
    %p103 = pneg %p97
    %p104 = scmp.eq.s32.totalorder %s10, 1
    %p105 = por %p103, %p104
    %p106 = scmp.ne.s32.totalorder %s98, %s101
    %p107 = scmp.eq.s32.totalorder %s10, 0
    %p108 = por %p106, %p107
    %p109 = scmp.ne.s32.totalorder %s98, %s101
    %p110 = scmp.eq.s32.totalorder %s15, 1
    %p111 = por %p109, %p110
    %p112 = scmp.ne.s32.totalorder %s101, %s102
    %p113 = scmp.eq.s32.totalorder %s15, 0
    %p114 = por %p112, %p113
    %p115 = scmp.ne.s32.totalorder %s101, %s102
    %p116 = scmp.eq.s32.totalorder %s16, 1
    %p117 = por %p115, %p116
    %p119 = scmp.ne.s32.totalorder %s102, %s118
    %p120 = scmp.eq.s32.totalorder %s16, 0
    %p121 = por %p119, %p120
    %s122 = ssub.s32 %s10, %s17
    %p123 = scmp.eq.s32.totalorder %s122, 0
    %s125 = sadd.s32 %s124, 1
    %s126 = scalar_select %p123, %s124, %s125
    %p129 = pneg %p123
    %p130 = scmp.eq.s32.totalorder %s10, 1
    %p131 = por %p129, %p130
    %p132 = scmp.ne.s32.totalorder %s124, %s127
    %p133 = scmp.eq.s32.totalorder %s10, 0
    %p134 = por %p132, %p133
    %p135 = scmp.ne.s32.totalorder %s124, %s127
    %p136 = scmp.eq.s32.totalorder %s15, 1
    %p137 = por %p135, %p136
    %p138 = scmp.ne.s32.totalorder %s127, %s128
    %p139 = scmp.eq.s32.totalorder %s15, 0
    %p140 = por %p138, %p139
    %p141 = scmp.ne.s32.totalorder %s127, %s128
    %p142 = scmp.eq.s32.totalorder %s16, 1
    %p143 = por %p141, %p142
    %p145 = scmp.ne.s32.totalorder %s128, %s144
    %p146 = scmp.eq.s32.totalorder %s16, 0
    %p147 = por %p145, %p146
    %p148 = scmp.le.s32.totalorder 1, %s10
    %p149 = scmp.lt.s32.totalorder %s10, 3
    %p150 = pnand %p148, %p149
    %p151 = pneg %p150
    // Predicated region
    $region9: #{analogical_networks_forward.47} parent=5 // pred_check
      _
    $region10: #{analogical_networks_forward.47} parent=5 // pred_check_branch
      %153 = sbr.rel (%p150) target = $region12
    $region11: #{analogical_networks_forward.47} parent=5 // pred_region
      %s154 = ssub.s32 %s10, 1
    $region12: #{analogical_networks_forward.47} parent=5 // pred_fallthru
      _
    %p155 = scmp.lt.s32.totalorder %s10, 2
    // Predicated region
    $region13: #{analogical_networks_forward.47} parent=5 // pred_check
      %p156 = pneg %p155
    $region14: #{analogical_networks_forward.47} parent=5 // pred_check_branch
      %158 = sbr.rel (%p156) target = $region16
    $region15: #{analogical_networks_forward.47} parent=5 // pred_region
      // Predicated region
      $region17: #{analogical_networks_forward.47} parent=15 // pred_check
        %p159 = pneg %p30
      $region18: #{analogical_networks_forward.47} parent=15 // pred_check_branch
        %161 = sbr.rel (%p159) target = $region20
      $region19: #{analogical_networks_forward.47} parent=15 // pred_region
        %p162 = scmp.lt.s32.totalorder %s10, 1
        %s163 = scalar_select %p162, %s10, 1
        %s164 = smul.addr %s163, 4
        %s165 = smul.addr %s164, 8
        %s166 = scalar_lea.vmem %s0, %s165
      $region20: #{analogical_networks_forward.47} parent=15 // pred_fallthru
        _
      // Predicated region
      $region21: #{analogical_networks_forward.47} parent=15 // pred_check
        %p167 = pneg %p56
      $region22: #{analogical_networks_forward.47} parent=15 // pred_check_branch
        %169 = sbr.rel (%p167) target = $region24
      $region23: #{analogical_networks_forward.47} parent=15 // pred_region
        %p170 = scmp.lt.s32.totalorder %s10, 1
        %s171 = scalar_select %p170, %s10, 1
        %s172 = smul.addr %s171, 4
        %s173 = smul.addr %s172, 8
        %s174 = scalar_lea.vmem %s1, %s173
      $region24: #{analogical_networks_forward.47} parent=15 // pred_fallthru
        _
      // Predicated region
      $region25: #{analogical_networks_forward.47} parent=15 // pred_check
        %p175 = pneg %p82
      $region26: #{analogical_networks_forward.47} parent=15 // pred_check_branch
        %177 = sbr.rel (%p175) target = $region28
      $region27: #{analogical_networks_forward.47} parent=15 // pred_region
        %p178 = scmp.lt.s32.totalorder %s10, 1
        %s179 = scalar_select %p178, %s10, 1
        %s180 = smul.addr %s179, 4
        %s181 = smul.addr %s180, 8
        %s182 = scalar_lea.vmem %s2, %s181
      $region28: #{analogical_networks_forward.47} parent=15 // pred_fallthru
        _
      // Predicated region
      $region29: #{analogical_networks_forward.47} parent=15 // pred_check
        %p183 = pneg %p108
      $region30: #{analogical_networks_forward.47} parent=15 // pred_check_branch
        %185 = sbr.rel (%p183) target = $region32
      $region31: #{analogical_networks_forward.47} parent=15 // pred_region
        %p186 = scmp.lt.s32.totalorder %s10, 1
        %s187 = scalar_select %p186, %s10, 1
        %s188 = scalar_lea.vmem %s3, %s187
      $region32: #{analogical_networks_forward.47} parent=15 // pred_fallthru
        _
    $region16: #{analogical_networks_forward.47} parent=5 // pred_fallthru
      _
    %p189 = scmp.le.s32.totalorder 1, %s10
    %p190 = scmp.lt.s32.totalorder %s10, 3
    %p191 = pnand %p189, %p190
    %p192 = pneg %p191
    // Predicated region
    $region33: #{analogical_networks_forward.47} parent=5 // pred_check
      _
    $region34: #{analogical_networks_forward.47} parent=5 // pred_check_branch
      %194 = sbr.rel (%p191) target = $region36
    $region35: #{analogical_networks_forward.47} parent=5 // pred_region
      %s195 = ssub.s32 %s10, 1
      %p196 = scmp.lt.s32.totalorder %s15, 1
      %s197 = scalar_select %p196, %s15, 1
      %s198 = smul.addr %s197, 4
      %s199 = smul.addr %s198, 8
      %s200 = scalar_lea.vmem %s0, %s199
      %p201 = pneg %p36
      %p202 = pneg %p33
      %p203 = scmp.lt.s32.totalorder %s15, 1
      %s204 = scalar_select %p203, %s15, 1
      %s205 = smul.addr %s204, 4
      %s206 = smul.addr %s205, 8
      %s207 = scalar_lea.vmem %s1, %s206
      %p208 = pneg %p62
      %p209 = pneg %p59
      %p210 = scmp.lt.s32.totalorder %s15, 1
      %s211 = scalar_select %p210, %s15, 1
      %s212 = smul.addr %s211, 4
      %s213 = smul.addr %s212, 8
      %s214 = scalar_lea.vmem %s2, %s213
      %p215 = pneg %p88
      %p216 = pneg %p85
      %p217 = scmp.lt.s32.totalorder %s15, 1
      %s218 = scalar_select %p217, %s15, 1
      %s219 = scalar_lea.vmem %s3, %s218
      %p220 = pneg %p114
      %p221 = pneg %p111
      %p222 = pneg %p140
      %p223 = pneg %p137
      %p224 = scmp.lt.s32.totalorder %s15, 1
      %s225 = scalar_select %p224, %s15, 1
      %s226 = smul.addr %s225, 4
      %s227 = smul.addr %s226, 8
      %s228 = scalar_lea.vmem %s4, %s227
      %p229 = scmp.lt.s32.totalorder %s15, 1
      %s230 = scalar_select %p229, %s15, 1
      %s231 = smul.addr %s230, 4
      %s232 = smul.addr %s231, 8
      %s233 = scalar_lea.vmem %s0, %s232
      %p234 = scmp.lt.s32.totalorder %s15, 1
      %s235 = scalar_select %p234, %s15, 1
      %s236 = smul.addr %s235, 4
      %s237 = smul.addr %s236, 8
      %s238 = scalar_lea.vmem %s1, %s237
      %p239 = scmp.lt.s32.totalorder %s15, 1
      %s240 = scalar_select %p239, %s15, 1
      %s241 = smul.addr %s240, 4
      %s242 = smul.addr %s241, 8
      %s243 = scalar_lea.vmem %s2, %s242
      %p244 = scmp.lt.s32.totalorder %s15, 1
      %s245 = scalar_select %p244, %s15, 1
      %s246 = scalar_lea.vmem %s3, %s245
      %p247 = scmp.lt.s32.totalorder %s15, 1
      %s248 = scalar_select %p247, %s15, 1
      %s249 = smul.addr %s248, 4
      %s250 = smul.addr %s249, 8
      %s251 = scalar_lea.vmem %s4, %s250
      %v252 = vld [vmem:[%s233] sm:$0xff]
      %v253 = vld [vmem:[%s233 + $0x8] sm:$0xff]
      %v254 = vld [vmem:[%s233 + $0x10] sm:$0xff]
      %v255 = vld [vmem:[%s233 + $0x18] sm:$0xff]
      %v256 = vld [vmem:[%s238] sm:$0xff]
      %v257 = vld [vmem:[%s238 + $0x8] sm:$0xff]
      %v258 = vld [vmem:[%s238 + $0x10] sm:$0xff]
      %v259 = vld [vmem:[%s238 + $0x18] sm:$0xff]
      %v260 = vld [vmem:[%s243] sm:$0xff]
      %v261 = vld [vmem:[%s243 + $0x8] sm:$0xff]
      %v262 = vld [vmem:[%s243 + $0x10] sm:$0xff]
      %v263 = vld [vmem:[%s243 + $0x18] sm:$0xff]
      %v264 = vld [vmem:[%s246] sm:$0x1]
      %vm265 = vcmask 64512
      %v267 = vsel %vm265, %v252, 0
      %v270 = vsel %vm265, %v256, 0
      %272 = vmatprep.subr.mxu0 0.0
      %273 = vmatpush1.xpose.msra.mxu0 %v270
      %274 = vmatprep.subr.mxu0 0.0
      %275 = vmatpush1.xpose.msra.mxu0 0.0
      %276 = vmatprep.subr.mxu0 0.0
      %277 = vmatpush1.xpose.msra.mxu0 0.0
      %278 = vmatprep.subr.mxu0 0.0
      %279 = vmatpush1.xpose.msra.mxu0 0.0
      %280 = vmatprep.subr.mxu0 0.0
      %281 = vmatpush1.xpose.msra.mxu0 0.0
      %282 = vmatprep.subr.mxu0 0.0
      %283 = vmatpush1.xpose.msra.mxu0 0.0
      %284 = vmatprep.subr.mxu0 0.0
      %285 = vmatpush1.xpose.msra.mxu0 0.0
      %286 = vmatprep.subr.mxu0 0.0
      %287 = vmatpush1.xpose.msra.mxu0 0.0
      %288 = vmatprep.subr.mxu0 0.0
      %289 = vmatpush1.xpose.msra.mxu0 0.0
      %290 = vmatprep.subr.mxu0 0.0
      %291 = vmatpush1.xpose.msra.mxu0 0.0
      %292 = vmatprep.subr.mxu0 0.0
      %293 = vmatpush1.xpose.msra.mxu0 0.0
      %294 = vmatprep.subr.mxu0 0.0
      %295 = vmatpush1.xpose.msra.mxu0 0.0
      %296 = vmatprep.subr.mxu0 0.0
      %297 = vmatpush1.xpose.msra.mxu0 0.0
      %298 = vmatprep.subr.mxu0 0.0
      %299 = vmatpush1.xpose.msra.mxu0 0.0
      %300 = vmatprep.subr.mxu0 0.0
      %301 = vmatpush1.xpose.msra.mxu0 0.0
      %302 = vmatprep.subr.mxu0 0.0
      %303 = vmatpush1.xpose.msra.mxu0 0.0
      %304 = vmatprep.subr.mxu0 0.0
      %305 = vmatpush1.xpose.msra.mxu0 0.0
      %306 = vmatprep.subr.mxu0 0.0
      %307 = vmatpush1.xpose.msra.mxu0 0.0
      %308 = vmatprep.subr.mxu0 0.0
      %309 = vmatpush1.xpose.msra.mxu0 0.0
      %310 = vmatprep.subr.mxu0 0.0
      %311 = vmatpush1.xpose.msra.mxu0 0.0
      %312 = vmatprep.subr.mxu0 0.0
      %313 = vmatpush1.xpose.msra.mxu0 0.0
      %314 = vmatprep.subr.mxu0 0.0
      %315 = vmatpush1.xpose.msra.mxu0 0.0
      %316 = vmatprep.subr.mxu0 0.0
      %317 = vmatpush1.xpose.msra.mxu0 0.0
      %318 = vmatprep.subr.mxu0 0.0
      %319 = vmatpush1.xpose.msra.mxu0 0.0
      %320 = vmatprep.subr.mxu0 0.0
      %321 = vmatpush1.xpose.msra.mxu0 0.0
      %322 = vmatprep.subr.mxu0 0.0
      %323 = vmatpush1.xpose.msra.mxu0 0.0
      %324 = vmatprep.subr.mxu0 0.0
      %325 = vmatpush1.xpose.msra.mxu0 0.0
      %326 = vmatprep.subr.mxu0 0.0
      %327 = vmatpush1.xpose.msra.mxu0 0.0
      %328 = vmatprep.subr.mxu0 0.0
      %329 = vmatpush1.xpose.msra.mxu0 0.0
      %330 = vmatprep.subr.mxu0 0.0
      %331 = vmatpush1.xpose.msra.mxu0 0.0
      %332 = vmatprep.subr.mxu0 0.0
      %333 = vmatpush1.xpose.msra.mxu0 0.0
      %334 = vmatprep.subr.mxu0 0.0
      %335 = vmatpush1.xpose.msra.mxu0 0.0
      %336 = vmatprep.mubr.f32.mxu0 0.0
      %337 = vmatmul.mubr.f32.gmra.mrb[0].mxu0 %v267
      %v338 = vpop.f32.mrb[0].mxu0
      %v339 = vadd.f32 0.0, %v338
      %v340 = vpop.f32.mrb[0].mxu0
      %341 = vdwg.mxu0
      %v343 = vsel %vm265, %v253, 0
      %v346 = vsel %vm265, %v257, 0
      %348 = vmatprep.subr.mxu0 0.0
      %349 = vmatpush1.xpose.msra.mxu0 %v346
      %350 = vmatprep.subr.mxu0 0.0
      %351 = vmatpush1.xpose.msra.mxu0 0.0
      %352 = vmatprep.subr.mxu0 0.0
      %353 = vmatpush1.xpose.msra.mxu0 0.0
      %354 = vmatprep.subr.mxu0 0.0
      %355 = vmatpush1.xpose.msra.mxu0 0.0
      %356 = vmatprep.subr.mxu0 0.0
      %357 = vmatpush1.xpose.msra.mxu0 0.0
      %358 = vmatprep.subr.mxu0 0.0
      %359 = vmatpush1.xpose.msra.mxu0 0.0
      %360 = vmatprep.subr.mxu0 0.0
      %361 = vmatpush1.xpose.msra.mxu0 0.0
      %362 = vmatprep.subr.mxu0 0.0
      %363 = vmatpush1.xpose.msra.mxu0 0.0
      %364 = vmatprep.subr.mxu0 0.0
      %365 = vmatpush1.xpose.msra.mxu0 0.0
      %366 = vmatprep.subr.mxu0 0.0
      %367 = vmatpush1.xpose.msra.mxu0 0.0
      %368 = vmatprep.subr.mxu0 0.0
      %369 = vmatpush1.xpose.msra.mxu0 0.0
      %370 = vmatprep.subr.mxu0 0.0
      %371 = vmatpush1.xpose.msra.mxu0 0.0
      %372 = vmatprep.subr.mxu0 0.0
      %373 = vmatpush1.xpose.msra.mxu0 0.0
      %374 = vmatprep.subr.mxu0 0.0
      %375 = vmatpush1.xpose.msra.mxu0 0.0
      %376 = vmatprep.subr.mxu0 0.0
      %377 = vmatpush1.xpose.msra.mxu0 0.0
      %378 = vmatprep.subr.mxu0 0.0
      %379 = vmatpush1.xpose.msra.mxu0 0.0
      %380 = vmatprep.subr.mxu0 0.0
      %381 = vmatpush1.xpose.msra.mxu0 0.0
      %382 = vmatprep.subr.mxu0 0.0
      %383 = vmatpush1.xpose.msra.mxu0 0.0
      %384 = vmatprep.subr.mxu0 0.0
      %385 = vmatpush1.xpose.msra.mxu0 0.0
      %386 = vmatprep.subr.mxu0 0.0
      %387 = vmatpush1.xpose.msra.mxu0 0.0
      %388 = vmatprep.subr.mxu0 0.0
      %389 = vmatpush1.xpose.msra.mxu0 0.0
      %390 = vmatprep.subr.mxu0 0.0
      %391 = vmatpush1.xpose.msra.mxu0 0.0
      %392 = vmatprep.subr.mxu0 0.0
      %393 = vmatpush1.xpose.msra.mxu0 0.0
      %394 = vmatprep.subr.mxu0 0.0
      %395 = vmatpush1.xpose.msra.mxu0 0.0
      %396 = vmatprep.subr.mxu0 0.0
      %397 = vmatpush1.xpose.msra.mxu0 0.0
      %398 = vmatprep.subr.mxu0 0.0
      %399 = vmatpush1.xpose.msra.mxu0 0.0
      %400 = vmatprep.subr.mxu0 0.0
      %401 = vmatpush1.xpose.msra.mxu0 0.0
      %402 = vmatprep.subr.mxu0 0.0
      %403 = vmatpush1.xpose.msra.mxu0 0.0
      %404 = vmatprep.subr.mxu0 0.0
      %405 = vmatpush1.xpose.msra.mxu0 0.0
      %406 = vmatprep.subr.mxu0 0.0
      %407 = vmatpush1.xpose.msra.mxu0 0.0
      %408 = vmatprep.subr.mxu0 0.0
      %409 = vmatpush1.xpose.msra.mxu0 0.0
      %410 = vmatprep.subr.mxu0 0.0
      %411 = vmatpush1.xpose.msra.mxu0 0.0
      %412 = vmatprep.mubr.f32.mxu0 0.0
      %413 = vmatmul.mubr.f32.gmra.mrb[0].mxu0 %v343
      %v414 = vpop.f32.mrb[0].mxu0
      %v415 = vadd.f32 0.0, %v414
      %v416 = vpop.f32.mrb[0].mxu0
      %417 = vdwg.mxu0
      %v419 = vsel %vm265, %v254, 0
      %v422 = vsel %vm265, %v258, 0
      %424 = vmatprep.subr.mxu0 0.0
      %425 = vmatpush1.xpose.msra.mxu0 %v422
      %426 = vmatprep.subr.mxu0 0.0
      %427 = vmatpush1.xpose.msra.mxu0 0.0
      %428 = vmatprep.subr.mxu0 0.0
      %429 = vmatpush1.xpose.msra.mxu0 0.0
      %430 = vmatprep.subr.mxu0 0.0
      %431 = vmatpush1.xpose.msra.mxu0 0.0
      %432 = vmatprep.subr.mxu0 0.0
      %433 = vmatpush1.xpose.msra.mxu0 0.0
      %434 = vmatprep.subr.mxu0 0.0
      %435 = vmatpush1.xpose.msra.mxu0 0.0
      %436 = vmatprep.subr.mxu0 0.0
      %437 = vmatpush1.xpose.msra.mxu0 0.0
      %438 = vmatprep.subr.mxu0 0.0
      %439 = vmatpush1.xpose.msra.mxu0 0.0
      %440 = vmatprep.subr.mxu0 0.0
      %441 = vmatpush1.xpose.msra.mxu0 0.0
      %442 = vmatprep.subr.mxu0 0.0
      %443 = vmatpush1.xpose.msra.mxu0 0.0
      %444 = vmatprep.subr.mxu0 0.0
      %445 = vmatpush1.xpose.msra.mxu0 0.0
      %446 = vmatprep.subr.mxu0 0.0
      %447 = vmatpush1.xpose.msra.mxu0 0.0
      %448 = vmatprep.subr.mxu0 0.0
      %449 = vmatpush1.xpose.msra.mxu0 0.0
      %450 = vmatprep.subr.mxu0 0.0
      %451 = vmatpush1.xpose.msra.mxu0 0.0
      %452 = vmatprep.subr.mxu0 0.0
      %453 = vmatpush1.xpose.msra.mxu0 0.0
      %454 = vmatprep.subr.mxu0 0.0
      %455 = vmatpush1.xpose.msra.mxu0 0.0
      %456 = vmatprep.subr.mxu0 0.0
      %457 = vmatpush1.xpose.msra.mxu0 0.0
      %458 = vmatprep.subr.mxu0 0.0
      %459 = vmatpush1.xpose.msra.mxu0 0.0
      %460 = vmatprep.subr.mxu0 0.0
      %461 = vmatpush1.xpose.msra.mxu0 0.0
      %462 = vmatprep.subr.mxu0 0.0
      %463 = vmatpush1.xpose.msra.mxu0 0.0
      %464 = vmatprep.subr.mxu0 0.0
      %465 = vmatpush1.xpose.msra.mxu0 0.0
      %466 = vmatprep.subr.mxu0 0.0
      %467 = vmatpush1.xpose.msra.mxu0 0.0
      %468 = vmatprep.subr.mxu0 0.0
      %469 = vmatpush1.xpose.msra.mxu0 0.0
      %470 = vmatprep.subr.mxu0 0.0
      %471 = vmatpush1.xpose.msra.mxu0 0.0
      %472 = vmatprep.subr.mxu0 0.0
      %473 = vmatpush1.xpose.msra.mxu0 0.0
      %474 = vmatprep.subr.mxu0 0.0
      %475 = vmatpush1.xpose.msra.mxu0 0.0
      %476 = vmatprep.subr.mxu0 0.0
      %477 = vmatpush1.xpose.msra.mxu0 0.0
      %478 = vmatprep.subr.mxu0 0.0
      %479 = vmatpush1.xpose.msra.mxu0 0.0
      %480 = vmatprep.subr.mxu0 0.0
      %481 = vmatpush1.xpose.msra.mxu0 0.0
      %482 = vmatprep.subr.mxu0 0.0
      %483 = vmatpush1.xpose.msra.mxu0 0.0
      %484 = vmatprep.subr.mxu0 0.0
      %485 = vmatpush1.xpose.msra.mxu0 0.0
      %486 = vmatprep.subr.mxu0 0.0
      %487 = vmatpush1.xpose.msra.mxu0 0.0
      %488 = vmatprep.mubr.f32.mxu0 0.0
      %489 = vmatmul.mubr.f32.gmra.mrb[0].mxu0 %v419
      %v490 = vpop.f32.mrb[0].mxu0
      %v491 = vadd.f32 0.0, %v490
      %v492 = vpop.f32.mrb[0].mxu0
      %493 = vdwg.mxu0
      %v495 = vsel %vm265, %v255, 0
      %v498 = vsel %vm265, %v259, 0
      %500 = vmatprep.subr.mxu0 0.0
      %501 = vmatpush1.xpose.msra.mxu0 %v498
      %502 = vmatprep.subr.mxu0 0.0
      %503 = vmatpush1.xpose.msra.mxu0 0.0
      %504 = vmatprep.subr.mxu0 0.0
      %505 = vmatpush1.xpose.msra.mxu0 0.0
      %506 = vmatprep.subr.mxu0 0.0
      %507 = vmatpush1.xpose.msra.mxu0 0.0
      %508 = vmatprep.subr.mxu0 0.0
      %509 = vmatpush1.xpose.msra.mxu0 0.0
      %510 = vmatprep.subr.mxu0 0.0
      %511 = vmatpush1.xpose.msra.mxu0 0.0
      %512 = vmatprep.subr.mxu0 0.0
      %513 = vmatpush1.xpose.msra.mxu0 0.0
      %514 = vmatprep.subr.mxu0 0.0
      %515 = vmatpush1.xpose.msra.mxu0 0.0
      %516 = vmatprep.subr.mxu0 0.0
      %517 = vmatpush1.xpose.msra.mxu0 0.0
      %518 = vmatprep.subr.mxu0 0.0
      %519 = vmatpush1.xpose.msra.mxu0 0.0
      %520 = vmatprep.subr.mxu0 0.0
      %521 = vmatpush1.xpose.msra.mxu0 0.0
      %522 = vmatprep.subr.mxu0 0.0
      %523 = vmatpush1.xpose.msra.mxu0 0.0
      %524 = vmatprep.subr.mxu0 0.0
      %525 = vmatpush1.xpose.msra.mxu0 0.0
      %526 = vmatprep.subr.mxu0 0.0
      %527 = vmatpush1.xpose.msra.mxu0 0.0
      %528 = vmatprep.subr.mxu0 0.0
      %529 = vmatpush1.xpose.msra.mxu0 0.0
      %530 = vmatprep.subr.mxu0 0.0
      %531 = vmatpush1.xpose.msra.mxu0 0.0
      %532 = vmatprep.subr.mxu0 0.0
      %533 = vmatpush1.xpose.msra.mxu0 0.0
      %534 = vmatprep.subr.mxu0 0.0
      %535 = vmatpush1.xpose.msra.mxu0 0.0
      %536 = vmatprep.subr.mxu0 0.0
      %537 = vmatpush1.xpose.msra.mxu0 0.0
      %538 = vmatprep.subr.mxu0 0.0
      %539 = vmatpush1.xpose.msra.mxu0 0.0
      %540 = vmatprep.subr.mxu0 0.0
      %541 = vmatpush1.xpose.msra.mxu0 0.0
      %542 = vmatprep.subr.mxu0 0.0
      %543 = vmatpush1.xpose.msra.mxu0 0.0
      %544 = vmatprep.subr.mxu0 0.0
      %545 = vmatpush1.xpose.msra.mxu0 0.0
      %546 = vmatprep.subr.mxu0 0.0
      %547 = vmatpush1.xpose.msra.mxu0 0.0
      %548 = vmatprep.subr.mxu0 0.0
      %549 = vmatpush1.xpose.msra.mxu0 0.0
      %550 = vmatprep.subr.mxu0 0.0
      %551 = vmatpush1.xpose.msra.mxu0 0.0
      %552 = vmatprep.subr.mxu0 0.0
      %553 = vmatpush1.xpose.msra.mxu0 0.0
      %554 = vmatprep.subr.mxu0 0.0
      %555 = vmatpush1.xpose.msra.mxu0 0.0
      %556 = vmatprep.subr.mxu0 0.0
      %557 = vmatpush1.xpose.msra.mxu0 0.0
      %558 = vmatprep.subr.mxu0 0.0
      %559 = vmatpush1.xpose.msra.mxu0 0.0
      %560 = vmatprep.subr.mxu0 0.0
      %561 = vmatpush1.xpose.msra.mxu0 0.0
      %562 = vmatprep.subr.mxu0 0.0
      %563 = vmatpush1.xpose.msra.mxu0 0.0
      %564 = vmatprep.mubr.f32.mxu0 0.0
      %565 = vmatmul.mubr.f32.gmra.mrb[0].mxu0 %v495
      %v566 = vpop.f32.mrb[0].mxu0
      %v567 = vadd.f32 0.0, %v566
      %v568 = vpop.f32.mrb[0].mxu0
      %569 = vdwg.mxu0
      %v570 = vmul.f32 %v339, 0.35355338
      %v571 = vmul.f32 %v415, 0.35355338
      %v572 = vmul.f32 %v491, 0.35355338
      %v573 = vmul.f32 %v567, 0.35355338
      %v575 = vlaneseq
      %v576 = vshrl.u32 %v575, 7
      %v577 = vsub.s32 0, %v576
      %v578 = vrot.slane %v264, %v577
      %v580 = vadd.f32 %v570, %v578
      %v581 = vadd.f32 %v571, %v578
      %v582 = vadd.f32 %v572, %v578
      %v583 = vadd.f32 %v573, %v578
      %v584 = vsel %vm265, %v580, -inf
      %585 = vmax.xlane.f32.xlu0 %v584
      %v586 = vpop.xlane.xlu0 %585
      %v587 = vsel %vm265, %v581, -inf
      %588 = vmax.xlane.f32.xlu0 %v587
      %v589 = vpop.xlane.xlu0 %588
      %v590 = vsel %vm265, %v582, -inf
      %591 = vmax.xlane.f32.xlu0 %v590
      %v592 = vpop.xlane.xlu0 %591
      %v593 = vsel %vm265, %v583, -inf
      %594 = vmax.xlane.f32.xlu0 %v593
      %v595 = vpop.xlane.xlu0 %594
      %v596 = vsub.f32 %v580, %v586
      %v597 = vsub.f32 %v581, %v589
      %v598 = vsub.f32 %v582, %v592
      %v599 = vsub.f32 %v583, %v595
      %v600 = vmul.f32 %v596, 1.442695
      %v601 = vpow.pop %v600
      %v602 = vmul.f32 %v597, 1.442695
      %v603 = vpow.pop %v602
      %v604 = vmul.f32 %v598, 1.442695
      %v605 = vpow.pop %v604
      %v606 = vmul.f32 %v599, 1.442695
      %v607 = vpow.pop %v606
      %v608 = vsel %vm265, %v601, 0.0
      %609 = vadd.xlane.f32.xlu0 %v608
      %v610 = vpop.xlane.xlu0 %609
      %v611 = vsel %vm265, %v603, 0.0
      %612 = vadd.xlane.f32.xlu0 %v611
      %v613 = vpop.xlane.xlu0 %612
      %v614 = vsel %vm265, %v605, 0.0
      %615 = vadd.xlane.f32.xlu0 %v614
      %v616 = vpop.xlane.xlu0 %615
      %v617 = vsel %vm265, %v607, 0.0
      %618 = vadd.xlane.f32.xlu0 %v617
      %v619 = vpop.xlane.xlu0 %618
      %v620 = vrcp.pop %v610
      %v621 = vrcp.pop %v613
      %v622 = vrcp.pop %v616
      %v623 = vrcp.pop %v619
      %v624 = vmul.f32 %v601, %v620
      %v625 = vmul.f32 %v603, %v621
      %v626 = vmul.f32 %v605, %v622
      %v627 = vmul.f32 %v607, %v623
      %v629 = vsel %vm265, %v624, 0
      %631 = vmatprep.subr.mxu0 0.0
      %632 = vmatpush1.msra.mxu0 %v260
      %633 = vmatprep.subr.mxu0 0.0
      %634 = vmatpush1.msra.mxu0 0.0
      %635 = vmatprep.subr.mxu0 0.0
      %636 = vmatpush1.msra.mxu0 0.0
      %637 = vmatprep.subr.mxu0 0.0
      %638 = vmatpush1.msra.mxu0 0.0
      %639 = vmatprep.subr.mxu0 0.0
      %640 = vmatpush1.msra.mxu0 0.0
      %641 = vmatprep.subr.mxu0 0.0
      %642 = vmatpush1.msra.mxu0 0.0
      %643 = vmatprep.subr.mxu0 0.0
      %644 = vmatpush1.msra.mxu0 0.0
      %645 = vmatprep.subr.mxu0 0.0
      %646 = vmatpush1.msra.mxu0 0.0
      %647 = vmatprep.subr.mxu0 0.0
      %648 = vmatpush1.msra.mxu0 0.0
      %649 = vmatprep.subr.mxu0 0.0
      %650 = vmatpush1.msra.mxu0 0.0
      %651 = vmatprep.subr.mxu0 0.0
      %652 = vmatpush1.msra.mxu0 0.0
      %653 = vmatprep.subr.mxu0 0.0
      %654 = vmatpush1.msra.mxu0 0.0
      %655 = vmatprep.subr.mxu0 0.0
      %656 = vmatpush1.msra.mxu0 0.0
      %657 = vmatprep.subr.mxu0 0.0
      %658 = vmatpush1.msra.mxu0 0.0
      %659 = vmatprep.subr.mxu0 0.0
      %660 = vmatpush1.msra.mxu0 0.0
      %661 = vmatprep.subr.mxu0 0.0
      %662 = vmatpush1.msra.mxu0 0.0
      %663 = vmatprep.subr.mxu0 0.0
      %664 = vmatpush1.msra.mxu0 0.0
      %665 = vmatprep.subr.mxu0 0.0
      %666 = vmatpush1.msra.mxu0 0.0
      %667 = vmatprep.subr.mxu0 0.0
      %668 = vmatpush1.msra.mxu0 0.0
      %669 = vmatprep.subr.mxu0 0.0
      %670 = vmatpush1.msra.mxu0 0.0
      %671 = vmatprep.subr.mxu0 0.0
      %672 = vmatpush1.msra.mxu0 0.0
      %673 = vmatprep.subr.mxu0 0.0
      %674 = vmatpush1.msra.mxu0 0.0
      %675 = vmatprep.subr.mxu0 0.0
      %676 = vmatpush1.msra.mxu0 0.0
      %677 = vmatprep.subr.mxu0 0.0
      %678 = vmatpush1.msra.mxu0 0.0
      %679 = vmatprep.subr.mxu0 0.0
      %680 = vmatpush1.msra.mxu0 0.0
      %681 = vmatprep.subr.mxu0 0.0
      %682 = vmatpush1.msra.mxu0 0.0
      %683 = vmatprep.subr.mxu0 0.0
      %684 = vmatpush1.msra.mxu0 0.0
      %685 = vmatprep.subr.mxu0 0.0
      %686 = vmatpush1.msra.mxu0 0.0
      %687 = vmatprep.subr.mxu0 0.0
      %688 = vmatpush1.msra.mxu0 0.0
      %689 = vmatprep.subr.mxu0 0.0
      %690 = vmatpush1.msra.mxu0 0.0
      %691 = vmatprep.subr.mxu0 0.0
      %692 = vmatpush1.msra.mxu0 0.0
      %693 = vmatprep.subr.mxu0 0.0
      %694 = vmatpush1.msra.mxu0 0.0
      %695 = vmatprep.mubr.f32.mxu0 0.0
      %696 = vmatmul.mubr.f32.gmra.mrb[0].mxu0 %v629
      %v697 = vpop.f32.mrb[0].mxu0
      %v698 = vadd.f32 0.0, %v697
      %v699 = vpop.f32.mrb[0].mxu0
      %700 = vdwg.mxu0
      %v702 = vsel %vm265, %v625, 0
      %704 = vmatprep.subr.mxu0 0.0
      %705 = vmatpush1.msra.mxu0 %v261
      %706 = vmatprep.subr.mxu0 0.0
      %707 = vmatpush1.msra.mxu0 0.0
      %708 = vmatprep.subr.mxu0 0.0
      %709 = vmatpush1.msra.mxu0 0.0
      %710 = vmatprep.subr.mxu0 0.0
      %711 = vmatpush1.msra.mxu0 0.0
      %712 = vmatprep.subr.mxu0 0.0
      %713 = vmatpush1.msra.mxu0 0.0
      %714 = vmatprep.subr.mxu0 0.0
      %715 = vmatpush1.msra.mxu0 0.0
      %716 = vmatprep.subr.mxu0 0.0
      %717 = vmatpush1.msra.mxu0 0.0
      %718 = vmatprep.subr.mxu0 0.0
      %719 = vmatpush1.msra.mxu0 0.0
      %720 = vmatprep.subr.mxu0 0.0
      %721 = vmatpush1.msra.mxu0 0.0
      %722 = vmatprep.subr.mxu0 0.0
      %723 = vmatpush1.msra.mxu0 0.0
      %724 = vmatprep.subr.mxu0 0.0
      %725 = vmatpush1.msra.mxu0 0.0
      %726 = vmatprep.subr.mxu0 0.0
      %727 = vmatpush1.msra.mxu0 0.0
      %728 = vmatprep.subr.mxu0 0.0
      %729 = vmatpush1.msra.mxu0 0.0
      %730 = vmatprep.subr.mxu0 0.0
      %731 = vmatpush1.msra.mxu0 0.0
      %732 = vmatprep.subr.mxu0 0.0
      %733 = vmatpush1.msra.mxu0 0.0
      %734 = vmatprep.subr.mxu0 0.0
      %735 = vmatpush1.msra.mxu0 0.0
      %736 = vmatprep.subr.mxu0 0.0
      %737 = vmatpush1.msra.mxu0 0.0
      %738 = vmatprep.subr.mxu0 0.0
      %739 = vmatpush1.msra.mxu0 0.0
      %740 = vmatprep.subr.mxu0 0.0
      %741 = vmatpush1.msra.mxu0 0.0
      %742 = vmatprep.subr.mxu0 0.0
      %743 = vmatpush1.msra.mxu0 0.0
      %744 = vmatprep.subr.mxu0 0.0
      %745 = vmatpush1.msra.mxu0 0.0
      %746 = vmatprep.subr.mxu0 0.0
      %747 = vmatpush1.msra.mxu0 0.0
      %748 = vmatprep.subr.mxu0 0.0
      %749 = vmatpush1.msra.mxu0 0.0
      %750 = vmatprep.subr.mxu0 0.0
      %751 = vmatpush1.msra.mxu0 0.0
      %752 = vmatprep.subr.mxu0 0.0
      %753 = vmatpush1.msra.mxu0 0.0
      %754 = vmatprep.subr.mxu0 0.0
      %755 = vmatpush1.msra.mxu0 0.0
      %756 = vmatprep.subr.mxu0 0.0
      %757 = vmatpush1.msra.mxu0 0.0
      %758 = vmatprep.subr.mxu0 0.0
      %759 = vmatpush1.msra.mxu0 0.0
      %760 = vmatprep.subr.mxu0 0.0
      %761 = vmatpush1.msra.mxu0 0.0
      %762 = vmatprep.subr.mxu0 0.0
      %763 = vmatpush1.msra.mxu0 0.0
      %764 = vmatprep.subr.mxu0 0.0
      %765 = vmatpush1.msra.mxu0 0.0
      %766 = vmatprep.subr.mxu0 0.0
      %767 = vmatpush1.msra.mxu0 0.0
      %768 = vmatprep.mubr.f32.mxu0 0.0
      %769 = vmatmul.mubr.f32.gmra.mrb[0].mxu0 %v702
      %v770 = vpop.f32.mrb[0].mxu0
      %v771 = vadd.f32 0.0, %v770
      %v772 = vpop.f32.mrb[0].mxu0
      %773 = vdwg.mxu0
      %v775 = vsel %vm265, %v626, 0
      %777 = vmatprep.subr.mxu0 0.0
      %778 = vmatpush1.msra.mxu0 %v262
      %779 = vmatprep.subr.mxu0 0.0
      %780 = vmatpush1.msra.mxu0 0.0
      %781 = vmatprep.subr.mxu0 0.0
      %782 = vmatpush1.msra.mxu0 0.0
      %783 = vmatprep.subr.mxu0 0.0
      %784 = vmatpush1.msra.mxu0 0.0
      %785 = vmatprep.subr.mxu0 0.0
      %786 = vmatpush1.msra.mxu0 0.0
      %787 = vmatprep.subr.mxu0 0.0
      %788 = vmatpush1.msra.mxu0 0.0
      %789 = vmatprep.subr.mxu0 0.0
      %790 = vmatpush1.msra.mxu0 0.0
      %791 = vmatprep.subr.mxu0 0.0
      %792 = vmatpush1.msra.mxu0 0.0
      %793 = vmatprep.subr.mxu0 0.0
      %794 = vmatpush1.msra.mxu0 0.0
      %795 = vmatprep.subr.mxu0 0.0
      %796 = vmatpush1.msra.mxu0 0.0
      %797 = vmatprep.subr.mxu0 0.0
      %798 = vmatpush1.msra.mxu0 0.0
      %799 = vmatprep.subr.mxu0 0.0
      %800 = vmatpush1.msra.mxu0 0.0
      %801 = vmatprep.subr.mxu0 0.0
      %802 = vmatpush1.msra.mxu0 0.0
      %803 = vmatprep.subr.mxu0 0.0
      %804 = vmatpush1.msra.mxu0 0.0
      %805 = vmatprep.subr.mxu0 0.0
      %806 = vmatpush1.msra.mxu0 0.0
      %807 = vmatprep.subr.mxu0 0.0
      %808 = vmatpush1.msra.mxu0 0.0
      %809 = vmatprep.subr.mxu0 0.0
      %810 = vmatpush1.msra.mxu0 0.0
      %811 = vmatprep.subr.mxu0 0.0
      %812 = vmatpush1.msra.mxu0 0.0
      %813 = vmatprep.subr.mxu0 0.0
      %814 = vmatpush1.msra.mxu0 0.0
      %815 = vmatprep.subr.mxu0 0.0
      %816 = vmatpush1.msra.mxu0 0.0
      %817 = vmatprep.subr.mxu0 0.0
      %818 = vmatpush1.msra.mxu0 0.0
      %819 = vmatprep.subr.mxu0 0.0
      %820 = vmatpush1.msra.mxu0 0.0
      %821 = vmatprep.subr.mxu0 0.0
      %822 = vmatpush1.msra.mxu0 0.0
      %823 = vmatprep.subr.mxu0 0.0
      %824 = vmatpush1.msra.mxu0 0.0
      %825 = vmatprep.subr.mxu0 0.0
      %826 = vmatpush1.msra.mxu0 0.0
      %827 = vmatprep.subr.mxu0 0.0
      %828 = vmatpush1.msra.mxu0 0.0
      %829 = vmatprep.subr.mxu0 0.0
      %830 = vmatpush1.msra.mxu0 0.0
      %831 = vmatprep.subr.mxu0 0.0
      %832 = vmatpush1.msra.mxu0 0.0
      %833 = vmatprep.subr.mxu0 0.0
      %834 = vmatpush1.msra.mxu0 0.0
      %835 = vmatprep.subr.mxu0 0.0
      %836 = vmatpush1.msra.mxu0 0.0
      %837 = vmatprep.subr.mxu0 0.0
      %838 = vmatpush1.msra.mxu0 0.0
      %839 = vmatprep.subr.mxu0 0.0
      %840 = vmatpush1.msra.mxu0 0.0
      %841 = vmatprep.mubr.f32.mxu0 0.0
      %842 = vmatmul.mubr.f32.gmra.mrb[0].mxu0 %v775
      %v843 = vpop.f32.mrb[0].mxu0
      %v844 = vadd.f32 0.0, %v843
      %v845 = vpop.f32.mrb[0].mxu0
      %846 = vdwg.mxu0
      %v848 = vsel %vm265, %v627, 0
      %850 = vmatprep.subr.mxu0 0.0
      %851 = vmatpush1.msra.mxu0 %v263
      %852 = vmatprep.subr.mxu0 0.0
      %853 = vmatpush1.msra.mxu0 0.0
      %854 = vmatprep.subr.mxu0 0.0
      %855 = vmatpush1.msra.mxu0 0.0
      %856 = vmatprep.subr.mxu0 0.0
      %857 = vmatpush1.msra.mxu0 0.0
      %858 = vmatprep.subr.mxu0 0.0
      %859 = vmatpush1.msra.mxu0 0.0
      %860 = vmatprep.subr.mxu0 0.0
      %861 = vmatpush1.msra.mxu0 0.0
      %862 = vmatprep.subr.mxu0 0.0
      %863 = vmatpush1.msra.mxu0 0.0
      %864 = vmatprep.subr.mxu0 0.0
      %865 = vmatpush1.msra.mxu0 0.0
      %866 = vmatprep.subr.mxu0 0.0
      %867 = vmatpush1.msra.mxu0 0.0
      %868 = vmatprep.subr.mxu0 0.0
      %869 = vmatpush1.msra.mxu0 0.0
      %870 = vmatprep.subr.mxu0 0.0
      %871 = vmatpush1.msra.mxu0 0.0
      %872 = vmatprep.subr.mxu0 0.0
      %873 = vmatpush1.msra.mxu0 0.0
      %874 = vmatprep.subr.mxu0 0.0
      %875 = vmatpush1.msra.mxu0 0.0
      %876 = vmatprep.subr.mxu0 0.0
      %877 = vmatpush1.msra.mxu0 0.0
      %878 = vmatprep.subr.mxu0 0.0
      %879 = vmatpush1.msra.mxu0 0.0
      %880 = vmatprep.subr.mxu0 0.0
      %881 = vmatpush1.msra.mxu0 0.0
      %882 = vmatprep.subr.mxu0 0.0
      %883 = vmatpush1.msra.mxu0 0.0
      %884 = vmatprep.subr.mxu0 0.0
      %885 = vmatpush1.msra.mxu0 0.0
      %886 = vmatprep.subr.mxu0 0.0
      %887 = vmatpush1.msra.mxu0 0.0
      %888 = vmatprep.subr.mxu0 0.0
      %889 = vmatpush1.msra.mxu0 0.0
      %890 = vmatprep.subr.mxu0 0.0
      %891 = vmatpush1.msra.mxu0 0.0
      %892 = vmatprep.subr.mxu0 0.0
      %893 = vmatpush1.msra.mxu0 0.0
      %894 = vmatprep.subr.mxu0 0.0
      %895 = vmatpush1.msra.mxu0 0.0
      %896 = vmatprep.subr.mxu0 0.0
      %897 = vmatpush1.msra.mxu0 0.0
      %898 = vmatprep.subr.mxu0 0.0
      %899 = vmatpush1.msra.mxu0 0.0
      %900 = vmatprep.subr.mxu0 0.0
      %901 = vmatpush1.msra.mxu0 0.0
      %902 = vmatprep.subr.mxu0 0.0
      %903 = vmatpush1.msra.mxu0 0.0
      %904 = vmatprep.subr.mxu0 0.0
      %905 = vmatpush1.msra.mxu0 0.0
      %906 = vmatprep.subr.mxu0 0.0
      %907 = vmatpush1.msra.mxu0 0.0
      %908 = vmatprep.subr.mxu0 0.0
      %909 = vmatpush1.msra.mxu0 0.0
      %910 = vmatprep.subr.mxu0 0.0
      %911 = vmatpush1.msra.mxu0 0.0
      %912 = vmatprep.subr.mxu0 0.0
      %913 = vmatpush1.msra.mxu0 0.0
      %914 = vmatprep.mubr.f32.mxu0 0.0
      %915 = vmatmul.mubr.f32.gmra.mrb[0].mxu0 %v848
      %v916 = vpop.f32.mrb[0].mxu0
      %v917 = vadd.f32 0.0, %v916
      %v918 = vpop.f32.mrb[0].mxu0
      %919 = vdwg.mxu0
      %920 = vst.msk [vmem:[%s251] sm:$0xff] %vm265, %v698
      %921 = vst.msk [vmem:[%s251 + $0x8] sm:$0xff] %vm265, %v771
      %922 = vst.msk [vmem:[%s251 + $0x10] sm:$0xff] %vm265, %v844
      %923 = vst.msk [vmem:[%s251 + $0x18] sm:$0xff] %vm265, %v917
      %p924 = scmp.lt.s32.totalorder %s15, 1
      %s925 = scalar_select %p924, %s15, 1
      %s926 = smul.addr %s925, 4
      %s927 = smul.addr %s926, 8
      %s928 = scalar_lea.vmem %s4, %s927
      // Predicated region
      $region37: #{analogical_networks_forward.47} parent=35 // pred_check
        %p929 = pneg %p137
      $region38: #{analogical_networks_forward.47} parent=35 // pred_check_branch
        %931 = sbr.rel (%p929) target = $region40
      $region39: #{analogical_networks_forward.47} parent=35 // pred_region
        _
      $region40: #{analogical_networks_forward.47} parent=35 // pred_fallthru
        _
    $region36: #{analogical_networks_forward.47} parent=5 // pred_fallthru
      _
    %p932 = scmp.le.s32.totalorder 2, %s10
    // Predicated region
    $region41: #{analogical_networks_forward.47} parent=5 // pred_check
      %p933 = pneg %p932
    $region42: #{analogical_networks_forward.47} parent=5 // pred_check_branch
      %935 = sbr.rel (%p933) target = $region44
    $region43: #{analogical_networks_forward.47} parent=5 // pred_region
      %s936 = ssub.s32 %s10, 2
      // Predicated region
      $region45: #{analogical_networks_forward.47} parent=43 // pred_check
        %p937 = pneg %p143
      $region46: #{analogical_networks_forward.47} parent=43 // pred_check_branch
        %939 = sbr.rel (%p937) target = $region48
      $region47: #{analogical_networks_forward.47} parent=43 // pred_region
        %p940 = scmp.lt.s32.totalorder %s16, 1
        %s941 = scalar_select %p940, %s16, 1
        %s942 = smul.addr %s941, 4
        %s943 = smul.addr %s942, 8
        %s944 = scalar_lea.vmem %s4, %s943
      $region48: #{analogical_networks_forward.47} parent=43 // pred_fallthru
        _
    $region44: #{analogical_networks_forward.47} parent=5 // pred_fallthru
      _
  $region6: #{analogical_networks_forward.47} parent=0 // loop_footer
    %s14 = sadd.s32 1, %s10
  $region7: #{analogical_networks_forward.47} parent=0 // loop_footer_branch
    %9 = sbr.rel target = $region3
  $region8: #{analogical_networks_forward.47} parent=0 // loop_exit
    _

// kernel: analogical_networks_forward.55
$region0: #{analogical_networks_forward.55}
  #allocation0 [shape = 'u32[]', space=smem, size = 0x4, offset = 0x4, fixed_abs, tag = 'smem constant byte address 0x4 - core index']
  #allocation1 [shape = 'u32[144,128]{1,0:T(1,128)}', space=vmem, size = 0x12000, scoped, tag = 'internal scratch']
  %s0 = inlined_call_operand.vmem [shape: f32[8,32], index: 0, kind: input, shape index: {}]
  %s1 = inlined_call_operand.vmem [shape: f32[16,32], index: 1, kind: input, shape index: {}]
  %s2 = inlined_call_operand.vmem [shape: f32[16,32], index: 2, kind: input, shape index: {}]
  %s3 = inlined_call_operand.vmem [shape: f32[32,32], index: 3, kind: input, shape index: {}]
  %s4 = inlined_call_operand.vmem [shape: f32[1,32], index: 4, kind: input, shape index: {}]
  %s5 = inlined_call_operand.vmem [shape: f32[32,32], index: 5, kind: input, shape index: {}]
  %s6 = inlined_call_operand.vmem [shape: f32[1,32], index: 6, kind: input, shape index: {}]
  %s7 = inlined_call_operand.vmem [shape: f32[32,32], index: 7, kind: input, shape index: {}]
  %s8 = inlined_call_operand.vmem [shape: f32[1,32], index: 8, kind: input, shape index: {}]
  %s9 = inlined_call_operand.vmem [shape: f32[8,32], index: 9, kind: output, shape index: {0}]
  %s10 = inlined_call_operand.vmem [shape: f32[16,32], index: 10, kind: output, shape index: {1}]
  %s11 = inlined_call_operand.vmem [shape: f32[16,32], index: 11, kind: output, shape index: {2}]
  %12 = xla_tuple %s9, %s10, %s11
  %s13 = sld [smem:[#allocation0]]
  $region62: #{analogical_networks_forward.55} parent=0
    _
  %s15 = ssub.s32 1, %s13
  %s16 = scalar_select 0, %s15, %s13
  // Predicated region
  $region2: #{analogical_networks_forward.55} parent=0 // pred_check
    _
  $region3: #{analogical_networks_forward.55} parent=0 // pred_check_branch
    %18 = sbr.rel (0) target = $region5
  $region4: #{analogical_networks_forward.55} parent=0 // pred_region
    _
  $region5: #{analogical_networks_forward.55} parent=0 // pred_fallthru
    _
  // Predicated region
  $region6: #{analogical_networks_forward.55} parent=0 // pred_check
    _
  $region7: #{analogical_networks_forward.55} parent=0 // pred_check_branch
    %20 = sbr.rel (0) target = $region9
  $region8: #{analogical_networks_forward.55} parent=0 // pred_region
    _
  $region9: #{analogical_networks_forward.55} parent=0 // pred_fallthru
    _
  // Predicated region
  $region10: #{analogical_networks_forward.55} parent=0 // pred_check
    _
  $region11: #{analogical_networks_forward.55} parent=0 // pred_check_branch
    %22 = sbr.rel (0) target = $region13
  $region12: #{analogical_networks_forward.55} parent=0 // pred_region
    _
  $region13: #{analogical_networks_forward.55} parent=0 // pred_fallthru
    _
  // Predicated region
  $region14: #{analogical_networks_forward.55} parent=0 // pred_check
    _
  $region15: #{analogical_networks_forward.55} parent=0 // pred_check_branch
    %24 = sbr.rel (0) target = $region17
  $region16: #{analogical_networks_forward.55} parent=0 // pred_region
    _
  $region17: #{analogical_networks_forward.55} parent=0 // pred_fallthru
    _
  // Predicated region
  $region18: #{analogical_networks_forward.55} parent=0 // pred_check
    _
  $region19: #{analogical_networks_forward.55} parent=0 // pred_check_branch
    %26 = sbr.rel (0) target = $region21
  $region20: #{analogical_networks_forward.55} parent=0 // pred_region
    _
  $region21: #{analogical_networks_forward.55} parent=0 // pred_fallthru
    _
  // Predicated region
  $region22: #{analogical_networks_forward.55} parent=0 // pred_check
    _
  $region23: #{analogical_networks_forward.55} parent=0 // pred_check_branch
    %28 = sbr.rel (0) target = $region25
  $region24: #{analogical_networks_forward.55} parent=0 // pred_region
    _
  $region25: #{analogical_networks_forward.55} parent=0 // pred_fallthru
    _
  // Predicated region
  $region26: #{analogical_networks_forward.55} parent=0 // pred_check
    _
  $region27: #{analogical_networks_forward.55} parent=0 // pred_check_branch
    %30 = sbr.rel (0) target = $region29
  $region28: #{analogical_networks_forward.55} parent=0 // pred_region
    _
  $region29: #{analogical_networks_forward.55} parent=0 // pred_fallthru
    _
  // Predicated region
  $region30: #{analogical_networks_forward.55} parent=0 // pred_check
    _
  $region31: #{analogical_networks_forward.55} parent=0 // pred_check_branch
    %32 = sbr.rel (0) target = $region33
  $region32: #{analogical_networks_forward.55} parent=0 // pred_region
    _
  $region33: #{analogical_networks_forward.55} parent=0 // pred_fallthru
    _
  // Predicated region
  $region34: #{analogical_networks_forward.55} parent=0 // pred_check
    _
  $region35: #{analogical_networks_forward.55} parent=0 // pred_check_branch
    %34 = sbr.rel (0) target = $region37
  $region36: #{analogical_networks_forward.55} parent=0 // pred_region
    _
  $region37: #{analogical_networks_forward.55} parent=0 // pred_fallthru
    _
  %v35 = vld [vmem:[%s0] sm:$0xff]
  %v36 = vld [vmem:[%s3] sm:$0xff]
  %v37 = vld [vmem:[%s3 + $0x8] sm:$0xff]
  %v38 = vld [vmem:[%s3 + $0x10] sm:$0xff]
  %v39 = vld [vmem:[%s3 + $0x18] sm:$0xff]
  %v40 = vld [vmem:[%s4] sm:$0x1]
  %v42 = vlaneseq
  %v43 = vshrl.u32 %v42, 7
  %v44 = vsub.s32 0, %v43
  %v45 = vrot.slane %v40, %v44
  %vm47 = vcmask 261120
  %v49 = vsel %vm47, %v35, 0
  %51 = vmatprep.subr.mxu0 0.0
  %52 = vmatpush1.msra.mxu0 %v36
  %53 = vmatprep.subr.mxu0 0.0
  %54 = vmatpush1.msra.mxu0 %v37
  %55 = vmatprep.subr.mxu0 0.0
  %56 = vmatpush1.msra.mxu0 %v38
  %57 = vmatprep.subr.mxu0 0.0
  %58 = vmatpush1.msra.mxu0 %v39
  %59 = vmatprep.subr.mxu0 0.0
  %60 = vmatpush1.msra.mxu0 0.0
  %61 = vmatprep.subr.mxu0 0.0
  %62 = vmatpush1.msra.mxu0 0.0
  %63 = vmatprep.subr.mxu0 0.0
  %64 = vmatpush1.msra.mxu0 0.0
  %65 = vmatprep.subr.mxu0 0.0
  %66 = vmatpush1.msra.mxu0 0.0
  %67 = vmatprep.subr.mxu0 0.0
  %68 = vmatpush1.msra.mxu0 0.0
  %69 = vmatprep.subr.mxu0 0.0
  %70 = vmatpush1.msra.mxu0 0.0
  %71 = vmatprep.subr.mxu0 0.0
  %72 = vmatpush1.msra.mxu0 0.0
  %73 = vmatprep.subr.mxu0 0.0
  %74 = vmatpush1.msra.mxu0 0.0
  %75 = vmatprep.subr.mxu0 0.0
  %76 = vmatpush1.msra.mxu0 0.0
  %77 = vmatprep.subr.mxu0 0.0
  %78 = vmatpush1.msra.mxu0 0.0
  %79 = vmatprep.subr.mxu0 0.0
  %80 = vmatpush1.msra.mxu0 0.0
  %81 = vmatprep.subr.mxu0 0.0
  %82 = vmatpush1.msra.mxu0 0.0
  %83 = vmatprep.subr.mxu0 0.0
  %84 = vmatpush1.msra.mxu0 0.0
  %85 = vmatprep.subr.mxu0 0.0
  %86 = vmatpush1.msra.mxu0 0.0
  %87 = vmatprep.subr.mxu0 0.0
  %88 = vmatpush1.msra.mxu0 0.0
  %89 = vmatprep.subr.mxu0 0.0
  %90 = vmatpush1.msra.mxu0 0.0
  %91 = vmatprep.subr.mxu0 0.0
  %92 = vmatpush1.msra.mxu0 0.0
  %93 = vmatprep.subr.mxu0 0.0
  %94 = vmatpush1.msra.mxu0 0.0
  %95 = vmatprep.subr.mxu0 0.0
  %96 = vmatpush1.msra.mxu0 0.0
  %97 = vmatprep.subr.mxu0 0.0
  %98 = vmatpush1.msra.mxu0 0.0
  %99 = vmatprep.subr.mxu0 0.0
  %100 = vmatpush1.msra.mxu0 0.0
  %101 = vmatprep.subr.mxu0 0.0
  %102 = vmatpush1.msra.mxu0 0.0
  %103 = vmatprep.subr.mxu0 0.0
  %104 = vmatpush1.msra.mxu0 0.0
  %105 = vmatprep.subr.mxu0 0.0
  %106 = vmatpush1.msra.mxu0 0.0
  %107 = vmatprep.subr.mxu0 0.0
  %108 = vmatpush1.msra.mxu0 0.0
  %109 = vmatprep.subr.mxu0 0.0
  %110 = vmatpush1.msra.mxu0 0.0
  %111 = vmatprep.subr.mxu0 0.0
  %112 = vmatpush1.msra.mxu0 0.0
  %113 = vmatprep.subr.mxu0 0.0
  %114 = vmatpush1.msra.mxu0 0.0
  %115 = vmatprep.mubr.f32.mxu0 0.0
  %116 = vmatmul.mubr.f32.gmra.mrb[0].mxu0 %v49
  %v117 = vpop.f32.mrb[0].mxu0
  %v118 = vadd.f32 %v45, %v117
  %v119 = vpop.f32.mrb[0].mxu0
  %120 = vdwg.mxu0
  %121 = vst.msk [vmem:[%s9] sm:$0xff] %vm47, %v118
  %v122 = vld [vmem:[%s1] sm:$0xff]
  %v123 = vld [vmem:[%s1 + $0x8] sm:$0xff]
  %v124 = vld [vmem:[%s5] sm:$0xff]
  %v125 = vld [vmem:[%s5 + $0x8] sm:$0xff]
  %v126 = vld [vmem:[%s5 + $0x10] sm:$0xff]
  %v127 = vld [vmem:[%s5 + $0x18] sm:$0xff]
  %v128 = vld [vmem:[%s6] sm:$0x1]
  %v130 = vlaneseq
  %v131 = vshrl.u32 %v130, 7
  %v132 = vsub.s32 0, %v131
  %v133 = vrot.slane %v128, %v132
  %v136 = vsel %vm47, %v122, 0
  %v139 = vsel %vm47, %v123, 0
  %141 = vmatprep.subr.mxu0 0.0
  %142 = vmatpush1.msra.mxu0 %v124
  %143 = vmatprep.subr.mxu0 0.0
  %144 = vmatpush1.msra.mxu0 %v125
  %145 = vmatprep.subr.mxu0 0.0
  %146 = vmatpush1.msra.mxu0 %v126
  %147 = vmatprep.subr.mxu0 0.0
  %148 = vmatpush1.msra.mxu0 %v127
  %149 = vmatprep.subr.mxu0 0.0
  %150 = vmatpush1.msra.mxu0 0.0
  %151 = vmatprep.subr.mxu0 0.0
  %152 = vmatpush1.msra.mxu0 0.0
  %153 = vmatprep.subr.mxu0 0.0
  %154 = vmatpush1.msra.mxu0 0.0
  %155 = vmatprep.subr.mxu0 0.0
  %156 = vmatpush1.msra.mxu0 0.0
  %157 = vmatprep.subr.mxu0 0.0
  %158 = vmatpush1.msra.mxu0 0.0
  %159 = vmatprep.subr.mxu0 0.0
  %160 = vmatpush1.msra.mxu0 0.0
  %161 = vmatprep.subr.mxu0 0.0
  %162 = vmatpush1.msra.mxu0 0.0
  %163 = vmatprep.subr.mxu0 0.0
  %164 = vmatpush1.msra.mxu0 0.0
  %165 = vmatprep.subr.mxu0 0.0
  %166 = vmatpush1.msra.mxu0 0.0
  %167 = vmatprep.subr.mxu0 0.0
  %168 = vmatpush1.msra.mxu0 0.0
  %169 = vmatprep.subr.mxu0 0.0
  %170 = vmatpush1.msra.mxu0 0.0
  %171 = vmatprep.subr.mxu0 0.0
  %172 = vmatpush1.msra.mxu0 0.0
  %173 = vmatprep.subr.mxu0 0.0
  %174 = vmatpush1.msra.mxu0 0.0
  %175 = vmatprep.subr.mxu0 0.0
  %176 = vmatpush1.msra.mxu0 0.0
  %177 = vmatprep.subr.mxu0 0.0
  %178 = vmatpush1.msra.mxu0 0.0
  %179 = vmatprep.subr.mxu0 0.0
  %180 = vmatpush1.msra.mxu0 0.0
  %181 = vmatprep.subr.mxu0 0.0
  %182 = vmatpush1.msra.mxu0 0.0
  %183 = vmatprep.subr.mxu0 0.0
  %184 = vmatpush1.msra.mxu0 0.0
  %185 = vmatprep.subr.mxu0 0.0
  %186 = vmatpush1.msra.mxu0 0.0
  %187 = vmatprep.subr.mxu0 0.0
  %188 = vmatpush1.msra.mxu0 0.0
  %189 = vmatprep.subr.mxu0 0.0
  %190 = vmatpush1.msra.mxu0 0.0
  %191 = vmatprep.subr.mxu0 0.0
  %192 = vmatpush1.msra.mxu0 0.0
  %193 = vmatprep.subr.mxu0 0.0
  %194 = vmatpush1.msra.mxu0 0.0
  %195 = vmatprep.subr.mxu0 0.0
  %196 = vmatpush1.msra.mxu0 0.0
  %197 = vmatprep.subr.mxu0 0.0
  %198 = vmatpush1.msra.mxu0 0.0
  %199 = vmatprep.subr.mxu0 0.0
  %200 = vmatpush1.msra.mxu0 0.0
  %201 = vmatprep.subr.mxu0 0.0
  %202 = vmatpush1.msra.mxu0 0.0
  %203 = vmatprep.subr.mxu0 0.0
  %204 = vmatpush1.msra.mxu0 0.0
  %205 = vmatprep.mubr.f32.mxu0 0.0
  %206 = vmatmul.mubr.f32.gmra.mrb[0].mxu0 %v136
  %v207 = vpop.f32.mrb[0].mxu0
  %v208 = vadd.f32 %v133, %v207
  %v209 = vpop.f32.mrb[0].mxu0
  %210 = vmatprep.mubr.f32.mxu0 0.0
  %211 = vmatmul.mubr.f32.gmra.mrb[0].mxu0 %v139
  %v212 = vpop.f32.mrb[0].mxu0
  %v213 = vadd.f32 %v133, %v212
  %v214 = vpop.f32.mrb[0].mxu0
  %215 = vdwg.mxu0
  %216 = vst.msk [vmem:[%s10] sm:$0xff] %vm47, %v208
  %217 = vst.msk [vmem:[%s10 + $0x8] sm:$0xff] %vm47, %v213
  %v218 = vld [vmem:[%s2] sm:$0xff]
  %v219 = vld [vmem:[%s2 + $0x8] sm:$0xff]
  %v220 = vld [vmem:[%s7] sm:$0xff]
  %v221 = vld [vmem:[%s7 + $0x8] sm:$0xff]
  %v222 = vld [vmem:[%s7 + $0x10] sm:$0xff]
  %v223 = vld [vmem:[%s7 + $0x18] sm:$0xff]
  %v224 = vld [vmem:[%s8] sm:$0x1]
  %v226 = vlaneseq
  %v227 = vshrl.u32 %v226, 7
  %v228 = vsub.s32 0, %v227
  %v229 = vrot.slane %v224, %v228
  %v232 = vsel %vm47, %v218, 0
  %v235 = vsel %vm47, %v219, 0
  %237 = vmatprep.subr.mxu0 0.0
  %238 = vmatpush1.msra.mxu0 %v220
  %239 = vmatprep.subr.mxu0 0.0
  %240 = vmatpush1.msra.mxu0 %v221
  %241 = vmatprep.subr.mxu0 0.0
  %242 = vmatpush1.msra.mxu0 %v222
  %243 = vmatprep.subr.mxu0 0.0
  %244 = vmatpush1.msra.mxu0 %v223
  %245 = vmatprep.subr.mxu0 0.0
  %246 = vmatpush1.msra.mxu0 0.0
  %247 = vmatprep.subr.mxu0 0.0
  %248 = vmatpush1.msra.mxu0 0.0
  %249 = vmatprep.subr.mxu0 0.0
  %250 = vmatpush1.msra.mxu0 0.0
  %251 = vmatprep.subr.mxu0 0.0
  %252 = vmatpush1.msra.mxu0 0.0
  %253 = vmatprep.subr.mxu0 0.0
  %254 = vmatpush1.msra.mxu0 0.0
  %255 = vmatprep.subr.mxu0 0.0
  %256 = vmatpush1.msra.mxu0 0.0
  %257 = vmatprep.subr.mxu0 0.0
  %258 = vmatpush1.msra.mxu0 0.0
  %259 = vmatprep.subr.mxu0 0.0
  %260 = vmatpush1.msra.mxu0 0.0
  %261 = vmatprep.subr.mxu0 0.0
  %262 = vmatpush1.msra.mxu0 0.0
  %263 = vmatprep.subr.mxu0 0.0
  %264 = vmatpush1.msra.mxu0 0.0
  %265 = vmatprep.subr.mxu0 0.0
  %266 = vmatpush1.msra.mxu0 0.0
  %267 = vmatprep.subr.mxu0 0.0
  %268 = vmatpush1.msra.mxu0 0.0
  %269 = vmatprep.subr.mxu0 0.0
  %270 = vmatpush1.msra.mxu0 0.0
  %271 = vmatprep.subr.mxu0 0.0
  %272 = vmatpush1.msra.mxu0 0.0
  %273 = vmatprep.subr.mxu0 0.0
  %274 = vmatpush1.msra.mxu0 0.0
  %275 = vmatprep.subr.mxu0 0.0
  %276 = vmatpush1.msra.mxu0 0.0
  %277 = vmatprep.subr.mxu0 0.0
  %278 = vmatpush1.msra.mxu0 0.0
  %279 = vmatprep.subr.mxu0 0.0
  %280 = vmatpush1.msra.mxu0 0.0
  %281 = vmatprep.subr.mxu0 0.0
  %282 = vmatpush1.msra.mxu0 0.0
  %283 = vmatprep.subr.mxu0 0.0
  %284 = vmatpush1.msra.mxu0 0.0
  %285 = vmatprep.subr.mxu0 0.0
  %286 = vmatpush1.msra.mxu0 0.0
  %287 = vmatprep.subr.mxu0 0.0
  %288 = vmatpush1.msra.mxu0 0.0
  %289 = vmatprep.subr.mxu0 0.0
  %290 = vmatpush1.msra.mxu0 0.0
  %291 = vmatprep.subr.mxu0 0.0
  %292 = vmatpush1.msra.mxu0 0.0
  %293 = vmatprep.subr.mxu0 0.0
  %294 = vmatpush1.msra.mxu0 0.0
  %295 = vmatprep.subr.mxu0 0.0
  %296 = vmatpush1.msra.mxu0 0.0
  %297 = vmatprep.subr.mxu0 0.0
  %298 = vmatpush1.msra.mxu0 0.0
  %299 = vmatprep.subr.mxu0 0.0
  %300 = vmatpush1.msra.mxu0 0.0
  %301 = vmatprep.mubr.f32.mxu0 0.0
  %302 = vmatmul.mubr.f32.gmra.mrb[0].mxu0 %v232
  %v303 = vpop.f32.mrb[0].mxu0
  %v304 = vadd.f32 %v229, %v303
  %v305 = vpop.f32.mrb[0].mxu0
  %306 = vmatprep.mubr.f32.mxu0 0.0
  %307 = vmatmul.mubr.f32.gmra.mrb[0].mxu0 %v235
  %v308 = vpop.f32.mrb[0].mxu0
  %v309 = vadd.f32 %v229, %v308
  %v310 = vpop.f32.mrb[0].mxu0
  %311 = vdwg.mxu0
  %312 = vst.msk [vmem:[%s11] sm:$0xff] %vm47, %v304
  %313 = vst.msk [vmem:[%s11 + $0x8] sm:$0xff] %vm47, %v309
  // Predicated region
  $region38: #{analogical_networks_forward.55} parent=0 // pred_check
    _
  $region39: #{analogical_networks_forward.55} parent=0 // pred_check_branch
    %315 = sbr.rel (0) target = $region41
  $region40: #{analogical_networks_forward.55} parent=0 // pred_region
    _
  $region41: #{analogical_networks_forward.55} parent=0 // pred_fallthru
    _
  // Predicated region
  $region42: #{analogical_networks_forward.55} parent=0 // pred_check
    _
  $region43: #{analogical_networks_forward.55} parent=0 // pred_check_branch
    %317 = sbr.rel (0) target = $region45
  $region44: #{analogical_networks_forward.55} parent=0 // pred_region
    _
  $region45: #{analogical_networks_forward.55} parent=0 // pred_fallthru
    _
  // Predicated region
  $region46: #{analogical_networks_forward.55} parent=0 // pred_check
    _
  $region47: #{analogical_networks_forward.55} parent=0 // pred_check_branch
    %319 = sbr.rel (0) target = $region49
  $region48: #{analogical_networks_forward.55} parent=0 // pred_region
    _
  $region49: #{analogical_networks_forward.55} parent=0 // pred_fallthru
    _
  // Predicated region
  $region50: #{analogical_networks_forward.55} parent=0 // pred_check
    _
  $region51: #{analogical_networks_forward.55} parent=0 // pred_check_branch
    %321 = sbr.rel (0) target = $region53
  $region52: #{analogical_networks_forward.55} parent=0 // pred_region
    _
  $region53: #{analogical_networks_forward.55} parent=0 // pred_fallthru
    _
  // Predicated region
  $region54: #{analogical_networks_forward.55} parent=0 // pred_check
    _
  $region55: #{analogical_networks_forward.55} parent=0 // pred_check_branch
    %323 = sbr.rel (0) target = $region57
  $region56: #{analogical_networks_forward.55} parent=0 // pred_region
    _
  $region57: #{analogical_networks_forward.55} parent=0 // pred_fallthru
    _
  // Predicated region
  $region58: #{analogical_networks_forward.55} parent=0 // pred_check
    _
  $region59: #{analogical_networks_forward.55} parent=0 // pred_check_branch
    %325 = sbr.rel (0) target = $region61
  $region60: #{analogical_networks_forward.55} parent=0 // pred_region
    _
  $region61: #{analogical_networks_forward.55} parent=0 // pred_fallthru
    _

// kernel: analogical_networks_forward.56
$region0: #{analogical_networks_forward.56}
  #allocation0 [shape = 'u32[]', space=smem, size = 0x4, offset = 0x4, fixed_abs, tag = 'smem constant byte address 0x4 - core index']
  #allocation1 [shape = 'u32[144,128]{1,0:T(1,128)}', space=vmem, size = 0x12000, scoped, tag = 'internal scratch']
  %s0 = inlined_call_operand.vmem [shape: f32[2,4,4,8], index: 0, kind: input, shape index: {}]
  %s1 = inlined_call_operand.vmem [shape: f32[2,4,8,8], index: 1, kind: input, shape index: {}]
  %s2 = inlined_call_operand.vmem [shape: f32[2,4,8,8], index: 2, kind: input, shape index: {}]
  %s3 = inlined_call_operand.vmem [shape: f32[2,1,8], index: 3, kind: input, shape index: {}]
  %s4 = inlined_call_operand.vmem [shape: f32[2,4,4,8], index: 4, kind: output, shape index: {}]
  %s5 = sld [smem:[#allocation0]]
  $region49: #{analogical_networks_forward.56} parent=0
    _
  %s7 = ssub.s32 1, %s5
  %s8 = scalar_select 0, %s7, %s5
  loop: start=0, step=1, limit=4
  $region2: #{analogical_networks_forward.56} parent=0 // loop_pre_header
    _
  $region3: #{analogical_networks_forward.56} parent=0 // loop_header
    %s10 = sphi 0, %s14
    %p11 = scmp.ge.s32.totalorder %s10, 4
    %s20 = sphi 0, %s22
    %s23 = sphi 0, %s20
    %s24 = sphi 0, %s23
    %s40 = sphi 0, %s24
    %s46 = sphi 0, %s48
    %s49 = sphi 0, %s46
    %s50 = sphi 0, %s49
    %s66 = sphi 0, %s50
    %s72 = sphi 0, %s74
    %s75 = sphi 0, %s72
    %s76 = sphi 0, %s75
    %s92 = sphi 0, %s76
    %s98 = sphi 0, %s100
    %s101 = sphi 0, %s98
    %s102 = sphi 0, %s101
    %s118 = sphi 0, %s102
    %s124 = sphi 0, %s126
    %s127 = sphi 0, %s124
    %s128 = sphi 0, %s127
    %s144 = sphi 0, %s128
  $region4: #{analogical_networks_forward.56} parent=0 // loop_header_branch
    %13 = sbr.rel (%p11) target = $region8
  $region5: #{analogical_networks_forward.56} parent=0 // loop_body
    %s15 = ssub.s32 %s10, 1
    %s16 = ssub.s32 %s10, 2
    %s17 = sadd.s32 %s10, 1
    %s18 = ssub.s32 %s10, %s17
    %p19 = scmp.eq.s32.totalorder %s18, 0
    %s21 = sadd.s32 %s20, 1
    %s22 = scalar_select %p19, %s20, %s21
    %p25 = pneg %p19
    %p26 = scmp.eq.s32.totalorder %s10, 1
    %p27 = por %p25, %p26
    %p28 = scmp.ne.s32.totalorder %s20, %s23
    %p29 = scmp.eq.s32.totalorder %s10, 0
    %p30 = por %p28, %p29
    %p31 = scmp.ne.s32.totalorder %s20, %s23
    %p32 = scmp.eq.s32.totalorder %s15, 1
    %p33 = por %p31, %p32
    %p34 = scmp.ne.s32.totalorder %s23, %s24
    %p35 = scmp.eq.s32.totalorder %s15, 0
    %p36 = por %p34, %p35
    %p37 = scmp.ne.s32.totalorder %s23, %s24
    %p38 = scmp.eq.s32.totalorder %s16, 1
    %p39 = por %p37, %p38
    %p41 = scmp.ne.s32.totalorder %s24, %s40
    %p42 = scmp.eq.s32.totalorder %s16, 0
    %p43 = por %p41, %p42
    %s44 = ssub.s32 %s10, %s17
    %p45 = scmp.eq.s32.totalorder %s44, 0
    %s47 = sadd.s32 %s46, 1
    %s48 = scalar_select %p45, %s46, %s47
    %p51 = pneg %p45
    %p52 = scmp.eq.s32.totalorder %s10, 1
    %p53 = por %p51, %p52
    %p54 = scmp.ne.s32.totalorder %s46, %s49
    %p55 = scmp.eq.s32.totalorder %s10, 0
    %p56 = por %p54, %p55
    %p57 = scmp.ne.s32.totalorder %s46, %s49
    %p58 = scmp.eq.s32.totalorder %s15, 1
    %p59 = por %p57, %p58
    %p60 = scmp.ne.s32.totalorder %s49, %s50
    %p61 = scmp.eq.s32.totalorder %s15, 0
    %p62 = por %p60, %p61
    %p63 = scmp.ne.s32.totalorder %s49, %s50
    %p64 = scmp.eq.s32.totalorder %s16, 1
    %p65 = por %p63, %p64
    %p67 = scmp.ne.s32.totalorder %s50, %s66
    %p68 = scmp.eq.s32.totalorder %s16, 0
    %p69 = por %p67, %p68
    %s70 = ssub.s32 %s10, %s17
    %p71 = scmp.eq.s32.totalorder %s70, 0
    %s73 = sadd.s32 %s72, 1
    %s74 = scalar_select %p71, %s72, %s73
    %p77 = pneg %p71
    %p78 = scmp.eq.s32.totalorder %s10, 1
    %p79 = por %p77, %p78
    %p80 = scmp.ne.s32.totalorder %s72, %s75
    %p81 = scmp.eq.s32.totalorder %s10, 0
    %p82 = por %p80, %p81
    %p83 = scmp.ne.s32.totalorder %s72, %s75
    %p84 = scmp.eq.s32.totalorder %s15, 1
    %p85 = por %p83, %p84
    %p86 = scmp.ne.s32.totalorder %s75, %s76
    %p87 = scmp.eq.s32.totalorder %s15, 0
    %p88 = por %p86, %p87
    %p89 = scmp.ne.s32.totalorder %s75, %s76
    %p90 = scmp.eq.s32.totalorder %s16, 1
    %p91 = por %p89, %p90
    %p93 = scmp.ne.s32.totalorder %s76, %s92
    %p94 = scmp.eq.s32.totalorder %s16, 0
    %p95 = por %p93, %p94
    %s96 = ssub.s32 %s10, %s17
    %p97 = scmp.eq.s32.totalorder %s96, 0
    %s99 = sadd.s32 %s98, 1
    %s100 = scalar_select %p97, %s98, %s99
    %p103 = pneg %p97
    %p104 = scmp.eq.s32.totalorder %s10, 1
    %p105 = por %p103, %p104
    %p106 = scmp.ne.s32.totalorder %s98, %s101
    %p107 = scmp.eq.s32.totalorder %s10, 0
    %p108 = por %p106, %p107
    %p109 = scmp.ne.s32.totalorder %s98, %s101
    %p110 = scmp.eq.s32.totalorder %s15, 1
    %p111 = por %p109, %p110
    %p112 = scmp.ne.s32.totalorder %s101, %s102
    %p113 = scmp.eq.s32.totalorder %s15, 0
    %p114 = por %p112, %p113
    %p115 = scmp.ne.s32.totalorder %s101, %s102
    %p116 = scmp.eq.s32.totalorder %s16, 1
    %p117 = por %p115, %p116
    %p119 = scmp.ne.s32.totalorder %s102, %s118
    %p120 = scmp.eq.s32.totalorder %s16, 0
    %p121 = por %p119, %p120
    %s122 = ssub.s32 %s10, %s17
    %p123 = scmp.eq.s32.totalorder %s122, 0
    %s125 = sadd.s32 %s124, 1
    %s126 = scalar_select %p123, %s124, %s125
    %p129 = pneg %p123
    %p130 = scmp.eq.s32.totalorder %s10, 1
    %p131 = por %p129, %p130
    %p132 = scmp.ne.s32.totalorder %s124, %s127
    %p133 = scmp.eq.s32.totalorder %s10, 0
    %p134 = por %p132, %p133
    %p135 = scmp.ne.s32.totalorder %s124, %s127
    %p136 = scmp.eq.s32.totalorder %s15, 1
    %p137 = por %p135, %p136
    %p138 = scmp.ne.s32.totalorder %s127, %s128
    %p139 = scmp.eq.s32.totalorder %s15, 0
    %p140 = por %p138, %p139
    %p141 = scmp.ne.s32.totalorder %s127, %s128
    %p142 = scmp.eq.s32.totalorder %s16, 1
    %p143 = por %p141, %p142
    %p145 = scmp.ne.s32.totalorder %s128, %s144
    %p146 = scmp.eq.s32.totalorder %s16, 0
    %p147 = por %p145, %p146
    %p148 = scmp.le.s32.totalorder 1, %s10
    %p149 = scmp.lt.s32.totalorder %s10, 3
    %p150 = pnand %p148, %p149
    %p151 = pneg %p150
    // Predicated region
    $region9: #{analogical_networks_forward.56} parent=5 // pred_check
      _
    $region10: #{analogical_networks_forward.56} parent=5 // pred_check_branch
      %153 = sbr.rel (%p150) target = $region12
    $region11: #{analogical_networks_forward.56} parent=5 // pred_region
      %s154 = ssub.s32 %s10, 1
    $region12: #{analogical_networks_forward.56} parent=5 // pred_fallthru
      _
    %p155 = scmp.lt.s32.totalorder %s10, 2
    // Predicated region
    $region13: #{analogical_networks_forward.56} parent=5 // pred_check
      %p156 = pneg %p155
    $region14: #{analogical_networks_forward.56} parent=5 // pred_check_branch
      %158 = sbr.rel (%p156) target = $region16
    $region15: #{analogical_networks_forward.56} parent=5 // pred_region
      // Predicated region
      $region17: #{analogical_networks_forward.56} parent=15 // pred_check
        %p159 = pneg %p30
      $region18: #{analogical_networks_forward.56} parent=15 // pred_check_branch
        %161 = sbr.rel (%p159) target = $region20
      $region19: #{analogical_networks_forward.56} parent=15 // pred_region
        %p162 = scmp.lt.s32.totalorder %s10, 1
        %s163 = scalar_select %p162, %s10, 1
        %s164 = smul.addr %s163, 4
        %s165 = smul.addr %s164, 4
        %s166 = scalar_lea.vmem %s0, %s165
      $region20: #{analogical_networks_forward.56} parent=15 // pred_fallthru
        _
      // Predicated region
      $region21: #{analogical_networks_forward.56} parent=15 // pred_check
        %p167 = pneg %p56
      $region22: #{analogical_networks_forward.56} parent=15 // pred_check_branch
        %169 = sbr.rel (%p167) target = $region24
      $region23: #{analogical_networks_forward.56} parent=15 // pred_region
        %p170 = scmp.lt.s32.totalorder %s10, 1
        %s171 = scalar_select %p170, %s10, 1
        %s172 = smul.addr %s171, 4
        %s173 = smul.addr %s172, 8
        %s174 = scalar_lea.vmem %s1, %s173
      $region24: #{analogical_networks_forward.56} parent=15 // pred_fallthru
        _
      // Predicated region
      $region25: #{analogical_networks_forward.56} parent=15 // pred_check
        %p175 = pneg %p82
      $region26: #{analogical_networks_forward.56} parent=15 // pred_check_branch
        %177 = sbr.rel (%p175) target = $region28
      $region27: #{analogical_networks_forward.56} parent=15 // pred_region
        %p178 = scmp.lt.s32.totalorder %s10, 1
        %s179 = scalar_select %p178, %s10, 1
        %s180 = smul.addr %s179, 4
        %s181 = smul.addr %s180, 8
        %s182 = scalar_lea.vmem %s2, %s181
      $region28: #{analogical_networks_forward.56} parent=15 // pred_fallthru
        _
      // Predicated region
      $region29: #{analogical_networks_forward.56} parent=15 // pred_check
        %p183 = pneg %p108
      $region30: #{analogical_networks_forward.56} parent=15 // pred_check_branch
        %185 = sbr.rel (%p183) target = $region32
      $region31: #{analogical_networks_forward.56} parent=15 // pred_region
        %p186 = scmp.lt.s32.totalorder %s10, 1
        %s187 = scalar_select %p186, %s10, 1
        %s188 = scalar_lea.vmem %s3, %s187
      $region32: #{analogical_networks_forward.56} parent=15 // pred_fallthru
        _
    $region16: #{analogical_networks_forward.56} parent=5 // pred_fallthru
      _
    %p189 = scmp.le.s32.totalorder 1, %s10
    %p190 = scmp.lt.s32.totalorder %s10, 3
    %p191 = pnand %p189, %p190
    %p192 = pneg %p191
    // Predicated region
    $region33: #{analogical_networks_forward.56} parent=5 // pred_check
      _
    $region34: #{analogical_networks_forward.56} parent=5 // pred_check_branch
      %194 = sbr.rel (%p191) target = $region36
    $region35: #{analogical_networks_forward.56} parent=5 // pred_region
      %s195 = ssub.s32 %s10, 1
      %p196 = scmp.lt.s32.totalorder %s15, 1
      %s197 = scalar_select %p196, %s15, 1
      %s198 = smul.addr %s197, 4
      %s199 = smul.addr %s198, 4
      %s200 = scalar_lea.vmem %s0, %s199
      %p201 = pneg %p36
      %p202 = pneg %p33
      %p203 = scmp.lt.s32.totalorder %s15, 1
      %s204 = scalar_select %p203, %s15, 1
      %s205 = smul.addr %s204, 4
      %s206 = smul.addr %s205, 8
      %s207 = scalar_lea.vmem %s1, %s206
      %p208 = pneg %p62
      %p209 = pneg %p59
      %p210 = scmp.lt.s32.totalorder %s15, 1
      %s211 = scalar_select %p210, %s15, 1
      %s212 = smul.addr %s211, 4
      %s213 = smul.addr %s212, 8
      %s214 = scalar_lea.vmem %s2, %s213
      %p215 = pneg %p88
      %p216 = pneg %p85
      %p217 = scmp.lt.s32.totalorder %s15, 1
      %s218 = scalar_select %p217, %s15, 1
      %s219 = scalar_lea.vmem %s3, %s218
      %p220 = pneg %p114
      %p221 = pneg %p111
      %p222 = pneg %p140
      %p223 = pneg %p137
      %p224 = scmp.lt.s32.totalorder %s15, 1
      %s225 = scalar_select %p224, %s15, 1
      %s226 = smul.addr %s225, 4
      %s227 = smul.addr %s226, 4
      %s228 = scalar_lea.vmem %s4, %s227
      %p229 = scmp.lt.s32.totalorder %s15, 1
      %s230 = scalar_select %p229, %s15, 1
      %s231 = smul.addr %s230, 4
      %s232 = smul.addr %s231, 4
      %s233 = scalar_lea.vmem %s0, %s232
      %p234 = scmp.lt.s32.totalorder %s15, 1
      %s235 = scalar_select %p234, %s15, 1
      %s236 = smul.addr %s235, 4
      %s237 = smul.addr %s236, 8
      %s238 = scalar_lea.vmem %s1, %s237
      %p239 = scmp.lt.s32.totalorder %s15, 1
      %s240 = scalar_select %p239, %s15, 1
      %s241 = smul.addr %s240, 4
      %s242 = smul.addr %s241, 8
      %s243 = scalar_lea.vmem %s2, %s242
      %p244 = scmp.lt.s32.totalorder %s15, 1
      %s245 = scalar_select %p244, %s15, 1
      %s246 = scalar_lea.vmem %s3, %s245
      %p247 = scmp.lt.s32.totalorder %s15, 1
      %s248 = scalar_select %p247, %s15, 1
      %s249 = smul.addr %s248, 4
      %s250 = smul.addr %s249, 4
      %s251 = scalar_lea.vmem %s4, %s250
      %v252 = vld [vmem:[%s233] sm:$0xf]
      %v253 = vld [vmem:[%s233 + $0x4] sm:$0xf]
      %v254 = vld [vmem:[%s233 + $0x8] sm:$0xf]
      %v255 = vld [vmem:[%s233 + $0xc] sm:$0xf]
      %v256 = vld [vmem:[%s238] sm:$0xff]
      %v257 = vld [vmem:[%s238 + $0x8] sm:$0xff]
      %v258 = vld [vmem:[%s238 + $0x10] sm:$0xff]
      %v259 = vld [vmem:[%s238 + $0x18] sm:$0xff]
      %v260 = vld [vmem:[%s243] sm:$0xff]
      %v261 = vld [vmem:[%s243 + $0x8] sm:$0xff]
      %v262 = vld [vmem:[%s243 + $0x10] sm:$0xff]
      %v263 = vld [vmem:[%s243 + $0x18] sm:$0xff]
      %v264 = vld [vmem:[%s246] sm:$0x1]
      %vm265 = vcmask 64512
      %v267 = vsel %vm265, %v252, 0
      %v270 = vsel %vm265, %v256, 0
      %272 = vmatprep.subr.mxu0 0.0
      %273 = vmatpush1.xpose.msra.mxu0 %v270
      %274 = vmatprep.subr.mxu0 0.0
      %275 = vmatpush1.xpose.msra.mxu0 0.0
      %276 = vmatprep.subr.mxu0 0.0
      %277 = vmatpush1.xpose.msra.mxu0 0.0
      %278 = vmatprep.subr.mxu0 0.0
      %279 = vmatpush1.xpose.msra.mxu0 0.0
      %280 = vmatprep.subr.mxu0 0.0
      %281 = vmatpush1.xpose.msra.mxu0 0.0
      %282 = vmatprep.subr.mxu0 0.0
      %283 = vmatpush1.xpose.msra.mxu0 0.0
      %284 = vmatprep.subr.mxu0 0.0
      %285 = vmatpush1.xpose.msra.mxu0 0.0
      %286 = vmatprep.subr.mxu0 0.0
      %287 = vmatpush1.xpose.msra.mxu0 0.0
      %288 = vmatprep.subr.mxu0 0.0
      %289 = vmatpush1.xpose.msra.mxu0 0.0
      %290 = vmatprep.subr.mxu0 0.0
      %291 = vmatpush1.xpose.msra.mxu0 0.0
      %292 = vmatprep.subr.mxu0 0.0
      %293 = vmatpush1.xpose.msra.mxu0 0.0
      %294 = vmatprep.subr.mxu0 0.0
      %295 = vmatpush1.xpose.msra.mxu0 0.0
      %296 = vmatprep.subr.mxu0 0.0
      %297 = vmatpush1.xpose.msra.mxu0 0.0
      %298 = vmatprep.subr.mxu0 0.0
      %299 = vmatpush1.xpose.msra.mxu0 0.0
      %300 = vmatprep.subr.mxu0 0.0
      %301 = vmatpush1.xpose.msra.mxu0 0.0
      %302 = vmatprep.subr.mxu0 0.0
      %303 = vmatpush1.xpose.msra.mxu0 0.0
      %304 = vmatprep.subr.mxu0 0.0
      %305 = vmatpush1.xpose.msra.mxu0 0.0
      %306 = vmatprep.subr.mxu0 0.0
      %307 = vmatpush1.xpose.msra.mxu0 0.0
      %308 = vmatprep.subr.mxu0 0.0
      %309 = vmatpush1.xpose.msra.mxu0 0.0
      %310 = vmatprep.subr.mxu0 0.0
      %311 = vmatpush1.xpose.msra.mxu0 0.0
      %312 = vmatprep.subr.mxu0 0.0
      %313 = vmatpush1.xpose.msra.mxu0 0.0
      %314 = vmatprep.subr.mxu0 0.0
      %315 = vmatpush1.xpose.msra.mxu0 0.0
      %316 = vmatprep.subr.mxu0 0.0
      %317 = vmatpush1.xpose.msra.mxu0 0.0
      %318 = vmatprep.subr.mxu0 0.0
      %319 = vmatpush1.xpose.msra.mxu0 0.0
      %320 = vmatprep.subr.mxu0 0.0
      %321 = vmatpush1.xpose.msra.mxu0 0.0
      %322 = vmatprep.subr.mxu0 0.0
      %323 = vmatpush1.xpose.msra.mxu0 0.0
      %324 = vmatprep.subr.mxu0 0.0
      %325 = vmatpush1.xpose.msra.mxu0 0.0
      %326 = vmatprep.subr.mxu0 0.0
      %327 = vmatpush1.xpose.msra.mxu0 0.0
      %328 = vmatprep.subr.mxu0 0.0
      %329 = vmatpush1.xpose.msra.mxu0 0.0
      %330 = vmatprep.subr.mxu0 0.0
      %331 = vmatpush1.xpose.msra.mxu0 0.0
      %332 = vmatprep.subr.mxu0 0.0
      %333 = vmatpush1.xpose.msra.mxu0 0.0
      %334 = vmatprep.subr.mxu0 0.0
      %335 = vmatpush1.xpose.msra.mxu0 0.0
      %336 = vmatprep.mubr.f32.mxu0 0.0
      %337 = vmatmul.mubr.f32.gmra.mrb[0].mxu0 %v267
      %v338 = vpop.f32.mrb[0].mxu0
      %v339 = vadd.f32 0.0, %v338
      %v340 = vpop.f32.mrb[0].mxu0
      %341 = vdwg.mxu0
      %v343 = vsel %vm265, %v253, 0
      %v346 = vsel %vm265, %v257, 0
      %348 = vmatprep.subr.mxu0 0.0
      %349 = vmatpush1.xpose.msra.mxu0 %v346
      %350 = vmatprep.subr.mxu0 0.0
      %351 = vmatpush1.xpose.msra.mxu0 0.0
      %352 = vmatprep.subr.mxu0 0.0
      %353 = vmatpush1.xpose.msra.mxu0 0.0
      %354 = vmatprep.subr.mxu0 0.0
      %355 = vmatpush1.xpose.msra.mxu0 0.0
      %356 = vmatprep.subr.mxu0 0.0
      %357 = vmatpush1.xpose.msra.mxu0 0.0
      %358 = vmatprep.subr.mxu0 0.0
      %359 = vmatpush1.xpose.msra.mxu0 0.0
      %360 = vmatprep.subr.mxu0 0.0
      %361 = vmatpush1.xpose.msra.mxu0 0.0
      %362 = vmatprep.subr.mxu0 0.0
      %363 = vmatpush1.xpose.msra.mxu0 0.0
      %364 = vmatprep.subr.mxu0 0.0
      %365 = vmatpush1.xpose.msra.mxu0 0.0
      %366 = vmatprep.subr.mxu0 0.0
      %367 = vmatpush1.xpose.msra.mxu0 0.0
      %368 = vmatprep.subr.mxu0 0.0
      %369 = vmatpush1.xpose.msra.mxu0 0.0
      %370 = vmatprep.subr.mxu0 0.0
      %371 = vmatpush1.xpose.msra.mxu0 0.0
      %372 = vmatprep.subr.mxu0 0.0
      %373 = vmatpush1.xpose.msra.mxu0 0.0
      %374 = vmatprep.subr.mxu0 0.0
      %375 = vmatpush1.xpose.msra.mxu0 0.0
      %376 = vmatprep.subr.mxu0 0.0
      %377 = vmatpush1.xpose.msra.mxu0 0.0
      %378 = vmatprep.subr.mxu0 0.0
      %379 = vmatpush1.xpose.msra.mxu0 0.0
      %380 = vmatprep.subr.mxu0 0.0
      %381 = vmatpush1.xpose.msra.mxu0 0.0
      %382 = vmatprep.subr.mxu0 0.0
      %383 = vmatpush1.xpose.msra.mxu0 0.0
      %384 = vmatprep.subr.mxu0 0.0
      %385 = vmatpush1.xpose.msra.mxu0 0.0
      %386 = vmatprep.subr.mxu0 0.0
      %387 = vmatpush1.xpose.msra.mxu0 0.0
      %388 = vmatprep.subr.mxu0 0.0
      %389 = vmatpush1.xpose.msra.mxu0 0.0
      %390 = vmatprep.subr.mxu0 0.0
      %391 = vmatpush1.xpose.msra.mxu0 0.0
      %392 = vmatprep.subr.mxu0 0.0
      %393 = vmatpush1.xpose.msra.mxu0 0.0
      %394 = vmatprep.subr.mxu0 0.0
      %395 = vmatpush1.xpose.msra.mxu0 0.0
      %396 = vmatprep.subr.mxu0 0.0
      %397 = vmatpush1.xpose.msra.mxu0 0.0
      %398 = vmatprep.subr.mxu0 0.0
      %399 = vmatpush1.xpose.msra.mxu0 0.0
      %400 = vmatprep.subr.mxu0 0.0
      %401 = vmatpush1.xpose.msra.mxu0 0.0
      %402 = vmatprep.subr.mxu0 0.0
      %403 = vmatpush1.xpose.msra.mxu0 0.0
      %404 = vmatprep.subr.mxu0 0.0
      %405 = vmatpush1.xpose.msra.mxu0 0.0
      %406 = vmatprep.subr.mxu0 0.0
      %407 = vmatpush1.xpose.msra.mxu0 0.0
      %408 = vmatprep.subr.mxu0 0.0
      %409 = vmatpush1.xpose.msra.mxu0 0.0
      %410 = vmatprep.subr.mxu0 0.0
      %411 = vmatpush1.xpose.msra.mxu0 0.0
      %412 = vmatprep.mubr.f32.mxu0 0.0
      %413 = vmatmul.mubr.f32.gmra.mrb[0].mxu0 %v343
      %v414 = vpop.f32.mrb[0].mxu0
      %v415 = vadd.f32 0.0, %v414
      %v416 = vpop.f32.mrb[0].mxu0
      %417 = vdwg.mxu0
      %v419 = vsel %vm265, %v254, 0
      %v422 = vsel %vm265, %v258, 0
      %424 = vmatprep.subr.mxu0 0.0
      %425 = vmatpush1.xpose.msra.mxu0 %v422
      %426 = vmatprep.subr.mxu0 0.0
      %427 = vmatpush1.xpose.msra.mxu0 0.0
      %428 = vmatprep.subr.mxu0 0.0
      %429 = vmatpush1.xpose.msra.mxu0 0.0
      %430 = vmatprep.subr.mxu0 0.0
      %431 = vmatpush1.xpose.msra.mxu0 0.0
      %432 = vmatprep.subr.mxu0 0.0
      %433 = vmatpush1.xpose.msra.mxu0 0.0
      %434 = vmatprep.subr.mxu0 0.0
      %435 = vmatpush1.xpose.msra.mxu0 0.0
      %436 = vmatprep.subr.mxu0 0.0
      %437 = vmatpush1.xpose.msra.mxu0 0.0
      %438 = vmatprep.subr.mxu0 0.0
      %439 = vmatpush1.xpose.msra.mxu0 0.0
      %440 = vmatprep.subr.mxu0 0.0
      %441 = vmatpush1.xpose.msra.mxu0 0.0
      %442 = vmatprep.subr.mxu0 0.0
      %443 = vmatpush1.xpose.msra.mxu0 0.0
      %444 = vmatprep.subr.mxu0 0.0
      %445 = vmatpush1.xpose.msra.mxu0 0.0
      %446 = vmatprep.subr.mxu0 0.0
      %447 = vmatpush1.xpose.msra.mxu0 0.0
      %448 = vmatprep.subr.mxu0 0.0
      %449 = vmatpush1.xpose.msra.mxu0 0.0
      %450 = vmatprep.subr.mxu0 0.0
      %451 = vmatpush1.xpose.msra.mxu0 0.0
      %452 = vmatprep.subr.mxu0 0.0
      %453 = vmatpush1.xpose.msra.mxu0 0.0
      %454 = vmatprep.subr.mxu0 0.0
      %455 = vmatpush1.xpose.msra.mxu0 0.0
      %456 = vmatprep.subr.mxu0 0.0
      %457 = vmatpush1.xpose.msra.mxu0 0.0
      %458 = vmatprep.subr.mxu0 0.0
      %459 = vmatpush1.xpose.msra.mxu0 0.0
      %460 = vmatprep.subr.mxu0 0.0
      %461 = vmatpush1.xpose.msra.mxu0 0.0
      %462 = vmatprep.subr.mxu0 0.0
      %463 = vmatpush1.xpose.msra.mxu0 0.0
      %464 = vmatprep.subr.mxu0 0.0
      %465 = vmatpush1.xpose.msra.mxu0 0.0
      %466 = vmatprep.subr.mxu0 0.0
      %467 = vmatpush1.xpose.msra.mxu0 0.0
      %468 = vmatprep.subr.mxu0 0.0
      %469 = vmatpush1.xpose.msra.mxu0 0.0
      %470 = vmatprep.subr.mxu0 0.0
      %471 = vmatpush1.xpose.msra.mxu0 0.0
      %472 = vmatprep.subr.mxu0 0.0
      %473 = vmatpush1.xpose.msra.mxu0 0.0
      %474 = vmatprep.subr.mxu0 0.0
      %475 = vmatpush1.xpose.msra.mxu0 0.0
      %476 = vmatprep.subr.mxu0 0.0
      %477 = vmatpush1.xpose.msra.mxu0 0.0
      %478 = vmatprep.subr.mxu0 0.0
      %479 = vmatpush1.xpose.msra.mxu0 0.0
      %480 = vmatprep.subr.mxu0 0.0
      %481 = vmatpush1.xpose.msra.mxu0 0.0
      %482 = vmatprep.subr.mxu0 0.0
      %483 = vmatpush1.xpose.msra.mxu0 0.0
      %484 = vmatprep.subr.mxu0 0.0
      %485 = vmatpush1.xpose.msra.mxu0 0.0
      %486 = vmatprep.subr.mxu0 0.0
      %487 = vmatpush1.xpose.msra.mxu0 0.0
      %488 = vmatprep.mubr.f32.mxu0 0.0
      %489 = vmatmul.mubr.f32.gmra.mrb[0].mxu0 %v419
      %v490 = vpop.f32.mrb[0].mxu0
      %v491 = vadd.f32 0.0, %v490
      %v492 = vpop.f32.mrb[0].mxu0
      %493 = vdwg.mxu0
      %v495 = vsel %vm265, %v255, 0
      %v498 = vsel %vm265, %v259, 0
      %500 = vmatprep.subr.mxu0 0.0
      %501 = vmatpush1.xpose.msra.mxu0 %v498
      %502 = vmatprep.subr.mxu0 0.0
      %503 = vmatpush1.xpose.msra.mxu0 0.0
      %504 = vmatprep.subr.mxu0 0.0
      %505 = vmatpush1.xpose.msra.mxu0 0.0
      %506 = vmatprep.subr.mxu0 0.0
      %507 = vmatpush1.xpose.msra.mxu0 0.0
      %508 = vmatprep.subr.mxu0 0.0
      %509 = vmatpush1.xpose.msra.mxu0 0.0
      %510 = vmatprep.subr.mxu0 0.0
      %511 = vmatpush1.xpose.msra.mxu0 0.0
      %512 = vmatprep.subr.mxu0 0.0
      %513 = vmatpush1.xpose.msra.mxu0 0.0
      %514 = vmatprep.subr.mxu0 0.0
      %515 = vmatpush1.xpose.msra.mxu0 0.0
      %516 = vmatprep.subr.mxu0 0.0
      %517 = vmatpush1.xpose.msra.mxu0 0.0
      %518 = vmatprep.subr.mxu0 0.0
      %519 = vmatpush1.xpose.msra.mxu0 0.0
      %520 = vmatprep.subr.mxu0 0.0
      %521 = vmatpush1.xpose.msra.mxu0 0.0
      %522 = vmatprep.subr.mxu0 0.0
      %523 = vmatpush1.xpose.msra.mxu0 0.0
      %524 = vmatprep.subr.mxu0 0.0
      %525 = vmatpush1.xpose.msra.mxu0 0.0
      %526 = vmatprep.subr.mxu0 0.0
      %527 = vmatpush1.xpose.msra.mxu0 0.0
      %528 = vmatprep.subr.mxu0 0.0
      %529 = vmatpush1.xpose.msra.mxu0 0.0
      %530 = vmatprep.subr.mxu0 0.0
      %531 = vmatpush1.xpose.msra.mxu0 0.0
      %532 = vmatprep.subr.mxu0 0.0
      %533 = vmatpush1.xpose.msra.mxu0 0.0
      %534 = vmatprep.subr.mxu0 0.0
      %535 = vmatpush1.xpose.msra.mxu0 0.0
      %536 = vmatprep.subr.mxu0 0.0
      %537 = vmatpush1.xpose.msra.mxu0 0.0
      %538 = vmatprep.subr.mxu0 0.0
      %539 = vmatpush1.xpose.msra.mxu0 0.0
      %540 = vmatprep.subr.mxu0 0.0
      %541 = vmatpush1.xpose.msra.mxu0 0.0
      %542 = vmatprep.subr.mxu0 0.0
      %543 = vmatpush1.xpose.msra.mxu0 0.0
      %544 = vmatprep.subr.mxu0 0.0
      %545 = vmatpush1.xpose.msra.mxu0 0.0
      %546 = vmatprep.subr.mxu0 0.0
      %547 = vmatpush1.xpose.msra.mxu0 0.0
      %548 = vmatprep.subr.mxu0 0.0
      %549 = vmatpush1.xpose.msra.mxu0 0.0
      %550 = vmatprep.subr.mxu0 0.0
      %551 = vmatpush1.xpose.msra.mxu0 0.0
      %552 = vmatprep.subr.mxu0 0.0
      %553 = vmatpush1.xpose.msra.mxu0 0.0
      %554 = vmatprep.subr.mxu0 0.0
      %555 = vmatpush1.xpose.msra.mxu0 0.0
      %556 = vmatprep.subr.mxu0 0.0
      %557 = vmatpush1.xpose.msra.mxu0 0.0
      %558 = vmatprep.subr.mxu0 0.0
      %559 = vmatpush1.xpose.msra.mxu0 0.0
      %560 = vmatprep.subr.mxu0 0.0
      %561 = vmatpush1.xpose.msra.mxu0 0.0
      %562 = vmatprep.subr.mxu0 0.0
      %563 = vmatpush1.xpose.msra.mxu0 0.0
      %564 = vmatprep.mubr.f32.mxu0 0.0
      %565 = vmatmul.mubr.f32.gmra.mrb[0].mxu0 %v495
      %v566 = vpop.f32.mrb[0].mxu0
      %v567 = vadd.f32 0.0, %v566
      %v568 = vpop.f32.mrb[0].mxu0
      %569 = vdwg.mxu0
      %v570 = vmul.f32 %v339, 0.35355338
      %v571 = vmul.f32 %v415, 0.35355338
      %v572 = vmul.f32 %v491, 0.35355338
      %v573 = vmul.f32 %v567, 0.35355338
      %v575 = vlaneseq
      %v576 = vshrl.u32 %v575, 7
      %v577 = vsub.s32 0, %v576
      %v578 = vrot.slane %v264, %v577
      %v580 = vadd.f32 %v570, %v578
      %v581 = vadd.f32 %v571, %v578
      %v582 = vadd.f32 %v572, %v578
      %v583 = vadd.f32 %v573, %v578
      %vm584 = vcmask 60416
      %v585 = vsel %vm584, %v580, -inf
      %586 = vmax.xlane.f32.xlu0 %v585
      %v587 = vpop.xlane.xlu0 %586
      %v588 = vsel %vm584, %v581, -inf
      %589 = vmax.xlane.f32.xlu0 %v588
      %v590 = vpop.xlane.xlu0 %589
      %v591 = vsel %vm584, %v582, -inf
      %592 = vmax.xlane.f32.xlu0 %v591
      %v593 = vpop.xlane.xlu0 %592
      %v594 = vsel %vm584, %v583, -inf
      %595 = vmax.xlane.f32.xlu0 %v594
      %v596 = vpop.xlane.xlu0 %595
      %v597 = vsub.f32 %v580, %v587
      %v598 = vsub.f32 %v581, %v590
      %v599 = vsub.f32 %v582, %v593
      %v600 = vsub.f32 %v583, %v596
      %v601 = vmul.f32 %v597, 1.442695
      %v602 = vpow.pop %v601
      %v603 = vmul.f32 %v598, 1.442695
      %v604 = vpow.pop %v603
      %v605 = vmul.f32 %v599, 1.442695
      %v606 = vpow.pop %v605
      %v607 = vmul.f32 %v600, 1.442695
      %v608 = vpow.pop %v607
      %v609 = vsel %vm584, %v602, 0.0
      %610 = vadd.xlane.f32.xlu0 %v609
      %v611 = vpop.xlane.xlu0 %610
      %v612 = vsel %vm584, %v604, 0.0
      %613 = vadd.xlane.f32.xlu0 %v612
      %v614 = vpop.xlane.xlu0 %613
      %v615 = vsel %vm584, %v606, 0.0
      %616 = vadd.xlane.f32.xlu0 %v615
      %v617 = vpop.xlane.xlu0 %616
      %v618 = vsel %vm584, %v608, 0.0
      %619 = vadd.xlane.f32.xlu0 %v618
      %v620 = vpop.xlane.xlu0 %619
      %v621 = vrcp.pop %v611
      %v622 = vrcp.pop %v614
      %v623 = vrcp.pop %v617
      %v624 = vrcp.pop %v620
      %v625 = vmul.f32 %v602, %v621
      %v626 = vmul.f32 %v604, %v622
      %v627 = vmul.f32 %v606, %v623
      %v628 = vmul.f32 %v608, %v624
      %v630 = vsel %vm265, %v625, 0
      %632 = vmatprep.subr.mxu0 0.0
      %633 = vmatpush1.msra.mxu0 %v260
      %634 = vmatprep.subr.mxu0 0.0
      %635 = vmatpush1.msra.mxu0 0.0
      %636 = vmatprep.subr.mxu0 0.0
      %637 = vmatpush1.msra.mxu0 0.0
      %638 = vmatprep.subr.mxu0 0.0
      %639 = vmatpush1.msra.mxu0 0.0
      %640 = vmatprep.subr.mxu0 0.0
      %641 = vmatpush1.msra.mxu0 0.0
      %642 = vmatprep.subr.mxu0 0.0
      %643 = vmatpush1.msra.mxu0 0.0
      %644 = vmatprep.subr.mxu0 0.0
      %645 = vmatpush1.msra.mxu0 0.0
      %646 = vmatprep.subr.mxu0 0.0
      %647 = vmatpush1.msra.mxu0 0.0
      %648 = vmatprep.subr.mxu0 0.0
      %649 = vmatpush1.msra.mxu0 0.0
      %650 = vmatprep.subr.mxu0 0.0
      %651 = vmatpush1.msra.mxu0 0.0
      %652 = vmatprep.subr.mxu0 0.0
      %653 = vmatpush1.msra.mxu0 0.0
      %654 = vmatprep.subr.mxu0 0.0
      %655 = vmatpush1.msra.mxu0 0.0
      %656 = vmatprep.subr.mxu0 0.0
      %657 = vmatpush1.msra.mxu0 0.0
      %658 = vmatprep.subr.mxu0 0.0
      %659 = vmatpush1.msra.mxu0 0.0
      %660 = vmatprep.subr.mxu0 0.0
      %661 = vmatpush1.msra.mxu0 0.0
      %662 = vmatprep.subr.mxu0 0.0
      %663 = vmatpush1.msra.mxu0 0.0
      %664 = vmatprep.subr.mxu0 0.0
      %665 = vmatpush1.msra.mxu0 0.0
      %666 = vmatprep.subr.mxu0 0.0
      %667 = vmatpush1.msra.mxu0 0.0
      %668 = vmatprep.subr.mxu0 0.0
      %669 = vmatpush1.msra.mxu0 0.0
      %670 = vmatprep.subr.mxu0 0.0
      %671 = vmatpush1.msra.mxu0 0.0
      %672 = vmatprep.subr.mxu0 0.0
      %673 = vmatpush1.msra.mxu0 0.0
      %674 = vmatprep.subr.mxu0 0.0
      %675 = vmatpush1.msra.mxu0 0.0
      %676 = vmatprep.subr.mxu0 0.0
      %677 = vmatpush1.msra.mxu0 0.0
      %678 = vmatprep.subr.mxu0 0.0
      %679 = vmatpush1.msra.mxu0 0.0
      %680 = vmatprep.subr.mxu0 0.0
      %681 = vmatpush1.msra.mxu0 0.0
      %682 = vmatprep.subr.mxu0 0.0
      %683 = vmatpush1.msra.mxu0 0.0
      %684 = vmatprep.subr.mxu0 0.0
      %685 = vmatpush1.msra.mxu0 0.0
      %686 = vmatprep.subr.mxu0 0.0
      %687 = vmatpush1.msra.mxu0 0.0
      %688 = vmatprep.subr.mxu0 0.0
      %689 = vmatpush1.msra.mxu0 0.0
      %690 = vmatprep.subr.mxu0 0.0
      %691 = vmatpush1.msra.mxu0 0.0
      %692 = vmatprep.subr.mxu0 0.0
      %693 = vmatpush1.msra.mxu0 0.0
      %694 = vmatprep.subr.mxu0 0.0
      %695 = vmatpush1.msra.mxu0 0.0
      %696 = vmatprep.mubr.f32.mxu0 0.0
      %697 = vmatmul.mubr.f32.gmra.mrb[0].mxu0 %v630
      %v698 = vpop.f32.mrb[0].mxu0
      %v699 = vadd.f32 0.0, %v698
      %v700 = vpop.f32.mrb[0].mxu0
      %701 = vdwg.mxu0
      %v703 = vsel %vm265, %v626, 0
      %705 = vmatprep.subr.mxu0 0.0
      %706 = vmatpush1.msra.mxu0 %v261
      %707 = vmatprep.subr.mxu0 0.0
      %708 = vmatpush1.msra.mxu0 0.0
      %709 = vmatprep.subr.mxu0 0.0
      %710 = vmatpush1.msra.mxu0 0.0
      %711 = vmatprep.subr.mxu0 0.0
      %712 = vmatpush1.msra.mxu0 0.0
      %713 = vmatprep.subr.mxu0 0.0
      %714 = vmatpush1.msra.mxu0 0.0
      %715 = vmatprep.subr.mxu0 0.0
      %716 = vmatpush1.msra.mxu0 0.0
      %717 = vmatprep.subr.mxu0 0.0
      %718 = vmatpush1.msra.mxu0 0.0
      %719 = vmatprep.subr.mxu0 0.0
      %720 = vmatpush1.msra.mxu0 0.0
      %721 = vmatprep.subr.mxu0 0.0
      %722 = vmatpush1.msra.mxu0 0.0
      %723 = vmatprep.subr.mxu0 0.0
      %724 = vmatpush1.msra.mxu0 0.0
      %725 = vmatprep.subr.mxu0 0.0
      %726 = vmatpush1.msra.mxu0 0.0
      %727 = vmatprep.subr.mxu0 0.0
      %728 = vmatpush1.msra.mxu0 0.0
      %729 = vmatprep.subr.mxu0 0.0
      %730 = vmatpush1.msra.mxu0 0.0
      %731 = vmatprep.subr.mxu0 0.0
      %732 = vmatpush1.msra.mxu0 0.0
      %733 = vmatprep.subr.mxu0 0.0
      %734 = vmatpush1.msra.mxu0 0.0
      %735 = vmatprep.subr.mxu0 0.0
      %736 = vmatpush1.msra.mxu0 0.0
      %737 = vmatprep.subr.mxu0 0.0
      %738 = vmatpush1.msra.mxu0 0.0
      %739 = vmatprep.subr.mxu0 0.0
      %740 = vmatpush1.msra.mxu0 0.0
      %741 = vmatprep.subr.mxu0 0.0
      %742 = vmatpush1.msra.mxu0 0.0
      %743 = vmatprep.subr.mxu0 0.0
      %744 = vmatpush1.msra.mxu0 0.0
      %745 = vmatprep.subr.mxu0 0.0
      %746 = vmatpush1.msra.mxu0 0.0
      %747 = vmatprep.subr.mxu0 0.0
      %748 = vmatpush1.msra.mxu0 0.0
      %749 = vmatprep.subr.mxu0 0.0
      %750 = vmatpush1.msra.mxu0 0.0
      %751 = vmatprep.subr.mxu0 0.0
      %752 = vmatpush1.msra.mxu0 0.0
      %753 = vmatprep.subr.mxu0 0.0
      %754 = vmatpush1.msra.mxu0 0.0
      %755 = vmatprep.subr.mxu0 0.0
      %756 = vmatpush1.msra.mxu0 0.0
      %757 = vmatprep.subr.mxu0 0.0
      %758 = vmatpush1.msra.mxu0 0.0
      %759 = vmatprep.subr.mxu0 0.0
      %760 = vmatpush1.msra.mxu0 0.0
      %761 = vmatprep.subr.mxu0 0.0
      %762 = vmatpush1.msra.mxu0 0.0
      %763 = vmatprep.subr.mxu0 0.0
      %764 = vmatpush1.msra.mxu0 0.0
      %765 = vmatprep.subr.mxu0 0.0
      %766 = vmatpush1.msra.mxu0 0.0
      %767 = vmatprep.subr.mxu0 0.0
      %768 = vmatpush1.msra.mxu0 0.0
      %769 = vmatprep.mubr.f32.mxu0 0.0
      %770 = vmatmul.mubr.f32.gmra.mrb[0].mxu0 %v703
      %v771 = vpop.f32.mrb[0].mxu0
      %v772 = vadd.f32 0.0, %v771
      %v773 = vpop.f32.mrb[0].mxu0
      %774 = vdwg.mxu0
      %v776 = vsel %vm265, %v627, 0
      %778 = vmatprep.subr.mxu0 0.0
      %779 = vmatpush1.msra.mxu0 %v262
      %780 = vmatprep.subr.mxu0 0.0
      %781 = vmatpush1.msra.mxu0 0.0
      %782 = vmatprep.subr.mxu0 0.0
      %783 = vmatpush1.msra.mxu0 0.0
      %784 = vmatprep.subr.mxu0 0.0
      %785 = vmatpush1.msra.mxu0 0.0
      %786 = vmatprep.subr.mxu0 0.0
      %787 = vmatpush1.msra.mxu0 0.0
      %788 = vmatprep.subr.mxu0 0.0
      %789 = vmatpush1.msra.mxu0 0.0
      %790 = vmatprep.subr.mxu0 0.0
      %791 = vmatpush1.msra.mxu0 0.0
      %792 = vmatprep.subr.mxu0 0.0
      %793 = vmatpush1.msra.mxu0 0.0
      %794 = vmatprep.subr.mxu0 0.0
      %795 = vmatpush1.msra.mxu0 0.0
      %796 = vmatprep.subr.mxu0 0.0
      %797 = vmatpush1.msra.mxu0 0.0
      %798 = vmatprep.subr.mxu0 0.0
      %799 = vmatpush1.msra.mxu0 0.0
      %800 = vmatprep.subr.mxu0 0.0
      %801 = vmatpush1.msra.mxu0 0.0
      %802 = vmatprep.subr.mxu0 0.0
      %803 = vmatpush1.msra.mxu0 0.0
      %804 = vmatprep.subr.mxu0 0.0
      %805 = vmatpush1.msra.mxu0 0.0
      %806 = vmatprep.subr.mxu0 0.0
      %807 = vmatpush1.msra.mxu0 0.0
      %808 = vmatprep.subr.mxu0 0.0
      %809 = vmatpush1.msra.mxu0 0.0
      %810 = vmatprep.subr.mxu0 0.0
      %811 = vmatpush1.msra.mxu0 0.0
      %812 = vmatprep.subr.mxu0 0.0
      %813 = vmatpush1.msra.mxu0 0.0
      %814 = vmatprep.subr.mxu0 0.0
      %815 = vmatpush1.msra.mxu0 0.0
      %816 = vmatprep.subr.mxu0 0.0
      %817 = vmatpush1.msra.mxu0 0.0
      %818 = vmatprep.subr.mxu0 0.0
      %819 = vmatpush1.msra.mxu0 0.0
      %820 = vmatprep.subr.mxu0 0.0
      %821 = vmatpush1.msra.mxu0 0.0
      %822 = vmatprep.subr.mxu0 0.0
      %823 = vmatpush1.msra.mxu0 0.0
      %824 = vmatprep.subr.mxu0 0.0
      %825 = vmatpush1.msra.mxu0 0.0
      %826 = vmatprep.subr.mxu0 0.0
      %827 = vmatpush1.msra.mxu0 0.0
      %828 = vmatprep.subr.mxu0 0.0
      %829 = vmatpush1.msra.mxu0 0.0
      %830 = vmatprep.subr.mxu0 0.0
      %831 = vmatpush1.msra.mxu0 0.0
      %832 = vmatprep.subr.mxu0 0.0
      %833 = vmatpush1.msra.mxu0 0.0
      %834 = vmatprep.subr.mxu0 0.0
      %835 = vmatpush1.msra.mxu0 0.0
      %836 = vmatprep.subr.mxu0 0.0
      %837 = vmatpush1.msra.mxu0 0.0
      %838 = vmatprep.subr.mxu0 0.0
      %839 = vmatpush1.msra.mxu0 0.0
      %840 = vmatprep.subr.mxu0 0.0
      %841 = vmatpush1.msra.mxu0 0.0
      %842 = vmatprep.mubr.f32.mxu0 0.0
      %843 = vmatmul.mubr.f32.gmra.mrb[0].mxu0 %v776
      %v844 = vpop.f32.mrb[0].mxu0
      %v845 = vadd.f32 0.0, %v844
      %v846 = vpop.f32.mrb[0].mxu0
      %847 = vdwg.mxu0
      %v849 = vsel %vm265, %v628, 0
      %851 = vmatprep.subr.mxu0 0.0
      %852 = vmatpush1.msra.mxu0 %v263
      %853 = vmatprep.subr.mxu0 0.0
      %854 = vmatpush1.msra.mxu0 0.0
      %855 = vmatprep.subr.mxu0 0.0
      %856 = vmatpush1.msra.mxu0 0.0
      %857 = vmatprep.subr.mxu0 0.0
      %858 = vmatpush1.msra.mxu0 0.0
      %859 = vmatprep.subr.mxu0 0.0
      %860 = vmatpush1.msra.mxu0 0.0
      %861 = vmatprep.subr.mxu0 0.0
      %862 = vmatpush1.msra.mxu0 0.0
      %863 = vmatprep.subr.mxu0 0.0
      %864 = vmatpush1.msra.mxu0 0.0
      %865 = vmatprep.subr.mxu0 0.0
      %866 = vmatpush1.msra.mxu0 0.0
      %867 = vmatprep.subr.mxu0 0.0
      %868 = vmatpush1.msra.mxu0 0.0
      %869 = vmatprep.subr.mxu0 0.0
      %870 = vmatpush1.msra.mxu0 0.0
      %871 = vmatprep.subr.mxu0 0.0
      %872 = vmatpush1.msra.mxu0 0.0
      %873 = vmatprep.subr.mxu0 0.0
      %874 = vmatpush1.msra.mxu0 0.0
      %875 = vmatprep.subr.mxu0 0.0
      %876 = vmatpush1.msra.mxu0 0.0
      %877 = vmatprep.subr.mxu0 0.0
      %878 = vmatpush1.msra.mxu0 0.0
      %879 = vmatprep.subr.mxu0 0.0
      %880 = vmatpush1.msra.mxu0 0.0
      %881 = vmatprep.subr.mxu0 0.0
      %882 = vmatpush1.msra.mxu0 0.0
      %883 = vmatprep.subr.mxu0 0.0
      %884 = vmatpush1.msra.mxu0 0.0
      %885 = vmatprep.subr.mxu0 0.0
      %886 = vmatpush1.msra.mxu0 0.0
      %887 = vmatprep.subr.mxu0 0.0
      %888 = vmatpush1.msra.mxu0 0.0
      %889 = vmatprep.subr.mxu0 0.0
      %890 = vmatpush1.msra.mxu0 0.0
      %891 = vmatprep.subr.mxu0 0.0
      %892 = vmatpush1.msra.mxu0 0.0
      %893 = vmatprep.subr.mxu0 0.0
      %894 = vmatpush1.msra.mxu0 0.0
      %895 = vmatprep.subr.mxu0 0.0
      %896 = vmatpush1.msra.mxu0 0.0
      %897 = vmatprep.subr.mxu0 0.0
      %898 = vmatpush1.msra.mxu0 0.0
      %899 = vmatprep.subr.mxu0 0.0
      %900 = vmatpush1.msra.mxu0 0.0
      %901 = vmatprep.subr.mxu0 0.0
      %902 = vmatpush1.msra.mxu0 0.0
      %903 = vmatprep.subr.mxu0 0.0
      %904 = vmatpush1.msra.mxu0 0.0
      %905 = vmatprep.subr.mxu0 0.0
      %906 = vmatpush1.msra.mxu0 0.0
      %907 = vmatprep.subr.mxu0 0.0
      %908 = vmatpush1.msra.mxu0 0.0
      %909 = vmatprep.subr.mxu0 0.0
      %910 = vmatpush1.msra.mxu0 0.0
      %911 = vmatprep.subr.mxu0 0.0
      %912 = vmatpush1.msra.mxu0 0.0
      %913 = vmatprep.subr.mxu0 0.0
      %914 = vmatpush1.msra.mxu0 0.0
      %915 = vmatprep.mubr.f32.mxu0 0.0
      %916 = vmatmul.mubr.f32.gmra.mrb[0].mxu0 %v849
      %v917 = vpop.f32.mrb[0].mxu0
      %v918 = vadd.f32 0.0, %v917
      %v919 = vpop.f32.mrb[0].mxu0
      %920 = vdwg.mxu0
      %921 = vst.msk [vmem:[%s251] sm:$0xf] %vm584, %v699
      %922 = vst.msk [vmem:[%s251 + $0x4] sm:$0xf] %vm584, %v772
      %923 = vst.msk [vmem:[%s251 + $0x8] sm:$0xf] %vm584, %v845
      %924 = vst.msk [vmem:[%s251 + $0xc] sm:$0xf] %vm584, %v918
      %p925 = scmp.lt.s32.totalorder %s15, 1
      %s926 = scalar_select %p925, %s15, 1
      %s927 = smul.addr %s926, 4
      %s928 = smul.addr %s927, 4
      %s929 = scalar_lea.vmem %s4, %s928
      // Predicated region
      $region37: #{analogical_networks_forward.56} parent=35 // pred_check
        %p930 = pneg %p137
      $region38: #{analogical_networks_forward.56} parent=35 // pred_check_branch
        %932 = sbr.rel (%p930) target = $region40
      $region39: #{analogical_networks_forward.56} parent=35 // pred_region
        _
      $region40: #{analogical_networks_forward.56} parent=35 // pred_fallthru
        _
    $region36: #{analogical_networks_forward.56} parent=5 // pred_fallthru
      _
    %p933 = scmp.le.s32.totalorder 2, %s10
    // Predicated region
    $region41: #{analogical_networks_forward.56} parent=5 // pred_check
      %p934 = pneg %p933
    $region42: #{analogical_networks_forward.56} parent=5 // pred_check_branch
      %936 = sbr.rel (%p934) target = $region44
    $region43: #{analogical_networks_forward.56} parent=5 // pred_region
      %s937 = ssub.s32 %s10, 2
      // Predicated region
      $region45: #{analogical_networks_forward.56} parent=43 // pred_check
        %p938 = pneg %p143
      $region46: #{analogical_networks_forward.56} parent=43 // pred_check_branch
        %940 = sbr.rel (%p938) target = $region48
      $region47: #{analogical_networks_forward.56} parent=43 // pred_region
        %p941 = scmp.lt.s32.totalorder %s16, 1
        %s942 = scalar_select %p941, %s16, 1
        %s943 = smul.addr %s942, 4
        %s944 = smul.addr %s943, 4
        %s945 = scalar_lea.vmem %s4, %s944
      $region48: #{analogical_networks_forward.56} parent=43 // pred_fallthru
        _
    $region44: #{analogical_networks_forward.56} parent=5 // pred_fallthru
      _
  $region6: #{analogical_networks_forward.56} parent=0 // loop_footer
    %s14 = sadd.s32 1, %s10
  $region7: #{analogical_networks_forward.56} parent=0 // loop_footer_branch
    %9 = sbr.rel target = $region3
  $region8: #{analogical_networks_forward.56} parent=0 // loop_exit
    _

// kernel: analogical_networks_forward.59
$region0: #{analogical_networks_forward.59}
  #allocation0 [shape = 'u32[]', space=smem, size = 0x4, offset = 0x4, fixed_abs, tag = 'smem constant byte address 0x4 - core index']
  #allocation1 [shape = 'u32[144,128]{1,0:T(1,128)}', space=vmem, size = 0x12000, scoped, tag = 'internal scratch']
  %s0 = inlined_call_operand.vmem [shape: f32[8,32], index: 0, kind: input, shape index: {}]
  %s1 = inlined_call_operand.vmem [shape: f32[32,128], index: 1, kind: input, shape index: {}]
  %s2 = inlined_call_operand.vmem [shape: f32[1,128], index: 2, kind: input, shape index: {}]
  %s3 = inlined_call_operand.vmem [shape: f32[128,32], index: 3, kind: input, shape index: {}]
  %s4 = inlined_call_operand.vmem [shape: f32[1,32], index: 4, kind: input, shape index: {}]
  %s5 = inlined_call_operand.vmem [shape: f32[8,32], index: 5, kind: output, shape index: {}]
  %s6 = sld [smem:[#allocation0]]
  $region30: #{analogical_networks_forward.59} parent=0
    _
  %s8 = ssub.s32 1, %s6
  %s9 = scalar_select 0, %s8, %s6
  // Predicated region
  $region2: #{analogical_networks_forward.59} parent=0 // pred_check
    _
  $region3: #{analogical_networks_forward.59} parent=0 // pred_check_branch
    %11 = sbr.rel (0) target = $region5
  $region4: #{analogical_networks_forward.59} parent=0 // pred_region
    _
  $region5: #{analogical_networks_forward.59} parent=0 // pred_fallthru
    _
  // Predicated region
  $region6: #{analogical_networks_forward.59} parent=0 // pred_check
    _
  $region7: #{analogical_networks_forward.59} parent=0 // pred_check_branch
    %13 = sbr.rel (0) target = $region9
  $region8: #{analogical_networks_forward.59} parent=0 // pred_region
    _
  $region9: #{analogical_networks_forward.59} parent=0 // pred_fallthru
    _
  // Predicated region
  $region10: #{analogical_networks_forward.59} parent=0 // pred_check
    _
  $region11: #{analogical_networks_forward.59} parent=0 // pred_check_branch
    %15 = sbr.rel (0) target = $region13
  $region12: #{analogical_networks_forward.59} parent=0 // pred_region
    _
  $region13: #{analogical_networks_forward.59} parent=0 // pred_fallthru
    _
  // Predicated region
  $region14: #{analogical_networks_forward.59} parent=0 // pred_check
    _
  $region15: #{analogical_networks_forward.59} parent=0 // pred_check_branch
    %17 = sbr.rel (0) target = $region17
  $region16: #{analogical_networks_forward.59} parent=0 // pred_region
    _
  $region17: #{analogical_networks_forward.59} parent=0 // pred_fallthru
    _
  // Predicated region
  $region18: #{analogical_networks_forward.59} parent=0 // pred_check
    _
  $region19: #{analogical_networks_forward.59} parent=0 // pred_check_branch
    %19 = sbr.rel (0) target = $region21
  $region20: #{analogical_networks_forward.59} parent=0 // pred_region
    _
  $region21: #{analogical_networks_forward.59} parent=0 // pred_fallthru
    _
  %v20 = vld [vmem:[%s0] sm:$0xff]
  %v21 = vld [vmem:[%s1] sm:$0xff]
  %v22 = vld [vmem:[%s1 + $0x8] sm:$0xff]
  %v23 = vld [vmem:[%s1 + $0x10] sm:$0xff]
  %v24 = vld [vmem:[%s1 + $0x18] sm:$0xff]
  %v25 = vld [vmem:[%s2] sm:$0x1]
  %v27 = vlaneseq
  %v28 = vshrl.u32 %v27, 7
  %v29 = vsub.s32 0, %v28
  %v30 = vrot.slane %v25, %v29
  %vm32 = vcmask 261120
  %v34 = vsel %vm32, %v20, 0
  %36 = vmatprep.subr.mxu0 0.0
  %37 = vmatpush1.msra.mxu0 %v21
  %38 = vmatprep.subr.mxu0 0.0
  %39 = vmatpush1.msra.mxu0 %v22
  %40 = vmatprep.subr.mxu0 0.0
  %41 = vmatpush1.msra.mxu0 %v23
  %42 = vmatprep.subr.mxu0 0.0
  %43 = vmatpush1.msra.mxu0 %v24
  %44 = vmatprep.subr.mxu0 0.0
  %45 = vmatpush1.msra.mxu0 0.0
  %46 = vmatprep.subr.mxu0 0.0
  %47 = vmatpush1.msra.mxu0 0.0
  %48 = vmatprep.subr.mxu0 0.0
  %49 = vmatpush1.msra.mxu0 0.0
  %50 = vmatprep.subr.mxu0 0.0
  %51 = vmatpush1.msra.mxu0 0.0
  %52 = vmatprep.subr.mxu0 0.0
  %53 = vmatpush1.msra.mxu0 0.0
  %54 = vmatprep.subr.mxu0 0.0
  %55 = vmatpush1.msra.mxu0 0.0
  %56 = vmatprep.subr.mxu0 0.0
  %57 = vmatpush1.msra.mxu0 0.0
  %58 = vmatprep.subr.mxu0 0.0
  %59 = vmatpush1.msra.mxu0 0.0
  %60 = vmatprep.subr.mxu0 0.0
  %61 = vmatpush1.msra.mxu0 0.0
  %62 = vmatprep.subr.mxu0 0.0
  %63 = vmatpush1.msra.mxu0 0.0
  %64 = vmatprep.subr.mxu0 0.0
  %65 = vmatpush1.msra.mxu0 0.0
  %66 = vmatprep.subr.mxu0 0.0
  %67 = vmatpush1.msra.mxu0 0.0
  %68 = vmatprep.subr.mxu0 0.0
  %69 = vmatpush1.msra.mxu0 0.0
  %70 = vmatprep.subr.mxu0 0.0
  %71 = vmatpush1.msra.mxu0 0.0
  %72 = vmatprep.subr.mxu0 0.0
  %73 = vmatpush1.msra.mxu0 0.0
  %74 = vmatprep.subr.mxu0 0.0
  %75 = vmatpush1.msra.mxu0 0.0
  %76 = vmatprep.subr.mxu0 0.0
  %77 = vmatpush1.msra.mxu0 0.0
  %78 = vmatprep.subr.mxu0 0.0
  %79 = vmatpush1.msra.mxu0 0.0
  %80 = vmatprep.subr.mxu0 0.0
  %81 = vmatpush1.msra.mxu0 0.0
  %82 = vmatprep.subr.mxu0 0.0
  %83 = vmatpush1.msra.mxu0 0.0
  %84 = vmatprep.subr.mxu0 0.0
  %85 = vmatpush1.msra.mxu0 0.0
  %86 = vmatprep.subr.mxu0 0.0
  %87 = vmatpush1.msra.mxu0 0.0
  %88 = vmatprep.subr.mxu0 0.0
  %89 = vmatpush1.msra.mxu0 0.0
  %90 = vmatprep.subr.mxu0 0.0
  %91 = vmatpush1.msra.mxu0 0.0
  %92 = vmatprep.subr.mxu0 0.0
  %93 = vmatpush1.msra.mxu0 0.0
  %94 = vmatprep.subr.mxu0 0.0
  %95 = vmatpush1.msra.mxu0 0.0
  %96 = vmatprep.subr.mxu0 0.0
  %97 = vmatpush1.msra.mxu0 0.0
  %98 = vmatprep.subr.mxu0 0.0
  %99 = vmatpush1.msra.mxu0 0.0
  %100 = vmatprep.mubr.f32.mxu0 0.0
  %101 = vmatmul.mubr.f32.gmra.mrb[0].mxu0 %v34
  %v102 = vpop.f32.mrb[0].mxu0
  %v103 = vadd.f32 %v30, %v102
  %v104 = vpop.f32.mrb[0].mxu0
  %105 = vdwg.mxu0
  %v106 = vmax.f32 %v103, 0.0
  %v107 = vld [vmem:[%s3] sm:$0xff]
  %v108 = vld [vmem:[%s3 + $0x8] sm:$0xff]
  %v109 = vld [vmem:[%s3 + $0x10] sm:$0xff]
  %v110 = vld [vmem:[%s3 + $0x18] sm:$0xff]
  %v111 = vld [vmem:[%s3 + $0x20] sm:$0xff]
  %v112 = vld [vmem:[%s3 + $0x28] sm:$0xff]
  %v113 = vld [vmem:[%s3 + $0x30] sm:$0xff]
  %v114 = vld [vmem:[%s3 + $0x38] sm:$0xff]
  %v115 = vld [vmem:[%s3 + $0x40] sm:$0xff]
  %v116 = vld [vmem:[%s3 + $0x48] sm:$0xff]
  %v117 = vld [vmem:[%s3 + $0x50] sm:$0xff]
  %v118 = vld [vmem:[%s3 + $0x58] sm:$0xff]
  %v119 = vld [vmem:[%s3 + $0x60] sm:$0xff]
  %v120 = vld [vmem:[%s3 + $0x68] sm:$0xff]
  %v121 = vld [vmem:[%s3 + $0x70] sm:$0xff]
  %v122 = vld [vmem:[%s3 + $0x78] sm:$0xff]
  %v123 = vld [vmem:[%s4] sm:$0x1]
  %v125 = vlaneseq
  %v126 = vshrl.u32 %v125, 7
  %v127 = vsub.s32 0, %v126
  %v128 = vrot.slane %v123, %v127
  %130 = vmatprep.subr.mxu0 0.0
  %131 = vmatpush1.msra.mxu0 %v107
  %132 = vmatprep.subr.mxu0 0.0
  %133 = vmatpush1.msra.mxu0 %v108
  %134 = vmatprep.subr.mxu0 0.0
  %135 = vmatpush1.msra.mxu0 %v109
  %136 = vmatprep.subr.mxu0 0.0
  %137 = vmatpush1.msra.mxu0 %v110
  %138 = vmatprep.subr.mxu0 0.0
  %139 = vmatpush1.msra.mxu0 %v111
  %140 = vmatprep.subr.mxu0 0.0
  %141 = vmatpush1.msra.mxu0 %v112
  %142 = vmatprep.subr.mxu0 0.0
  %143 = vmatpush1.msra.mxu0 %v113
  %144 = vmatprep.subr.mxu0 0.0
  %145 = vmatpush1.msra.mxu0 %v114
  %146 = vmatprep.subr.mxu0 0.0
  %147 = vmatpush1.msra.mxu0 %v115
  %148 = vmatprep.subr.mxu0 0.0
  %149 = vmatpush1.msra.mxu0 %v116
  %150 = vmatprep.subr.mxu0 0.0
  %151 = vmatpush1.msra.mxu0 %v117
  %152 = vmatprep.subr.mxu0 0.0
  %153 = vmatpush1.msra.mxu0 %v118
  %154 = vmatprep.subr.mxu0 0.0
  %155 = vmatpush1.msra.mxu0 %v119
  %156 = vmatprep.subr.mxu0 0.0
  %157 = vmatpush1.msra.mxu0 %v120
  %158 = vmatprep.subr.mxu0 0.0
  %159 = vmatpush1.msra.mxu0 %v121
  %160 = vmatprep.subr.mxu0 0.0
  %161 = vmatpush1.msra.mxu0 %v122
  %162 = vmatprep.subr.mxu0 0.0
  %163 = vmatpush1.msra.mxu0 0.0
  %164 = vmatprep.subr.mxu0 0.0
  %165 = vmatpush1.msra.mxu0 0.0
  %166 = vmatprep.subr.mxu0 0.0
  %167 = vmatpush1.msra.mxu0 0.0
  %168 = vmatprep.subr.mxu0 0.0
  %169 = vmatpush1.msra.mxu0 0.0
  %170 = vmatprep.subr.mxu0 0.0
  %171 = vmatpush1.msra.mxu0 0.0
  %172 = vmatprep.subr.mxu0 0.0
  %173 = vmatpush1.msra.mxu0 0.0
  %174 = vmatprep.subr.mxu0 0.0
  %175 = vmatpush1.msra.mxu0 0.0
  %176 = vmatprep.subr.mxu0 0.0
  %177 = vmatpush1.msra.mxu0 0.0
  %178 = vmatprep.subr.mxu0 0.0
  %179 = vmatpush1.msra.mxu0 0.0
  %180 = vmatprep.subr.mxu0 0.0
  %181 = vmatpush1.msra.mxu0 0.0
  %182 = vmatprep.subr.mxu0 0.0
  %183 = vmatpush1.msra.mxu0 0.0
  %184 = vmatprep.subr.mxu0 0.0
  %185 = vmatpush1.msra.mxu0 0.0
  %186 = vmatprep.subr.mxu0 0.0
  %187 = vmatpush1.msra.mxu0 0.0
  %188 = vmatprep.subr.mxu0 0.0
  %189 = vmatpush1.msra.mxu0 0.0
  %190 = vmatprep.subr.mxu0 0.0
  %191 = vmatpush1.msra.mxu0 0.0
  %192 = vmatprep.subr.mxu0 0.0
  %193 = vmatpush1.msra.mxu0 0.0
  %194 = vmatprep.mubr.f32.mxu0 0.0
  %195 = vmatmul.mubr.f32.gmra.mrb[0].mxu0 %v106
  %v196 = vpop.f32.mrb[0].mxu0
  %v197 = vadd.f32 %v128, %v196
  %v198 = vpop.f32.mrb[0].mxu0
  %199 = vdwg.mxu0
  %200 = vst.msk [vmem:[%s5] sm:$0xff] %vm32, %v197
  // Predicated region
  $region22: #{analogical_networks_forward.59} parent=0 // pred_check
    _
  $region23: #{analogical_networks_forward.59} parent=0 // pred_check_branch
    %202 = sbr.rel (0) target = $region25
  $region24: #{analogical_networks_forward.59} parent=0 // pred_region
    _
  $region25: #{analogical_networks_forward.59} parent=0 // pred_fallthru
    _
  // Predicated region
  $region26: #{analogical_networks_forward.59} parent=0 // pred_check
    _
  $region27: #{analogical_networks_forward.59} parent=0 // pred_check_branch
    %204 = sbr.rel (0) target = $region29
  $region28: #{analogical_networks_forward.59} parent=0 // pred_region
    _
  $region29: #{analogical_networks_forward.59} parent=0 // pred_fallthru
    _

// kernel: analogical_networks_forward.52
$region0: #{analogical_networks_forward.52}
  #allocation0 [shape = 'u32[]', space=smem, size = 0x4, offset = 0x4, fixed_abs, tag = 'smem constant byte address 0x4 - core index']
  #allocation1 [shape = 'u32[144,128]{1,0:T(1,128)}', space=vmem, size = 0x12000, scoped, tag = 'internal scratch']
  %s0 = inlined_call_operand.vmem [shape: f32[16,32], index: 0, kind: input, shape index: {}]
  %s1 = inlined_call_operand.vmem [shape: f32[8,32], index: 1, kind: input, shape index: {}]
  %s2 = inlined_call_operand.vmem [shape: f32[8,32], index: 2, kind: input, shape index: {}]
  %s3 = inlined_call_operand.vmem [shape: f32[32,32], index: 3, kind: input, shape index: {}]
  %s4 = inlined_call_operand.vmem [shape: f32[1,32], index: 4, kind: input, shape index: {}]
  %s5 = inlined_call_operand.vmem [shape: f32[32,32], index: 5, kind: input, shape index: {}]
  %s6 = inlined_call_operand.vmem [shape: f32[1,32], index: 6, kind: input, shape index: {}]
  %s7 = inlined_call_operand.vmem [shape: f32[32,32], index: 7, kind: input, shape index: {}]
  %s8 = inlined_call_operand.vmem [shape: f32[1,32], index: 8, kind: input, shape index: {}]
  %s9 = inlined_call_operand.vmem [shape: f32[16,32], index: 9, kind: output, shape index: {0}]
  %s10 = inlined_call_operand.vmem [shape: f32[8,32], index: 10, kind: output, shape index: {1}]
  %s11 = inlined_call_operand.vmem [shape: f32[8,32], index: 11, kind: output, shape index: {2}]
  %12 = xla_tuple %s9, %s10, %s11
  %s13 = sld [smem:[#allocation0]]
  $region62: #{analogical_networks_forward.52} parent=0
    _
  %s15 = ssub.s32 1, %s13
  %s16 = scalar_select 0, %s15, %s13
  // Predicated region
  $region2: #{analogical_networks_forward.52} parent=0 // pred_check
    _
  $region3: #{analogical_networks_forward.52} parent=0 // pred_check_branch
    %18 = sbr.rel (0) target = $region5
  $region4: #{analogical_networks_forward.52} parent=0 // pred_region
    _
  $region5: #{analogical_networks_forward.52} parent=0 // pred_fallthru
    _
  // Predicated region
  $region6: #{analogical_networks_forward.52} parent=0 // pred_check
    _
  $region7: #{analogical_networks_forward.52} parent=0 // pred_check_branch
    %20 = sbr.rel (0) target = $region9
  $region8: #{analogical_networks_forward.52} parent=0 // pred_region
    _
  $region9: #{analogical_networks_forward.52} parent=0 // pred_fallthru
    _
  // Predicated region
  $region10: #{analogical_networks_forward.52} parent=0 // pred_check
    _
  $region11: #{analogical_networks_forward.52} parent=0 // pred_check_branch
    %22 = sbr.rel (0) target = $region13
  $region12: #{analogical_networks_forward.52} parent=0 // pred_region
    _
  $region13: #{analogical_networks_forward.52} parent=0 // pred_fallthru
    _
  // Predicated region
  $region14: #{analogical_networks_forward.52} parent=0 // pred_check
    _
  $region15: #{analogical_networks_forward.52} parent=0 // pred_check_branch
    %24 = sbr.rel (0) target = $region17
  $region16: #{analogical_networks_forward.52} parent=0 // pred_region
    _
  $region17: #{analogical_networks_forward.52} parent=0 // pred_fallthru
    _
  // Predicated region
  $region18: #{analogical_networks_forward.52} parent=0 // pred_check
    _
  $region19: #{analogical_networks_forward.52} parent=0 // pred_check_branch
    %26 = sbr.rel (0) target = $region21
  $region20: #{analogical_networks_forward.52} parent=0 // pred_region
    _
  $region21: #{analogical_networks_forward.52} parent=0 // pred_fallthru
    _
  // Predicated region
  $region22: #{analogical_networks_forward.52} parent=0 // pred_check
    _
  $region23: #{analogical_networks_forward.52} parent=0 // pred_check_branch
    %28 = sbr.rel (0) target = $region25
  $region24: #{analogical_networks_forward.52} parent=0 // pred_region
    _
  $region25: #{analogical_networks_forward.52} parent=0 // pred_fallthru
    _
  // Predicated region
  $region26: #{analogical_networks_forward.52} parent=0 // pred_check
    _
  $region27: #{analogical_networks_forward.52} parent=0 // pred_check_branch
    %30 = sbr.rel (0) target = $region29
  $region28: #{analogical_networks_forward.52} parent=0 // pred_region
    _
  $region29: #{analogical_networks_forward.52} parent=0 // pred_fallthru
    _
  // Predicated region
  $region30: #{analogical_networks_forward.52} parent=0 // pred_check
    _
  $region31: #{analogical_networks_forward.52} parent=0 // pred_check_branch
    %32 = sbr.rel (0) target = $region33
  $region32: #{analogical_networks_forward.52} parent=0 // pred_region
    _
  $region33: #{analogical_networks_forward.52} parent=0 // pred_fallthru
    _
  // Predicated region
  $region34: #{analogical_networks_forward.52} parent=0 // pred_check
    _
  $region35: #{analogical_networks_forward.52} parent=0 // pred_check_branch
    %34 = sbr.rel (0) target = $region37
  $region36: #{analogical_networks_forward.52} parent=0 // pred_region
    _
  $region37: #{analogical_networks_forward.52} parent=0 // pred_fallthru
    _
  %v35 = vld [vmem:[%s0] sm:$0xff]
  %v36 = vld [vmem:[%s0 + $0x8] sm:$0xff]
  %v37 = vld [vmem:[%s3] sm:$0xff]
  %v38 = vld [vmem:[%s3 + $0x8] sm:$0xff]
  %v39 = vld [vmem:[%s3 + $0x10] sm:$0xff]
  %v40 = vld [vmem:[%s3 + $0x18] sm:$0xff]
  %v41 = vld [vmem:[%s4] sm:$0x1]
  %v43 = vlaneseq
  %v44 = vshrl.u32 %v43, 7
  %v45 = vsub.s32 0, %v44
  %v46 = vrot.slane %v41, %v45
  %vm48 = vcmask 261120
  %v50 = vsel %vm48, %v35, 0
  %v53 = vsel %vm48, %v36, 0
  %55 = vmatprep.subr.mxu0 0.0
  %56 = vmatpush1.msra.mxu0 %v37
  %57 = vmatprep.subr.mxu0 0.0
  %58 = vmatpush1.msra.mxu0 %v38
  %59 = vmatprep.subr.mxu0 0.0
  %60 = vmatpush1.msra.mxu0 %v39
  %61 = vmatprep.subr.mxu0 0.0
  %62 = vmatpush1.msra.mxu0 %v40
  %63 = vmatprep.subr.mxu0 0.0
  %64 = vmatpush1.msra.mxu0 0.0
  %65 = vmatprep.subr.mxu0 0.0
  %66 = vmatpush1.msra.mxu0 0.0
  %67 = vmatprep.subr.mxu0 0.0
  %68 = vmatpush1.msra.mxu0 0.0
  %69 = vmatprep.subr.mxu0 0.0
  %70 = vmatpush1.msra.mxu0 0.0
  %71 = vmatprep.subr.mxu0 0.0
  %72 = vmatpush1.msra.mxu0 0.0
  %73 = vmatprep.subr.mxu0 0.0
  %74 = vmatpush1.msra.mxu0 0.0
  %75 = vmatprep.subr.mxu0 0.0
  %76 = vmatpush1.msra.mxu0 0.0
  %77 = vmatprep.subr.mxu0 0.0
  %78 = vmatpush1.msra.mxu0 0.0
  %79 = vmatprep.subr.mxu0 0.0
  %80 = vmatpush1.msra.mxu0 0.0
  %81 = vmatprep.subr.mxu0 0.0
  %82 = vmatpush1.msra.mxu0 0.0
  %83 = vmatprep.subr.mxu0 0.0
  %84 = vmatpush1.msra.mxu0 0.0
  %85 = vmatprep.subr.mxu0 0.0
  %86 = vmatpush1.msra.mxu0 0.0
  %87 = vmatprep.subr.mxu0 0.0
  %88 = vmatpush1.msra.mxu0 0.0
  %89 = vmatprep.subr.mxu0 0.0
  %90 = vmatpush1.msra.mxu0 0.0
  %91 = vmatprep.subr.mxu0 0.0
  %92 = vmatpush1.msra.mxu0 0.0
  %93 = vmatprep.subr.mxu0 0.0
  %94 = vmatpush1.msra.mxu0 0.0
  %95 = vmatprep.subr.mxu0 0.0
  %96 = vmatpush1.msra.mxu0 0.0
  %97 = vmatprep.subr.mxu0 0.0
  %98 = vmatpush1.msra.mxu0 0.0
  %99 = vmatprep.subr.mxu0 0.0
  %100 = vmatpush1.msra.mxu0 0.0
  %101 = vmatprep.subr.mxu0 0.0
  %102 = vmatpush1.msra.mxu0 0.0
  %103 = vmatprep.subr.mxu0 0.0
  %104 = vmatpush1.msra.mxu0 0.0
  %105 = vmatprep.subr.mxu0 0.0
  %106 = vmatpush1.msra.mxu0 0.0
  %107 = vmatprep.subr.mxu0 0.0
  %108 = vmatpush1.msra.mxu0 0.0
  %109 = vmatprep.subr.mxu0 0.0
  %110 = vmatpush1.msra.mxu0 0.0
  %111 = vmatprep.subr.mxu0 0.0
  %112 = vmatpush1.msra.mxu0 0.0
  %113 = vmatprep.subr.mxu0 0.0
  %114 = vmatpush1.msra.mxu0 0.0
  %115 = vmatprep.subr.mxu0 0.0
  %116 = vmatpush1.msra.mxu0 0.0
  %117 = vmatprep.subr.mxu0 0.0
  %118 = vmatpush1.msra.mxu0 0.0
  %119 = vmatprep.mubr.f32.mxu0 0.0
  %120 = vmatmul.mubr.f32.gmra.mrb[0].mxu0 %v50
  %v121 = vpop.f32.mrb[0].mxu0
  %v122 = vadd.f32 %v46, %v121
  %v123 = vpop.f32.mrb[0].mxu0
  %124 = vmatprep.mubr.f32.mxu0 0.0
  %125 = vmatmul.mubr.f32.gmra.mrb[0].mxu0 %v53
  %v126 = vpop.f32.mrb[0].mxu0
  %v127 = vadd.f32 %v46, %v126
  %v128 = vpop.f32.mrb[0].mxu0
  %129 = vdwg.mxu0
  %130 = vst.msk [vmem:[%s9] sm:$0xff] %vm48, %v122
  %131 = vst.msk [vmem:[%s9 + $0x8] sm:$0xff] %vm48, %v127
  %v132 = vld [vmem:[%s1] sm:$0xff]
  %v133 = vld [vmem:[%s5] sm:$0xff]
  %v134 = vld [vmem:[%s5 + $0x8] sm:$0xff]
  %v135 = vld [vmem:[%s5 + $0x10] sm:$0xff]
  %v136 = vld [vmem:[%s5 + $0x18] sm:$0xff]
  %v137 = vld [vmem:[%s6] sm:$0x1]
  %v139 = vlaneseq
  %v140 = vshrl.u32 %v139, 7
  %v141 = vsub.s32 0, %v140
  %v142 = vrot.slane %v137, %v141
  %v145 = vsel %vm48, %v132, 0
  %147 = vmatprep.subr.mxu0 0.0
  %148 = vmatpush1.msra.mxu0 %v133
  %149 = vmatprep.subr.mxu0 0.0
  %150 = vmatpush1.msra.mxu0 %v134
  %151 = vmatprep.subr.mxu0 0.0
  %152 = vmatpush1.msra.mxu0 %v135
  %153 = vmatprep.subr.mxu0 0.0
  %154 = vmatpush1.msra.mxu0 %v136
  %155 = vmatprep.subr.mxu0 0.0
  %156 = vmatpush1.msra.mxu0 0.0
  %157 = vmatprep.subr.mxu0 0.0
  %158 = vmatpush1.msra.mxu0 0.0
  %159 = vmatprep.subr.mxu0 0.0
  %160 = vmatpush1.msra.mxu0 0.0
  %161 = vmatprep.subr.mxu0 0.0
  %162 = vmatpush1.msra.mxu0 0.0
  %163 = vmatprep.subr.mxu0 0.0
  %164 = vmatpush1.msra.mxu0 0.0
  %165 = vmatprep.subr.mxu0 0.0
  %166 = vmatpush1.msra.mxu0 0.0
  %167 = vmatprep.subr.mxu0 0.0
  %168 = vmatpush1.msra.mxu0 0.0
  %169 = vmatprep.subr.mxu0 0.0
  %170 = vmatpush1.msra.mxu0 0.0
  %171 = vmatprep.subr.mxu0 0.0
  %172 = vmatpush1.msra.mxu0 0.0
  %173 = vmatprep.subr.mxu0 0.0
  %174 = vmatpush1.msra.mxu0 0.0
  %175 = vmatprep.subr.mxu0 0.0
  %176 = vmatpush1.msra.mxu0 0.0
  %177 = vmatprep.subr.mxu0 0.0
  %178 = vmatpush1.msra.mxu0 0.0
  %179 = vmatprep.subr.mxu0 0.0
  %180 = vmatpush1.msra.mxu0 0.0
  %181 = vmatprep.subr.mxu0 0.0
  %182 = vmatpush1.msra.mxu0 0.0
  %183 = vmatprep.subr.mxu0 0.0
  %184 = vmatpush1.msra.mxu0 0.0
  %185 = vmatprep.subr.mxu0 0.0
  %186 = vmatpush1.msra.mxu0 0.0
  %187 = vmatprep.subr.mxu0 0.0
  %188 = vmatpush1.msra.mxu0 0.0
  %189 = vmatprep.subr.mxu0 0.0
  %190 = vmatpush1.msra.mxu0 0.0
  %191 = vmatprep.subr.mxu0 0.0
  %192 = vmatpush1.msra.mxu0 0.0
  %193 = vmatprep.subr.mxu0 0.0
  %194 = vmatpush1.msra.mxu0 0.0
  %195 = vmatprep.subr.mxu0 0.0
  %196 = vmatpush1.msra.mxu0 0.0
  %197 = vmatprep.subr.mxu0 0.0
  %198 = vmatpush1.msra.mxu0 0.0
  %199 = vmatprep.subr.mxu0 0.0
  %200 = vmatpush1.msra.mxu0 0.0
  %201 = vmatprep.subr.mxu0 0.0
  %202 = vmatpush1.msra.mxu0 0.0
  %203 = vmatprep.subr.mxu0 0.0
  %204 = vmatpush1.msra.mxu0 0.0
  %205 = vmatprep.subr.mxu0 0.0
  %206 = vmatpush1.msra.mxu0 0.0
  %207 = vmatprep.subr.mxu0 0.0
  %208 = vmatpush1.msra.mxu0 0.0
  %209 = vmatprep.subr.mxu0 0.0
  %210 = vmatpush1.msra.mxu0 0.0
  %211 = vmatprep.mubr.f32.mxu0 0.0
  %212 = vmatmul.mubr.f32.gmra.mrb[0].mxu0 %v145
  %v213 = vpop.f32.mrb[0].mxu0
  %v214 = vadd.f32 %v142, %v213
  %v215 = vpop.f32.mrb[0].mxu0
  %216 = vdwg.mxu0
  %217 = vst.msk [vmem:[%s10] sm:$0xff] %vm48, %v214
  %v218 = vld [vmem:[%s2] sm:$0xff]
  %v219 = vld [vmem:[%s7] sm:$0xff]
  %v220 = vld [vmem:[%s7 + $0x8] sm:$0xff]
  %v221 = vld [vmem:[%s7 + $0x10] sm:$0xff]
  %v222 = vld [vmem:[%s7 + $0x18] sm:$0xff]
  %v223 = vld [vmem:[%s8] sm:$0x1]
  %v225 = vlaneseq
  %v226 = vshrl.u32 %v225, 7
  %v227 = vsub.s32 0, %v226
  %v228 = vrot.slane %v223, %v227
  %v231 = vsel %vm48, %v218, 0
  %233 = vmatprep.subr.mxu0 0.0
  %234 = vmatpush1.msra.mxu0 %v219
  %235 = vmatprep.subr.mxu0 0.0
  %236 = vmatpush1.msra.mxu0 %v220
  %237 = vmatprep.subr.mxu0 0.0
  %238 = vmatpush1.msra.mxu0 %v221
  %239 = vmatprep.subr.mxu0 0.0
  %240 = vmatpush1.msra.mxu0 %v222
  %241 = vmatprep.subr.mxu0 0.0
  %242 = vmatpush1.msra.mxu0 0.0
  %243 = vmatprep.subr.mxu0 0.0
  %244 = vmatpush1.msra.mxu0 0.0
  %245 = vmatprep.subr.mxu0 0.0
  %246 = vmatpush1.msra.mxu0 0.0
  %247 = vmatprep.subr.mxu0 0.0
  %248 = vmatpush1.msra.mxu0 0.0
  %249 = vmatprep.subr.mxu0 0.0
  %250 = vmatpush1.msra.mxu0 0.0
  %251 = vmatprep.subr.mxu0 0.0
  %252 = vmatpush1.msra.mxu0 0.0
  %253 = vmatprep.subr.mxu0 0.0
  %254 = vmatpush1.msra.mxu0 0.0
  %255 = vmatprep.subr.mxu0 0.0
  %256 = vmatpush1.msra.mxu0 0.0
  %257 = vmatprep.subr.mxu0 0.0
  %258 = vmatpush1.msra.mxu0 0.0
  %259 = vmatprep.subr.mxu0 0.0
  %260 = vmatpush1.msra.mxu0 0.0
  %261 = vmatprep.subr.mxu0 0.0
  %262 = vmatpush1.msra.mxu0 0.0
  %263 = vmatprep.subr.mxu0 0.0
  %264 = vmatpush1.msra.mxu0 0.0
  %265 = vmatprep.subr.mxu0 0.0
  %266 = vmatpush1.msra.mxu0 0.0
  %267 = vmatprep.subr.mxu0 0.0
  %268 = vmatpush1.msra.mxu0 0.0
  %269 = vmatprep.subr.mxu0 0.0
  %270 = vmatpush1.msra.mxu0 0.0
  %271 = vmatprep.subr.mxu0 0.0
  %272 = vmatpush1.msra.mxu0 0.0
  %273 = vmatprep.subr.mxu0 0.0
  %274 = vmatpush1.msra.mxu0 0.0
  %275 = vmatprep.subr.mxu0 0.0
  %276 = vmatpush1.msra.mxu0 0.0
  %277 = vmatprep.subr.mxu0 0.0
  %278 = vmatpush1.msra.mxu0 0.0
  %279 = vmatprep.subr.mxu0 0.0
  %280 = vmatpush1.msra.mxu0 0.0
  %281 = vmatprep.subr.mxu0 0.0
  %282 = vmatpush1.msra.mxu0 0.0
  %283 = vmatprep.subr.mxu0 0.0
  %284 = vmatpush1.msra.mxu0 0.0
  %285 = vmatprep.subr.mxu0 0.0
  %286 = vmatpush1.msra.mxu0 0.0
  %287 = vmatprep.subr.mxu0 0.0
  %288 = vmatpush1.msra.mxu0 0.0
  %289 = vmatprep.subr.mxu0 0.0
  %290 = vmatpush1.msra.mxu0 0.0
  %291 = vmatprep.subr.mxu0 0.0
  %292 = vmatpush1.msra.mxu0 0.0
  %293 = vmatprep.subr.mxu0 0.0
  %294 = vmatpush1.msra.mxu0 0.0
  %295 = vmatprep.subr.mxu0 0.0
  %296 = vmatpush1.msra.mxu0 0.0
  %297 = vmatprep.mubr.f32.mxu0 0.0
  %298 = vmatmul.mubr.f32.gmra.mrb[0].mxu0 %v231
  %v299 = vpop.f32.mrb[0].mxu0
  %v300 = vadd.f32 %v228, %v299
  %v301 = vpop.f32.mrb[0].mxu0
  %302 = vdwg.mxu0
  %303 = vst.msk [vmem:[%s11] sm:$0xff] %vm48, %v300
  // Predicated region
  $region38: #{analogical_networks_forward.52} parent=0 // pred_check
    _
  $region39: #{analogical_networks_forward.52} parent=0 // pred_check_branch
    %305 = sbr.rel (0) target = $region41
  $region40: #{analogical_networks_forward.52} parent=0 // pred_region
    _
  $region41: #{analogical_networks_forward.52} parent=0 // pred_fallthru
    _
  // Predicated region
  $region42: #{analogical_networks_forward.52} parent=0 // pred_check
    _
  $region43: #{analogical_networks_forward.52} parent=0 // pred_check_branch
    %307 = sbr.rel (0) target = $region45
  $region44: #{analogical_networks_forward.52} parent=0 // pred_region
    _
  $region45: #{analogical_networks_forward.52} parent=0 // pred_fallthru
    _
  // Predicated region
  $region46: #{analogical_networks_forward.52} parent=0 // pred_check
    _
  $region47: #{analogical_networks_forward.52} parent=0 // pred_check_branch
    %309 = sbr.rel (0) target = $region49
  $region48: #{analogical_networks_forward.52} parent=0 // pred_region
    _
  $region49: #{analogical_networks_forward.52} parent=0 // pred_fallthru
    _
  // Predicated region
  $region50: #{analogical_networks_forward.52} parent=0 // pred_check
    _
  $region51: #{analogical_networks_forward.52} parent=0 // pred_check_branch
    %311 = sbr.rel (0) target = $region53
  $region52: #{analogical_networks_forward.52} parent=0 // pred_region
    _
  $region53: #{analogical_networks_forward.52} parent=0 // pred_fallthru
    _
  // Predicated region
  $region54: #{analogical_networks_forward.52} parent=0 // pred_check
    _
  $region55: #{analogical_networks_forward.52} parent=0 // pred_check_branch
    %313 = sbr.rel (0) target = $region57
  $region56: #{analogical_networks_forward.52} parent=0 // pred_region
    _
  $region57: #{analogical_networks_forward.52} parent=0 // pred_fallthru
    _
  // Predicated region
  $region58: #{analogical_networks_forward.52} parent=0 // pred_check
    _
  $region59: #{analogical_networks_forward.52} parent=0 // pred_check_branch
    %315 = sbr.rel (0) target = $region61
  $region60: #{analogical_networks_forward.52} parent=0 // pred_region
    _
  $region61: #{analogical_networks_forward.52} parent=0 // pred_fallthru
    _

// kernel: analogical_networks_forward.58
$region0: #{analogical_networks_forward.58}
  #allocation0 [shape = 'u32[]', space=smem, size = 0x4, offset = 0x4, fixed_abs, tag = 'smem constant byte address 0x4 - core index']
  #allocation1 [shape = 'u32[144,128]{1,0:T(1,128)}', space=vmem, size = 0x12000, scoped, tag = 'internal scratch']
  %s0 = inlined_call_operand.vmem [shape: f32[16,32], index: 0, kind: input, shape index: {}]
  %s1 = inlined_call_operand.vmem [shape: f32[32,128], index: 1, kind: input, shape index: {}]
  %s2 = inlined_call_operand.vmem [shape: f32[1,128], index: 2, kind: input, shape index: {}]
  %s3 = inlined_call_operand.vmem [shape: f32[128,32], index: 3, kind: input, shape index: {}]
  %s4 = inlined_call_operand.vmem [shape: f32[1,32], index: 4, kind: input, shape index: {}]
  %s5 = inlined_call_operand.vmem [shape: f32[16,32], index: 5, kind: output, shape index: {}]
  %s6 = sld [smem:[#allocation0]]
  $region30: #{analogical_networks_forward.58} parent=0
    _
  %s8 = ssub.s32 1, %s6
  %s9 = scalar_select 0, %s8, %s6
  // Predicated region
  $region2: #{analogical_networks_forward.58} parent=0 // pred_check
    _
  $region3: #{analogical_networks_forward.58} parent=0 // pred_check_branch
    %11 = sbr.rel (0) target = $region5
  $region4: #{analogical_networks_forward.58} parent=0 // pred_region
    _
  $region5: #{analogical_networks_forward.58} parent=0 // pred_fallthru
    _
  // Predicated region
  $region6: #{analogical_networks_forward.58} parent=0 // pred_check
    _
  $region7: #{analogical_networks_forward.58} parent=0 // pred_check_branch
    %13 = sbr.rel (0) target = $region9
  $region8: #{analogical_networks_forward.58} parent=0 // pred_region
    _
  $region9: #{analogical_networks_forward.58} parent=0 // pred_fallthru
    _
  // Predicated region
  $region10: #{analogical_networks_forward.58} parent=0 // pred_check
    _
  $region11: #{analogical_networks_forward.58} parent=0 // pred_check_branch
    %15 = sbr.rel (0) target = $region13
  $region12: #{analogical_networks_forward.58} parent=0 // pred_region
    _
  $region13: #{analogical_networks_forward.58} parent=0 // pred_fallthru
    _
  // Predicated region
  $region14: #{analogical_networks_forward.58} parent=0 // pred_check
    _
  $region15: #{analogical_networks_forward.58} parent=0 // pred_check_branch
    %17 = sbr.rel (0) target = $region17
  $region16: #{analogical_networks_forward.58} parent=0 // pred_region
    _
  $region17: #{analogical_networks_forward.58} parent=0 // pred_fallthru
    _
  // Predicated region
  $region18: #{analogical_networks_forward.58} parent=0 // pred_check
    _
  $region19: #{analogical_networks_forward.58} parent=0 // pred_check_branch
    %19 = sbr.rel (0) target = $region21
  $region20: #{analogical_networks_forward.58} parent=0 // pred_region
    _
  $region21: #{analogical_networks_forward.58} parent=0 // pred_fallthru
    _
  %v20 = vld [vmem:[%s0] sm:$0xff]
  %v21 = vld [vmem:[%s0 + $0x8] sm:$0xff]
  %v22 = vld [vmem:[%s1] sm:$0xff]
  %v23 = vld [vmem:[%s1 + $0x8] sm:$0xff]
  %v24 = vld [vmem:[%s1 + $0x10] sm:$0xff]
  %v25 = vld [vmem:[%s1 + $0x18] sm:$0xff]
  %v26 = vld [vmem:[%s2] sm:$0x1]
  %v28 = vlaneseq
  %v29 = vshrl.u32 %v28, 7
  %v30 = vsub.s32 0, %v29
  %v31 = vrot.slane %v26, %v30
  %vm33 = vcmask 261120
  %v35 = vsel %vm33, %v20, 0
  %v38 = vsel %vm33, %v21, 0
  %40 = vmatprep.subr.mxu0 0.0
  %41 = vmatpush1.msra.mxu0 %v22
  %42 = vmatprep.subr.mxu0 0.0
  %43 = vmatpush1.msra.mxu0 %v23
  %44 = vmatprep.subr.mxu0 0.0
  %45 = vmatpush1.msra.mxu0 %v24
  %46 = vmatprep.subr.mxu0 0.0
  %47 = vmatpush1.msra.mxu0 %v25
  %48 = vmatprep.subr.mxu0 0.0
  %49 = vmatpush1.msra.mxu0 0.0
  %50 = vmatprep.subr.mxu0 0.0
  %51 = vmatpush1.msra.mxu0 0.0
  %52 = vmatprep.subr.mxu0 0.0
  %53 = vmatpush1.msra.mxu0 0.0
  %54 = vmatprep.subr.mxu0 0.0
  %55 = vmatpush1.msra.mxu0 0.0
  %56 = vmatprep.subr.mxu0 0.0
  %57 = vmatpush1.msra.mxu0 0.0
  %58 = vmatprep.subr.mxu0 0.0
  %59 = vmatpush1.msra.mxu0 0.0
  %60 = vmatprep.subr.mxu0 0.0
  %61 = vmatpush1.msra.mxu0 0.0
  %62 = vmatprep.subr.mxu0 0.0
  %63 = vmatpush1.msra.mxu0 0.0
  %64 = vmatprep.subr.mxu0 0.0
  %65 = vmatpush1.msra.mxu0 0.0
  %66 = vmatprep.subr.mxu0 0.0
  %67 = vmatpush1.msra.mxu0 0.0
  %68 = vmatprep.subr.mxu0 0.0
  %69 = vmatpush1.msra.mxu0 0.0
  %70 = vmatprep.subr.mxu0 0.0
  %71 = vmatpush1.msra.mxu0 0.0
  %72 = vmatprep.subr.mxu0 0.0
  %73 = vmatpush1.msra.mxu0 0.0
  %74 = vmatprep.subr.mxu0 0.0
  %75 = vmatpush1.msra.mxu0 0.0
  %76 = vmatprep.subr.mxu0 0.0
  %77 = vmatpush1.msra.mxu0 0.0
  %78 = vmatprep.subr.mxu0 0.0
  %79 = vmatpush1.msra.mxu0 0.0
  %80 = vmatprep.subr.mxu0 0.0
  %81 = vmatpush1.msra.mxu0 0.0
  %82 = vmatprep.subr.mxu0 0.0
  %83 = vmatpush1.msra.mxu0 0.0
  %84 = vmatprep.subr.mxu0 0.0
  %85 = vmatpush1.msra.mxu0 0.0
  %86 = vmatprep.subr.mxu0 0.0
  %87 = vmatpush1.msra.mxu0 0.0
  %88 = vmatprep.subr.mxu0 0.0
  %89 = vmatpush1.msra.mxu0 0.0
  %90 = vmatprep.subr.mxu0 0.0
  %91 = vmatpush1.msra.mxu0 0.0
  %92 = vmatprep.subr.mxu0 0.0
  %93 = vmatpush1.msra.mxu0 0.0
  %94 = vmatprep.subr.mxu0 0.0
  %95 = vmatpush1.msra.mxu0 0.0
  %96 = vmatprep.subr.mxu0 0.0
  %97 = vmatpush1.msra.mxu0 0.0
  %98 = vmatprep.subr.mxu0 0.0
  %99 = vmatpush1.msra.mxu0 0.0
  %100 = vmatprep.subr.mxu0 0.0
  %101 = vmatpush1.msra.mxu0 0.0
  %102 = vmatprep.subr.mxu0 0.0
  %103 = vmatpush1.msra.mxu0 0.0
  %104 = vmatprep.mubr.f32.mxu0 0.0
  %105 = vmatmul.mubr.f32.gmra.mrb[0].mxu0 %v35
  %v106 = vpop.f32.mrb[0].mxu0
  %v107 = vadd.f32 %v31, %v106
  %v108 = vpop.f32.mrb[0].mxu0
  %109 = vmatprep.mubr.f32.mxu0 0.0
  %110 = vmatmul.mubr.f32.gmra.mrb[0].mxu0 %v38
  %v111 = vpop.f32.mrb[0].mxu0
  %v112 = vadd.f32 %v31, %v111
  %v113 = vpop.f32.mrb[0].mxu0
  %114 = vdwg.mxu0
  %v115 = vmax.f32 %v107, 0.0
  %v116 = vmax.f32 %v112, 0.0
  %v117 = vld [vmem:[%s3] sm:$0xff]
  %v118 = vld [vmem:[%s3 + $0x8] sm:$0xff]
  %v119 = vld [vmem:[%s3 + $0x10] sm:$0xff]
  %v120 = vld [vmem:[%s3 + $0x18] sm:$0xff]
  %v121 = vld [vmem:[%s3 + $0x20] sm:$0xff]
  %v122 = vld [vmem:[%s3 + $0x28] sm:$0xff]
  %v123 = vld [vmem:[%s3 + $0x30] sm:$0xff]
  %v124 = vld [vmem:[%s3 + $0x38] sm:$0xff]
  %v125 = vld [vmem:[%s3 + $0x40] sm:$0xff]
  %v126 = vld [vmem:[%s3 + $0x48] sm:$0xff]
  %v127 = vld [vmem:[%s3 + $0x50] sm:$0xff]
  %v128 = vld [vmem:[%s3 + $0x58] sm:$0xff]
  %v129 = vld [vmem:[%s3 + $0x60] sm:$0xff]
  %v130 = vld [vmem:[%s3 + $0x68] sm:$0xff]
  %v131 = vld [vmem:[%s3 + $0x70] sm:$0xff]
  %v132 = vld [vmem:[%s3 + $0x78] sm:$0xff]
  %v133 = vld [vmem:[%s4] sm:$0x1]
  %v135 = vlaneseq
  %v136 = vshrl.u32 %v135, 7
  %v137 = vsub.s32 0, %v136
  %v138 = vrot.slane %v133, %v137
  %140 = vmatprep.subr.mxu0 0.0
  %141 = vmatpush1.msra.mxu0 %v117
  %142 = vmatprep.subr.mxu0 0.0
  %143 = vmatpush1.msra.mxu0 %v118
  %144 = vmatprep.subr.mxu0 0.0
  %145 = vmatpush1.msra.mxu0 %v119
  %146 = vmatprep.subr.mxu0 0.0
  %147 = vmatpush1.msra.mxu0 %v120
  %148 = vmatprep.subr.mxu0 0.0
  %149 = vmatpush1.msra.mxu0 %v121
  %150 = vmatprep.subr.mxu0 0.0
  %151 = vmatpush1.msra.mxu0 %v122
  %152 = vmatprep.subr.mxu0 0.0
  %153 = vmatpush1.msra.mxu0 %v123
  %154 = vmatprep.subr.mxu0 0.0
  %155 = vmatpush1.msra.mxu0 %v124
  %156 = vmatprep.subr.mxu0 0.0
  %157 = vmatpush1.msra.mxu0 %v125
  %158 = vmatprep.subr.mxu0 0.0
  %159 = vmatpush1.msra.mxu0 %v126
  %160 = vmatprep.subr.mxu0 0.0
  %161 = vmatpush1.msra.mxu0 %v127
  %162 = vmatprep.subr.mxu0 0.0
  %163 = vmatpush1.msra.mxu0 %v128
  %164 = vmatprep.subr.mxu0 0.0
  %165 = vmatpush1.msra.mxu0 %v129
  %166 = vmatprep.subr.mxu0 0.0
  %167 = vmatpush1.msra.mxu0 %v130
  %168 = vmatprep.subr.mxu0 0.0
  %169 = vmatpush1.msra.mxu0 %v131
  %170 = vmatprep.subr.mxu0 0.0
  %171 = vmatpush1.msra.mxu0 %v132
  %172 = vmatprep.subr.mxu0 0.0
  %173 = vmatpush1.msra.mxu0 0.0
  %174 = vmatprep.subr.mxu0 0.0
  %175 = vmatpush1.msra.mxu0 0.0
  %176 = vmatprep.subr.mxu0 0.0
  %177 = vmatpush1.msra.mxu0 0.0
  %178 = vmatprep.subr.mxu0 0.0
  %179 = vmatpush1.msra.mxu0 0.0
  %180 = vmatprep.subr.mxu0 0.0
  %181 = vmatpush1.msra.mxu0 0.0
  %182 = vmatprep.subr.mxu0 0.0
  %183 = vmatpush1.msra.mxu0 0.0
  %184 = vmatprep.subr.mxu0 0.0
  %185 = vmatpush1.msra.mxu0 0.0
  %186 = vmatprep.subr.mxu0 0.0
  %187 = vmatpush1.msra.mxu0 0.0
  %188 = vmatprep.subr.mxu0 0.0
  %189 = vmatpush1.msra.mxu0 0.0
  %190 = vmatprep.subr.mxu0 0.0
  %191 = vmatpush1.msra.mxu0 0.0
  %192 = vmatprep.subr.mxu0 0.0
  %193 = vmatpush1.msra.mxu0 0.0
  %194 = vmatprep.subr.mxu0 0.0
  %195 = vmatpush1.msra.mxu0 0.0
  %196 = vmatprep.subr.mxu0 0.0
  %197 = vmatpush1.msra.mxu0 0.0
  %198 = vmatprep.subr.mxu0 0.0
  %199 = vmatpush1.msra.mxu0 0.0
  %200 = vmatprep.subr.mxu0 0.0
  %201 = vmatpush1.msra.mxu0 0.0
  %202 = vmatprep.subr.mxu0 0.0
  %203 = vmatpush1.msra.mxu0 0.0
  %204 = vmatprep.mubr.f32.mxu0 0.0
  %205 = vmatmul.mubr.f32.gmra.mrb[0].mxu0 %v115
  %v206 = vpop.f32.mrb[0].mxu0
  %v207 = vadd.f32 %v138, %v206
  %v208 = vpop.f32.mrb[0].mxu0
  %209 = vmatprep.mubr.f32.mxu0 0.0
  %210 = vmatmul.mubr.f32.gmra.mrb[0].mxu0 %v116
  %v211 = vpop.f32.mrb[0].mxu0
  %v212 = vadd.f32 %v138, %v211
  %v213 = vpop.f32.mrb[0].mxu0
  %214 = vdwg.mxu0
  %215 = vst.msk [vmem:[%s5] sm:$0xff] %vm33, %v207
  %216 = vst.msk [vmem:[%s5 + $0x8] sm:$0xff] %vm33, %v212
  // Predicated region
  $region22: #{analogical_networks_forward.58} parent=0 // pred_check
    _
  $region23: #{analogical_networks_forward.58} parent=0 // pred_check_branch
    %218 = sbr.rel (0) target = $region25
  $region24: #{analogical_networks_forward.58} parent=0 // pred_region
    _
  $region25: #{analogical_networks_forward.58} parent=0 // pred_fallthru
    _
  // Predicated region
  $region26: #{analogical_networks_forward.58} parent=0 // pred_check
    _
  $region27: #{analogical_networks_forward.58} parent=0 // pred_check_branch
    %220 = sbr.rel (0) target = $region29
  $region28: #{analogical_networks_forward.58} parent=0 // pred_region
    _
  $region29: #{analogical_networks_forward.58} parent=0 // pred_fallthru
    _

// kernel: analogical_networks_forward.53
$region0: #{analogical_networks_forward.53}
  #allocation0 [shape = 'u32[]', space=smem, size = 0x4, offset = 0x4, fixed_abs, tag = 'smem constant byte address 0x4 - core index']
  #allocation1 [shape = 'u32[144,128]{1,0:T(1,128)}', space=vmem, size = 0x12000, scoped, tag = 'internal scratch']
  %s0 = inlined_call_operand.vmem [shape: f32[2,4,8,8], index: 0, kind: input, shape index: {}]
  %s1 = inlined_call_operand.vmem [shape: f32[2,4,4,8], index: 1, kind: input, shape index: {}]
  %s2 = inlined_call_operand.vmem [shape: f32[2,4,4,8], index: 2, kind: input, shape index: {}]
  %s3 = inlined_call_operand.vmem [shape: f32[2,1,4], index: 3, kind: input, shape index: {}]
  %s4 = inlined_call_operand.vmem [shape: f32[2,4,8,8], index: 4, kind: output, shape index: {}]
  %s5 = sld [smem:[#allocation0]]
  $region49: #{analogical_networks_forward.53} parent=0
    _
  %s7 = ssub.s32 1, %s5
  %s8 = scalar_select 0, %s7, %s5
  loop: start=0, step=1, limit=4
  $region2: #{analogical_networks_forward.53} parent=0 // loop_pre_header
    _
  $region3: #{analogical_networks_forward.53} parent=0 // loop_header
    %s10 = sphi 0, %s14
    %p11 = scmp.ge.s32.totalorder %s10, 4
    %s20 = sphi 0, %s22
    %s23 = sphi 0, %s20
    %s24 = sphi 0, %s23
    %s40 = sphi 0, %s24
    %s46 = sphi 0, %s48
    %s49 = sphi 0, %s46
    %s50 = sphi 0, %s49
    %s66 = sphi 0, %s50
    %s72 = sphi 0, %s74
    %s75 = sphi 0, %s72
    %s76 = sphi 0, %s75
    %s92 = sphi 0, %s76
    %s98 = sphi 0, %s100
    %s101 = sphi 0, %s98
    %s102 = sphi 0, %s101
    %s118 = sphi 0, %s102
    %s124 = sphi 0, %s126
    %s127 = sphi 0, %s124
    %s128 = sphi 0, %s127
    %s144 = sphi 0, %s128
  $region4: #{analogical_networks_forward.53} parent=0 // loop_header_branch
    %13 = sbr.rel (%p11) target = $region8
  $region5: #{analogical_networks_forward.53} parent=0 // loop_body
    %s15 = ssub.s32 %s10, 1
    %s16 = ssub.s32 %s10, 2
    %s17 = sadd.s32 %s10, 1
    %s18 = ssub.s32 %s10, %s17
    %p19 = scmp.eq.s32.totalorder %s18, 0
    %s21 = sadd.s32 %s20, 1
    %s22 = scalar_select %p19, %s20, %s21
    %p25 = pneg %p19
    %p26 = scmp.eq.s32.totalorder %s10, 1
    %p27 = por %p25, %p26
    %p28 = scmp.ne.s32.totalorder %s20, %s23
    %p29 = scmp.eq.s32.totalorder %s10, 0
    %p30 = por %p28, %p29
    %p31 = scmp.ne.s32.totalorder %s20, %s23
    %p32 = scmp.eq.s32.totalorder %s15, 1
    %p33 = por %p31, %p32
    %p34 = scmp.ne.s32.totalorder %s23, %s24
    %p35 = scmp.eq.s32.totalorder %s15, 0
    %p36 = por %p34, %p35
    %p37 = scmp.ne.s32.totalorder %s23, %s24
    %p38 = scmp.eq.s32.totalorder %s16, 1
    %p39 = por %p37, %p38
    %p41 = scmp.ne.s32.totalorder %s24, %s40
    %p42 = scmp.eq.s32.totalorder %s16, 0
    %p43 = por %p41, %p42
    %s44 = ssub.s32 %s10, %s17
    %p45 = scmp.eq.s32.totalorder %s44, 0
    %s47 = sadd.s32 %s46, 1
    %s48 = scalar_select %p45, %s46, %s47
    %p51 = pneg %p45
    %p52 = scmp.eq.s32.totalorder %s10, 1
    %p53 = por %p51, %p52
    %p54 = scmp.ne.s32.totalorder %s46, %s49
    %p55 = scmp.eq.s32.totalorder %s10, 0
    %p56 = por %p54, %p55
    %p57 = scmp.ne.s32.totalorder %s46, %s49
    %p58 = scmp.eq.s32.totalorder %s15, 1
    %p59 = por %p57, %p58
    %p60 = scmp.ne.s32.totalorder %s49, %s50
    %p61 = scmp.eq.s32.totalorder %s15, 0
    %p62 = por %p60, %p61
    %p63 = scmp.ne.s32.totalorder %s49, %s50
    %p64 = scmp.eq.s32.totalorder %s16, 1
    %p65 = por %p63, %p64
    %p67 = scmp.ne.s32.totalorder %s50, %s66
    %p68 = scmp.eq.s32.totalorder %s16, 0
    %p69 = por %p67, %p68
    %s70 = ssub.s32 %s10, %s17
    %p71 = scmp.eq.s32.totalorder %s70, 0
    %s73 = sadd.s32 %s72, 1
    %s74 = scalar_select %p71, %s72, %s73
    %p77 = pneg %p71
    %p78 = scmp.eq.s32.totalorder %s10, 1
    %p79 = por %p77, %p78
    %p80 = scmp.ne.s32.totalorder %s72, %s75
    %p81 = scmp.eq.s32.totalorder %s10, 0
    %p82 = por %p80, %p81
    %p83 = scmp.ne.s32.totalorder %s72, %s75
    %p84 = scmp.eq.s32.totalorder %s15, 1
    %p85 = por %p83, %p84
    %p86 = scmp.ne.s32.totalorder %s75, %s76
    %p87 = scmp.eq.s32.totalorder %s15, 0
    %p88 = por %p86, %p87
    %p89 = scmp.ne.s32.totalorder %s75, %s76
    %p90 = scmp.eq.s32.totalorder %s16, 1
    %p91 = por %p89, %p90
    %p93 = scmp.ne.s32.totalorder %s76, %s92
    %p94 = scmp.eq.s32.totalorder %s16, 0
    %p95 = por %p93, %p94
    %s96 = ssub.s32 %s10, %s17
    %p97 = scmp.eq.s32.totalorder %s96, 0
    %s99 = sadd.s32 %s98, 1
    %s100 = scalar_select %p97, %s98, %s99
    %p103 = pneg %p97
    %p104 = scmp.eq.s32.totalorder %s10, 1
    %p105 = por %p103, %p104
    %p106 = scmp.ne.s32.totalorder %s98, %s101
    %p107 = scmp.eq.s32.totalorder %s10, 0
    %p108 = por %p106, %p107
    %p109 = scmp.ne.s32.totalorder %s98, %s101
    %p110 = scmp.eq.s32.totalorder %s15, 1
    %p111 = por %p109, %p110
    %p112 = scmp.ne.s32.totalorder %s101, %s102
    %p113 = scmp.eq.s32.totalorder %s15, 0
    %p114 = por %p112, %p113
    %p115 = scmp.ne.s32.totalorder %s101, %s102
    %p116 = scmp.eq.s32.totalorder %s16, 1
    %p117 = por %p115, %p116
    %p119 = scmp.ne.s32.totalorder %s102, %s118
    %p120 = scmp.eq.s32.totalorder %s16, 0
    %p121 = por %p119, %p120
    %s122 = ssub.s32 %s10, %s17
    %p123 = scmp.eq.s32.totalorder %s122, 0
    %s125 = sadd.s32 %s124, 1
    %s126 = scalar_select %p123, %s124, %s125
    %p129 = pneg %p123
    %p130 = scmp.eq.s32.totalorder %s10, 1
    %p131 = por %p129, %p130
    %p132 = scmp.ne.s32.totalorder %s124, %s127
    %p133 = scmp.eq.s32.totalorder %s10, 0
    %p134 = por %p132, %p133
    %p135 = scmp.ne.s32.totalorder %s124, %s127
    %p136 = scmp.eq.s32.totalorder %s15, 1
    %p137 = por %p135, %p136
    %p138 = scmp.ne.s32.totalorder %s127, %s128
    %p139 = scmp.eq.s32.totalorder %s15, 0
    %p140 = por %p138, %p139
    %p141 = scmp.ne.s32.totalorder %s127, %s128
    %p142 = scmp.eq.s32.totalorder %s16, 1
    %p143 = por %p141, %p142
    %p145 = scmp.ne.s32.totalorder %s128, %s144
    %p146 = scmp.eq.s32.totalorder %s16, 0
    %p147 = por %p145, %p146
    %p148 = scmp.le.s32.totalorder 1, %s10
    %p149 = scmp.lt.s32.totalorder %s10, 3
    %p150 = pnand %p148, %p149
    %p151 = pneg %p150
    // Predicated region
    $region9: #{analogical_networks_forward.53} parent=5 // pred_check
      _
    $region10: #{analogical_networks_forward.53} parent=5 // pred_check_branch
      %153 = sbr.rel (%p150) target = $region12
    $region11: #{analogical_networks_forward.53} parent=5 // pred_region
      %s154 = ssub.s32 %s10, 1
    $region12: #{analogical_networks_forward.53} parent=5 // pred_fallthru
      _
    %p155 = scmp.lt.s32.totalorder %s10, 2
    // Predicated region
    $region13: #{analogical_networks_forward.53} parent=5 // pred_check
      %p156 = pneg %p155
    $region14: #{analogical_networks_forward.53} parent=5 // pred_check_branch
      %158 = sbr.rel (%p156) target = $region16
    $region15: #{analogical_networks_forward.53} parent=5 // pred_region
      // Predicated region
      $region17: #{analogical_networks_forward.53} parent=15 // pred_check
        %p159 = pneg %p30
      $region18: #{analogical_networks_forward.53} parent=15 // pred_check_branch
        %161 = sbr.rel (%p159) target = $region20
      $region19: #{analogical_networks_forward.53} parent=15 // pred_region
        %p162 = scmp.lt.s32.totalorder %s10, 1
        %s163 = scalar_select %p162, %s10, 1
        %s164 = smul.addr %s163, 4
        %s165 = smul.addr %s164, 8
        %s166 = scalar_lea.vmem %s0, %s165
      $region20: #{analogical_networks_forward.53} parent=15 // pred_fallthru
        _
      // Predicated region
      $region21: #{analogical_networks_forward.53} parent=15 // pred_check
        %p167 = pneg %p56
      $region22: #{analogical_networks_forward.53} parent=15 // pred_check_branch
        %169 = sbr.rel (%p167) target = $region24
      $region23: #{analogical_networks_forward.53} parent=15 // pred_region
        %p170 = scmp.lt.s32.totalorder %s10, 1
        %s171 = scalar_select %p170, %s10, 1
        %s172 = smul.addr %s171, 4
        %s173 = smul.addr %s172, 4
        %s174 = scalar_lea.vmem %s1, %s173
      $region24: #{analogical_networks_forward.53} parent=15 // pred_fallthru
        _
      // Predicated region
      $region25: #{analogical_networks_forward.53} parent=15 // pred_check
        %p175 = pneg %p82
      $region26: #{analogical_networks_forward.53} parent=15 // pred_check_branch
        %177 = sbr.rel (%p175) target = $region28
      $region27: #{analogical_networks_forward.53} parent=15 // pred_region
        %p178 = scmp.lt.s32.totalorder %s10, 1
        %s179 = scalar_select %p178, %s10, 1
        %s180 = smul.addr %s179, 4
        %s181 = smul.addr %s180, 4
        %s182 = scalar_lea.vmem %s2, %s181
      $region28: #{analogical_networks_forward.53} parent=15 // pred_fallthru
        _
      // Predicated region
      $region29: #{analogical_networks_forward.53} parent=15 // pred_check
        %p183 = pneg %p108
      $region30: #{analogical_networks_forward.53} parent=15 // pred_check_branch
        %185 = sbr.rel (%p183) target = $region32
      $region31: #{analogical_networks_forward.53} parent=15 // pred_region
        %p186 = scmp.lt.s32.totalorder %s10, 1
        %s187 = scalar_select %p186, %s10, 1
        %s188 = scalar_lea.vmem %s3, %s187
      $region32: #{analogical_networks_forward.53} parent=15 // pred_fallthru
        _
    $region16: #{analogical_networks_forward.53} parent=5 // pred_fallthru
      _
    %p189 = scmp.le.s32.totalorder 1, %s10
    %p190 = scmp.lt.s32.totalorder %s10, 3
    %p191 = pnand %p189, %p190
    %p192 = pneg %p191
    // Predicated region
    $region33: #{analogical_networks_forward.53} parent=5 // pred_check
      _
    $region34: #{analogical_networks_forward.53} parent=5 // pred_check_branch
      %194 = sbr.rel (%p191) target = $region36
    $region35: #{analogical_networks_forward.53} parent=5 // pred_region
      %s195 = ssub.s32 %s10, 1
      %p196 = scmp.lt.s32.totalorder %s15, 1
      %s197 = scalar_select %p196, %s15, 1
      %s198 = smul.addr %s197, 4
      %s199 = smul.addr %s198, 8
      %s200 = scalar_lea.vmem %s0, %s199
      %p201 = pneg %p36
      %p202 = pneg %p33
      %p203 = scmp.lt.s32.totalorder %s15, 1
      %s204 = scalar_select %p203, %s15, 1
      %s205 = smul.addr %s204, 4
      %s206 = smul.addr %s205, 4
      %s207 = scalar_lea.vmem %s1, %s206
      %p208 = pneg %p62
      %p209 = pneg %p59
      %p210 = scmp.lt.s32.totalorder %s15, 1
      %s211 = scalar_select %p210, %s15, 1
      %s212 = smul.addr %s211, 4
      %s213 = smul.addr %s212, 4
      %s214 = scalar_lea.vmem %s2, %s213
      %p215 = pneg %p88
      %p216 = pneg %p85
      %p217 = scmp.lt.s32.totalorder %s15, 1
      %s218 = scalar_select %p217, %s15, 1
      %s219 = scalar_lea.vmem %s3, %s218
      %p220 = pneg %p114
      %p221 = pneg %p111
      %p222 = pneg %p140
      %p223 = pneg %p137
      %p224 = scmp.lt.s32.totalorder %s15, 1
      %s225 = scalar_select %p224, %s15, 1
      %s226 = smul.addr %s225, 4
      %s227 = smul.addr %s226, 8
      %s228 = scalar_lea.vmem %s4, %s227
      %p229 = scmp.lt.s32.totalorder %s15, 1
      %s230 = scalar_select %p229, %s15, 1
      %s231 = smul.addr %s230, 4
      %s232 = smul.addr %s231, 8
      %s233 = scalar_lea.vmem %s0, %s232
      %p234 = scmp.lt.s32.totalorder %s15, 1
      %s235 = scalar_select %p234, %s15, 1
      %s236 = smul.addr %s235, 4
      %s237 = smul.addr %s236, 4
      %s238 = scalar_lea.vmem %s1, %s237
      %p239 = scmp.lt.s32.totalorder %s15, 1
      %s240 = scalar_select %p239, %s15, 1
      %s241 = smul.addr %s240, 4
      %s242 = smul.addr %s241, 4
      %s243 = scalar_lea.vmem %s2, %s242
      %p244 = scmp.lt.s32.totalorder %s15, 1
      %s245 = scalar_select %p244, %s15, 1
      %s246 = scalar_lea.vmem %s3, %s245
      %p247 = scmp.lt.s32.totalorder %s15, 1
      %s248 = scalar_select %p247, %s15, 1
      %s249 = smul.addr %s248, 4
      %s250 = smul.addr %s249, 8
      %s251 = scalar_lea.vmem %s4, %s250
      %v252 = vld [vmem:[%s233] sm:$0xff]
      %v253 = vld [vmem:[%s233 + $0x8] sm:$0xff]
      %v254 = vld [vmem:[%s233 + $0x10] sm:$0xff]
      %v255 = vld [vmem:[%s233 + $0x18] sm:$0xff]
      %v256 = vld [vmem:[%s238] sm:$0xf]
      %v257 = vld [vmem:[%s238 + $0x4] sm:$0xf]
      %v258 = vld [vmem:[%s238 + $0x8] sm:$0xf]
      %v259 = vld [vmem:[%s238 + $0xc] sm:$0xf]
      %v260 = vld [vmem:[%s243] sm:$0xf]
      %v261 = vld [vmem:[%s243 + $0x4] sm:$0xf]
      %v262 = vld [vmem:[%s243 + $0x8] sm:$0xf]
      %v263 = vld [vmem:[%s243 + $0xc] sm:$0xf]
      %v264 = vld [vmem:[%s246] sm:$0x1]
      %vm265 = vcmask 64512
      %v267 = vsel %vm265, %v252, 0
      %v270 = vsel %vm265, %v256, 0
      %272 = vmatprep.subr.mxu0 0.0
      %273 = vmatpush1.xpose.msra.mxu0 %v270
      %274 = vmatprep.subr.mxu0 0.0
      %275 = vmatpush1.xpose.msra.mxu0 0.0
      %276 = vmatprep.subr.mxu0 0.0
      %277 = vmatpush1.xpose.msra.mxu0 0.0
      %278 = vmatprep.subr.mxu0 0.0
      %279 = vmatpush1.xpose.msra.mxu0 0.0
      %280 = vmatprep.subr.mxu0 0.0
      %281 = vmatpush1.xpose.msra.mxu0 0.0
      %282 = vmatprep.subr.mxu0 0.0
      %283 = vmatpush1.xpose.msra.mxu0 0.0
      %284 = vmatprep.subr.mxu0 0.0
      %285 = vmatpush1.xpose.msra.mxu0 0.0
      %286 = vmatprep.subr.mxu0 0.0
      %287 = vmatpush1.xpose.msra.mxu0 0.0
      %288 = vmatprep.subr.mxu0 0.0
      %289 = vmatpush1.xpose.msra.mxu0 0.0
      %290 = vmatprep.subr.mxu0 0.0
      %291 = vmatpush1.xpose.msra.mxu0 0.0
      %292 = vmatprep.subr.mxu0 0.0
      %293 = vmatpush1.xpose.msra.mxu0 0.0
      %294 = vmatprep.subr.mxu0 0.0
      %295 = vmatpush1.xpose.msra.mxu0 0.0
      %296 = vmatprep.subr.mxu0 0.0
      %297 = vmatpush1.xpose.msra.mxu0 0.0
      %298 = vmatprep.subr.mxu0 0.0
      %299 = vmatpush1.xpose.msra.mxu0 0.0
      %300 = vmatprep.subr.mxu0 0.0
      %301 = vmatpush1.xpose.msra.mxu0 0.0
      %302 = vmatprep.subr.mxu0 0.0
      %303 = vmatpush1.xpose.msra.mxu0 0.0
      %304 = vmatprep.subr.mxu0 0.0
      %305 = vmatpush1.xpose.msra.mxu0 0.0
      %306 = vmatprep.subr.mxu0 0.0
      %307 = vmatpush1.xpose.msra.mxu0 0.0
      %308 = vmatprep.subr.mxu0 0.0
      %309 = vmatpush1.xpose.msra.mxu0 0.0
      %310 = vmatprep.subr.mxu0 0.0
      %311 = vmatpush1.xpose.msra.mxu0 0.0
      %312 = vmatprep.subr.mxu0 0.0
      %313 = vmatpush1.xpose.msra.mxu0 0.0
      %314 = vmatprep.subr.mxu0 0.0
      %315 = vmatpush1.xpose.msra.mxu0 0.0
      %316 = vmatprep.subr.mxu0 0.0
      %317 = vmatpush1.xpose.msra.mxu0 0.0
      %318 = vmatprep.subr.mxu0 0.0
      %319 = vmatpush1.xpose.msra.mxu0 0.0
      %320 = vmatprep.subr.mxu0 0.0
      %321 = vmatpush1.xpose.msra.mxu0 0.0
      %322 = vmatprep.subr.mxu0 0.0
      %323 = vmatpush1.xpose.msra.mxu0 0.0
      %324 = vmatprep.subr.mxu0 0.0
      %325 = vmatpush1.xpose.msra.mxu0 0.0
      %326 = vmatprep.subr.mxu0 0.0
      %327 = vmatpush1.xpose.msra.mxu0 0.0
      %328 = vmatprep.subr.mxu0 0.0
      %329 = vmatpush1.xpose.msra.mxu0 0.0
      %330 = vmatprep.subr.mxu0 0.0
      %331 = vmatpush1.xpose.msra.mxu0 0.0
      %332 = vmatprep.subr.mxu0 0.0
      %333 = vmatpush1.xpose.msra.mxu0 0.0
      %334 = vmatprep.subr.mxu0 0.0
      %335 = vmatpush1.xpose.msra.mxu0 0.0
      %336 = vmatprep.mubr.f32.mxu0 0.0
      %337 = vmatmul.mubr.f32.gmra.mrb[0].mxu0 %v267
      %v338 = vpop.f32.mrb[0].mxu0
      %v339 = vadd.f32 0.0, %v338
      %v340 = vpop.f32.mrb[0].mxu0
      %341 = vdwg.mxu0
      %v343 = vsel %vm265, %v253, 0
      %v346 = vsel %vm265, %v257, 0
      %348 = vmatprep.subr.mxu0 0.0
      %349 = vmatpush1.xpose.msra.mxu0 %v346
      %350 = vmatprep.subr.mxu0 0.0
      %351 = vmatpush1.xpose.msra.mxu0 0.0
      %352 = vmatprep.subr.mxu0 0.0
      %353 = vmatpush1.xpose.msra.mxu0 0.0
      %354 = vmatprep.subr.mxu0 0.0
      %355 = vmatpush1.xpose.msra.mxu0 0.0
      %356 = vmatprep.subr.mxu0 0.0
      %357 = vmatpush1.xpose.msra.mxu0 0.0
      %358 = vmatprep.subr.mxu0 0.0
      %359 = vmatpush1.xpose.msra.mxu0 0.0
      %360 = vmatprep.subr.mxu0 0.0
      %361 = vmatpush1.xpose.msra.mxu0 0.0
      %362 = vmatprep.subr.mxu0 0.0
      %363 = vmatpush1.xpose.msra.mxu0 0.0
      %364 = vmatprep.subr.mxu0 0.0
      %365 = vmatpush1.xpose.msra.mxu0 0.0
      %366 = vmatprep.subr.mxu0 0.0
      %367 = vmatpush1.xpose.msra.mxu0 0.0
      %368 = vmatprep.subr.mxu0 0.0
      %369 = vmatpush1.xpose.msra.mxu0 0.0
      %370 = vmatprep.subr.mxu0 0.0
      %371 = vmatpush1.xpose.msra.mxu0 0.0
      %372 = vmatprep.subr.mxu0 0.0
      %373 = vmatpush1.xpose.msra.mxu0 0.0
      %374 = vmatprep.subr.mxu0 0.0
      %375 = vmatpush1.xpose.msra.mxu0 0.0
      %376 = vmatprep.subr.mxu0 0.0
      %377 = vmatpush1.xpose.msra.mxu0 0.0
      %378 = vmatprep.subr.mxu0 0.0
      %379 = vmatpush1.xpose.msra.mxu0 0.0
      %380 = vmatprep.subr.mxu0 0.0
      %381 = vmatpush1.xpose.msra.mxu0 0.0
      %382 = vmatprep.subr.mxu0 0.0
      %383 = vmatpush1.xpose.msra.mxu0 0.0
      %384 = vmatprep.subr.mxu0 0.0
      %385 = vmatpush1.xpose.msra.mxu0 0.0
      %386 = vmatprep.subr.mxu0 0.0
      %387 = vmatpush1.xpose.msra.mxu0 0.0
      %388 = vmatprep.subr.mxu0 0.0
      %389 = vmatpush1.xpose.msra.mxu0 0.0
      %390 = vmatprep.subr.mxu0 0.0
      %391 = vmatpush1.xpose.msra.mxu0 0.0
      %392 = vmatprep.subr.mxu0 0.0
      %393 = vmatpush1.xpose.msra.mxu0 0.0
      %394 = vmatprep.subr.mxu0 0.0
      %395 = vmatpush1.xpose.msra.mxu0 0.0
      %396 = vmatprep.subr.mxu0 0.0
      %397 = vmatpush1.xpose.msra.mxu0 0.0
      %398 = vmatprep.subr.mxu0 0.0
      %399 = vmatpush1.xpose.msra.mxu0 0.0
      %400 = vmatprep.subr.mxu0 0.0
      %401 = vmatpush1.xpose.msra.mxu0 0.0
      %402 = vmatprep.subr.mxu0 0.0
      %403 = vmatpush1.xpose.msra.mxu0 0.0
      %404 = vmatprep.subr.mxu0 0.0
      %405 = vmatpush1.xpose.msra.mxu0 0.0
      %406 = vmatprep.subr.mxu0 0.0
      %407 = vmatpush1.xpose.msra.mxu0 0.0
      %408 = vmatprep.subr.mxu0 0.0
      %409 = vmatpush1.xpose.msra.mxu0 0.0
      %410 = vmatprep.subr.mxu0 0.0
      %411 = vmatpush1.xpose.msra.mxu0 0.0
      %412 = vmatprep.mubr.f32.mxu0 0.0
      %413 = vmatmul.mubr.f32.gmra.mrb[0].mxu0 %v343
      %v414 = vpop.f32.mrb[0].mxu0
      %v415 = vadd.f32 0.0, %v414
      %v416 = vpop.f32.mrb[0].mxu0
      %417 = vdwg.mxu0
      %v419 = vsel %vm265, %v254, 0
      %v422 = vsel %vm265, %v258, 0
      %424 = vmatprep.subr.mxu0 0.0
      %425 = vmatpush1.xpose.msra.mxu0 %v422
      %426 = vmatprep.subr.mxu0 0.0
      %427 = vmatpush1.xpose.msra.mxu0 0.0
      %428 = vmatprep.subr.mxu0 0.0
      %429 = vmatpush1.xpose.msra.mxu0 0.0
      %430 = vmatprep.subr.mxu0 0.0
      %431 = vmatpush1.xpose.msra.mxu0 0.0
      %432 = vmatprep.subr.mxu0 0.0
      %433 = vmatpush1.xpose.msra.mxu0 0.0
      %434 = vmatprep.subr.mxu0 0.0
      %435 = vmatpush1.xpose.msra.mxu0 0.0
      %436 = vmatprep.subr.mxu0 0.0
      %437 = vmatpush1.xpose.msra.mxu0 0.0
      %438 = vmatprep.subr.mxu0 0.0
      %439 = vmatpush1.xpose.msra.mxu0 0.0
      %440 = vmatprep.subr.mxu0 0.0
      %441 = vmatpush1.xpose.msra.mxu0 0.0
      %442 = vmatprep.subr.mxu0 0.0
      %443 = vmatpush1.xpose.msra.mxu0 0.0
      %444 = vmatprep.subr.mxu0 0.0
      %445 = vmatpush1.xpose.msra.mxu0 0.0
      %446 = vmatprep.subr.mxu0 0.0
      %447 = vmatpush1.xpose.msra.mxu0 0.0
      %448 = vmatprep.subr.mxu0 0.0
      %449 = vmatpush1.xpose.msra.mxu0 0.0
      %450 = vmatprep.subr.mxu0 0.0
      %451 = vmatpush1.xpose.msra.mxu0 0.0
      %452 = vmatprep.subr.mxu0 0.0
      %453 = vmatpush1.xpose.msra.mxu0 0.0
      %454 = vmatprep.subr.mxu0 0.0
      %455 = vmatpush1.xpose.msra.mxu0 0.0
      %456 = vmatprep.subr.mxu0 0.0
      %457 = vmatpush1.xpose.msra.mxu0 0.0
      %458 = vmatprep.subr.mxu0 0.0
      %459 = vmatpush1.xpose.msra.mxu0 0.0
      %460 = vmatprep.subr.mxu0 0.0
      %461 = vmatpush1.xpose.msra.mxu0 0.0
      %462 = vmatprep.subr.mxu0 0.0
      %463 = vmatpush1.xpose.msra.mxu0 0.0
      %464 = vmatprep.subr.mxu0 0.0
      %465 = vmatpush1.xpose.msra.mxu0 0.0
      %466 = vmatprep.subr.mxu0 0.0
      %467 = vmatpush1.xpose.msra.mxu0 0.0
      %468 = vmatprep.subr.mxu0 0.0
      %469 = vmatpush1.xpose.msra.mxu0 0.0
      %470 = vmatprep.subr.mxu0 0.0
      %471 = vmatpush1.xpose.msra.mxu0 0.0
      %472 = vmatprep.subr.mxu0 0.0
      %473 = vmatpush1.xpose.msra.mxu0 0.0
      %474 = vmatprep.subr.mxu0 0.0
      %475 = vmatpush1.xpose.msra.mxu0 0.0
      %476 = vmatprep.subr.mxu0 0.0
      %477 = vmatpush1.xpose.msra.mxu0 0.0
      %478 = vmatprep.subr.mxu0 0.0
      %479 = vmatpush1.xpose.msra.mxu0 0.0
      %480 = vmatprep.subr.mxu0 0.0
      %481 = vmatpush1.xpose.msra.mxu0 0.0
      %482 = vmatprep.subr.mxu0 0.0
      %483 = vmatpush1.xpose.msra.mxu0 0.0
      %484 = vmatprep.subr.mxu0 0.0
      %485 = vmatpush1.xpose.msra.mxu0 0.0
      %486 = vmatprep.subr.mxu0 0.0
      %487 = vmatpush1.xpose.msra.mxu0 0.0
      %488 = vmatprep.mubr.f32.mxu0 0.0
      %489 = vmatmul.mubr.f32.gmra.mrb[0].mxu0 %v419
      %v490 = vpop.f32.mrb[0].mxu0
      %v491 = vadd.f32 0.0, %v490
      %v492 = vpop.f32.mrb[0].mxu0
      %493 = vdwg.mxu0
      %v495 = vsel %vm265, %v255, 0
      %v498 = vsel %vm265, %v259, 0
      %500 = vmatprep.subr.mxu0 0.0
      %501 = vmatpush1.xpose.msra.mxu0 %v498
      %502 = vmatprep.subr.mxu0 0.0
      %503 = vmatpush1.xpose.msra.mxu0 0.0
      %504 = vmatprep.subr.mxu0 0.0
      %505 = vmatpush1.xpose.msra.mxu0 0.0
      %506 = vmatprep.subr.mxu0 0.0
      %507 = vmatpush1.xpose.msra.mxu0 0.0
      %508 = vmatprep.subr.mxu0 0.0
      %509 = vmatpush1.xpose.msra.mxu0 0.0
      %510 = vmatprep.subr.mxu0 0.0
      %511 = vmatpush1.xpose.msra.mxu0 0.0
      %512 = vmatprep.subr.mxu0 0.0
      %513 = vmatpush1.xpose.msra.mxu0 0.0
      %514 = vmatprep.subr.mxu0 0.0
      %515 = vmatpush1.xpose.msra.mxu0 0.0
      %516 = vmatprep.subr.mxu0 0.0
      %517 = vmatpush1.xpose.msra.mxu0 0.0
      %518 = vmatprep.subr.mxu0 0.0
      %519 = vmatpush1.xpose.msra.mxu0 0.0
      %520 = vmatprep.subr.mxu0 0.0
      %521 = vmatpush1.xpose.msra.mxu0 0.0
      %522 = vmatprep.subr.mxu0 0.0
      %523 = vmatpush1.xpose.msra.mxu0 0.0
      %524 = vmatprep.subr.mxu0 0.0
      %525 = vmatpush1.xpose.msra.mxu0 0.0
      %526 = vmatprep.subr.mxu0 0.0
      %527 = vmatpush1.xpose.msra.mxu0 0.0
      %528 = vmatprep.subr.mxu0 0.0
      %529 = vmatpush1.xpose.msra.mxu0 0.0
      %530 = vmatprep.subr.mxu0 0.0
      %531 = vmatpush1.xpose.msra.mxu0 0.0
      %532 = vmatprep.subr.mxu0 0.0
      %533 = vmatpush1.xpose.msra.mxu0 0.0
      %534 = vmatprep.subr.mxu0 0.0
      %535 = vmatpush1.xpose.msra.mxu0 0.0
      %536 = vmatprep.subr.mxu0 0.0
      %537 = vmatpush1.xpose.msra.mxu0 0.0
      %538 = vmatprep.subr.mxu0 0.0
      %539 = vmatpush1.xpose.msra.mxu0 0.0
      %540 = vmatprep.subr.mxu0 0.0
      %541 = vmatpush1.xpose.msra.mxu0 0.0
      %542 = vmatprep.subr.mxu0 0.0
      %543 = vmatpush1.xpose.msra.mxu0 0.0
      %544 = vmatprep.subr.mxu0 0.0
      %545 = vmatpush1.xpose.msra.mxu0 0.0
      %546 = vmatprep.subr.mxu0 0.0
      %547 = vmatpush1.xpose.msra.mxu0 0.0
      %548 = vmatprep.subr.mxu0 0.0
      %549 = vmatpush1.xpose.msra.mxu0 0.0
      %550 = vmatprep.subr.mxu0 0.0
      %551 = vmatpush1.xpose.msra.mxu0 0.0
      %552 = vmatprep.subr.mxu0 0.0
      %553 = vmatpush1.xpose.msra.mxu0 0.0
      %554 = vmatprep.subr.mxu0 0.0
      %555 = vmatpush1.xpose.msra.mxu0 0.0
      %556 = vmatprep.subr.mxu0 0.0
      %557 = vmatpush1.xpose.msra.mxu0 0.0
      %558 = vmatprep.subr.mxu0 0.0
      %559 = vmatpush1.xpose.msra.mxu0 0.0
      %560 = vmatprep.subr.mxu0 0.0
      %561 = vmatpush1.xpose.msra.mxu0 0.0
      %562 = vmatprep.subr.mxu0 0.0
      %563 = vmatpush1.xpose.msra.mxu0 0.0
      %564 = vmatprep.mubr.f32.mxu0 0.0
      %565 = vmatmul.mubr.f32.gmra.mrb[0].mxu0 %v495
      %v566 = vpop.f32.mrb[0].mxu0
      %v567 = vadd.f32 0.0, %v566
      %v568 = vpop.f32.mrb[0].mxu0
      %569 = vdwg.mxu0
      %v570 = vmul.f32 %v339, 0.35355338
      %v571 = vmul.f32 %v415, 0.35355338
      %v572 = vmul.f32 %v491, 0.35355338
      %v573 = vmul.f32 %v567, 0.35355338
      %v575 = vlaneseq
      %v576 = vshrl.u32 %v575, 7
      %v577 = vsub.s32 0, %v576
      %v578 = vrot.slane %v264, %v577
      %v580 = vadd.f32 %v570, %v578
      %v581 = vadd.f32 %v571, %v578
      %v582 = vadd.f32 %v572, %v578
      %v583 = vadd.f32 %v573, %v578
      %vm584 = vcmask 31744
      %v585 = vsel %vm584, %v580, -inf
      %586 = vmax.xlane.f32.xlu0 %v585
      %v587 = vpop.xlane.xlu0 %586
      %v588 = vsel %vm584, %v581, -inf
      %589 = vmax.xlane.f32.xlu0 %v588
      %v590 = vpop.xlane.xlu0 %589
      %v591 = vsel %vm584, %v582, -inf
      %592 = vmax.xlane.f32.xlu0 %v591
      %v593 = vpop.xlane.xlu0 %592
      %v594 = vsel %vm584, %v583, -inf
      %595 = vmax.xlane.f32.xlu0 %v594
      %v596 = vpop.xlane.xlu0 %595
      %v597 = vsub.f32 %v580, %v587
      %v598 = vsub.f32 %v581, %v590
      %v599 = vsub.f32 %v582, %v593
      %v600 = vsub.f32 %v583, %v596
      %v601 = vmul.f32 %v597, 1.442695
      %v602 = vpow.pop %v601
      %v603 = vmul.f32 %v598, 1.442695
      %v604 = vpow.pop %v603
      %v605 = vmul.f32 %v599, 1.442695
      %v606 = vpow.pop %v605
      %v607 = vmul.f32 %v600, 1.442695
      %v608 = vpow.pop %v607
      %v609 = vsel %vm584, %v602, 0.0
      %610 = vadd.xlane.f32.xlu0 %v609
      %v611 = vpop.xlane.xlu0 %610
      %v612 = vsel %vm584, %v604, 0.0
      %613 = vadd.xlane.f32.xlu0 %v612
      %v614 = vpop.xlane.xlu0 %613
      %v615 = vsel %vm584, %v606, 0.0
      %616 = vadd.xlane.f32.xlu0 %v615
      %v617 = vpop.xlane.xlu0 %616
      %v618 = vsel %vm584, %v608, 0.0
      %619 = vadd.xlane.f32.xlu0 %v618
      %v620 = vpop.xlane.xlu0 %619
      %v621 = vrcp.pop %v611
      %v622 = vrcp.pop %v614
      %v623 = vrcp.pop %v617
      %v624 = vrcp.pop %v620
      %v625 = vmul.f32 %v602, %v621
      %v626 = vmul.f32 %v604, %v622
      %v627 = vmul.f32 %v606, %v623
      %v628 = vmul.f32 %v608, %v624
      %v630 = vsel %vm584, %v625, 0
      %vm632 = vcmask 1043456
      %v634 = vsel %vm632, %v260, 0
      %636 = vmatprep.subr.mxu0 0.0
      %637 = vmatpush1.msra.mxu0 %v634
      %638 = vmatprep.subr.mxu0 0.0
      %639 = vmatpush1.msra.mxu0 0.0
      %640 = vmatprep.subr.mxu0 0.0
      %641 = vmatpush1.msra.mxu0 0.0
      %642 = vmatprep.subr.mxu0 0.0
      %643 = vmatpush1.msra.mxu0 0.0
      %644 = vmatprep.subr.mxu0 0.0
      %645 = vmatpush1.msra.mxu0 0.0
      %646 = vmatprep.subr.mxu0 0.0
      %647 = vmatpush1.msra.mxu0 0.0
      %648 = vmatprep.subr.mxu0 0.0
      %649 = vmatpush1.msra.mxu0 0.0
      %650 = vmatprep.subr.mxu0 0.0
      %651 = vmatpush1.msra.mxu0 0.0
      %652 = vmatprep.subr.mxu0 0.0
      %653 = vmatpush1.msra.mxu0 0.0
      %654 = vmatprep.subr.mxu0 0.0
      %655 = vmatpush1.msra.mxu0 0.0
      %656 = vmatprep.subr.mxu0 0.0
      %657 = vmatpush1.msra.mxu0 0.0
      %658 = vmatprep.subr.mxu0 0.0
      %659 = vmatpush1.msra.mxu0 0.0
      %660 = vmatprep.subr.mxu0 0.0
      %661 = vmatpush1.msra.mxu0 0.0
      %662 = vmatprep.subr.mxu0 0.0
      %663 = vmatpush1.msra.mxu0 0.0
      %664 = vmatprep.subr.mxu0 0.0
      %665 = vmatpush1.msra.mxu0 0.0
      %666 = vmatprep.subr.mxu0 0.0
      %667 = vmatpush1.msra.mxu0 0.0
      %668 = vmatprep.subr.mxu0 0.0
      %669 = vmatpush1.msra.mxu0 0.0
      %670 = vmatprep.subr.mxu0 0.0
      %671 = vmatpush1.msra.mxu0 0.0
      %672 = vmatprep.subr.mxu0 0.0
      %673 = vmatpush1.msra.mxu0 0.0
      %674 = vmatprep.subr.mxu0 0.0
      %675 = vmatpush1.msra.mxu0 0.0
      %676 = vmatprep.subr.mxu0 0.0
      %677 = vmatpush1.msra.mxu0 0.0
      %678 = vmatprep.subr.mxu0 0.0
      %679 = vmatpush1.msra.mxu0 0.0
      %680 = vmatprep.subr.mxu0 0.0
      %681 = vmatpush1.msra.mxu0 0.0
      %682 = vmatprep.subr.mxu0 0.0
      %683 = vmatpush1.msra.mxu0 0.0
      %684 = vmatprep.subr.mxu0 0.0
      %685 = vmatpush1.msra.mxu0 0.0
      %686 = vmatprep.subr.mxu0 0.0
      %687 = vmatpush1.msra.mxu0 0.0
      %688 = vmatprep.subr.mxu0 0.0
      %689 = vmatpush1.msra.mxu0 0.0
      %690 = vmatprep.subr.mxu0 0.0
      %691 = vmatpush1.msra.mxu0 0.0
      %692 = vmatprep.subr.mxu0 0.0
      %693 = vmatpush1.msra.mxu0 0.0
      %694 = vmatprep.subr.mxu0 0.0
      %695 = vmatpush1.msra.mxu0 0.0
      %696 = vmatprep.subr.mxu0 0.0
      %697 = vmatpush1.msra.mxu0 0.0
      %698 = vmatprep.subr.mxu0 0.0
      %699 = vmatpush1.msra.mxu0 0.0
      %700 = vmatprep.mubr.f32.mxu0 0.0
      %701 = vmatmul.mubr.f32.gmra.mrb[0].mxu0 %v630
      %v702 = vpop.f32.mrb[0].mxu0
      %v703 = vadd.f32 0.0, %v702
      %v704 = vpop.f32.mrb[0].mxu0
      %705 = vdwg.mxu0
      %v707 = vsel %vm584, %v626, 0
      %v710 = vsel %vm632, %v261, 0
      %712 = vmatprep.subr.mxu0 0.0
      %713 = vmatpush1.msra.mxu0 %v710
      %714 = vmatprep.subr.mxu0 0.0
      %715 = vmatpush1.msra.mxu0 0.0
      %716 = vmatprep.subr.mxu0 0.0
      %717 = vmatpush1.msra.mxu0 0.0
      %718 = vmatprep.subr.mxu0 0.0
      %719 = vmatpush1.msra.mxu0 0.0
      %720 = vmatprep.subr.mxu0 0.0
      %721 = vmatpush1.msra.mxu0 0.0
      %722 = vmatprep.subr.mxu0 0.0
      %723 = vmatpush1.msra.mxu0 0.0
      %724 = vmatprep.subr.mxu0 0.0
      %725 = vmatpush1.msra.mxu0 0.0
      %726 = vmatprep.subr.mxu0 0.0
      %727 = vmatpush1.msra.mxu0 0.0
      %728 = vmatprep.subr.mxu0 0.0
      %729 = vmatpush1.msra.mxu0 0.0
      %730 = vmatprep.subr.mxu0 0.0
      %731 = vmatpush1.msra.mxu0 0.0
      %732 = vmatprep.subr.mxu0 0.0
      %733 = vmatpush1.msra.mxu0 0.0
      %734 = vmatprep.subr.mxu0 0.0
      %735 = vmatpush1.msra.mxu0 0.0
      %736 = vmatprep.subr.mxu0 0.0
      %737 = vmatpush1.msra.mxu0 0.0
      %738 = vmatprep.subr.mxu0 0.0
      %739 = vmatpush1.msra.mxu0 0.0
      %740 = vmatprep.subr.mxu0 0.0
      %741 = vmatpush1.msra.mxu0 0.0
      %742 = vmatprep.subr.mxu0 0.0
      %743 = vmatpush1.msra.mxu0 0.0
      %744 = vmatprep.subr.mxu0 0.0
      %745 = vmatpush1.msra.mxu0 0.0
      %746 = vmatprep.subr.mxu0 0.0
      %747 = vmatpush1.msra.mxu0 0.0
      %748 = vmatprep.subr.mxu0 0.0
      %749 = vmatpush1.msra.mxu0 0.0
      %750 = vmatprep.subr.mxu0 0.0
      %751 = vmatpush1.msra.mxu0 0.0
      %752 = vmatprep.subr.mxu0 0.0
      %753 = vmatpush1.msra.mxu0 0.0
      %754 = vmatprep.subr.mxu0 0.0
      %755 = vmatpush1.msra.mxu0 0.0
      %756 = vmatprep.subr.mxu0 0.0
      %757 = vmatpush1.msra.mxu0 0.0
      %758 = vmatprep.subr.mxu0 0.0
      %759 = vmatpush1.msra.mxu0 0.0
      %760 = vmatprep.subr.mxu0 0.0
      %761 = vmatpush1.msra.mxu0 0.0
      %762 = vmatprep.subr.mxu0 0.0
      %763 = vmatpush1.msra.mxu0 0.0
      %764 = vmatprep.subr.mxu0 0.0
      %765 = vmatpush1.msra.mxu0 0.0
      %766 = vmatprep.subr.mxu0 0.0
      %767 = vmatpush1.msra.mxu0 0.0
      %768 = vmatprep.subr.mxu0 0.0
      %769 = vmatpush1.msra.mxu0 0.0
      %770 = vmatprep.subr.mxu0 0.0
      %771 = vmatpush1.msra.mxu0 0.0
      %772 = vmatprep.subr.mxu0 0.0
      %773 = vmatpush1.msra.mxu0 0.0
      %774 = vmatprep.subr.mxu0 0.0
      %775 = vmatpush1.msra.mxu0 0.0
      %776 = vmatprep.mubr.f32.mxu0 0.0
      %777 = vmatmul.mubr.f32.gmra.mrb[0].mxu0 %v707
      %v778 = vpop.f32.mrb[0].mxu0
      %v779 = vadd.f32 0.0, %v778
      %v780 = vpop.f32.mrb[0].mxu0
      %781 = vdwg.mxu0
      %v783 = vsel %vm584, %v627, 0
      %v786 = vsel %vm632, %v262, 0
      %788 = vmatprep.subr.mxu0 0.0
      %789 = vmatpush1.msra.mxu0 %v786
      %790 = vmatprep.subr.mxu0 0.0
      %791 = vmatpush1.msra.mxu0 0.0
      %792 = vmatprep.subr.mxu0 0.0
      %793 = vmatpush1.msra.mxu0 0.0
      %794 = vmatprep.subr.mxu0 0.0
      %795 = vmatpush1.msra.mxu0 0.0
      %796 = vmatprep.subr.mxu0 0.0
      %797 = vmatpush1.msra.mxu0 0.0
      %798 = vmatprep.subr.mxu0 0.0
      %799 = vmatpush1.msra.mxu0 0.0
      %800 = vmatprep.subr.mxu0 0.0
      %801 = vmatpush1.msra.mxu0 0.0
      %802 = vmatprep.subr.mxu0 0.0
      %803 = vmatpush1.msra.mxu0 0.0
      %804 = vmatprep.subr.mxu0 0.0
      %805 = vmatpush1.msra.mxu0 0.0
      %806 = vmatprep.subr.mxu0 0.0
      %807 = vmatpush1.msra.mxu0 0.0
      %808 = vmatprep.subr.mxu0 0.0
      %809 = vmatpush1.msra.mxu0 0.0
      %810 = vmatprep.subr.mxu0 0.0
      %811 = vmatpush1.msra.mxu0 0.0
      %812 = vmatprep.subr.mxu0 0.0
      %813 = vmatpush1.msra.mxu0 0.0
      %814 = vmatprep.subr.mxu0 0.0
      %815 = vmatpush1.msra.mxu0 0.0
      %816 = vmatprep.subr.mxu0 0.0
      %817 = vmatpush1.msra.mxu0 0.0
      %818 = vmatprep.subr.mxu0 0.0
      %819 = vmatpush1.msra.mxu0 0.0
      %820 = vmatprep.subr.mxu0 0.0
      %821 = vmatpush1.msra.mxu0 0.0
      %822 = vmatprep.subr.mxu0 0.0
      %823 = vmatpush1.msra.mxu0 0.0
      %824 = vmatprep.subr.mxu0 0.0
      %825 = vmatpush1.msra.mxu0 0.0
      %826 = vmatprep.subr.mxu0 0.0
      %827 = vmatpush1.msra.mxu0 0.0
      %828 = vmatprep.subr.mxu0 0.0
      %829 = vmatpush1.msra.mxu0 0.0
      %830 = vmatprep.subr.mxu0 0.0
      %831 = vmatpush1.msra.mxu0 0.0
      %832 = vmatprep.subr.mxu0 0.0
      %833 = vmatpush1.msra.mxu0 0.0
      %834 = vmatprep.subr.mxu0 0.0
      %835 = vmatpush1.msra.mxu0 0.0
      %836 = vmatprep.subr.mxu0 0.0
      %837 = vmatpush1.msra.mxu0 0.0
      %838 = vmatprep.subr.mxu0 0.0
      %839 = vmatpush1.msra.mxu0 0.0
      %840 = vmatprep.subr.mxu0 0.0
      %841 = vmatpush1.msra.mxu0 0.0
      %842 = vmatprep.subr.mxu0 0.0
      %843 = vmatpush1.msra.mxu0 0.0
      %844 = vmatprep.subr.mxu0 0.0
      %845 = vmatpush1.msra.mxu0 0.0
      %846 = vmatprep.subr.mxu0 0.0
      %847 = vmatpush1.msra.mxu0 0.0
      %848 = vmatprep.subr.mxu0 0.0
      %849 = vmatpush1.msra.mxu0 0.0
      %850 = vmatprep.subr.mxu0 0.0
      %851 = vmatpush1.msra.mxu0 0.0
      %852 = vmatprep.mubr.f32.mxu0 0.0
      %853 = vmatmul.mubr.f32.gmra.mrb[0].mxu0 %v783
      %v854 = vpop.f32.mrb[0].mxu0
      %v855 = vadd.f32 0.0, %v854
      %v856 = vpop.f32.mrb[0].mxu0
      %857 = vdwg.mxu0
      %v859 = vsel %vm584, %v628, 0
      %v862 = vsel %vm632, %v263, 0
      %864 = vmatprep.subr.mxu0 0.0
      %865 = vmatpush1.msra.mxu0 %v862
      %866 = vmatprep.subr.mxu0 0.0
      %867 = vmatpush1.msra.mxu0 0.0
      %868 = vmatprep.subr.mxu0 0.0
      %869 = vmatpush1.msra.mxu0 0.0
      %870 = vmatprep.subr.mxu0 0.0
      %871 = vmatpush1.msra.mxu0 0.0
      %872 = vmatprep.subr.mxu0 0.0
      %873 = vmatpush1.msra.mxu0 0.0
      %874 = vmatprep.subr.mxu0 0.0
      %875 = vmatpush1.msra.mxu0 0.0
      %876 = vmatprep.subr.mxu0 0.0
      %877 = vmatpush1.msra.mxu0 0.0
      %878 = vmatprep.subr.mxu0 0.0
      %879 = vmatpush1.msra.mxu0 0.0
      %880 = vmatprep.subr.mxu0 0.0
      %881 = vmatpush1.msra.mxu0 0.0
      %882 = vmatprep.subr.mxu0 0.0
      %883 = vmatpush1.msra.mxu0 0.0
      %884 = vmatprep.subr.mxu0 0.0
      %885 = vmatpush1.msra.mxu0 0.0
      %886 = vmatprep.subr.mxu0 0.0
      %887 = vmatpush1.msra.mxu0 0.0
      %888 = vmatprep.subr.mxu0 0.0
      %889 = vmatpush1.msra.mxu0 0.0
      %890 = vmatprep.subr.mxu0 0.0
      %891 = vmatpush1.msra.mxu0 0.0
      %892 = vmatprep.subr.mxu0 0.0
      %893 = vmatpush1.msra.mxu0 0.0
      %894 = vmatprep.subr.mxu0 0.0
      %895 = vmatpush1.msra.mxu0 0.0
      %896 = vmatprep.subr.mxu0 0.0
      %897 = vmatpush1.msra.mxu0 0.0
      %898 = vmatprep.subr.mxu0 0.0
      %899 = vmatpush1.msra.mxu0 0.0
      %900 = vmatprep.subr.mxu0 0.0
      %901 = vmatpush1.msra.mxu0 0.0
      %902 = vmatprep.subr.mxu0 0.0
      %903 = vmatpush1.msra.mxu0 0.0
      %904 = vmatprep.subr.mxu0 0.0
      %905 = vmatpush1.msra.mxu0 0.0
      %906 = vmatprep.subr.mxu0 0.0
      %907 = vmatpush1.msra.mxu0 0.0
      %908 = vmatprep.subr.mxu0 0.0
      %909 = vmatpush1.msra.mxu0 0.0
      %910 = vmatprep.subr.mxu0 0.0
      %911 = vmatpush1.msra.mxu0 0.0
      %912 = vmatprep.subr.mxu0 0.0
      %913 = vmatpush1.msra.mxu0 0.0
      %914 = vmatprep.subr.mxu0 0.0
      %915 = vmatpush1.msra.mxu0 0.0
      %916 = vmatprep.subr.mxu0 0.0
      %917 = vmatpush1.msra.mxu0 0.0
      %918 = vmatprep.subr.mxu0 0.0
      %919 = vmatpush1.msra.mxu0 0.0
      %920 = vmatprep.subr.mxu0 0.0
      %921 = vmatpush1.msra.mxu0 0.0
      %922 = vmatprep.subr.mxu0 0.0
      %923 = vmatpush1.msra.mxu0 0.0
      %924 = vmatprep.subr.mxu0 0.0
      %925 = vmatpush1.msra.mxu0 0.0
      %926 = vmatprep.subr.mxu0 0.0
      %927 = vmatpush1.msra.mxu0 0.0
      %928 = vmatprep.mubr.f32.mxu0 0.0
      %929 = vmatmul.mubr.f32.gmra.mrb[0].mxu0 %v859
      %v930 = vpop.f32.mrb[0].mxu0
      %v931 = vadd.f32 0.0, %v930
      %v932 = vpop.f32.mrb[0].mxu0
      %933 = vdwg.mxu0
      %934 = vst.msk [vmem:[%s251] sm:$0xff] %vm265, %v703
      %935 = vst.msk [vmem:[%s251 + $0x8] sm:$0xff] %vm265, %v779
      %936 = vst.msk [vmem:[%s251 + $0x10] sm:$0xff] %vm265, %v855
      %937 = vst.msk [vmem:[%s251 + $0x18] sm:$0xff] %vm265, %v931
      %p938 = scmp.lt.s32.totalorder %s15, 1
      %s939 = scalar_select %p938, %s15, 1
      %s940 = smul.addr %s939, 4
      %s941 = smul.addr %s940, 8
      %s942 = scalar_lea.vmem %s4, %s941
      // Predicated region
      $region37: #{analogical_networks_forward.53} parent=35 // pred_check
        %p943 = pneg %p137
      $region38: #{analogical_networks_forward.53} parent=35 // pred_check_branch
        %945 = sbr.rel (%p943) target = $region40
      $region39: #{analogical_networks_forward.53} parent=35 // pred_region
        _
      $region40: #{analogical_networks_forward.53} parent=35 // pred_fallthru
        _
    $region36: #{analogical_networks_forward.53} parent=5 // pred_fallthru
      _
    %p946 = scmp.le.s32.totalorder 2, %s10
    // Predicated region
    $region41: #{analogical_networks_forward.53} parent=5 // pred_check
      %p947 = pneg %p946
    $region42: #{analogical_networks_forward.53} parent=5 // pred_check_branch
      %949 = sbr.rel (%p947) target = $region44
    $region43: #{analogical_networks_forward.53} parent=5 // pred_region
      %s950 = ssub.s32 %s10, 2
      // Predicated region
      $region45: #{analogical_networks_forward.53} parent=43 // pred_check
        %p951 = pneg %p143
      $region46: #{analogical_networks_forward.53} parent=43 // pred_check_branch
        %953 = sbr.rel (%p951) target = $region48
      $region47: #{analogical_networks_forward.53} parent=43 // pred_region
        %p954 = scmp.lt.s32.totalorder %s16, 1
        %s955 = scalar_select %p954, %s16, 1
        %s956 = smul.addr %s955, 4
        %s957 = smul.addr %s956, 8
        %s958 = scalar_lea.vmem %s4, %s957
      $region48: #{analogical_networks_forward.53} parent=43 // pred_fallthru
        _
    $region44: #{analogical_networks_forward.53} parent=5 // pred_fallthru
      _
  $region6: #{analogical_networks_forward.53} parent=0 // loop_footer
    %s14 = sadd.s32 1, %s10
  $region7: #{analogical_networks_forward.53} parent=0 // loop_footer_branch
    %9 = sbr.rel target = $region3
  $region8: #{analogical_networks_forward.53} parent=0 // loop_exit
    _

// kernel: analogical_networks_forward.79
$region0: #{analogical_networks_forward.79}
  #allocation0 [shape = 'u32[]', space=smem, size = 0x4, offset = 0x4, fixed_abs, tag = 'smem constant byte address 0x4 - core index']
  #allocation1 [shape = 'u32[144,128]{1,0:T(1,128)}', space=vmem, size = 0x12000, scoped, tag = 'internal scratch']
  #allocation2 [shape = 'f32[1,1]{1,0:T(1,128)S(1)}', space=vmem, size = 0x200, scoped, tag = 'scoped memory for analogical_networks_forward.79']
  %s0 = inlined_call_operand.vmem [shape: f32[8,32], index: 0, kind: input, shape index: {}]
  %s1 = inlined_call_operand.vmem [shape: f32[32,32], index: 1, kind: input, shape index: {}]
  %s2 = inlined_call_operand.vmem [shape: f32[1,32], index: 2, kind: input, shape index: {}, may-alias: {2,4}]
  %s3 = inlined_call_operand.vmem [shape: f32[32,32], index: 3, kind: input, shape index: {}]
  %s4 = inlined_call_operand.vmem [shape: f32[1,32], index: 4, kind: input, shape index: {}, may-alias: {2,4}]
  %s5 = inlined_call_operand.vmem [shape: f32[32,1], index: 5, kind: input, shape index: {}]
  %s6 = inlined_call_operand.<no memory space> [shape: f32[1,1], index: 6, kind: input, shape index: {}]
  %s7 = inlined_call_operand.vmem [shape: f32[8,1], index: 7, kind: output, shape index: {}]
  %s8 = sld [smem:[#allocation0]]
  $region38: #{analogical_networks_forward.79} parent=0
    _
  %s10 = ssub.s32 1, %s8
  %s11 = scalar_select 0, %s10, %s8
  %v12 = vstv %s6
  %13 = vst [vmem:[#allocation2] sm:$0x1] %v12
  // Predicated region
  $region2: #{analogical_networks_forward.79} parent=0 // pred_check
    _
  $region3: #{analogical_networks_forward.79} parent=0 // pred_check_branch
    %15 = sbr.rel (0) target = $region5
  $region4: #{analogical_networks_forward.79} parent=0 // pred_region
    _
  $region5: #{analogical_networks_forward.79} parent=0 // pred_fallthru
    _
  // Predicated region
  $region6: #{analogical_networks_forward.79} parent=0 // pred_check
    _
  $region7: #{analogical_networks_forward.79} parent=0 // pred_check_branch
    %17 = sbr.rel (0) target = $region9
  $region8: #{analogical_networks_forward.79} parent=0 // pred_region
    _
  $region9: #{analogical_networks_forward.79} parent=0 // pred_fallthru
    _
  // Predicated region
  $region10: #{analogical_networks_forward.79} parent=0 // pred_check
    _
  $region11: #{analogical_networks_forward.79} parent=0 // pred_check_branch
    %19 = sbr.rel (0) target = $region13
  $region12: #{analogical_networks_forward.79} parent=0 // pred_region
    _
  $region13: #{analogical_networks_forward.79} parent=0 // pred_fallthru
    _
  // Predicated region
  $region14: #{analogical_networks_forward.79} parent=0 // pred_check
    _
  $region15: #{analogical_networks_forward.79} parent=0 // pred_check_branch
    %21 = sbr.rel (0) target = $region17
  $region16: #{analogical_networks_forward.79} parent=0 // pred_region
    _
  $region17: #{analogical_networks_forward.79} parent=0 // pred_fallthru
    _
  // Predicated region
  $region18: #{analogical_networks_forward.79} parent=0 // pred_check
    _
  $region19: #{analogical_networks_forward.79} parent=0 // pred_check_branch
    %23 = sbr.rel (0) target = $region21
  $region20: #{analogical_networks_forward.79} parent=0 // pred_region
    _
  $region21: #{analogical_networks_forward.79} parent=0 // pred_fallthru
    _
  // Predicated region
  $region22: #{analogical_networks_forward.79} parent=0 // pred_check
    _
  $region23: #{analogical_networks_forward.79} parent=0 // pred_check_branch
    %25 = sbr.rel (0) target = $region25
  $region24: #{analogical_networks_forward.79} parent=0 // pred_region
    _
  $region25: #{analogical_networks_forward.79} parent=0 // pred_fallthru
    _
  // Predicated region
  $region26: #{analogical_networks_forward.79} parent=0 // pred_check
    _
  $region27: #{analogical_networks_forward.79} parent=0 // pred_check_branch
    %27 = sbr.rel (0) target = $region29
  $region28: #{analogical_networks_forward.79} parent=0 // pred_region
    _
  $region29: #{analogical_networks_forward.79} parent=0 // pred_fallthru
    _
  %v28 = vld [vmem:[%s0] sm:$0xff]
  %v29 = vld [vmem:[%s1] sm:$0xff]
  %v30 = vld [vmem:[%s1 + $0x8] sm:$0xff]
  %v31 = vld [vmem:[%s1 + $0x10] sm:$0xff]
  %v32 = vld [vmem:[%s1 + $0x18] sm:$0xff]
  %v33 = vld [vmem:[%s2] sm:$0x1]
  %v35 = vlaneseq
  %v36 = vshrl.u32 %v35, 7
  %v37 = vsub.s32 0, %v36
  %v38 = vrot.slane %v33, %v37
  %vm40 = vcmask 261120
  %v42 = vsel %vm40, %v28, 0
  %44 = vmatprep.subr.mxu0 0.0
  %45 = vmatpush1.msra.mxu0 %v29
  %46 = vmatprep.subr.mxu0 0.0
  %47 = vmatpush1.msra.mxu0 %v30
  %48 = vmatprep.subr.mxu0 0.0
  %49 = vmatpush1.msra.mxu0 %v31
  %50 = vmatprep.subr.mxu0 0.0
  %51 = vmatpush1.msra.mxu0 %v32
  %52 = vmatprep.subr.mxu0 0.0
  %53 = vmatpush1.msra.mxu0 0.0
  %54 = vmatprep.subr.mxu0 0.0
  %55 = vmatpush1.msra.mxu0 0.0
  %56 = vmatprep.subr.mxu0 0.0
  %57 = vmatpush1.msra.mxu0 0.0
  %58 = vmatprep.subr.mxu0 0.0
  %59 = vmatpush1.msra.mxu0 0.0
  %60 = vmatprep.subr.mxu0 0.0
  %61 = vmatpush1.msra.mxu0 0.0
  %62 = vmatprep.subr.mxu0 0.0
  %63 = vmatpush1.msra.mxu0 0.0
  %64 = vmatprep.subr.mxu0 0.0
  %65 = vmatpush1.msra.mxu0 0.0
  %66 = vmatprep.subr.mxu0 0.0
  %67 = vmatpush1.msra.mxu0 0.0
  %68 = vmatprep.subr.mxu0 0.0
  %69 = vmatpush1.msra.mxu0 0.0
  %70 = vmatprep.subr.mxu0 0.0
  %71 = vmatpush1.msra.mxu0 0.0
  %72 = vmatprep.subr.mxu0 0.0
  %73 = vmatpush1.msra.mxu0 0.0
  %74 = vmatprep.subr.mxu0 0.0
  %75 = vmatpush1.msra.mxu0 0.0
  %76 = vmatprep.subr.mxu0 0.0
  %77 = vmatpush1.msra.mxu0 0.0
  %78 = vmatprep.subr.mxu0 0.0
  %79 = vmatpush1.msra.mxu0 0.0
  %80 = vmatprep.subr.mxu0 0.0
  %81 = vmatpush1.msra.mxu0 0.0
  %82 = vmatprep.subr.mxu0 0.0
  %83 = vmatpush1.msra.mxu0 0.0
  %84 = vmatprep.subr.mxu0 0.0
  %85 = vmatpush1.msra.mxu0 0.0
  %86 = vmatprep.subr.mxu0 0.0
  %87 = vmatpush1.msra.mxu0 0.0
  %88 = vmatprep.subr.mxu0 0.0
  %89 = vmatpush1.msra.mxu0 0.0
  %90 = vmatprep.subr.mxu0 0.0
  %91 = vmatpush1.msra.mxu0 0.0
  %92 = vmatprep.subr.mxu0 0.0
  %93 = vmatpush1.msra.mxu0 0.0
  %94 = vmatprep.subr.mxu0 0.0
  %95 = vmatpush1.msra.mxu0 0.0
  %96 = vmatprep.subr.mxu0 0.0
  %97 = vmatpush1.msra.mxu0 0.0
  %98 = vmatprep.subr.mxu0 0.0
  %99 = vmatpush1.msra.mxu0 0.0
  %100 = vmatprep.subr.mxu0 0.0
  %101 = vmatpush1.msra.mxu0 0.0
  %102 = vmatprep.subr.mxu0 0.0
  %103 = vmatpush1.msra.mxu0 0.0
  %104 = vmatprep.subr.mxu0 0.0
  %105 = vmatpush1.msra.mxu0 0.0
  %106 = vmatprep.subr.mxu0 0.0
  %107 = vmatpush1.msra.mxu0 0.0
  %108 = vmatprep.mubr.f32.mxu0 0.0
  %109 = vmatmul.mubr.f32.gmra.mrb[0].mxu0 %v42
  %v110 = vpop.f32.mrb[0].mxu0
  %v111 = vadd.f32 %v38, %v110
  %v112 = vpop.f32.mrb[0].mxu0
  %113 = vdwg.mxu0
  %v114 = vmax.f32 %v111, 0.0
  %v115 = vld [vmem:[%s3] sm:$0xff]
  %v116 = vld [vmem:[%s3 + $0x8] sm:$0xff]
  %v117 = vld [vmem:[%s3 + $0x10] sm:$0xff]
  %v118 = vld [vmem:[%s3 + $0x18] sm:$0xff]
  %v119 = vld [vmem:[%s4] sm:$0x1]
  %v121 = vlaneseq
  %v122 = vshrl.u32 %v121, 7
  %v123 = vsub.s32 0, %v122
  %v124 = vrot.slane %v119, %v123
  %v127 = vsel %vm40, %v114, 0
  %129 = vmatprep.subr.mxu0 0.0
  %130 = vmatpush1.msra.mxu0 %v115
  %131 = vmatprep.subr.mxu0 0.0
  %132 = vmatpush1.msra.mxu0 %v116
  %133 = vmatprep.subr.mxu0 0.0
  %134 = vmatpush1.msra.mxu0 %v117
  %135 = vmatprep.subr.mxu0 0.0
  %136 = vmatpush1.msra.mxu0 %v118
  %137 = vmatprep.subr.mxu0 0.0
  %138 = vmatpush1.msra.mxu0 0.0
  %139 = vmatprep.subr.mxu0 0.0
  %140 = vmatpush1.msra.mxu0 0.0
  %141 = vmatprep.subr.mxu0 0.0
  %142 = vmatpush1.msra.mxu0 0.0
  %143 = vmatprep.subr.mxu0 0.0
  %144 = vmatpush1.msra.mxu0 0.0
  %145 = vmatprep.subr.mxu0 0.0
  %146 = vmatpush1.msra.mxu0 0.0
  %147 = vmatprep.subr.mxu0 0.0
  %148 = vmatpush1.msra.mxu0 0.0
  %149 = vmatprep.subr.mxu0 0.0
  %150 = vmatpush1.msra.mxu0 0.0
  %151 = vmatprep.subr.mxu0 0.0
  %152 = vmatpush1.msra.mxu0 0.0
  %153 = vmatprep.subr.mxu0 0.0
  %154 = vmatpush1.msra.mxu0 0.0
  %155 = vmatprep.subr.mxu0 0.0
  %156 = vmatpush1.msra.mxu0 0.0
  %157 = vmatprep.subr.mxu0 0.0
  %158 = vmatpush1.msra.mxu0 0.0
  %159 = vmatprep.subr.mxu0 0.0
  %160 = vmatpush1.msra.mxu0 0.0
  %161 = vmatprep.subr.mxu0 0.0
  %162 = vmatpush1.msra.mxu0 0.0
  %163 = vmatprep.subr.mxu0 0.0
  %164 = vmatpush1.msra.mxu0 0.0
  %165 = vmatprep.subr.mxu0 0.0
  %166 = vmatpush1.msra.mxu0 0.0
  %167 = vmatprep.subr.mxu0 0.0
  %168 = vmatpush1.msra.mxu0 0.0
  %169 = vmatprep.subr.mxu0 0.0
  %170 = vmatpush1.msra.mxu0 0.0
  %171 = vmatprep.subr.mxu0 0.0
  %172 = vmatpush1.msra.mxu0 0.0
  %173 = vmatprep.subr.mxu0 0.0
  %174 = vmatpush1.msra.mxu0 0.0
  %175 = vmatprep.subr.mxu0 0.0
  %176 = vmatpush1.msra.mxu0 0.0
  %177 = vmatprep.subr.mxu0 0.0
  %178 = vmatpush1.msra.mxu0 0.0
  %179 = vmatprep.subr.mxu0 0.0
  %180 = vmatpush1.msra.mxu0 0.0
  %181 = vmatprep.subr.mxu0 0.0
  %182 = vmatpush1.msra.mxu0 0.0
  %183 = vmatprep.subr.mxu0 0.0
  %184 = vmatpush1.msra.mxu0 0.0
  %185 = vmatprep.subr.mxu0 0.0
  %186 = vmatpush1.msra.mxu0 0.0
  %187 = vmatprep.subr.mxu0 0.0
  %188 = vmatpush1.msra.mxu0 0.0
  %189 = vmatprep.subr.mxu0 0.0
  %190 = vmatpush1.msra.mxu0 0.0
  %191 = vmatprep.subr.mxu0 0.0
  %192 = vmatpush1.msra.mxu0 0.0
  %193 = vmatprep.mubr.f32.mxu0 0.0
  %194 = vmatmul.mubr.f32.gmra.mrb[0].mxu0 %v127
  %v195 = vpop.f32.mrb[0].mxu0
  %v196 = vadd.f32 %v124, %v195
  %v197 = vpop.f32.mrb[0].mxu0
  %198 = vdwg.mxu0
  %v199 = vmax.f32 %v196, 0.0
  %v200 = vld [vmem:[%s5] sm:$0xff]
  %v201 = vld [vmem:[%s5 + $0x8] sm:$0xff]
  %v202 = vld [vmem:[%s5 + $0x10] sm:$0xff]
  %v203 = vld [vmem:[%s5 + $0x18] sm:$0xff]
  %v204 = vld [vmem:[#allocation2] sm:$0x1]
  %v206 = vlaneseq
  %v207 = vshrl.u32 %v206, 7
  %v208 = vsub.s32 0, %v207
  %v209 = vrot.slane %v204, %v208
  %v212 = vsel %vm40, %v199, 0
  %214 = vmatprep.subr.mxu0 0.0
  %215 = vmatpush1.msra.mxu0 %v200
  %216 = vmatprep.subr.mxu0 0.0
  %217 = vmatpush1.msra.mxu0 %v201
  %218 = vmatprep.subr.mxu0 0.0
  %219 = vmatpush1.msra.mxu0 %v202
  %220 = vmatprep.subr.mxu0 0.0
  %221 = vmatpush1.msra.mxu0 %v203
  %222 = vmatprep.subr.mxu0 0.0
  %223 = vmatpush1.msra.mxu0 0.0
  %224 = vmatprep.subr.mxu0 0.0
  %225 = vmatpush1.msra.mxu0 0.0
  %226 = vmatprep.subr.mxu0 0.0
  %227 = vmatpush1.msra.mxu0 0.0
  %228 = vmatprep.subr.mxu0 0.0
  %229 = vmatpush1.msra.mxu0 0.0
  %230 = vmatprep.subr.mxu0 0.0
  %231 = vmatpush1.msra.mxu0 0.0
  %232 = vmatprep.subr.mxu0 0.0
  %233 = vmatpush1.msra.mxu0 0.0
  %234 = vmatprep.subr.mxu0 0.0
  %235 = vmatpush1.msra.mxu0 0.0
  %236 = vmatprep.subr.mxu0 0.0
  %237 = vmatpush1.msra.mxu0 0.0
  %238 = vmatprep.subr.mxu0 0.0
  %239 = vmatpush1.msra.mxu0 0.0
  %240 = vmatprep.subr.mxu0 0.0
  %241 = vmatpush1.msra.mxu0 0.0
  %242 = vmatprep.subr.mxu0 0.0
  %243 = vmatpush1.msra.mxu0 0.0
  %244 = vmatprep.subr.mxu0 0.0
  %245 = vmatpush1.msra.mxu0 0.0
  %246 = vmatprep.subr.mxu0 0.0
  %247 = vmatpush1.msra.mxu0 0.0
  %248 = vmatprep.subr.mxu0 0.0
  %249 = vmatpush1.msra.mxu0 0.0
  %250 = vmatprep.subr.mxu0 0.0
  %251 = vmatpush1.msra.mxu0 0.0
  %252 = vmatprep.subr.mxu0 0.0
  %253 = vmatpush1.msra.mxu0 0.0
  %254 = vmatprep.subr.mxu0 0.0
  %255 = vmatpush1.msra.mxu0 0.0
  %256 = vmatprep.subr.mxu0 0.0
  %257 = vmatpush1.msra.mxu0 0.0
  %258 = vmatprep.subr.mxu0 0.0
  %259 = vmatpush1.msra.mxu0 0.0
  %260 = vmatprep.subr.mxu0 0.0
  %261 = vmatpush1.msra.mxu0 0.0
  %262 = vmatprep.subr.mxu0 0.0
  %263 = vmatpush1.msra.mxu0 0.0
  %264 = vmatprep.subr.mxu0 0.0
  %265 = vmatpush1.msra.mxu0 0.0
  %266 = vmatprep.subr.mxu0 0.0
  %267 = vmatpush1.msra.mxu0 0.0
  %268 = vmatprep.subr.mxu0 0.0
  %269 = vmatpush1.msra.mxu0 0.0
  %270 = vmatprep.subr.mxu0 0.0
  %271 = vmatpush1.msra.mxu0 0.0
  %272 = vmatprep.subr.mxu0 0.0
  %273 = vmatpush1.msra.mxu0 0.0
  %274 = vmatprep.subr.mxu0 0.0
  %275 = vmatpush1.msra.mxu0 0.0
  %276 = vmatprep.subr.mxu0 0.0
  %277 = vmatpush1.msra.mxu0 0.0
  %278 = vmatprep.mubr.f32.mxu0 0.0
  %279 = vmatmul.mubr.f32.gmra.mrb[0].mxu0 %v212
  %v280 = vpop.f32.mrb[0].mxu0
  %v281 = vadd.f32 %v209, %v280
  %v282 = vpop.f32.mrb[0].mxu0
  %283 = vdwg.mxu0
  %vm284 = vcmask 7168
  %285 = vst.msk [vmem:[%s7] sm:$0xff] %vm284, %v281
  // Predicated region
  $region30: #{analogical_networks_forward.79} parent=0 // pred_check
    _
  $region31: #{analogical_networks_forward.79} parent=0 // pred_check_branch
    %287 = sbr.rel (0) target = $region33
  $region32: #{analogical_networks_forward.79} parent=0 // pred_region
    _
  $region33: #{analogical_networks_forward.79} parent=0 // pred_fallthru
    _
  // Predicated region
  $region34: #{analogical_networks_forward.79} parent=0 // pred_check
    _
  $region35: #{analogical_networks_forward.79} parent=0 // pred_check_branch
    %289 = sbr.rel (0) target = $region37
  $region36: #{analogical_networks_forward.79} parent=0 // pred_region
    _
  $region37: #{analogical_networks_forward.79} parent=0 // pred_fallthru
    _

// kernel: analogical_networks_forward.78
$region0: #{analogical_networks_forward.78}
  #allocation0 [shape = 'u32[]', space=smem, size = 0x4, offset = 0x4, fixed_abs, tag = 'smem constant byte address 0x4 - core index']
  #allocation1 [shape = 'u32[144,128]{1,0:T(1,128)}', space=vmem, size = 0x12000, scoped, tag = 'internal scratch']
  %s0 = inlined_call_operand.vmem [shape: f32[2,16,32], index: 0, kind: input, shape index: {}]
  %s1 = inlined_call_operand.vmem [shape: f32[2,4,32], index: 1, kind: input, shape index: {}]
  %s2 = inlined_call_operand.vmem [shape: f32[2,16,4], index: 2, kind: output, shape index: {}]
  %s3 = sld [smem:[#allocation0]]
  $region41: #{analogical_networks_forward.78} parent=0
    _
  %s5 = ssub.s32 1, %s3
  %s6 = scalar_select 0, %s5, %s3
  loop: start=0, step=1, limit=4
  $region2: #{analogical_networks_forward.78} parent=0 // loop_pre_header
    _
  $region3: #{analogical_networks_forward.78} parent=0 // loop_header
    %s8 = sphi 0, %s12
    %p9 = scmp.ge.s32.totalorder %s8, 4
    %s18 = sphi 0, %s20
    %s21 = sphi 0, %s18
    %s22 = sphi 0, %s21
    %s38 = sphi 0, %s22
    %s44 = sphi 0, %s46
    %s47 = sphi 0, %s44
    %s48 = sphi 0, %s47
    %s64 = sphi 0, %s48
    %s70 = sphi 0, %s72
    %s73 = sphi 0, %s70
    %s74 = sphi 0, %s73
    %s90 = sphi 0, %s74
  $region4: #{analogical_networks_forward.78} parent=0 // loop_header_branch
    %11 = sbr.rel (%p9) target = $region8
  $region5: #{analogical_networks_forward.78} parent=0 // loop_body
    %s13 = ssub.s32 %s8, 1
    %s14 = ssub.s32 %s8, 2
    %s15 = sadd.s32 %s8, 1
    %s16 = ssub.s32 %s8, %s15
    %p17 = scmp.eq.s32.totalorder %s16, 0
    %s19 = sadd.s32 %s18, 1
    %s20 = scalar_select %p17, %s18, %s19
    %p23 = pneg %p17
    %p24 = scmp.eq.s32.totalorder %s8, 1
    %p25 = por %p23, %p24
    %p26 = scmp.ne.s32.totalorder %s18, %s21
    %p27 = scmp.eq.s32.totalorder %s8, 0
    %p28 = por %p26, %p27
    %p29 = scmp.ne.s32.totalorder %s18, %s21
    %p30 = scmp.eq.s32.totalorder %s13, 1
    %p31 = por %p29, %p30
    %p32 = scmp.ne.s32.totalorder %s21, %s22
    %p33 = scmp.eq.s32.totalorder %s13, 0
    %p34 = por %p32, %p33
    %p35 = scmp.ne.s32.totalorder %s21, %s22
    %p36 = scmp.eq.s32.totalorder %s14, 1
    %p37 = por %p35, %p36
    %p39 = scmp.ne.s32.totalorder %s22, %s38
    %p40 = scmp.eq.s32.totalorder %s14, 0
    %p41 = por %p39, %p40
    %s42 = ssub.s32 %s8, %s15
    %p43 = scmp.eq.s32.totalorder %s42, 0
    %s45 = sadd.s32 %s44, 1
    %s46 = scalar_select %p43, %s44, %s45
    %p49 = pneg %p43
    %p50 = scmp.eq.s32.totalorder %s8, 1
    %p51 = por %p49, %p50
    %p52 = scmp.ne.s32.totalorder %s44, %s47
    %p53 = scmp.eq.s32.totalorder %s8, 0
    %p54 = por %p52, %p53
    %p55 = scmp.ne.s32.totalorder %s44, %s47
    %p56 = scmp.eq.s32.totalorder %s13, 1
    %p57 = por %p55, %p56
    %p58 = scmp.ne.s32.totalorder %s47, %s48
    %p59 = scmp.eq.s32.totalorder %s13, 0
    %p60 = por %p58, %p59
    %p61 = scmp.ne.s32.totalorder %s47, %s48
    %p62 = scmp.eq.s32.totalorder %s14, 1
    %p63 = por %p61, %p62
    %p65 = scmp.ne.s32.totalorder %s48, %s64
    %p66 = scmp.eq.s32.totalorder %s14, 0
    %p67 = por %p65, %p66
    %s68 = ssub.s32 %s8, %s15
    %p69 = scmp.eq.s32.totalorder %s68, 0
    %s71 = sadd.s32 %s70, 1
    %s72 = scalar_select %p69, %s70, %s71
    %p75 = pneg %p69
    %p76 = scmp.eq.s32.totalorder %s8, 1
    %p77 = por %p75, %p76
    %p78 = scmp.ne.s32.totalorder %s70, %s73
    %p79 = scmp.eq.s32.totalorder %s8, 0
    %p80 = por %p78, %p79
    %p81 = scmp.ne.s32.totalorder %s70, %s73
    %p82 = scmp.eq.s32.totalorder %s13, 1
    %p83 = por %p81, %p82
    %p84 = scmp.ne.s32.totalorder %s73, %s74
    %p85 = scmp.eq.s32.totalorder %s13, 0
    %p86 = por %p84, %p85
    %p87 = scmp.ne.s32.totalorder %s73, %s74
    %p88 = scmp.eq.s32.totalorder %s14, 1
    %p89 = por %p87, %p88
    %p91 = scmp.ne.s32.totalorder %s74, %s90
    %p92 = scmp.eq.s32.totalorder %s14, 0
    %p93 = por %p91, %p92
    %p94 = scmp.le.s32.totalorder 1, %s8
    %p95 = scmp.lt.s32.totalorder %s8, 3
    %p96 = pnand %p94, %p95
    %p97 = pneg %p96
    // Predicated region
    $region9: #{analogical_networks_forward.78} parent=5 // pred_check
      _
    $region10: #{analogical_networks_forward.78} parent=5 // pred_check_branch
      %99 = sbr.rel (%p96) target = $region12
    $region11: #{analogical_networks_forward.78} parent=5 // pred_region
      %s100 = ssub.s32 %s8, 1
    $region12: #{analogical_networks_forward.78} parent=5 // pred_fallthru
      _
    %p101 = scmp.lt.s32.totalorder %s8, 2
    // Predicated region
    $region13: #{analogical_networks_forward.78} parent=5 // pred_check
      %p102 = pneg %p101
    $region14: #{analogical_networks_forward.78} parent=5 // pred_check_branch
      %104 = sbr.rel (%p102) target = $region16
    $region15: #{analogical_networks_forward.78} parent=5 // pred_region
      // Predicated region
      $region17: #{analogical_networks_forward.78} parent=15 // pred_check
        %p105 = pneg %p28
      $region18: #{analogical_networks_forward.78} parent=15 // pred_check_branch
        %107 = sbr.rel (%p105) target = $region20
      $region19: #{analogical_networks_forward.78} parent=15 // pred_region
        %p108 = scmp.lt.s32.totalorder %s8, 1
        %s109 = scalar_select %p108, %s8, 1
        %s110 = smul.addr %s109, 2
        %s111 = smul.addr %s110, 8
        %s112 = scalar_lea.vmem %s0, %s111
      $region20: #{analogical_networks_forward.78} parent=15 // pred_fallthru
        _
      // Predicated region
      $region21: #{analogical_networks_forward.78} parent=15 // pred_check
        %p113 = pneg %p54
      $region22: #{analogical_networks_forward.78} parent=15 // pred_check_branch
        %115 = sbr.rel (%p113) target = $region24
      $region23: #{analogical_networks_forward.78} parent=15 // pred_region
        %p116 = scmp.lt.s32.totalorder %s8, 1
        %s117 = scalar_select %p116, %s8, 1
        %s118 = smul.addr %s117, 4
        %s119 = scalar_lea.vmem %s1, %s118
      $region24: #{analogical_networks_forward.78} parent=15 // pred_fallthru
        _
    $region16: #{analogical_networks_forward.78} parent=5 // pred_fallthru
      _
    %p120 = scmp.le.s32.totalorder 1, %s8
    %p121 = scmp.lt.s32.totalorder %s8, 3
    %p122 = pnand %p120, %p121
    %p123 = pneg %p122
    // Predicated region
    $region25: #{analogical_networks_forward.78} parent=5 // pred_check
      _
    $region26: #{analogical_networks_forward.78} parent=5 // pred_check_branch
      %125 = sbr.rel (%p122) target = $region28
    $region27: #{analogical_networks_forward.78} parent=5 // pred_region
      %s126 = ssub.s32 %s8, 1
      %p127 = scmp.lt.s32.totalorder %s13, 1
      %s128 = scalar_select %p127, %s13, 1
      %s129 = smul.addr %s128, 2
      %s130 = smul.addr %s129, 8
      %s131 = scalar_lea.vmem %s0, %s130
      %p132 = pneg %p34
      %p133 = pneg %p31
      %p134 = scmp.lt.s32.totalorder %s13, 1
      %s135 = scalar_select %p134, %s13, 1
      %s136 = smul.addr %s135, 4
      %s137 = scalar_lea.vmem %s1, %s136
      %p138 = pneg %p60
      %p139 = pneg %p57
      %p140 = pneg %p86
      %p141 = pneg %p83
      %p142 = scmp.lt.s32.totalorder %s13, 1
      %s143 = scalar_select %p142, %s13, 1
      %s144 = smul.addr %s143, 2
      %s145 = smul.addr %s144, 8
      %s146 = scalar_lea.vmem %s2, %s145
      %p147 = scmp.lt.s32.totalorder %s13, 1
      %s148 = scalar_select %p147, %s13, 1
      %s149 = smul.addr %s148, 2
      %s150 = smul.addr %s149, 8
      %s151 = scalar_lea.vmem %s0, %s150
      %p152 = scmp.lt.s32.totalorder %s13, 1
      %s153 = scalar_select %p152, %s13, 1
      %s154 = smul.addr %s153, 4
      %s155 = scalar_lea.vmem %s1, %s154
      %p156 = scmp.lt.s32.totalorder %s13, 1
      %s157 = scalar_select %p156, %s13, 1
      %s158 = smul.addr %s157, 2
      %s159 = smul.addr %s158, 8
      %s160 = scalar_lea.vmem %s2, %s159
      %v161 = vld [vmem:[%s151] sm:$0xff]
      %v162 = vld [vmem:[%s151 + $0x8] sm:$0xff]
      %v163 = vld [vmem:[%s155] sm:$0xf]
      %v164 = vmul.f32 %v161, %v161
      %v165 = vmul.f32 %v162, %v162
      %vm166 = vcmask 261120
      %v167 = vsel %vm166, %v164, 0.0
      %168 = vadd.xlane.f32.xlu0 %v167
      %v169 = vpop.xlane.xlu0 %168
      %v170 = vsel %vm166, %v165, 0.0
      %171 = vadd.xlane.f32.xlu0 %v170
      %v172 = vpop.xlane.xlu0 %171
      %v173 = vmax.f32 %v169, 1e-24
      %v174 = vmax.f32 %v172, 1e-24
      %v175 = vrsqrt.pop %v173
      %v176 = vrsqrt.pop %v174
      %v177 = vmul.f32 %v161, %v175
      %v178 = vmul.f32 %v162, %v176
      %v179 = vmul.f32 %v163, %v163
      %vm180 = vcmask 257024
      %v181 = vsel %vm180, %v179, 0.0
      %182 = vadd.xlane.f32.xlu0 %v181
      %v183 = vpop.xlane.xlu0 %182
      %v184 = vmax.f32 %v183, 1e-24
      %v185 = vrsqrt.pop %v184
      %v186 = vmul.f32 %v163, %v185
      %v188 = vsel %vm166, %v177, 0
      %v191 = vsel %vm166, %v178, 0
      %v194 = vsel %vm166, %v186, 0
      %196 = vmatprep.subr.mxu0 0.0
      %197 = vmatpush1.xpose.msra.mxu0 %v194
      %198 = vmatprep.subr.mxu0 0.0
      %199 = vmatpush1.xpose.msra.mxu0 0.0
      %200 = vmatprep.subr.mxu0 0.0
      %201 = vmatpush1.xpose.msra.mxu0 0.0
      %202 = vmatprep.subr.mxu0 0.0
      %203 = vmatpush1.xpose.msra.mxu0 0.0
      %204 = vmatprep.subr.mxu0 0.0
      %205 = vmatpush1.xpose.msra.mxu0 0.0
      %206 = vmatprep.subr.mxu0 0.0
      %207 = vmatpush1.xpose.msra.mxu0 0.0
      %208 = vmatprep.subr.mxu0 0.0
      %209 = vmatpush1.xpose.msra.mxu0 0.0
      %210 = vmatprep.subr.mxu0 0.0
      %211 = vmatpush1.xpose.msra.mxu0 0.0
      %212 = vmatprep.subr.mxu0 0.0
      %213 = vmatpush1.xpose.msra.mxu0 0.0
      %214 = vmatprep.subr.mxu0 0.0
      %215 = vmatpush1.xpose.msra.mxu0 0.0
      %216 = vmatprep.subr.mxu0 0.0
      %217 = vmatpush1.xpose.msra.mxu0 0.0
      %218 = vmatprep.subr.mxu0 0.0
      %219 = vmatpush1.xpose.msra.mxu0 0.0
      %220 = vmatprep.subr.mxu0 0.0
      %221 = vmatpush1.xpose.msra.mxu0 0.0
      %222 = vmatprep.subr.mxu0 0.0
      %223 = vmatpush1.xpose.msra.mxu0 0.0
      %224 = vmatprep.subr.mxu0 0.0
      %225 = vmatpush1.xpose.msra.mxu0 0.0
      %226 = vmatprep.subr.mxu0 0.0
      %227 = vmatpush1.xpose.msra.mxu0 0.0
      %228 = vmatprep.subr.mxu0 0.0
      %229 = vmatpush1.xpose.msra.mxu0 0.0
      %230 = vmatprep.subr.mxu0 0.0
      %231 = vmatpush1.xpose.msra.mxu0 0.0
      %232 = vmatprep.subr.mxu0 0.0
      %233 = vmatpush1.xpose.msra.mxu0 0.0
      %234 = vmatprep.subr.mxu0 0.0
      %235 = vmatpush1.xpose.msra.mxu0 0.0
      %236 = vmatprep.subr.mxu0 0.0
      %237 = vmatpush1.xpose.msra.mxu0 0.0
      %238 = vmatprep.subr.mxu0 0.0
      %239 = vmatpush1.xpose.msra.mxu0 0.0
      %240 = vmatprep.subr.mxu0 0.0
      %241 = vmatpush1.xpose.msra.mxu0 0.0
      %242 = vmatprep.subr.mxu0 0.0
      %243 = vmatpush1.xpose.msra.mxu0 0.0
      %244 = vmatprep.subr.mxu0 0.0
      %245 = vmatpush1.xpose.msra.mxu0 0.0
      %246 = vmatprep.subr.mxu0 0.0
      %247 = vmatpush1.xpose.msra.mxu0 0.0
      %248 = vmatprep.subr.mxu0 0.0
      %249 = vmatpush1.xpose.msra.mxu0 0.0
      %250 = vmatprep.subr.mxu0 0.0
      %251 = vmatpush1.xpose.msra.mxu0 0.0
      %252 = vmatprep.subr.mxu0 0.0
      %253 = vmatpush1.xpose.msra.mxu0 0.0
      %254 = vmatprep.subr.mxu0 0.0
      %255 = vmatpush1.xpose.msra.mxu0 0.0
      %256 = vmatprep.subr.mxu0 0.0
      %257 = vmatpush1.xpose.msra.mxu0 0.0
      %258 = vmatprep.subr.mxu0 0.0
      %259 = vmatpush1.xpose.msra.mxu0 0.0
      %260 = vmatprep.mubr.f32.mxu0 0.0
      %261 = vmatmul.mubr.f32.gmra.mrb[0].mxu0 %v188
      %v262 = vpop.f32.mrb[0].mxu0
      %v263 = vadd.f32 0.0, %v262
      %v264 = vpop.f32.mrb[0].mxu0
      %265 = vmatprep.mubr.f32.mxu0 0.0
      %266 = vmatmul.mubr.f32.gmra.mrb[0].mxu0 %v191
      %v267 = vpop.f32.mrb[0].mxu0
      %v268 = vadd.f32 0.0, %v267
      %v269 = vpop.f32.mrb[0].mxu0
      %270 = vdwg.mxu0
      %v271 = vmul.f32 %v263, 6.0
      %v272 = vmul.f32 %v268, 6.0
      %vm273 = vcmask 31744
      %274 = vst.msk [vmem:[%s160] sm:$0xff] %vm273, %v271
      %275 = vst.msk [vmem:[%s160 + $0x8] sm:$0xff] %vm273, %v272
      %p276 = scmp.lt.s32.totalorder %s13, 1
      %s277 = scalar_select %p276, %s13, 1
      %s278 = smul.addr %s277, 2
      %s279 = smul.addr %s278, 8
      %s280 = scalar_lea.vmem %s2, %s279
      // Predicated region
      $region29: #{analogical_networks_forward.78} parent=27 // pred_check
        %p281 = pneg %p83
      $region30: #{analogical_networks_forward.78} parent=27 // pred_check_branch
        %283 = sbr.rel (%p281) target = $region32
      $region31: #{analogical_networks_forward.78} parent=27 // pred_region
        _
      $region32: #{analogical_networks_forward.78} parent=27 // pred_fallthru
        _
    $region28: #{analogical_networks_forward.78} parent=5 // pred_fallthru
      _
    %p284 = scmp.le.s32.totalorder 2, %s8
    // Predicated region
    $region33: #{analogical_networks_forward.78} parent=5 // pred_check
      %p285 = pneg %p284
    $region34: #{analogical_networks_forward.78} parent=5 // pred_check_branch
      %287 = sbr.rel (%p285) target = $region36
    $region35: #{analogical_networks_forward.78} parent=5 // pred_region
      %s288 = ssub.s32 %s8, 2
      // Predicated region
      $region37: #{analogical_networks_forward.78} parent=35 // pred_check
        %p289 = pneg %p89
      $region38: #{analogical_networks_forward.78} parent=35 // pred_check_branch
        %291 = sbr.rel (%p289) target = $region40
      $region39: #{analogical_networks_forward.78} parent=35 // pred_region
        %p292 = scmp.lt.s32.totalorder %s14, 1
        %s293 = scalar_select %p292, %s14, 1
        %s294 = smul.addr %s293, 2
        %s295 = smul.addr %s294, 8
        %s296 = scalar_lea.vmem %s2, %s295
      $region40: #{analogical_networks_forward.78} parent=35 // pred_fallthru
        _
    $region36: #{analogical_networks_forward.78} parent=5 // pred_fallthru
      _
  $region6: #{analogical_networks_forward.78} parent=0 // loop_footer
    %s12 = sadd.s32 1, %s8
  $region7: #{analogical_networks_forward.78} parent=0 // loop_footer_branch
    %7 = sbr.rel target = $region3
  $region8: #{analogical_networks_forward.78} parent=0 // loop_exit
    _

// kernel: analogical_networks_forward.77
$region0: #{analogical_networks_forward.77}
  #allocation0 [shape = 'u32[]', space=smem, size = 0x4, offset = 0x4, fixed_abs, tag = 'smem constant byte address 0x4 - core index']
  #allocation1 [shape = 'u32[144,128]{1,0:T(1,128)}', space=vmem, size = 0x12000, scoped, tag = 'internal scratch']
  %s0 = inlined_call_operand.vmem [shape: f32[32,64], index: 0, kind: input, shape index: {}]
  %s1 = inlined_call_operand.vmem [shape: f32[64,32], index: 1, kind: input, shape index: {}]
  %s2 = inlined_call_operand.vmem [shape: f32[1,32], index: 2, kind: input, shape index: {}]
  %s3 = inlined_call_operand.vmem [shape: f32[32,32], index: 3, kind: input, shape index: {}]
  %s4 = inlined_call_operand.vmem [shape: f32[1,32], index: 4, kind: input, shape index: {}]
  %s5 = inlined_call_operand.vmem [shape: f32[32,32], index: 5, kind: output, shape index: {}]
  %s6 = sld [smem:[#allocation0]]
  $region30: #{analogical_networks_forward.77} parent=0
    _
  %s8 = ssub.s32 1, %s6
  %s9 = scalar_select 0, %s8, %s6
  // Predicated region
  $region2: #{analogical_networks_forward.77} parent=0 // pred_check
    _
  $region3: #{analogical_networks_forward.77} parent=0 // pred_check_branch
    %11 = sbr.rel (0) target = $region5
  $region4: #{analogical_networks_forward.77} parent=0 // pred_region
    _
  $region5: #{analogical_networks_forward.77} parent=0 // pred_fallthru
    _
  // Predicated region
  $region6: #{analogical_networks_forward.77} parent=0 // pred_check
    _
  $region7: #{analogical_networks_forward.77} parent=0 // pred_check_branch
    %13 = sbr.rel (0) target = $region9
  $region8: #{analogical_networks_forward.77} parent=0 // pred_region
    _
  $region9: #{analogical_networks_forward.77} parent=0 // pred_fallthru
    _
  // Predicated region
  $region10: #{analogical_networks_forward.77} parent=0 // pred_check
    _
  $region11: #{analogical_networks_forward.77} parent=0 // pred_check_branch
    %15 = sbr.rel (0) target = $region13
  $region12: #{analogical_networks_forward.77} parent=0 // pred_region
    _
  $region13: #{analogical_networks_forward.77} parent=0 // pred_fallthru
    _
  // Predicated region
  $region14: #{analogical_networks_forward.77} parent=0 // pred_check
    _
  $region15: #{analogical_networks_forward.77} parent=0 // pred_check_branch
    %17 = sbr.rel (0) target = $region17
  $region16: #{analogical_networks_forward.77} parent=0 // pred_region
    _
  $region17: #{analogical_networks_forward.77} parent=0 // pred_fallthru
    _
  // Predicated region
  $region18: #{analogical_networks_forward.77} parent=0 // pred_check
    _
  $region19: #{analogical_networks_forward.77} parent=0 // pred_check_branch
    %19 = sbr.rel (0) target = $region21
  $region20: #{analogical_networks_forward.77} parent=0 // pred_region
    _
  $region21: #{analogical_networks_forward.77} parent=0 // pred_fallthru
    _
  %v20 = vld [vmem:[%s0] sm:$0xff]
  %v21 = vld [vmem:[%s0 + $0x8] sm:$0xff]
  %v22 = vld [vmem:[%s0 + $0x10] sm:$0xff]
  %v23 = vld [vmem:[%s0 + $0x18] sm:$0xff]
  %v24 = vld [vmem:[%s1] sm:$0xff]
  %v25 = vld [vmem:[%s1 + $0x8] sm:$0xff]
  %v26 = vld [vmem:[%s1 + $0x10] sm:$0xff]
  %v27 = vld [vmem:[%s1 + $0x18] sm:$0xff]
  %v28 = vld [vmem:[%s1 + $0x20] sm:$0xff]
  %v29 = vld [vmem:[%s1 + $0x28] sm:$0xff]
  %v30 = vld [vmem:[%s1 + $0x30] sm:$0xff]
  %v31 = vld [vmem:[%s1 + $0x38] sm:$0xff]
  %v32 = vld [vmem:[%s2] sm:$0x1]
  %v34 = vlaneseq
  %v35 = vshrl.u32 %v34, 7
  %v36 = vsub.s32 0, %v35
  %v37 = vrot.slane %v32, %v36
  %vm39 = vcmask 523264
  %v41 = vsel %vm39, %v20, 0
  %v44 = vsel %vm39, %v21, 0
  %v47 = vsel %vm39, %v22, 0
  %v50 = vsel %vm39, %v23, 0
  %52 = vmatprep.subr.mxu0 0.0
  %53 = vmatpush1.msra.mxu0 %v24
  %54 = vmatprep.subr.mxu0 0.0
  %55 = vmatpush1.msra.mxu0 %v25
  %56 = vmatprep.subr.mxu0 0.0
  %57 = vmatpush1.msra.mxu0 %v26
  %58 = vmatprep.subr.mxu0 0.0
  %59 = vmatpush1.msra.mxu0 %v27
  %60 = vmatprep.subr.mxu0 0.0
  %61 = vmatpush1.msra.mxu0 %v28
  %62 = vmatprep.subr.mxu0 0.0
  %63 = vmatpush1.msra.mxu0 %v29
  %64 = vmatprep.subr.mxu0 0.0
  %65 = vmatpush1.msra.mxu0 %v30
  %66 = vmatprep.subr.mxu0 0.0
  %67 = vmatpush1.msra.mxu0 %v31
  %68 = vmatprep.subr.mxu0 0.0
  %69 = vmatpush1.msra.mxu0 0.0
  %70 = vmatprep.subr.mxu0 0.0
  %71 = vmatpush1.msra.mxu0 0.0
  %72 = vmatprep.subr.mxu0 0.0
  %73 = vmatpush1.msra.mxu0 0.0
  %74 = vmatprep.subr.mxu0 0.0
  %75 = vmatpush1.msra.mxu0 0.0
  %76 = vmatprep.subr.mxu0 0.0
  %77 = vmatpush1.msra.mxu0 0.0
  %78 = vmatprep.subr.mxu0 0.0
  %79 = vmatpush1.msra.mxu0 0.0
  %80 = vmatprep.subr.mxu0 0.0
  %81 = vmatpush1.msra.mxu0 0.0
  %82 = vmatprep.subr.mxu0 0.0
  %83 = vmatpush1.msra.mxu0 0.0
  %84 = vmatprep.subr.mxu0 0.0
  %85 = vmatpush1.msra.mxu0 0.0
  %86 = vmatprep.subr.mxu0 0.0
  %87 = vmatpush1.msra.mxu0 0.0
  %88 = vmatprep.subr.mxu0 0.0
  %89 = vmatpush1.msra.mxu0 0.0
  %90 = vmatprep.subr.mxu0 0.0
  %91 = vmatpush1.msra.mxu0 0.0
  %92 = vmatprep.subr.mxu0 0.0
  %93 = vmatpush1.msra.mxu0 0.0
  %94 = vmatprep.subr.mxu0 0.0
  %95 = vmatpush1.msra.mxu0 0.0
  %96 = vmatprep.subr.mxu0 0.0
  %97 = vmatpush1.msra.mxu0 0.0
  %98 = vmatprep.subr.mxu0 0.0
  %99 = vmatpush1.msra.mxu0 0.0
  %100 = vmatprep.subr.mxu0 0.0
  %101 = vmatpush1.msra.mxu0 0.0
  %102 = vmatprep.subr.mxu0 0.0
  %103 = vmatpush1.msra.mxu0 0.0
  %104 = vmatprep.subr.mxu0 0.0
  %105 = vmatpush1.msra.mxu0 0.0
  %106 = vmatprep.subr.mxu0 0.0
  %107 = vmatpush1.msra.mxu0 0.0
  %108 = vmatprep.subr.mxu0 0.0
  %109 = vmatpush1.msra.mxu0 0.0
  %110 = vmatprep.subr.mxu0 0.0
  %111 = vmatpush1.msra.mxu0 0.0
  %112 = vmatprep.subr.mxu0 0.0
  %113 = vmatpush1.msra.mxu0 0.0
  %114 = vmatprep.subr.mxu0 0.0
  %115 = vmatpush1.msra.mxu0 0.0
  %116 = vmatprep.mubr.f32.mxu0 0.0
  %117 = vmatmul.mubr.f32.gmra.mrb[0].mxu0 %v41
  %v118 = vpop.f32.mrb[0].mxu0
  %v119 = vadd.f32 %v37, %v118
  %v120 = vpop.f32.mrb[0].mxu0
  %121 = vmatprep.mubr.f32.mxu0 0.0
  %122 = vmatmul.mubr.f32.gmra.mrb[0].mxu0 %v44
  %v123 = vpop.f32.mrb[0].mxu0
  %v124 = vadd.f32 %v37, %v123
  %v125 = vpop.f32.mrb[0].mxu0
  %126 = vmatprep.mubr.f32.mxu0 0.0
  %127 = vmatmul.mubr.f32.gmra.mrb[0].mxu0 %v47
  %v128 = vpop.f32.mrb[0].mxu0
  %v129 = vadd.f32 %v37, %v128
  %v130 = vpop.f32.mrb[0].mxu0
  %131 = vmatprep.mubr.f32.mxu0 0.0
  %132 = vmatmul.mubr.f32.gmra.mrb[0].mxu0 %v50
  %v133 = vpop.f32.mrb[0].mxu0
  %v134 = vadd.f32 %v37, %v133
  %v135 = vpop.f32.mrb[0].mxu0
  %136 = vdwg.mxu0
  %v137 = vmax.f32 %v119, 0.0
  %v138 = vmax.f32 %v124, 0.0
  %v139 = vmax.f32 %v129, 0.0
  %v140 = vmax.f32 %v134, 0.0
  %v141 = vld [vmem:[%s3] sm:$0xff]
  %v142 = vld [vmem:[%s3 + $0x8] sm:$0xff]
  %v143 = vld [vmem:[%s3 + $0x10] sm:$0xff]
  %v144 = vld [vmem:[%s3 + $0x18] sm:$0xff]
  %v145 = vld [vmem:[%s4] sm:$0x1]
  %v147 = vlaneseq
  %v148 = vshrl.u32 %v147, 7
  %v149 = vsub.s32 0, %v148
  %v150 = vrot.slane %v145, %v149
  %vm152 = vcmask 261120
  %v154 = vsel %vm152, %v137, 0
  %v157 = vsel %vm152, %v138, 0
  %v160 = vsel %vm152, %v139, 0
  %v163 = vsel %vm152, %v140, 0
  %165 = vmatprep.subr.mxu0 0.0
  %166 = vmatpush1.msra.mxu0 %v141
  %167 = vmatprep.subr.mxu0 0.0
  %168 = vmatpush1.msra.mxu0 %v142
  %169 = vmatprep.subr.mxu0 0.0
  %170 = vmatpush1.msra.mxu0 %v143
  %171 = vmatprep.subr.mxu0 0.0
  %172 = vmatpush1.msra.mxu0 %v144
  %173 = vmatprep.subr.mxu0 0.0
  %174 = vmatpush1.msra.mxu0 0.0
  %175 = vmatprep.subr.mxu0 0.0
  %176 = vmatpush1.msra.mxu0 0.0
  %177 = vmatprep.subr.mxu0 0.0
  %178 = vmatpush1.msra.mxu0 0.0
  %179 = vmatprep.subr.mxu0 0.0
  %180 = vmatpush1.msra.mxu0 0.0
  %181 = vmatprep.subr.mxu0 0.0
  %182 = vmatpush1.msra.mxu0 0.0
  %183 = vmatprep.subr.mxu0 0.0
  %184 = vmatpush1.msra.mxu0 0.0
  %185 = vmatprep.subr.mxu0 0.0
  %186 = vmatpush1.msra.mxu0 0.0
  %187 = vmatprep.subr.mxu0 0.0
  %188 = vmatpush1.msra.mxu0 0.0
  %189 = vmatprep.subr.mxu0 0.0
  %190 = vmatpush1.msra.mxu0 0.0
  %191 = vmatprep.subr.mxu0 0.0
  %192 = vmatpush1.msra.mxu0 0.0
  %193 = vmatprep.subr.mxu0 0.0
  %194 = vmatpush1.msra.mxu0 0.0
  %195 = vmatprep.subr.mxu0 0.0
  %196 = vmatpush1.msra.mxu0 0.0
  %197 = vmatprep.subr.mxu0 0.0
  %198 = vmatpush1.msra.mxu0 0.0
  %199 = vmatprep.subr.mxu0 0.0
  %200 = vmatpush1.msra.mxu0 0.0
  %201 = vmatprep.subr.mxu0 0.0
  %202 = vmatpush1.msra.mxu0 0.0
  %203 = vmatprep.subr.mxu0 0.0
  %204 = vmatpush1.msra.mxu0 0.0
  %205 = vmatprep.subr.mxu0 0.0
  %206 = vmatpush1.msra.mxu0 0.0
  %207 = vmatprep.subr.mxu0 0.0
  %208 = vmatpush1.msra.mxu0 0.0
  %209 = vmatprep.subr.mxu0 0.0
  %210 = vmatpush1.msra.mxu0 0.0
  %211 = vmatprep.subr.mxu0 0.0
  %212 = vmatpush1.msra.mxu0 0.0
  %213 = vmatprep.subr.mxu0 0.0
  %214 = vmatpush1.msra.mxu0 0.0
  %215 = vmatprep.subr.mxu0 0.0
  %216 = vmatpush1.msra.mxu0 0.0
  %217 = vmatprep.subr.mxu0 0.0
  %218 = vmatpush1.msra.mxu0 0.0
  %219 = vmatprep.subr.mxu0 0.0
  %220 = vmatpush1.msra.mxu0 0.0
  %221 = vmatprep.subr.mxu0 0.0
  %222 = vmatpush1.msra.mxu0 0.0
  %223 = vmatprep.subr.mxu0 0.0
  %224 = vmatpush1.msra.mxu0 0.0
  %225 = vmatprep.subr.mxu0 0.0
  %226 = vmatpush1.msra.mxu0 0.0
  %227 = vmatprep.subr.mxu0 0.0
  %228 = vmatpush1.msra.mxu0 0.0
  %229 = vmatprep.mubr.f32.mxu0 0.0
  %230 = vmatmul.mubr.f32.gmra.mrb[0].mxu0 %v154
  %v231 = vpop.f32.mrb[0].mxu0
  %v232 = vadd.f32 %v150, %v231
  %v233 = vpop.f32.mrb[0].mxu0
  %234 = vmatprep.mubr.f32.mxu0 0.0
  %235 = vmatmul.mubr.f32.gmra.mrb[0].mxu0 %v157
  %v236 = vpop.f32.mrb[0].mxu0
  %v237 = vadd.f32 %v150, %v236
  %v238 = vpop.f32.mrb[0].mxu0
  %239 = vmatprep.mubr.f32.mxu0 0.0
  %240 = vmatmul.mubr.f32.gmra.mrb[0].mxu0 %v160
  %v241 = vpop.f32.mrb[0].mxu0
  %v242 = vadd.f32 %v150, %v241
  %v243 = vpop.f32.mrb[0].mxu0
  %244 = vmatprep.mubr.f32.mxu0 0.0
  %245 = vmatmul.mubr.f32.gmra.mrb[0].mxu0 %v163
  %v246 = vpop.f32.mrb[0].mxu0
  %v247 = vadd.f32 %v150, %v246
  %v248 = vpop.f32.mrb[0].mxu0
  %249 = vdwg.mxu0
  %250 = vst.msk [vmem:[%s5] sm:$0xff] %vm152, %v232
  %251 = vst.msk [vmem:[%s5 + $0x8] sm:$0xff] %vm152, %v237
  %252 = vst.msk [vmem:[%s5 + $0x10] sm:$0xff] %vm152, %v242
  %253 = vst.msk [vmem:[%s5 + $0x18] sm:$0xff] %vm152, %v247
  // Predicated region
  $region22: #{analogical_networks_forward.77} parent=0 // pred_check
    _
  $region23: #{analogical_networks_forward.77} parent=0 // pred_check_branch
    %255 = sbr.rel (0) target = $region25
  $region24: #{analogical_networks_forward.77} parent=0 // pred_region
    _
  $region25: #{analogical_networks_forward.77} parent=0 // pred_fallthru
    _
  // Predicated region
  $region26: #{analogical_networks_forward.77} parent=0 // pred_check
    _
  $region27: #{analogical_networks_forward.77} parent=0 // pred_check_branch
    %257 = sbr.rel (0) target = $region29
  $region28: #{analogical_networks_forward.77} parent=0 // pred_region
    _
  $region29: #{analogical_networks_forward.77} parent=0 // pred_fallthru
    _

</llo_original>
